<compile_context>
chip_gen: v7x
topology: tpu7x:2x2x1
jax: 0.10.0
libtpu: 0.0.40
codegen_flags: <defaults>
</compile_context>

<pallas_src>
import functools

import jax
import jax.numpy as jnp
from jax.experimental import pallas as pl
from jax.experimental.pallas import tpu as pltpu


# ----------------------------------------------------------------------------
# Pallas kernel: fused VAE forward for one batch tile
#   encoder : h   = relu(x @ W1 + b1)
#             ms  = h @ [Wmu | 0 | Wsg | 0] + [bmu | 0 | bsg | 0]   (aligned heads)
#             mu  = ms[:, :L] ; s = ms[:, HEAD:HEAD+L] ; sigma = exp(s)
#             z   = mu + sigma * eps                    (eps ~ N(0,1), input)
#             kl_row = sum_L(sigma^2 + mu^2 - s - 1/2)  (per-row partial output)
#   decoder : hd  = relu(z @ Wd1 + bd1)
#             y   = sigmoid(hd @ Wd2 + bd2)
# ----------------------------------------------------------------------------
def make_vae_kernel(latent_dims, head_off):
    L = latent_dims

    def vae_kernel(x_ref, w1_ref, b1_ref, wms_ref, bms_ref, eps_ref,
                   wd1_ref, bd1_ref, wd2_ref, bd2_ref,
                   recon_ref, kl_ref):
        # --- encoder ---
        x = x_ref[...].astype(jnp.bfloat16)                          # (TB, 784)
        h = jnp.dot(x, w1_ref[...],
                    preferred_element_type=jnp.float32) + b1_ref[...]
        h = jnp.maximum(h, 0.0)                                      # relu, f32

        ms = jnp.dot(h.astype(jnp.bfloat16), wms_ref[...],
                     preferred_element_type=jnp.float32) + bms_ref[...]
        mu = ms[:, :L]                                               # tile 0 head
        s = ms[:, head_off:head_off + L]                             # tile 1 head
        sigma = jnp.exp(s)

        # --- reparameterization ---
        z = mu + sigma * eps_ref[...]                                # (TB, L) f32

        # --- KL per-row partials (log(sigma) == s; summed over latent dim) ---
        kl_ref[...] = jnp.sum(sigma * sigma + mu * mu - s - 0.5,
                              axis=-1, keepdims=True)                # (TB, 1)

        # --- decoder ---
        hd = jnp.dot(z.astype(jnp.bfloat16), wd1_ref[...],
                     preferred_element_type=jnp.float32) + bd1_ref[...]
        hd = jnp.maximum(hd, 0.0)

        logits = jnp.dot(hd.astype(jnp.bfloat16), wd2_ref[...],
                         preferred_element_type=jnp.float32) + bd2_ref[...]
        recon_ref[...] = jax.nn.sigmoid(logits).astype(recon_ref.dtype)

    return vae_kernel


def _resident(shape):
    # Whole-array block, same block index every grid step -> stays in VMEM.
    # Single-buffered: no point double-buffering a block that never changes.
    nd = len(shape)
    return pl.BlockSpec(shape, lambda i: (0,) * nd,
                        pipeline_mode=pl.Buffered(1))


def _round_up(a, m):
    return ((a + m - 1) // m) * m


def _cdiv(a, b):
    return (a + b - 1) // b


def _choose_tiling(batch, tb):
    """Number of grid steps + balanced batch tile (multiple of 8 sublanes).

    Balancing the tile across ceil(B / tb) steps bounds wrapper-side padding to
    fewer than 8 rows per tile, so the jnp.pad copy of x is (almost) never the
    dominant HBM cost."""
    n = max(1, _cdiv(batch, tb))
    tb_eff = _round_up(_cdiv(batch, n), 8)
    return n, tb_eff


def vae_forward(x_nchw, params, eps, *, tb=512, recon_dtype=jnp.float32):
    """x_nchw: (B, 1, 28, 28) f32. params: packed kernel params (see pack_params).
    eps: (B, L) f32 standard-normal noise. Returns (recon (B,1,28,28), kl scalar).

    tb: batch tile. 512 is a good default on all generations with the 32 MiB
    VMEM limit below; v5e/v6e (128 MiB VMEM) can go to 1024 with ~48 MiB."""
    B = x_nchw.shape[0]
    L = eps.shape[1]
    x_flat = x_nchw.reshape(B, 784)                 # == torch.flatten(x, 1)

    n_tiles, tb_eff = _choose_tiling(B, tb)
    b_pad = n_tiles * tb_eff
    if b_pad != B:
        pad = b_pad - B                              # < 8 rows per tile by construction
        x_flat = jnp.pad(x_flat, ((0, pad), (0, 0)))
        eps = jnp.pad(eps, ((0, pad), (0, 0)))
    grid = (n_tiles,)

    (w1, b1, wms, bms, wd1, bd1, wd2, bd2) = params
    head_off = wms.shape[1] // 2                     # lane-aligned sigma-head offset

    in_specs = [
        pl.BlockSpec((tb_eff, 784), lambda i: (i, 0)),   # x tile
        _resident(w1.shape), _resident(b1.shape),
        _resident(wms.shape), _resident(bms.shape),
        pl.BlockSpec((tb_eff, L), lambda i: (i, 0)),     # eps tile
        _resident(wd1.shape), _resident(bd1.shape),
        _resident(wd2.shape), _resident(bd2.shape),
    ]
    out_specs = (
        pl.BlockSpec((tb_eff, 784), lambda i: (i, 0)),   # recon tile
        pl.BlockSpec((tb_eff, 1), lambda i: (i, 0)),     # per-row KL partials
    )

    # Advisory cost estimate for XLA's scheduler.
    recon_itemsize = jnp.dtype(recon_dtype).itemsize
    weight_bytes = sum(int(p.size) * p.dtype.itemsize for p in params)
    flops = 2 * b_pad * (784 * 512 + 512 * wms.shape[1] + L * 512 + 512 * 784)
    transcendentals = b_pad * (L + 784)              # exp(s) + sigmoid(logits)
    bytes_accessed = (b_pad * 784 * 4                # x in (f32)
                      + b_pad * L * 4                # eps in
                      + b_pad * 784 * recon_itemsize # recon out
                      + b_pad * 4                    # kl partials out
                      + weight_bytes)

    recon_pad, kl_rows = pl.pallas_call(
        make_vae_kernel(L, head_off),
        out_shape=(
            jax.ShapeDtypeStruct((b_pad, 784), recon_dtype),
            jax.ShapeDtypeStruct((b_pad, 1), jnp.float32),
        ),
        grid=grid,
        in_specs=in_specs,
        out_specs=out_specs,
        compiler_params=pltpu.CompilerParams(
            dimension_semantics=("parallel",),
            vmem_limit_bytes=32 << 20,               # fits v7x's 64 MiB/TC; plenty at TB=512
        ),
        cost_estimate=pl.CostEstimate(
            flops=flops,
            transcendentals=transcendentals,
            bytes_accessed=bytes_accessed,
        ),
    )(x_flat, w1, b1, wms, bms, eps, wd1, bd1, wd2, bd2)

    recon = recon_pad[:B].reshape(B, 1, 28, 28)
    kl = jnp.sum(kl_rows[:B, 0])                    # drop padded rows, then reduce
    return recon, kl


# ----------------------------------------------------------------------------
# Parameter handling
# ----------------------------------------------------------------------------
def init_params(key, latent_dims, scale=0.02):
    """PyTorch-layout params (weights transposed to (in, out), biases (1, out))."""
    ks = jax.random.split(key, 10)

    def lin(kw, kb, fan_in, fan_out):
        w = scale * jax.random.normal(kw, (fan_in, fan_out), jnp.float32)
        b = scale * jax.random.normal(kb, (1, fan_out), jnp.float32)
        return w, b

    w1, b1 = lin(ks[0], ks[1], 784, 512)              # encoder.linear1
    wmu, bmu = lin(ks[2], ks[3], 512, latent_dims)    # encoder.linear2
    wsg, bsg = lin(ks[4], ks[5], 512, latent_dims)    # encoder.linear3
    wd1, bd1 = lin(ks[6], ks[7], latent_dims, 512)    # decoder.linear1
    wd2, bd2 = lin(ks[8], ks[9], 512, 784)            # decoder.linear2
    return (w1, b1, wmu, bmu, wsg, bsg, wd1, bd1, wd2, bd2)


def pack_params(torch_params):
    """Pack for the kernel: bf16 weights, lane-aligned fused mu/sigma head, f32 biases.

    The mu head occupies columns [0, L) and the log-sigma head columns
    [HEAD, HEAD+L) with HEAD a multiple of 128, so both in-kernel slices start
    on a 128-lane tile boundary (no lane shuffles). Padded columns are zero."""
    (w1, b1, wmu, bmu, wsg, bsg, wd1, bd1, wd2, bd2) = torch_params
    L = wmu.shape[1]
    hidden = w1.shape[1]
    head_off = max(128, _round_up(L, 128))
    wms = jnp.zeros((hidden, 2 * head_off), jnp.float32)
    wms = wms.at[:, :L].set(wmu).at[:, head_off:head_off + L].set(wsg)
    bms = jnp.zeros((1, 2 * head_off), jnp.float32)
    bms = bms.at[:, :L].set(bmu).at[:, head_off:head_off + L].set(bsg)
    return (w1.astype(jnp.bfloat16), b1,
            wms.astype(jnp.bfloat16), bms,
            wd1.astype(jnp.bfloat16), bd1,
            wd2.astype(jnp.bfloat16), bd2)


def vae_reference(x_nchw, torch_params, eps):
    """Pure-JAX f32 reference matching the PyTorch module semantics."""
    (w1, b1, wmu, bmu, wsg, bsg, wd1, bd1, wd2, bd2) = torch_params
    x = x_nchw.reshape(x_nchw.shape[0], -1)
    h = jax.nn.relu(x @ w1 + b1)
    mu = h @ wmu + bmu
    s = h @ wsg + bsg
    sigma = jnp.exp(s)
    z = mu + sigma * eps
    kl = jnp.sum(sigma ** 2 + mu ** 2 - s - 0.5)      # log(sigma) == s
    hd = jax.nn.relu(z @ wd1 + bd1)
    y = jax.nn.sigmoid(hd @ wd2 + bd2)
    return y.reshape(-1, 1, 28, 28), kl


if __name__ == "__main__":
    latent_dims = 16
    batch = 256                        # 2 tiles of 128 -> exercises tiling + megacore

    key = jax.random.PRNGKey(0)
    k_x, k_p, k_eps = jax.random.split(key, 3)

    x = jax.random.uniform(k_x, (batch, 1, 28, 28), jnp.float32)   # MNIST-like pixels
    torch_params = init_params(k_p, latent_dims)
    # Standard-normal noise for the reparameterization trick (torch's self.N.sample)
    eps = jax.random.normal(k_eps, (batch, latent_dims), jnp.float32)

    kernel_params = pack_params(torch_params)

    fwd = jax.jit(functools.partial(vae_forward, tb=128))   # grid of 2 tiles, no padding
    recon, kl = fwd(x, kernel_params, eps)
    jax.block_until_ready((recon, kl))

    recon_ref, kl_ref = vae_reference(x, torch_params, eps)

    assert recon.shape == (batch, 1, 28, 28)
    assert recon.dtype == jnp.float32
    assert jnp.all(jnp.isfinite(recon)) and bool(jnp.isfinite(kl))
    assert jnp.all(recon >= 0.0) and jnp.all(recon <= 1.0)       # sigmoid output
    # bf16 MXU inputs vs f32 reference: loose tolerances
    assert jnp.allclose(recon, recon_ref, atol=3e-2, rtol=3e-2)
    assert jnp.allclose(kl, kl_ref, rtol=5e-2, atol=2.0)
    print("KERNEL_OK")
</pallas_src>

<mosaic_0001>
module attributes {stable_mosaic.version = 11 : i64} {
  func.func @vae_kernel(%arg0: i32, %arg1: memref<128x784xf32, #tpu.memory_space<vmem>>, %arg2: memref<784x512xbf16, #tpu.memory_space<vmem>>, %arg3: memref<1x512xf32, #tpu.memory_space<vmem>>, %arg4: memref<512x256xbf16, #tpu.memory_space<vmem>>, %arg5: memref<1x256xf32, #tpu.memory_space<vmem>>, %arg6: memref<128x16xf32, #tpu.memory_space<vmem>>, %arg7: memref<16x512xbf16, #tpu.memory_space<vmem>>, %arg8: memref<1x512xf32, #tpu.memory_space<vmem>>, %arg9: memref<512x784xbf16, #tpu.memory_space<vmem>>, %arg10: memref<1x784xf32, #tpu.memory_space<vmem>>, %arg11: memref<128x784xf32, #tpu.memory_space<vmem>>, %arg12: memref<128x1xf32, #tpu.memory_space<vmem>>) attributes {dimension_semantics = [#tpu.dimension_semantics<parallel>], iteration_bounds = array<i64: 2>, scalar_prefetch = 0 : i64, scratch_operands = 0 : i64, tpu.core_type = #tpu.core_type<tc>, window_params = [{transform_indices = @transform_0, window_bounds = array<i64: 128, 784>}, {pipeline_mode = #tpu.pipeline_mode<synchronous>, transform_indices = @transform_1, window_bounds = array<i64: 784, 512>}, {pipeline_mode = #tpu.pipeline_mode<synchronous>, transform_indices = @transform_2, window_bounds = array<i64: 1, 512>}, {pipeline_mode = #tpu.pipeline_mode<synchronous>, transform_indices = @transform_3, window_bounds = array<i64: 512, 256>}, {pipeline_mode = #tpu.pipeline_mode<synchronous>, transform_indices = @transform_4, window_bounds = array<i64: 1, 256>}, {transform_indices = @transform_5, window_bounds = array<i64: 128, 16>}, {pipeline_mode = #tpu.pipeline_mode<synchronous>, transform_indices = @transform_6, window_bounds = array<i64: 16, 512>}, {pipeline_mode = #tpu.pipeline_mode<synchronous>, transform_indices = @transform_7, window_bounds = array<i64: 1, 512>}, {pipeline_mode = #tpu.pipeline_mode<synchronous>, transform_indices = @transform_8, window_bounds = array<i64: 512, 784>}, {pipeline_mode = #tpu.pipeline_mode<synchronous>, transform_indices = @transform_9, window_bounds = array<i64: 1, 784>}, {transform_indices = @transform_10, window_bounds = array<i64: 128, 784>}, {transform_indices = @transform_11, window_bounds = array<i64: 128, 1>}]} {
    %c0 = arith.constant 0 : index
    %c0_0 = arith.constant 0 : index
    %0 = vector.load %arg1[%c0, %c0_0] : memref<128x784xf32, #tpu.memory_space<vmem>>, vector<128x784xf32>
    %1 = arith.truncf %0 : vector<128x784xf32> to vector<128x784xbf16>
    %c0_1 = arith.constant 0 : index
    %c0_2 = arith.constant 0 : index
    %2 = vector.load %arg2[%c0_1, %c0_2] : memref<784x512xbf16, #tpu.memory_space<vmem>>, vector<784x512xbf16>
    %cst = arith.constant dense<0.000000e+00> : vector<128x512xf32>
    %3 = tpu.matmul %1, %2, %cst {dimension_numbers = #tpu.dot_dimension_numbers<[1], [0], [0], [1], [0, 0, 1, 1], [], []>} : vector<128x784xbf16>, vector<784x512xbf16>, vector<128x512xf32> -> vector<128x512xf32>
    %c0_3 = arith.constant 0 : index
    %c0_4 = arith.constant 0 : index
    %4 = vector.load %arg3[%c0_3, %c0_4] : memref<1x512xf32, #tpu.memory_space<vmem>>, vector<1x512xf32>
    %5 = vector.broadcast %4 : vector<1x512xf32> to vector<128x512xf32>
    %6 = arith.addf %3, %5 : vector<128x512xf32>
    %cst_5 = arith.constant 0.000000e+00 : f32
    %7 = vector.broadcast %cst_5 : f32 to vector<128x512xf32>
    %8 = arith.maximumf %6, %7 : vector<128x512xf32>
    %9 = arith.truncf %8 : vector<128x512xf32> to vector<128x512xbf16>
    %c0_6 = arith.constant 0 : index
    %c0_7 = arith.constant 0 : index
    %10 = vector.load %arg4[%c0_6, %c0_7] : memref<512x256xbf16, #tpu.memory_space<vmem>>, vector<512x256xbf16>
    %cst_8 = arith.constant dense<0.000000e+00> : vector<128x256xf32>
    %11 = tpu.matmul %9, %10, %cst_8 {dimension_numbers = #tpu.dot_dimension_numbers<[1], [0], [0], [1], [0, 0, 1, 1], [], []>} : vector<128x512xbf16>, vector<512x256xbf16>, vector<128x256xf32> -> vector<128x256xf32>
    %c0_9 = arith.constant 0 : index
    %c0_10 = arith.constant 0 : index
    %12 = vector.load %arg5[%c0_9, %c0_10] : memref<1x256xf32, #tpu.memory_space<vmem>>, vector<1x256xf32>
    %13 = vector.broadcast %12 : vector<1x256xf32> to vector<128x256xf32>
    %14 = arith.addf %11, %13 : vector<128x256xf32>
    %15 = vector.extract_strided_slice %14 {offsets = [0, 0], sizes = [128, 16], strides = [1, 1]} : vector<128x256xf32> to vector<128x16xf32>
    %16 = vector.extract_strided_slice %14 {offsets = [0, 128], sizes = [128, 16], strides = [1, 1]} : vector<128x256xf32> to vector<128x16xf32>
    %17 = math.exp %16 : vector<128x16xf32>
    %c0_11 = arith.constant 0 : index
    %c0_12 = arith.constant 0 : index
    %18 = vector.load %arg6[%c0_11, %c0_12] : memref<128x16xf32, #tpu.memory_space<vmem>>, vector<128x16xf32>
    %19 = arith.mulf %17, %18 : vector<128x16xf32>
    %20 = arith.addf %15, %19 : vector<128x16xf32>
    %21 = arith.mulf %17, %17 : vector<128x16xf32>
    %22 = arith.mulf %15, %15 : vector<128x16xf32>
    %23 = arith.addf %21, %22 : vector<128x16xf32>
    %24 = arith.subf %23, %16 : vector<128x16xf32>
    %cst_13 = arith.constant 5.000000e-01 : f32
    %25 = vector.broadcast %cst_13 : f32 to vector<128x16xf32>
    %26 = arith.subf %24, %25 : vector<128x16xf32>
    %cst_14 = arith.constant dense<0.000000e+00> : vector<128xf32>
    %27 = vector.multi_reduction <add>, %26, %cst_14 [1] : vector<128x16xf32> to vector<128xf32>
    %28 = vector.shape_cast %27 : vector<128xf32> to vector<128x1xf32>
    %c0_15 = arith.constant 0 : index
    %c0_16 = arith.constant 0 : index
    %29 = vector.load %arg12[%c0_15, %c0_16] : memref<128x1xf32, #tpu.memory_space<vmem>>, vector<128x1xf32>
    tpu.vector_store %arg12[%c0_15, %c0_16], %28 {strides = array<i32>} : memref<128x1xf32, #tpu.memory_space<vmem>>, vector<128x1xf32>,
    %30 = arith.truncf %20 : vector<128x16xf32> to vector<128x16xbf16>
    %c0_17 = arith.constant 0 : index
    %c0_18 = arith.constant 0 : index
    %31 = vector.load %arg7[%c0_17, %c0_18] : memref<16x512xbf16, #tpu.memory_space<vmem>>, vector<16x512xbf16>
    %cst_19 = arith.constant dense<0.000000e+00> : vector<128x512xf32>
    %32 = tpu.matmul %30, %31, %cst_19 {dimension_numbers = #tpu.dot_dimension_numbers<[1], [0], [0], [1], [0, 0, 1, 1], [], []>} : vector<128x16xbf16>, vector<16x512xbf16>, vector<128x512xf32> -> vector<128x512xf32>
    %c0_20 = arith.constant 0 : index
    %c0_21 = arith.constant 0 : index
    %33 = vector.load %arg8[%c0_20, %c0_21] : memref<1x512xf32, #tpu.memory_space<vmem>>, vector<1x512xf32>
    %34 = vector.broadcast %33 : vector<1x512xf32> to vector<128x512xf32>
    %35 = arith.addf %32, %34 : vector<128x512xf32>
    %cst_22 = arith.constant 0.000000e+00 : f32
    %36 = vector.broadcast %cst_22 : f32 to vector<128x512xf32>
    %37 = arith.maximumf %35, %36 : vector<128x512xf32>
    %38 = arith.truncf %37 : vector<128x512xf32> to vector<128x512xbf16>
    %c0_23 = arith.constant 0 : index
    %c0_24 = arith.constant 0 : index
    %39 = vector.load %arg9[%c0_23, %c0_24] : memref<512x784xbf16, #tpu.memory_space<vmem>>, vector<512x784xbf16>
    %cst_25 = arith.constant dense<0.000000e+00> : vector<128x784xf32>
    %40 = tpu.matmul %38, %39, %cst_25 {dimension_numbers = #tpu.dot_dimension_numbers<[1], [0], [0], [1], [0, 0, 1, 1], [], []>} : vector<128x512xbf16>, vector<512x784xbf16>, vector<128x784xf32> -> vector<128x784xf32>
    %c0_26 = arith.constant 0 : index
    %c0_27 = arith.constant 0 : index
    %41 = vector.load %arg10[%c0_26, %c0_27] : memref<1x784xf32, #tpu.memory_space<vmem>>, vector<1x784xf32>
    %42 = vector.broadcast %41 : vector<1x784xf32> to vector<128x784xf32>
    %43 = arith.addf %40, %42 : vector<128x784xf32>
    %44 = arith.negf %43 : vector<128x784xf32>
    %45 = math.exp %44 : vector<128x784xf32>
    %cst_28 = arith.constant 1.000000e+00 : f32
    %46 = vector.broadcast %cst_28 : f32 to vector<128x784xf32>
    %47 = arith.addf %46, %45 : vector<128x784xf32>
    %48 = arith.divf %46, %47 : vector<128x784xf32>
    %c0_29 = arith.constant 0 : index
    %c0_30 = arith.constant 0 : index
    %49 = vector.load %arg11[%c0_29, %c0_30] : memref<128x784xf32, #tpu.memory_space<vmem>>, vector<128x784xf32>
    tpu.vector_store %arg11[%c0_29, %c0_30], %48 {strides = array<i32>} : memref<128x784xf32, #tpu.memory_space<vmem>>, vector<128x784xf32>,
    return
  }
  func.func @transform_0(%arg0: i32) -> (i32, i32) {
    %c0_i32 = arith.constant 0 : i32
    %c0_i32_0 = arith.constant 0 : i32
    return %arg0, %c0_i32 : i32, i32
  }
  func.func @transform_1(%arg0: i32) -> (i32, i32) {
    %c0_i32 = arith.constant 0 : i32
    %c0_i32_0 = arith.constant 0 : i32
    %c0_i32_1 = arith.constant 0 : i32
    return %c0_i32, %c0_i32_0 : i32, i32
  }
  func.func @transform_2(%arg0: i32) -> (i32, i32) {
    %c0_i32 = arith.constant 0 : i32
    %c0_i32_0 = arith.constant 0 : i32
    %c0_i32_1 = arith.constant 0 : i32
    return %c0_i32, %c0_i32_0 : i32, i32
  }
  func.func @transform_3(%arg0: i32) -> (i32, i32) {
    %c0_i32 = arith.constant 0 : i32
    %c0_i32_0 = arith.constant 0 : i32
    %c0_i32_1 = arith.constant 0 : i32
    return %c0_i32, %c0_i32_0 : i32, i32
  }
  func.func @transform_4(%arg0: i32) -> (i32, i32) {
    %c0_i32 = arith.constant 0 : i32
    %c0_i32_0 = arith.constant 0 : i32
    %c0_i32_1 = arith.constant 0 : i32
    return %c0_i32, %c0_i32_0 : i32, i32
  }
  func.func @transform_5(%arg0: i32) -> (i32, i32) {
    %c0_i32 = arith.constant 0 : i32
    %c0_i32_0 = arith.constant 0 : i32
    return %arg0, %c0_i32 : i32, i32
  }
  func.func @transform_6(%arg0: i32) -> (i32, i32) {
    %c0_i32 = arith.constant 0 : i32
    %c0_i32_0 = arith.constant 0 : i32
    %c0_i32_1 = arith.constant 0 : i32
    return %c0_i32, %c0_i32_0 : i32, i32
  }
  func.func @transform_7(%arg0: i32) -> (i32, i32) {
    %c0_i32 = arith.constant 0 : i32
    %c0_i32_0 = arith.constant 0 : i32
    %c0_i32_1 = arith.constant 0 : i32
    return %c0_i32, %c0_i32_0 : i32, i32
  }
  func.func @transform_8(%arg0: i32) -> (i32, i32) {
    %c0_i32 = arith.constant 0 : i32
    %c0_i32_0 = arith.constant 0 : i32
    %c0_i32_1 = arith.constant 0 : i32
    return %c0_i32, %c0_i32_0 : i32, i32
  }
  func.func @transform_9(%arg0: i32) -> (i32, i32) {
    %c0_i32 = arith.constant 0 : i32
    %c0_i32_0 = arith.constant 0 : i32
    %c0_i32_1 = arith.constant 0 : i32
    return %c0_i32, %c0_i32_0 : i32, i32
  }
  func.func @transform_10(%arg0: i32) -> (i32, i32) {
    %c0_i32 = arith.constant 0 : i32
    %c0_i32_0 = arith.constant 0 : i32
    return %arg0, %c0_i32 : i32, i32
  }
  func.func @transform_11(%arg0: i32) -> (i32, i32) {
    %c0_i32 = arith.constant 0 : i32
    %c0_i32_0 = arith.constant 0 : i32
    return %arg0, %c0_i32 : i32, i32
  }
}

</mosaic_0001>

<llo_original>
// kernel: vae_forward.1
$region0: #{vae_forward.1}
  #allocation0 [shape = 'u32[]', space=smem, size = 0x4, offset = 0x4, fixed_abs, tag = 'smem constant byte address 0x4 - core index']
  #allocation1 [shape = 'u32[144,128]{1,0:T(1,128)}', space=vmem, size = 0x12000, scoped, tag = 'internal scratch']
  %s0 = inlined_call_operand.vmem [shape: f32[256,784], index: 0, kind: input, shape index: {}]
  %s1 = inlined_call_operand.vmem [shape: bf16[784,512], index: 1, kind: input, shape index: {}]
  %s2 = inlined_call_operand.vmem [shape: f32[1,512], index: 2, kind: input, shape index: {}]
  %s3 = inlined_call_operand.vmem [shape: bf16[512,256], index: 3, kind: input, shape index: {}]
  %s4 = inlined_call_operand.vmem [shape: f32[1,256], index: 4, kind: input, shape index: {}]
  %s5 = inlined_call_operand.vmem [shape: f32[256,16], index: 5, kind: input, shape index: {}]
  %s6 = inlined_call_operand.vmem [shape: bf16[16,512], index: 6, kind: input, shape index: {}]
  %s7 = inlined_call_operand.vmem [shape: f32[1,512], index: 7, kind: input, shape index: {}]
  %s8 = inlined_call_operand.vmem [shape: bf16[512,784], index: 8, kind: input, shape index: {}]
  %s9 = inlined_call_operand.vmem [shape: f32[1,784], index: 9, kind: input, shape index: {}]
  %s10 = inlined_call_operand.vmem [shape: f32[256,784], index: 10, kind: output, shape index: {0}]
  %s11 = inlined_call_operand.vmem [shape: f32[256,1], index: 11, kind: output, shape index: {1}]
  %12 = xla_tuple %s10, %s11
  %s13 = sld [smem:[#allocation0]]
  $region81: #{vae_forward.1} parent=0
    _
  %s15 = ssub.s32 1, %s13
  %s16 = scalar_select 0, %s15, %s13
  loop: start=0, step=1, limit=4
  $region2: #{vae_forward.1} parent=0 // loop_pre_header
    _
  $region3: #{vae_forward.1} parent=0 // loop_header
    %s18 = sphi 0, %s22
    %p19 = scmp.ge.s32.totalorder %s18, 4
    %s28 = sphi 0, %s30
    %s31 = sphi 0, %s28
    %s32 = sphi 0, %s31
    %s48 = sphi 0, %s32
    %s52 = sphi 0, %s52
    %s54 = sphi 0, %s52
    %s55 = sphi 0, %s54
    %s69 = sphi 0, %s55
    %s73 = sphi 0, %s73
    %s75 = sphi 0, %s73
    %s76 = sphi 0, %s75
    %s90 = sphi 0, %s76
    %s94 = sphi 0, %s94
    %s96 = sphi 0, %s94
    %s97 = sphi 0, %s96
    %s111 = sphi 0, %s97
    %s115 = sphi 0, %s115
    %s117 = sphi 0, %s115
    %s118 = sphi 0, %s117
    %s132 = sphi 0, %s118
    %s138 = sphi 0, %s140
    %s141 = sphi 0, %s138
    %s142 = sphi 0, %s141
    %s158 = sphi 0, %s142
    %s162 = sphi 0, %s162
    %s164 = sphi 0, %s162
    %s165 = sphi 0, %s164
    %s179 = sphi 0, %s165
    %s183 = sphi 0, %s183
    %s185 = sphi 0, %s183
    %s186 = sphi 0, %s185
    %s200 = sphi 0, %s186
    %s204 = sphi 0, %s204
    %s206 = sphi 0, %s204
    %s207 = sphi 0, %s206
    %s221 = sphi 0, %s207
    %s225 = sphi 0, %s225
    %s227 = sphi 0, %s225
    %s228 = sphi 0, %s227
    %s242 = sphi 0, %s228
    %s248 = sphi 0, %s250
    %s251 = sphi 0, %s248
    %s252 = sphi 0, %s251
    %s268 = sphi 0, %s252
    %s274 = sphi 0, %s276
    %s277 = sphi 0, %s274
    %s278 = sphi 0, %s277
    %s294 = sphi 0, %s278
  $region4: #{vae_forward.1} parent=0 // loop_header_branch
    %21 = sbr.rel (%p19) target = $region8
  $region5: #{vae_forward.1} parent=0 // loop_body
    %s23 = ssub.s32 %s18, 1
    %s24 = ssub.s32 %s18, 2
    %s25 = sadd.s32 %s18, 1
    %s26 = ssub.s32 %s18, %s25
    %p27 = scmp.eq.s32.totalorder %s26, 0
    %s29 = sadd.s32 %s28, 1
    %s30 = scalar_select %p27, %s28, %s29
    %p33 = pneg %p27
    %p34 = scmp.eq.s32.totalorder %s18, 1
    %p35 = por %p33, %p34
    %p36 = scmp.ne.s32.totalorder %s28, %s31
    %p37 = scmp.eq.s32.totalorder %s18, 0
    %p38 = por %p36, %p37
    %p39 = scmp.ne.s32.totalorder %s28, %s31
    %p40 = scmp.eq.s32.totalorder %s23, 1
    %p41 = por %p39, %p40
    %p42 = scmp.ne.s32.totalorder %s31, %s32
    %p43 = scmp.eq.s32.totalorder %s23, 0
    %p44 = por %p42, %p43
    %p45 = scmp.ne.s32.totalorder %s31, %s32
    %p46 = scmp.eq.s32.totalorder %s24, 1
    %p47 = por %p45, %p46
    %p49 = scmp.ne.s32.totalorder %s32, %s48
    %p50 = scmp.eq.s32.totalorder %s24, 0
    %p51 = por %p49, %p50
    %s53 = sadd.s32 %s52, 1
    %p56 = scmp.eq.s32.totalorder %s18, 1
    %p57 = scmp.ne.s32.totalorder %s52, %s54
    %p58 = scmp.eq.s32.totalorder %s18, 0
    %p59 = por %p57, %p58
    %p60 = scmp.ne.s32.totalorder %s52, %s54
    %p61 = scmp.eq.s32.totalorder %s23, 1
    %p62 = por %p60, %p61
    %p63 = scmp.ne.s32.totalorder %s54, %s55
    %p64 = scmp.eq.s32.totalorder %s23, 0
    %p65 = por %p63, %p64
    %p66 = scmp.ne.s32.totalorder %s54, %s55
    %p67 = scmp.eq.s32.totalorder %s24, 1
    %p68 = por %p66, %p67
    %p70 = scmp.ne.s32.totalorder %s55, %s69
    %p71 = scmp.eq.s32.totalorder %s24, 0
    %p72 = por %p70, %p71
    %s74 = sadd.s32 %s73, 1
    %p77 = scmp.eq.s32.totalorder %s18, 1
    %p78 = scmp.ne.s32.totalorder %s73, %s75
    %p79 = scmp.eq.s32.totalorder %s18, 0
    %p80 = por %p78, %p79
    %p81 = scmp.ne.s32.totalorder %s73, %s75
    %p82 = scmp.eq.s32.totalorder %s23, 1
    %p83 = por %p81, %p82
    %p84 = scmp.ne.s32.totalorder %s75, %s76
    %p85 = scmp.eq.s32.totalorder %s23, 0
    %p86 = por %p84, %p85
    %p87 = scmp.ne.s32.totalorder %s75, %s76
    %p88 = scmp.eq.s32.totalorder %s24, 1
    %p89 = por %p87, %p88
    %p91 = scmp.ne.s32.totalorder %s76, %s90
    %p92 = scmp.eq.s32.totalorder %s24, 0
    %p93 = por %p91, %p92
    %s95 = sadd.s32 %s94, 1
    %p98 = scmp.eq.s32.totalorder %s18, 1
    %p99 = scmp.ne.s32.totalorder %s94, %s96
    %p100 = scmp.eq.s32.totalorder %s18, 0
    %p101 = por %p99, %p100
    %p102 = scmp.ne.s32.totalorder %s94, %s96
    %p103 = scmp.eq.s32.totalorder %s23, 1
    %p104 = por %p102, %p103
    %p105 = scmp.ne.s32.totalorder %s96, %s97
    %p106 = scmp.eq.s32.totalorder %s23, 0
    %p107 = por %p105, %p106
    %p108 = scmp.ne.s32.totalorder %s96, %s97
    %p109 = scmp.eq.s32.totalorder %s24, 1
    %p110 = por %p108, %p109
    %p112 = scmp.ne.s32.totalorder %s97, %s111
    %p113 = scmp.eq.s32.totalorder %s24, 0
    %p114 = por %p112, %p113
    %s116 = sadd.s32 %s115, 1
    %p119 = scmp.eq.s32.totalorder %s18, 1
    %p120 = scmp.ne.s32.totalorder %s115, %s117
    %p121 = scmp.eq.s32.totalorder %s18, 0
    %p122 = por %p120, %p121
    %p123 = scmp.ne.s32.totalorder %s115, %s117
    %p124 = scmp.eq.s32.totalorder %s23, 1
    %p125 = por %p123, %p124
    %p126 = scmp.ne.s32.totalorder %s117, %s118
    %p127 = scmp.eq.s32.totalorder %s23, 0
    %p128 = por %p126, %p127
    %p129 = scmp.ne.s32.totalorder %s117, %s118
    %p130 = scmp.eq.s32.totalorder %s24, 1
    %p131 = por %p129, %p130
    %p133 = scmp.ne.s32.totalorder %s118, %s132
    %p134 = scmp.eq.s32.totalorder %s24, 0
    %p135 = por %p133, %p134
    %s136 = ssub.s32 %s18, %s25
    %p137 = scmp.eq.s32.totalorder %s136, 0
    %s139 = sadd.s32 %s138, 1
    %s140 = scalar_select %p137, %s138, %s139
    %p143 = pneg %p137
    %p144 = scmp.eq.s32.totalorder %s18, 1
    %p145 = por %p143, %p144
    %p146 = scmp.ne.s32.totalorder %s138, %s141
    %p147 = scmp.eq.s32.totalorder %s18, 0
    %p148 = por %p146, %p147
    %p149 = scmp.ne.s32.totalorder %s138, %s141
    %p150 = scmp.eq.s32.totalorder %s23, 1
    %p151 = por %p149, %p150
    %p152 = scmp.ne.s32.totalorder %s141, %s142
    %p153 = scmp.eq.s32.totalorder %s23, 0
    %p154 = por %p152, %p153
    %p155 = scmp.ne.s32.totalorder %s141, %s142
    %p156 = scmp.eq.s32.totalorder %s24, 1
    %p157 = por %p155, %p156
    %p159 = scmp.ne.s32.totalorder %s142, %s158
    %p160 = scmp.eq.s32.totalorder %s24, 0
    %p161 = por %p159, %p160
    %s163 = sadd.s32 %s162, 1
    %p166 = scmp.eq.s32.totalorder %s18, 1
    %p167 = scmp.ne.s32.totalorder %s162, %s164
    %p168 = scmp.eq.s32.totalorder %s18, 0
    %p169 = por %p167, %p168
    %p170 = scmp.ne.s32.totalorder %s162, %s164
    %p171 = scmp.eq.s32.totalorder %s23, 1
    %p172 = por %p170, %p171
    %p173 = scmp.ne.s32.totalorder %s164, %s165
    %p174 = scmp.eq.s32.totalorder %s23, 0
    %p175 = por %p173, %p174
    %p176 = scmp.ne.s32.totalorder %s164, %s165
    %p177 = scmp.eq.s32.totalorder %s24, 1
    %p178 = por %p176, %p177
    %p180 = scmp.ne.s32.totalorder %s165, %s179
    %p181 = scmp.eq.s32.totalorder %s24, 0
    %p182 = por %p180, %p181
    %s184 = sadd.s32 %s183, 1
    %p187 = scmp.eq.s32.totalorder %s18, 1
    %p188 = scmp.ne.s32.totalorder %s183, %s185
    %p189 = scmp.eq.s32.totalorder %s18, 0
    %p190 = por %p188, %p189
    %p191 = scmp.ne.s32.totalorder %s183, %s185
    %p192 = scmp.eq.s32.totalorder %s23, 1
    %p193 = por %p191, %p192
    %p194 = scmp.ne.s32.totalorder %s185, %s186
    %p195 = scmp.eq.s32.totalorder %s23, 0
    %p196 = por %p194, %p195
    %p197 = scmp.ne.s32.totalorder %s185, %s186
    %p198 = scmp.eq.s32.totalorder %s24, 1
    %p199 = por %p197, %p198
    %p201 = scmp.ne.s32.totalorder %s186, %s200
    %p202 = scmp.eq.s32.totalorder %s24, 0
    %p203 = por %p201, %p202
    %s205 = sadd.s32 %s204, 1
    %p208 = scmp.eq.s32.totalorder %s18, 1
    %p209 = scmp.ne.s32.totalorder %s204, %s206
    %p210 = scmp.eq.s32.totalorder %s18, 0
    %p211 = por %p209, %p210
    %p212 = scmp.ne.s32.totalorder %s204, %s206
    %p213 = scmp.eq.s32.totalorder %s23, 1
    %p214 = por %p212, %p213
    %p215 = scmp.ne.s32.totalorder %s206, %s207
    %p216 = scmp.eq.s32.totalorder %s23, 0
    %p217 = por %p215, %p216
    %p218 = scmp.ne.s32.totalorder %s206, %s207
    %p219 = scmp.eq.s32.totalorder %s24, 1
    %p220 = por %p218, %p219
    %p222 = scmp.ne.s32.totalorder %s207, %s221
    %p223 = scmp.eq.s32.totalorder %s24, 0
    %p224 = por %p222, %p223
    %s226 = sadd.s32 %s225, 1
    %p229 = scmp.eq.s32.totalorder %s18, 1
    %p230 = scmp.ne.s32.totalorder %s225, %s227
    %p231 = scmp.eq.s32.totalorder %s18, 0
    %p232 = por %p230, %p231
    %p233 = scmp.ne.s32.totalorder %s225, %s227
    %p234 = scmp.eq.s32.totalorder %s23, 1
    %p235 = por %p233, %p234
    %p236 = scmp.ne.s32.totalorder %s227, %s228
    %p237 = scmp.eq.s32.totalorder %s23, 0
    %p238 = por %p236, %p237
    %p239 = scmp.ne.s32.totalorder %s227, %s228
    %p240 = scmp.eq.s32.totalorder %s24, 1
    %p241 = por %p239, %p240
    %p243 = scmp.ne.s32.totalorder %s228, %s242
    %p244 = scmp.eq.s32.totalorder %s24, 0
    %p245 = por %p243, %p244
    %s246 = ssub.s32 %s18, %s25
    %p247 = scmp.eq.s32.totalorder %s246, 0
    %s249 = sadd.s32 %s248, 1
    %s250 = scalar_select %p247, %s248, %s249
    %p253 = pneg %p247
    %p254 = scmp.eq.s32.totalorder %s18, 1
    %p255 = por %p253, %p254
    %p256 = scmp.ne.s32.totalorder %s248, %s251
    %p257 = scmp.eq.s32.totalorder %s18, 0
    %p258 = por %p256, %p257
    %p259 = scmp.ne.s32.totalorder %s248, %s251
    %p260 = scmp.eq.s32.totalorder %s23, 1
    %p261 = por %p259, %p260
    %p262 = scmp.ne.s32.totalorder %s251, %s252
    %p263 = scmp.eq.s32.totalorder %s23, 0
    %p264 = por %p262, %p263
    %p265 = scmp.ne.s32.totalorder %s251, %s252
    %p266 = scmp.eq.s32.totalorder %s24, 1
    %p267 = por %p265, %p266
    %p269 = scmp.ne.s32.totalorder %s252, %s268
    %p270 = scmp.eq.s32.totalorder %s24, 0
    %p271 = por %p269, %p270
    %s272 = ssub.s32 %s18, %s25
    %p273 = scmp.eq.s32.totalorder %s272, 0
    %s275 = sadd.s32 %s274, 1
    %s276 = scalar_select %p273, %s274, %s275
    %p279 = pneg %p273
    %p280 = scmp.eq.s32.totalorder %s18, 1
    %p281 = por %p279, %p280
    %p282 = scmp.ne.s32.totalorder %s274, %s277
    %p283 = scmp.eq.s32.totalorder %s18, 0
    %p284 = por %p282, %p283
    %p285 = scmp.ne.s32.totalorder %s274, %s277
    %p286 = scmp.eq.s32.totalorder %s23, 1
    %p287 = por %p285, %p286
    %p288 = scmp.ne.s32.totalorder %s277, %s278
    %p289 = scmp.eq.s32.totalorder %s23, 0
    %p290 = por %p288, %p289
    %p291 = scmp.ne.s32.totalorder %s277, %s278
    %p292 = scmp.eq.s32.totalorder %s24, 1
    %p293 = por %p291, %p292
    %p295 = scmp.ne.s32.totalorder %s278, %s294
    %p296 = scmp.eq.s32.totalorder %s24, 0
    %p297 = por %p295, %p296
    %p298 = scmp.le.s32.totalorder 1, %s18
    %p299 = scmp.lt.s32.totalorder %s18, 3
    %p300 = pnand %p298, %p299
    %p301 = pneg %p300
    // Predicated region
    $region9: #{vae_forward.1} parent=5 // pred_check
      _
    $region10: #{vae_forward.1} parent=5 // pred_check_branch
      %303 = sbr.rel (%p300) target = $region12
    $region11: #{vae_forward.1} parent=5 // pred_region
      %s304 = ssub.s32 %s18, 1
      // Predicated region
      $region13: #{vae_forward.1} parent=11 // pred_check
        %p305 = pneg %p65
      $region14: #{vae_forward.1} parent=11 // pred_check_branch
        %307 = sbr.rel (%p305) target = $region16
      $region15: #{vae_forward.1} parent=11 // pred_region
        _
      $region16: #{vae_forward.1} parent=11 // pred_fallthru
        _
      // Predicated region
      $region17: #{vae_forward.1} parent=11 // pred_check
        %p308 = pneg %p86
      $region18: #{vae_forward.1} parent=11 // pred_check_branch
        %310 = sbr.rel (%p308) target = $region20
      $region19: #{vae_forward.1} parent=11 // pred_region
        _
      $region20: #{vae_forward.1} parent=11 // pred_fallthru
        _
      // Predicated region
      $region21: #{vae_forward.1} parent=11 // pred_check
        %p311 = pneg %p107
      $region22: #{vae_forward.1} parent=11 // pred_check_branch
        %313 = sbr.rel (%p311) target = $region24
      $region23: #{vae_forward.1} parent=11 // pred_region
        _
      $region24: #{vae_forward.1} parent=11 // pred_fallthru
        _
      // Predicated region
      $region25: #{vae_forward.1} parent=11 // pred_check
        %p314 = pneg %p128
      $region26: #{vae_forward.1} parent=11 // pred_check_branch
        %316 = sbr.rel (%p314) target = $region28
      $region27: #{vae_forward.1} parent=11 // pred_region
        _
      $region28: #{vae_forward.1} parent=11 // pred_fallthru
        _
      // Predicated region
      $region29: #{vae_forward.1} parent=11 // pred_check
        %p317 = pneg %p175
      $region30: #{vae_forward.1} parent=11 // pred_check_branch
        %319 = sbr.rel (%p317) target = $region32
      $region31: #{vae_forward.1} parent=11 // pred_region
        _
      $region32: #{vae_forward.1} parent=11 // pred_fallthru
        _
      // Predicated region
      $region33: #{vae_forward.1} parent=11 // pred_check
        %p320 = pneg %p196
      $region34: #{vae_forward.1} parent=11 // pred_check_branch
        %322 = sbr.rel (%p320) target = $region36
      $region35: #{vae_forward.1} parent=11 // pred_region
        _
      $region36: #{vae_forward.1} parent=11 // pred_fallthru
        _
      // Predicated region
      $region37: #{vae_forward.1} parent=11 // pred_check
        %p323 = pneg %p217
      $region38: #{vae_forward.1} parent=11 // pred_check_branch
        %325 = sbr.rel (%p323) target = $region40
      $region39: #{vae_forward.1} parent=11 // pred_region
        _
      $region40: #{vae_forward.1} parent=11 // pred_fallthru
        _
      // Predicated region
      $region41: #{vae_forward.1} parent=11 // pred_check
        %p326 = pneg %p238
      $region42: #{vae_forward.1} parent=11 // pred_check_branch
        %328 = sbr.rel (%p326) target = $region44
      $region43: #{vae_forward.1} parent=11 // pred_region
        _
      $region44: #{vae_forward.1} parent=11 // pred_fallthru
        _
    $region12: #{vae_forward.1} parent=5 // pred_fallthru
      _
    %p329 = scmp.lt.s32.totalorder %s18, 2
    // Predicated region
    $region45: #{vae_forward.1} parent=5 // pred_check
      %p330 = pneg %p329
    $region46: #{vae_forward.1} parent=5 // pred_check_branch
      %332 = sbr.rel (%p330) target = $region48
    $region47: #{vae_forward.1} parent=5 // pred_region
      // Predicated region
      $region49: #{vae_forward.1} parent=47 // pred_check
        %p333 = pneg %p38
      $region50: #{vae_forward.1} parent=47 // pred_check_branch
        %335 = sbr.rel (%p333) target = $region52
      $region51: #{vae_forward.1} parent=47 // pred_region
        %s336 = smul.u32 16, %s18
        %p337 = scmp.lt.s32.totalorder %s336, 31
        %s338 = scalar_select %p337, %s336, 31
        %s339 = smul.addr %s338, 7
        %s340 = smul.addr %s339, 8
        %s341 = scalar_lea.vmem %s0, %s340
        %s342 = smul.u32 16, %s18
      $region52: #{vae_forward.1} parent=47 // pred_fallthru
        _
      // Predicated region
      $region53: #{vae_forward.1} parent=47 // pred_check
        %p343 = pneg %p148
      $region54: #{vae_forward.1} parent=47 // pred_check_branch
        %345 = sbr.rel (%p343) target = $region56
      $region55: #{vae_forward.1} parent=47 // pred_region
        %s346 = smul.u32 16, %s18
        %p347 = scmp.lt.s32.totalorder %s346, 31
        %s348 = scalar_select %p347, %s346, 31
        %s349 = smul.addr %s348, 8
        %s350 = scalar_lea.vmem %s5, %s349
        %s351 = smul.u32 16, %s18
      $region56: #{vae_forward.1} parent=47 // pred_fallthru
        _
    $region48: #{vae_forward.1} parent=5 // pred_fallthru
      _
    %p352 = scmp.le.s32.totalorder 1, %s18
    %p353 = scmp.lt.s32.totalorder %s18, 3
    %p354 = pnand %p352, %p353
    %p355 = pneg %p354
    // Predicated region
    $region57: #{vae_forward.1} parent=5 // pred_check
      _
    $region58: #{vae_forward.1} parent=5 // pred_check_branch
      %357 = sbr.rel (%p354) target = $region60
    $region59: #{vae_forward.1} parent=5 // pred_region
      %s358 = ssub.s32 %s18, 1
      %s359 = smul.u32 16, %s23
      %p360 = scmp.lt.s32.totalorder %s359, 31
      %s361 = scalar_select %p360, %s359, 31
      %s362 = smul.addr %s361, 7
      %s363 = smul.addr %s362, 8
      %s364 = scalar_lea.vmem %s0, %s363
      %p365 = pneg %p44
      %p366 = pneg %p41
      %p367 = pneg %p65
      %p368 = pneg %p62
      %p369 = pneg %p86
      %p370 = pneg %p83
      %p371 = pneg %p107
      %p372 = pneg %p104
      %p373 = pneg %p128
      %p374 = pneg %p125
      %s375 = smul.u32 16, %s23
      %p376 = scmp.lt.s32.totalorder %s375, 31
      %s377 = scalar_select %p376, %s375, 31
      %s378 = smul.addr %s377, 8
      %s379 = scalar_lea.vmem %s5, %s378
      %p380 = pneg %p154
      %p381 = pneg %p151
      %p382 = pneg %p175
      %p383 = pneg %p172
      %p384 = pneg %p196
      %p385 = pneg %p193
      %p386 = pneg %p217
      %p387 = pneg %p214
      %p388 = pneg %p238
      %p389 = pneg %p235
      %p390 = pneg %p264
      %p391 = pneg %p261
      %s392 = smul.u32 16, %s23
      %p393 = scmp.lt.s32.totalorder %s392, 31
      %s394 = scalar_select %p393, %s392, 31
      %s395 = smul.addr %s394, 7
      %s396 = smul.addr %s395, 8
      %s397 = scalar_lea.vmem %s10, %s396
      %p398 = pneg %p290
      %p399 = pneg %p287
      %s400 = smul.u32 16, %s23
      %p401 = scmp.lt.s32.totalorder %s400, 31
      %s402 = scalar_select %p401, %s400, 31
      %s403 = smul.addr %s402, 8
      %s404 = scalar_lea.vmem %s11, %s403
      %s405 = smul.u32 16, %s23
      %p406 = scmp.lt.s32.totalorder %s405, 31
      %s407 = scalar_select %p406, %s405, 31
      %s408 = smul.addr %s407, 7
      %s409 = smul.addr %s408, 8
      %s410 = scalar_lea.vmem %s0, %s409
      %s411 = smul.u32 16, %s23
      %s412 = smul.u32 16, %s23
      %p413 = scmp.lt.s32.totalorder %s412, 31
      %s414 = scalar_select %p413, %s412, 31
      %s415 = smul.addr %s414, 8
      %s416 = scalar_lea.vmem %s5, %s415
      %s417 = smul.u32 16, %s23
      %s418 = smul.u32 16, %s23
      %p419 = scmp.lt.s32.totalorder %s418, 31
      %s420 = scalar_select %p419, %s418, 31
      %s421 = smul.addr %s420, 7
      %s422 = smul.addr %s421, 8
      %s423 = scalar_lea.vmem %s10, %s422
      %s424 = smul.u32 16, %s23
      %s425 = smul.u32 16, %s23
      %p426 = scmp.lt.s32.totalorder %s425, 31
      %s427 = scalar_select %p426, %s425, 31
      %s428 = smul.addr %s427, 8
      %s429 = scalar_lea.vmem %s11, %s428
      %s430 = smul.u32 16, %s23
      %v432 = vld [vmem:[%s410] sm:$0xff]
      %v433 = vld [vmem:[%s410 + $0x8] sm:$0xff]
      %v434 = vld [vmem:[%s410 + $0x10] sm:$0xff]
      %v435 = vld [vmem:[%s410 + $0x18] sm:$0xff]
      %v436 = vld [vmem:[%s410 + $0x20] sm:$0xff]
      %v437 = vld [vmem:[%s410 + $0x28] sm:$0xff]
      %v438 = vld [vmem:[%s410 + $0x30] sm:$0xff]
      %v439 = vld [vmem:[%s410 + $0x38] sm:$0xff]
      %v440 = vld [vmem:[%s410 + $0x40] sm:$0xff]
      %v441 = vld [vmem:[%s410 + $0x48] sm:$0xff]
      %v442 = vld [vmem:[%s410 + $0x50] sm:$0xff]
      %v443 = vld [vmem:[%s410 + $0x58] sm:$0xff]
      %v444 = vld [vmem:[%s410 + $0x60] sm:$0xff]
      %v445 = vld [vmem:[%s410 + $0x68] sm:$0xff]
      %v446 = vld [vmem:[%s410 + $0x70] sm:$0xff]
      %v447 = vld [vmem:[%s410 + $0x78] sm:$0xff]
      %v448 = vld [vmem:[%s410 + $0x80] sm:$0xff]
      %v449 = vld [vmem:[%s410 + $0x88] sm:$0xff]
      %v450 = vld [vmem:[%s410 + $0x90] sm:$0xff]
      %v451 = vld [vmem:[%s410 + $0x98] sm:$0xff]
      %v452 = vld [vmem:[%s410 + $0xa0] sm:$0xff]
      %v453 = vld [vmem:[%s410 + $0xa8] sm:$0xff]
      %v454 = vld [vmem:[%s410 + $0xb0] sm:$0xff]
      %v455 = vld [vmem:[%s410 + $0xb8] sm:$0xff]
      %v456 = vld [vmem:[%s410 + $0xc0] sm:$0xff]
      %v457 = vld [vmem:[%s410 + $0xc8] sm:$0xff]
      %v458 = vld [vmem:[%s410 + $0xd0] sm:$0xff]
      %v459 = vld [vmem:[%s410 + $0xd8] sm:$0xff]
      %v460 = vld [vmem:[%s410 + $0xe0] sm:$0xff]
      %v461 = vld [vmem:[%s410 + $0xe8] sm:$0xff]
      %v462 = vld [vmem:[%s410 + $0xf0] sm:$0xff]
      %v463 = vld [vmem:[%s410 + $0xf8] sm:$0xff]
      %v464 = vld [vmem:[%s410 + $0x100] sm:$0xff]
      %v465 = vld [vmem:[%s410 + $0x108] sm:$0xff]
      %v466 = vld [vmem:[%s410 + $0x110] sm:$0xff]
      %v467 = vld [vmem:[%s410 + $0x118] sm:$0xff]
      %v468 = vld [vmem:[%s410 + $0x120] sm:$0xff]
      %v469 = vld [vmem:[%s410 + $0x128] sm:$0xff]
      %v470 = vld [vmem:[%s410 + $0x130] sm:$0xff]
      %v471 = vld [vmem:[%s410 + $0x138] sm:$0xff]
      %v472 = vld [vmem:[%s410 + $0x140] sm:$0xff]
      %v473 = vld [vmem:[%s410 + $0x148] sm:$0xff]
      %v474 = vld [vmem:[%s410 + $0x150] sm:$0xff]
      %v475 = vld [vmem:[%s410 + $0x158] sm:$0xff]
      %v476 = vld [vmem:[%s410 + $0x160] sm:$0xff]
      %v477 = vld [vmem:[%s410 + $0x168] sm:$0xff]
      %v478 = vld [vmem:[%s410 + $0x170] sm:$0xff]
      %v479 = vld [vmem:[%s410 + $0x178] sm:$0xff]
      %v480 = vld [vmem:[%s410 + $0x180] sm:$0xff]
      %v481 = vld [vmem:[%s410 + $0x188] sm:$0xff]
      %v482 = vld [vmem:[%s410 + $0x190] sm:$0xff]
      %v483 = vld [vmem:[%s410 + $0x198] sm:$0xff]
      %v484 = vld [vmem:[%s410 + $0x1a0] sm:$0xff]
      %v485 = vld [vmem:[%s410 + $0x1a8] sm:$0xff]
      %v486 = vld [vmem:[%s410 + $0x1b0] sm:$0xff]
      %v487 = vld [vmem:[%s410 + $0x1b8] sm:$0xff]
      %v488 = vld [vmem:[%s410 + $0x1c0] sm:$0xff]
      %v489 = vld [vmem:[%s410 + $0x1c8] sm:$0xff]
      %v490 = vld [vmem:[%s410 + $0x1d0] sm:$0xff]
      %v491 = vld [vmem:[%s410 + $0x1d8] sm:$0xff]
      %v492 = vld [vmem:[%s410 + $0x1e0] sm:$0xff]
      %v493 = vld [vmem:[%s410 + $0x1e8] sm:$0xff]
      %v494 = vld [vmem:[%s410 + $0x1f0] sm:$0xff]
      %v495 = vld [vmem:[%s410 + $0x1f8] sm:$0xff]
      %v496 = vld [vmem:[%s410 + $0x200] sm:$0xff]
      %v497 = vld [vmem:[%s410 + $0x208] sm:$0xff]
      %v498 = vld [vmem:[%s410 + $0x210] sm:$0xff]
      %v499 = vld [vmem:[%s410 + $0x218] sm:$0xff]
      %v500 = vld [vmem:[%s410 + $0x220] sm:$0xff]
      %v501 = vld [vmem:[%s410 + $0x228] sm:$0xff]
      %v502 = vld [vmem:[%s410 + $0x230] sm:$0xff]
      %v503 = vld [vmem:[%s410 + $0x238] sm:$0xff]
      %v504 = vld [vmem:[%s410 + $0x240] sm:$0xff]
      %v505 = vld [vmem:[%s410 + $0x248] sm:$0xff]
      %v506 = vld [vmem:[%s410 + $0x250] sm:$0xff]
      %v507 = vld [vmem:[%s410 + $0x258] sm:$0xff]
      %v508 = vld [vmem:[%s410 + $0x260] sm:$0xff]
      %v509 = vld [vmem:[%s410 + $0x268] sm:$0xff]
      %v510 = vld [vmem:[%s410 + $0x270] sm:$0xff]
      %v511 = vld [vmem:[%s410 + $0x278] sm:$0xff]
      %v512 = vld [vmem:[%s410 + $0x280] sm:$0xff]
      %v513 = vld [vmem:[%s410 + $0x288] sm:$0xff]
      %v514 = vld [vmem:[%s410 + $0x290] sm:$0xff]
      %v515 = vld [vmem:[%s410 + $0x298] sm:$0xff]
      %v516 = vld [vmem:[%s410 + $0x2a0] sm:$0xff]
      %v517 = vld [vmem:[%s410 + $0x2a8] sm:$0xff]
      %v518 = vld [vmem:[%s410 + $0x2b0] sm:$0xff]
      %v519 = vld [vmem:[%s410 + $0x2b8] sm:$0xff]
      %v520 = vld [vmem:[%s410 + $0x2c0] sm:$0xff]
      %v521 = vld [vmem:[%s410 + $0x2c8] sm:$0xff]
      %v522 = vld [vmem:[%s410 + $0x2d0] sm:$0xff]
      %v523 = vld [vmem:[%s410 + $0x2d8] sm:$0xff]
      %v524 = vld [vmem:[%s410 + $0x2e0] sm:$0xff]
      %v525 = vld [vmem:[%s410 + $0x2e8] sm:$0xff]
      %v526 = vld [vmem:[%s410 + $0x2f0] sm:$0xff]
      %v527 = vld [vmem:[%s410 + $0x2f8] sm:$0xff]
      %v528 = vld [vmem:[%s410 + $0x300] sm:$0xff]
      %v529 = vld [vmem:[%s410 + $0x308] sm:$0xff]
      %v530 = vld [vmem:[%s410 + $0x310] sm:$0xff]
      %v531 = vld [vmem:[%s410 + $0x318] sm:$0xff]
      %v532 = vld [vmem:[%s410 + $0x320] sm:$0xff]
      %v533 = vld [vmem:[%s410 + $0x328] sm:$0xff]
      %v534 = vld [vmem:[%s410 + $0x330] sm:$0xff]
      %v535 = vld [vmem:[%s410 + $0x338] sm:$0xff]
      %v536 = vld [vmem:[%s410 + $0x340] sm:$0xff]
      %v537 = vld [vmem:[%s410 + $0x348] sm:$0xff]
      %v538 = vld [vmem:[%s410 + $0x350] sm:$0xff]
      %v539 = vld [vmem:[%s410 + $0x358] sm:$0xff]
      %v540 = vld [vmem:[%s410 + $0x360] sm:$0xff]
      %v541 = vld [vmem:[%s410 + $0x368] sm:$0xff]
      %v542 = vld [vmem:[%s410 + $0x370] sm:$0xff]
      %v543 = vld [vmem:[%s410 + $0x378] sm:$0xff]
      %v544 = vpack.c.bf16 %v439, %v432
      %v545 = vpack.c.bf16 %v440, %v433
      %v546 = vpack.c.bf16 %v441, %v434
      %v547 = vpack.c.bf16 %v442, %v435
      %v548 = vpack.c.bf16 %v443, %v436
      %v549 = vpack.c.bf16 %v444, %v437
      %v550 = vpack.c.bf16 %v445, %v438
      %v551 = vpack.c.bf16 %v453, %v446
      %v552 = vpack.c.bf16 %v454, %v447
      %v553 = vpack.c.bf16 %v455, %v448
      %v554 = vpack.c.bf16 %v456, %v449
      %v555 = vpack.c.bf16 %v457, %v450
      %v556 = vpack.c.bf16 %v458, %v451
      %v557 = vpack.c.bf16 %v459, %v452
      %v558 = vpack.c.bf16 %v467, %v460
      %v559 = vpack.c.bf16 %v468, %v461
      %v560 = vpack.c.bf16 %v469, %v462
      %v561 = vpack.c.bf16 %v470, %v463
      %v562 = vpack.c.bf16 %v471, %v464
      %v563 = vpack.c.bf16 %v472, %v465
      %v564 = vpack.c.bf16 %v473, %v466
      %v565 = vpack.c.bf16 %v481, %v474
      %v566 = vpack.c.bf16 %v482, %v475
      %v567 = vpack.c.bf16 %v483, %v476
      %v568 = vpack.c.bf16 %v484, %v477
      %v569 = vpack.c.bf16 %v485, %v478
      %v570 = vpack.c.bf16 %v486, %v479
      %v571 = vpack.c.bf16 %v487, %v480
      %v572 = vpack.c.bf16 %v495, %v488
      %v573 = vpack.c.bf16 %v496, %v489
      %v574 = vpack.c.bf16 %v497, %v490
      %v575 = vpack.c.bf16 %v498, %v491
      %v576 = vpack.c.bf16 %v499, %v492
      %v577 = vpack.c.bf16 %v500, %v493
      %v578 = vpack.c.bf16 %v501, %v494
      %v579 = vpack.c.bf16 %v509, %v502
      %v580 = vpack.c.bf16 %v510, %v503
      %v581 = vpack.c.bf16 %v511, %v504
      %v582 = vpack.c.bf16 %v512, %v505
      %v583 = vpack.c.bf16 %v513, %v506
      %v584 = vpack.c.bf16 %v514, %v507
      %v585 = vpack.c.bf16 %v515, %v508
      %v586 = vpack.c.bf16 %v523, %v516
      %v587 = vpack.c.bf16 %v524, %v517
      %v588 = vpack.c.bf16 %v525, %v518
      %v589 = vpack.c.bf16 %v526, %v519
      %v590 = vpack.c.bf16 %v527, %v520
      %v591 = vpack.c.bf16 %v528, %v521
      %v592 = vpack.c.bf16 %v529, %v522
      %v593 = vpack.c.bf16 %v537, %v530
      %v594 = vpack.c.bf16 %v538, %v531
      %v595 = vpack.c.bf16 %v539, %v532
      %v596 = vpack.c.bf16 %v540, %v533
      %v597 = vpack.c.bf16 %v541, %v534
      %v598 = vpack.c.bf16 %v542, %v535
      %v599 = vpack.c.bf16 %v543, %v536
      %v600 = vld [vmem:[%s1] sm:$0xff]
      %v601 = vld [vmem:[%s1 + $0x8] sm:$0xff]
      %v602 = vld [vmem:[%s1 + $0x10] sm:$0xff]
      %v603 = vld [vmem:[%s1 + $0x18] sm:$0xff]
      %v604 = vld [vmem:[%s1 + $0x20] sm:$0xff]
      %v605 = vld [vmem:[%s1 + $0x28] sm:$0xff]
      %v606 = vld [vmem:[%s1 + $0x30] sm:$0xff]
      %v607 = vld [vmem:[%s1 + $0x38] sm:$0xff]
      %v608 = vld [vmem:[%s1 + $0x40] sm:$0xff]
      %v609 = vld [vmem:[%s1 + $0x48] sm:$0xff]
      %v610 = vld [vmem:[%s1 + $0x50] sm:$0xff]
      %v611 = vld [vmem:[%s1 + $0x58] sm:$0xff]
      %v612 = vld [vmem:[%s1 + $0x60] sm:$0xff]
      %v613 = vld [vmem:[%s1 + $0x68] sm:$0xff]
      %v614 = vld [vmem:[%s1 + $0x70] sm:$0xff]
      %v615 = vld [vmem:[%s1 + $0x78] sm:$0xff]
      %v616 = vld [vmem:[%s1 + $0x80] sm:$0xff]
      %v617 = vld [vmem:[%s1 + $0x88] sm:$0xff]
      %v618 = vld [vmem:[%s1 + $0x90] sm:$0xff]
      %v619 = vld [vmem:[%s1 + $0x98] sm:$0xff]
      %v620 = vld [vmem:[%s1 + $0xa0] sm:$0xff]
      %v621 = vld [vmem:[%s1 + $0xa8] sm:$0xff]
      %v622 = vld [vmem:[%s1 + $0xb0] sm:$0xff]
      %v623 = vld [vmem:[%s1 + $0xb8] sm:$0xff]
      %v624 = vld [vmem:[%s1 + $0xc0] sm:$0xff]
      %v625 = vld [vmem:[%s1 + $0xc8] sm:$0xff]
      %v626 = vld [vmem:[%s1 + $0xd0] sm:$0xff]
      %v627 = vld [vmem:[%s1 + $0xd8] sm:$0xff]
      %v628 = vld [vmem:[%s1 + $0xe0] sm:$0xff]
      %v629 = vld [vmem:[%s1 + $0xe8] sm:$0xff]
      %v630 = vld [vmem:[%s1 + $0xf0] sm:$0xff]
      %v631 = vld [vmem:[%s1 + $0xf8] sm:$0xff]
      %v632 = vld [vmem:[%s1 + $0x100] sm:$0xff]
      %v633 = vld [vmem:[%s1 + $0x108] sm:$0xff]
      %v634 = vld [vmem:[%s1 + $0x110] sm:$0xff]
      %v635 = vld [vmem:[%s1 + $0x118] sm:$0xff]
      %v636 = vld [vmem:[%s1 + $0x120] sm:$0xff]
      %v637 = vld [vmem:[%s1 + $0x128] sm:$0xff]
      %v638 = vld [vmem:[%s1 + $0x130] sm:$0xff]
      %v639 = vld [vmem:[%s1 + $0x138] sm:$0xff]
      %v640 = vld [vmem:[%s1 + $0x140] sm:$0xff]
      %v641 = vld [vmem:[%s1 + $0x148] sm:$0xff]
      %v642 = vld [vmem:[%s1 + $0x150] sm:$0xff]
      %v643 = vld [vmem:[%s1 + $0x158] sm:$0xff]
      %v644 = vld [vmem:[%s1 + $0x160] sm:$0xff]
      %v645 = vld [vmem:[%s1 + $0x168] sm:$0xff]
      %v646 = vld [vmem:[%s1 + $0x170] sm:$0xff]
      %v647 = vld [vmem:[%s1 + $0x178] sm:$0xff]
      %v648 = vld [vmem:[%s1 + $0x180] sm:$0xff]
      %v649 = vld [vmem:[%s1 + $0x188] sm:$0xff]
      %v650 = vld [vmem:[%s1 + $0x190] sm:$0xff]
      %v651 = vld [vmem:[%s1 + $0x198] sm:$0xff]
      %v652 = vld [vmem:[%s1 + $0x1a0] sm:$0xff]
      %v653 = vld [vmem:[%s1 + $0x1a8] sm:$0xff]
      %v654 = vld [vmem:[%s1 + $0x1b0] sm:$0xff]
      %v655 = vld [vmem:[%s1 + $0x1b8] sm:$0xff]
      %v656 = vld [vmem:[%s1 + $0x1c0] sm:$0xff]
      %v657 = vld [vmem:[%s1 + $0x1c8] sm:$0xff]
      %v658 = vld [vmem:[%s1 + $0x1d0] sm:$0xff]
      %v659 = vld [vmem:[%s1 + $0x1d8] sm:$0xff]
      %v660 = vld [vmem:[%s1 + $0x1e0] sm:$0xff]
      %v661 = vld [vmem:[%s1 + $0x1e8] sm:$0xff]
      %v662 = vld [vmem:[%s1 + $0x1f0] sm:$0xff]
      %v663 = vld [vmem:[%s1 + $0x1f8] sm:$0xff]
      %v664 = vld [vmem:[%s1 + $0x200] sm:$0xff]
      %v665 = vld [vmem:[%s1 + $0x208] sm:$0xff]
      %v666 = vld [vmem:[%s1 + $0x210] sm:$0xff]
      %v667 = vld [vmem:[%s1 + $0x218] sm:$0xff]
      %v668 = vld [vmem:[%s1 + $0x220] sm:$0xff]
      %v669 = vld [vmem:[%s1 + $0x228] sm:$0xff]
      %v670 = vld [vmem:[%s1 + $0x230] sm:$0xff]
      %v671 = vld [vmem:[%s1 + $0x238] sm:$0xff]
      %v672 = vld [vmem:[%s1 + $0x240] sm:$0xff]
      %v673 = vld [vmem:[%s1 + $0x248] sm:$0xff]
      %v674 = vld [vmem:[%s1 + $0x250] sm:$0xff]
      %v675 = vld [vmem:[%s1 + $0x258] sm:$0xff]
      %v676 = vld [vmem:[%s1 + $0x260] sm:$0xff]
      %v677 = vld [vmem:[%s1 + $0x268] sm:$0xff]
      %v678 = vld [vmem:[%s1 + $0x270] sm:$0xff]
      %v679 = vld [vmem:[%s1 + $0x278] sm:$0xff]
      %v680 = vld [vmem:[%s1 + $0x280] sm:$0xff]
      %v681 = vld [vmem:[%s1 + $0x288] sm:$0xff]
      %v682 = vld [vmem:[%s1 + $0x290] sm:$0xff]
      %v683 = vld [vmem:[%s1 + $0x298] sm:$0xff]
      %v684 = vld [vmem:[%s1 + $0x2a0] sm:$0xff]
      %v685 = vld [vmem:[%s1 + $0x2a8] sm:$0xff]
      %v686 = vld [vmem:[%s1 + $0x2b0] sm:$0xff]
      %v687 = vld [vmem:[%s1 + $0x2b8] sm:$0xff]
      %v688 = vld [vmem:[%s1 + $0x2c0] sm:$0xff]
      %v689 = vld [vmem:[%s1 + $0x2c8] sm:$0xff]
      %v690 = vld [vmem:[%s1 + $0x2d0] sm:$0xff]
      %v691 = vld [vmem:[%s1 + $0x2d8] sm:$0xff]
      %v692 = vld [vmem:[%s1 + $0x2e0] sm:$0xff]
      %v693 = vld [vmem:[%s1 + $0x2e8] sm:$0xff]
      %v694 = vld [vmem:[%s1 + $0x2f0] sm:$0xff]
      %v695 = vld [vmem:[%s1 + $0x2f8] sm:$0xff]
      %v696 = vld [vmem:[%s1 + $0x300] sm:$0xff]
      %v697 = vld [vmem:[%s1 + $0x308] sm:$0xff]
      %v698 = vld [vmem:[%s1 + $0x310] sm:$0xff]
      %v699 = vld [vmem:[%s1 + $0x318] sm:$0xff]
      %v700 = vld [vmem:[%s1 + $0x320] sm:$0xff]
      %v701 = vld [vmem:[%s1 + $0x328] sm:$0xff]
      %v702 = vld [vmem:[%s1 + $0x330] sm:$0xff]
      %v703 = vld [vmem:[%s1 + $0x338] sm:$0xff]
      %v704 = vld [vmem:[%s1 + $0x340] sm:$0xff]
      %v705 = vld [vmem:[%s1 + $0x348] sm:$0xff]
      %v706 = vld [vmem:[%s1 + $0x350] sm:$0xff]
      %v707 = vld [vmem:[%s1 + $0x358] sm:$0xff]
      %v708 = vld [vmem:[%s1 + $0x360] sm:$0xff]
      %v709 = vld [vmem:[%s1 + $0x368] sm:$0xff]
      %v710 = vld [vmem:[%s1 + $0x370] sm:$0xff]
      %v711 = vld [vmem:[%s1 + $0x378] sm:$0xff]
      %v712 = vld [vmem:[%s1 + $0x380] sm:$0xff]
      %v713 = vld [vmem:[%s1 + $0x388] sm:$0xff]
      %v714 = vld [vmem:[%s1 + $0x390] sm:$0xff]
      %v715 = vld [vmem:[%s1 + $0x398] sm:$0xff]
      %v716 = vld [vmem:[%s1 + $0x3a0] sm:$0xff]
      %v717 = vld [vmem:[%s1 + $0x3a8] sm:$0xff]
      %v718 = vld [vmem:[%s1 + $0x3b0] sm:$0xff]
      %v719 = vld [vmem:[%s1 + $0x3b8] sm:$0xff]
      %v720 = vld [vmem:[%s1 + $0x3c0] sm:$0xff]
      %v721 = vld [vmem:[%s1 + $0x3c8] sm:$0xff]
      %v722 = vld [vmem:[%s1 + $0x3d0] sm:$0xff]
      %v723 = vld [vmem:[%s1 + $0x3d8] sm:$0xff]
      %v724 = vld [vmem:[%s1 + $0x3e0] sm:$0xff]
      %v725 = vld [vmem:[%s1 + $0x3e8] sm:$0xff]
      %v726 = vld [vmem:[%s1 + $0x3f0] sm:$0xff]
      %v727 = vld [vmem:[%s1 + $0x3f8] sm:$0xff]
      %v728 = vld [vmem:[%s1 + $0x400] sm:$0xff]
      %v729 = vld [vmem:[%s1 + $0x408] sm:$0xff]
      %v730 = vld [vmem:[%s1 + $0x410] sm:$0xff]
      %v731 = vld [vmem:[%s1 + $0x418] sm:$0xff]
      %v732 = vld [vmem:[%s1 + $0x420] sm:$0xff]
      %v733 = vld [vmem:[%s1 + $0x428] sm:$0xff]
      %v734 = vld [vmem:[%s1 + $0x430] sm:$0xff]
      %v735 = vld [vmem:[%s1 + $0x438] sm:$0xff]
      %v736 = vld [vmem:[%s1 + $0x440] sm:$0xff]
      %v737 = vld [vmem:[%s1 + $0x448] sm:$0xff]
      %v738 = vld [vmem:[%s1 + $0x450] sm:$0xff]
      %v739 = vld [vmem:[%s1 + $0x458] sm:$0xff]
      %v740 = vld [vmem:[%s1 + $0x460] sm:$0xff]
      %v741 = vld [vmem:[%s1 + $0x468] sm:$0xff]
      %v742 = vld [vmem:[%s1 + $0x470] sm:$0xff]
      %v743 = vld [vmem:[%s1 + $0x478] sm:$0xff]
      %v744 = vld [vmem:[%s1 + $0x480] sm:$0xff]
      %v745 = vld [vmem:[%s1 + $0x488] sm:$0xff]
      %v746 = vld [vmem:[%s1 + $0x490] sm:$0xff]
      %v747 = vld [vmem:[%s1 + $0x498] sm:$0xff]
      %v748 = vld [vmem:[%s1 + $0x4a0] sm:$0xff]
      %v749 = vld [vmem:[%s1 + $0x4a8] sm:$0xff]
      %v750 = vld [vmem:[%s1 + $0x4b0] sm:$0xff]
      %v751 = vld [vmem:[%s1 + $0x4b8] sm:$0xff]
      %v752 = vld [vmem:[%s1 + $0x4c0] sm:$0xff]
      %v753 = vld [vmem:[%s1 + $0x4c8] sm:$0xff]
      %v754 = vld [vmem:[%s1 + $0x4d0] sm:$0xff]
      %v755 = vld [vmem:[%s1 + $0x4d8] sm:$0xff]
      %v756 = vld [vmem:[%s1 + $0x4e0] sm:$0xff]
      %v757 = vld [vmem:[%s1 + $0x4e8] sm:$0xff]
      %v758 = vld [vmem:[%s1 + $0x4f0] sm:$0xff]
      %v759 = vld [vmem:[%s1 + $0x4f8] sm:$0xff]
      %v760 = vld [vmem:[%s1 + $0x500] sm:$0xff]
      %v761 = vld [vmem:[%s1 + $0x508] sm:$0xff]
      %v762 = vld [vmem:[%s1 + $0x510] sm:$0xff]
      %v763 = vld [vmem:[%s1 + $0x518] sm:$0xff]
      %v764 = vld [vmem:[%s1 + $0x520] sm:$0xff]
      %v765 = vld [vmem:[%s1 + $0x528] sm:$0xff]
      %v766 = vld [vmem:[%s1 + $0x530] sm:$0xff]
      %v767 = vld [vmem:[%s1 + $0x538] sm:$0xff]
      %v768 = vld [vmem:[%s1 + $0x540] sm:$0xff]
      %v769 = vld [vmem:[%s1 + $0x548] sm:$0xff]
      %v770 = vld [vmem:[%s1 + $0x550] sm:$0xff]
      %v771 = vld [vmem:[%s1 + $0x558] sm:$0xff]
      %v772 = vld [vmem:[%s1 + $0x560] sm:$0xff]
      %v773 = vld [vmem:[%s1 + $0x568] sm:$0xff]
      %v774 = vld [vmem:[%s1 + $0x570] sm:$0xff]
      %v775 = vld [vmem:[%s1 + $0x578] sm:$0xff]
      %v776 = vld [vmem:[%s1 + $0x580] sm:$0xff]
      %v777 = vld [vmem:[%s1 + $0x588] sm:$0xff]
      %v778 = vld [vmem:[%s1 + $0x590] sm:$0xff]
      %v779 = vld [vmem:[%s1 + $0x598] sm:$0xff]
      %v780 = vld [vmem:[%s1 + $0x5a0] sm:$0xff]
      %v781 = vld [vmem:[%s1 + $0x5a8] sm:$0xff]
      %v782 = vld [vmem:[%s1 + $0x5b0] sm:$0xff]
      %v783 = vld [vmem:[%s1 + $0x5b8] sm:$0xff]
      %v784 = vld [vmem:[%s1 + $0x5c0] sm:$0xff]
      %v785 = vld [vmem:[%s1 + $0x5c8] sm:$0xff]
      %v786 = vld [vmem:[%s1 + $0x5d0] sm:$0xff]
      %v787 = vld [vmem:[%s1 + $0x5d8] sm:$0xff]
      %v788 = vld [vmem:[%s1 + $0x5e0] sm:$0xff]
      %v789 = vld [vmem:[%s1 + $0x5e8] sm:$0xff]
      %v790 = vld [vmem:[%s1 + $0x5f0] sm:$0xff]
      %v791 = vld [vmem:[%s1 + $0x5f8] sm:$0xff]
      %v792 = vld [vmem:[%s1 + $0x600] sm:$0xff]
      %v793 = vld [vmem:[%s1 + $0x608] sm:$0xff]
      %v794 = vld [vmem:[%s1 + $0x610] sm:$0xff]
      %v795 = vld [vmem:[%s1 + $0x618] sm:$0xff]
      %v796 = vld [vmem:[%s2] sm:$0xf]
      %v798 = vlaneseq
      %v799 = vshrl.u32 %v798, 7
      %v800 = vsub.s32 0, %v799
      %v801 = vrot.slane %v796, %v800
      %v802 = vlaneseq
      %v803 = vshrl.u32 %v802, 7
      %v804 = vsub.s32 1, %v803
      %v805 = vrot.slane %v796, %v804
      %v806 = vlaneseq
      %v807 = vshrl.u32 %v806, 7
      %v808 = vsub.s32 2, %v807
      %v809 = vrot.slane %v796, %v808
      %v810 = vlaneseq
      %v811 = vshrl.u32 %v810, 7
      %v812 = vsub.s32 3, %v811
      %v813 = vrot.slane %v796, %v812
      %v1014 = vunpack.c.l.b16 %v600
      %v1015 = vunpack.c.h.b16 %v600
      %v1016 = vunpack.c.l.b16 %v601
      %v1017 = vunpack.c.h.b16 %v601
      %v1018 = vunpack.c.l.b16 %v602
      %v1019 = vunpack.c.h.b16 %v602
      %v1020 = vunpack.c.l.b16 %v603
      %v1021 = vunpack.c.h.b16 %v603
      %v1022 = vunpack.c.l.b16 %v604
      %v1023 = vunpack.c.h.b16 %v604
      %v1024 = vunpack.c.l.b16 %v605
      %v1025 = vunpack.c.h.b16 %v605
      %v1026 = vunpack.c.l.b16 %v606
      %v1027 = vunpack.c.h.b16 %v606
      %v1028 = vunpack.c.l.b16 %v607
      %v1029 = vunpack.c.h.b16 %v607
      %v1030 = vunpack.c.l.b16 %v608
      %v1031 = vunpack.c.h.b16 %v608
      %v1032 = vunpack.c.l.b16 %v609
      %v1033 = vunpack.c.h.b16 %v609
      %v1034 = vunpack.c.l.b16 %v610
      %v1035 = vunpack.c.h.b16 %v610
      %v1036 = vunpack.c.l.b16 %v611
      %v1037 = vunpack.c.h.b16 %v611
      %v1038 = vunpack.c.l.b16 %v612
      %v1039 = vunpack.c.h.b16 %v612
      %v1040 = vunpack.c.l.b16 %v613
      %v1041 = vunpack.c.h.b16 %v613
      %v1042 = vunpack.c.l.b16 %v614
      %v1043 = vunpack.c.h.b16 %v614
      %v1044 = vunpack.c.l.b16 %v615
      %v1045 = vunpack.c.h.b16 %v615
      %v1046 = vunpack.c.l.b16 %v616
      %v1047 = vunpack.c.h.b16 %v616
      %v1048 = vunpack.c.l.b16 %v617
      %v1049 = vunpack.c.h.b16 %v617
      %v1050 = vunpack.c.l.b16 %v618
      %v1051 = vunpack.c.h.b16 %v618
      %v1052 = vunpack.c.l.b16 %v619
      %v1053 = vunpack.c.h.b16 %v619
      %v1054 = vunpack.c.l.b16 %v620
      %v1055 = vunpack.c.h.b16 %v620
      %v1056 = vunpack.c.l.b16 %v621
      %v1057 = vunpack.c.h.b16 %v621
      %v1058 = vunpack.c.l.b16 %v622
      %v1059 = vunpack.c.h.b16 %v622
      %v1060 = vunpack.c.l.b16 %v623
      %v1061 = vunpack.c.h.b16 %v623
      %v1062 = vunpack.c.l.b16 %v624
      %v1063 = vunpack.c.h.b16 %v624
      %v1064 = vunpack.c.l.b16 %v625
      %v1065 = vunpack.c.h.b16 %v625
      %v1066 = vunpack.c.l.b16 %v626
      %v1067 = vunpack.c.h.b16 %v626
      %v1068 = vunpack.c.l.b16 %v627
      %v1069 = vunpack.c.h.b16 %v627
      %v1070 = vunpack.c.l.b16 %v628
      %v1071 = vunpack.c.h.b16 %v628
      %v1072 = vunpack.c.l.b16 %v629
      %v1073 = vunpack.c.h.b16 %v629
      %v1074 = vunpack.c.l.b16 %v630
      %v1075 = vunpack.c.h.b16 %v630
      %v1076 = vunpack.c.l.b16 %v631
      %v1077 = vunpack.c.h.b16 %v631
      %v1078 = vunpack.c.l.b16 %v632
      %v1079 = vunpack.c.h.b16 %v632
      %v1080 = vunpack.c.l.b16 %v633
      %v1081 = vunpack.c.h.b16 %v633
      %v1082 = vunpack.c.l.b16 %v634
      %v1083 = vunpack.c.h.b16 %v634
      %v1084 = vunpack.c.l.b16 %v635
      %v1085 = vunpack.c.h.b16 %v635
      %v1086 = vunpack.c.l.b16 %v636
      %v1087 = vunpack.c.h.b16 %v636
      %v1088 = vunpack.c.l.b16 %v637
      %v1089 = vunpack.c.h.b16 %v637
      %v1090 = vunpack.c.l.b16 %v638
      %v1091 = vunpack.c.h.b16 %v638
      %v1092 = vunpack.c.l.b16 %v639
      %v1093 = vunpack.c.h.b16 %v639
      %v1094 = vunpack.c.l.b16 %v640
      %v1095 = vunpack.c.h.b16 %v640
      %v1096 = vunpack.c.l.b16 %v641
      %v1097 = vunpack.c.h.b16 %v641
      %v1098 = vunpack.c.l.b16 %v642
      %v1099 = vunpack.c.h.b16 %v642
      %v1100 = vunpack.c.l.b16 %v643
      %v1101 = vunpack.c.h.b16 %v643
      %v1102 = vunpack.c.l.b16 %v644
      %v1103 = vunpack.c.h.b16 %v644
      %v1104 = vunpack.c.l.b16 %v645
      %v1105 = vunpack.c.h.b16 %v645
      %v1106 = vunpack.c.l.b16 %v646
      %v1107 = vunpack.c.h.b16 %v646
      %v1108 = vunpack.c.l.b16 %v647
      %v1109 = vunpack.c.h.b16 %v647
      %v1110 = vunpack.c.l.b16 %v648
      %v1111 = vunpack.c.h.b16 %v648
      %v1112 = vunpack.c.l.b16 %v649
      %v1113 = vunpack.c.h.b16 %v649
      %v1114 = vunpack.c.l.b16 %v650
      %v1115 = vunpack.c.h.b16 %v650
      %v1116 = vunpack.c.l.b16 %v651
      %v1117 = vunpack.c.h.b16 %v651
      %v1118 = vunpack.c.l.b16 %v652
      %v1119 = vunpack.c.h.b16 %v652
      %v1120 = vunpack.c.l.b16 %v653
      %v1121 = vunpack.c.h.b16 %v653
      %v1122 = vunpack.c.l.b16 %v654
      %v1123 = vunpack.c.h.b16 %v654
      %v1124 = vunpack.c.l.b16 %v655
      %v1125 = vunpack.c.h.b16 %v655
      %v1126 = vunpack.c.l.b16 %v656
      %v1127 = vunpack.c.h.b16 %v656
      %v1128 = vunpack.c.l.b16 %v657
      %v1129 = vunpack.c.h.b16 %v657
      %v1130 = vunpack.c.l.b16 %v658
      %v1131 = vunpack.c.h.b16 %v658
      %v1132 = vunpack.c.l.b16 %v659
      %v1133 = vunpack.c.h.b16 %v659
      %v1134 = vunpack.c.l.b16 %v660
      %v1135 = vunpack.c.h.b16 %v660
      %v1136 = vunpack.c.l.b16 %v661
      %v1137 = vunpack.c.h.b16 %v661
      %v1138 = vunpack.c.l.b16 %v662
      %v1139 = vunpack.c.h.b16 %v662
      %v1140 = vunpack.c.l.b16 %v663
      %v1141 = vunpack.c.h.b16 %v663
      %v1142 = vunpack.c.l.b16 %v664
      %v1143 = vunpack.c.h.b16 %v664
      %v1144 = vunpack.c.l.b16 %v665
      %v1145 = vunpack.c.h.b16 %v665
      %v1146 = vunpack.c.l.b16 %v666
      %v1147 = vunpack.c.h.b16 %v666
      %v1148 = vunpack.c.l.b16 %v667
      %v1149 = vunpack.c.h.b16 %v667
      %v1150 = vunpack.c.l.b16 %v668
      %v1151 = vunpack.c.h.b16 %v668
      %v1152 = vunpack.c.l.b16 %v669
      %v1153 = vunpack.c.h.b16 %v669
      %v1154 = vunpack.c.l.b16 %v670
      %v1155 = vunpack.c.h.b16 %v670
      %v1156 = vunpack.c.l.b16 %v671
      %v1157 = vunpack.c.h.b16 %v671
      %v1158 = vunpack.c.l.b16 %v672
      %v1159 = vunpack.c.h.b16 %v672
      %v1160 = vunpack.c.l.b16 %v673
      %v1161 = vunpack.c.h.b16 %v673
      %v1162 = vunpack.c.l.b16 %v674
      %v1163 = vunpack.c.h.b16 %v674
      %v1164 = vunpack.c.l.b16 %v675
      %v1165 = vunpack.c.h.b16 %v675
      %v1166 = vunpack.c.l.b16 %v676
      %v1167 = vunpack.c.h.b16 %v676
      %v1168 = vunpack.c.l.b16 %v677
      %v1169 = vunpack.c.h.b16 %v677
      %v1170 = vunpack.c.l.b16 %v678
      %v1171 = vunpack.c.h.b16 %v678
      %v1172 = vunpack.c.l.b16 %v679
      %v1173 = vunpack.c.h.b16 %v679
      %v1174 = vunpack.c.l.b16 %v680
      %v1175 = vunpack.c.h.b16 %v680
      %v1176 = vunpack.c.l.b16 %v681
      %v1177 = vunpack.c.h.b16 %v681
      %v1178 = vunpack.c.l.b16 %v682
      %v1179 = vunpack.c.h.b16 %v682
      %v1180 = vunpack.c.l.b16 %v683
      %v1181 = vunpack.c.h.b16 %v683
      %v1182 = vunpack.c.l.b16 %v684
      %v1183 = vunpack.c.h.b16 %v684
      %v1184 = vunpack.c.l.b16 %v685
      %v1185 = vunpack.c.h.b16 %v685
      %v1186 = vunpack.c.l.b16 %v686
      %v1187 = vunpack.c.h.b16 %v686
      %v1188 = vunpack.c.l.b16 %v687
      %v1189 = vunpack.c.h.b16 %v687
      %v1190 = vunpack.c.l.b16 %v688
      %v1191 = vunpack.c.h.b16 %v688
      %v1192 = vunpack.c.l.b16 %v689
      %v1193 = vunpack.c.h.b16 %v689
      %v1194 = vunpack.c.l.b16 %v690
      %v1195 = vunpack.c.h.b16 %v690
      %v1196 = vunpack.c.l.b16 %v691
      %v1197 = vunpack.c.h.b16 %v691
      %v1198 = vunpack.c.l.b16 %v692
      %v1199 = vunpack.c.h.b16 %v692
      %v1200 = vunpack.c.l.b16 %v693
      %v1201 = vunpack.c.h.b16 %v693
      %v1202 = vunpack.c.l.b16 %v694
      %v1203 = vunpack.c.h.b16 %v694
      %v1204 = vunpack.c.l.b16 %v695
      %v1205 = vunpack.c.h.b16 %v695
      %v1206 = vunpack.c.l.b16 %v696
      %v1207 = vunpack.c.h.b16 %v696
      %v1208 = vunpack.c.l.b16 %v697
      %v1209 = vunpack.c.h.b16 %v697
      %v1210 = vunpack.c.l.b16 %v698
      %v1211 = vunpack.c.h.b16 %v698
      %v1212 = vunpack.c.l.b16 %v699
      %v1213 = vunpack.c.h.b16 %v699
      %v1214 = vunpack.c.l.b16 %v700
      %v1215 = vunpack.c.h.b16 %v700
      %v1216 = vunpack.c.l.b16 %v701
      %v1217 = vunpack.c.h.b16 %v701
      %v1218 = vunpack.c.l.b16 %v702
      %v1219 = vunpack.c.h.b16 %v702
      %v1220 = vunpack.c.l.b16 %v703
      %v1221 = vunpack.c.h.b16 %v703
      %v1222 = vunpack.c.l.b16 %v704
      %v1223 = vunpack.c.h.b16 %v704
      %v1224 = vunpack.c.l.b16 %v705
      %v1225 = vunpack.c.h.b16 %v705
      %v1226 = vunpack.c.l.b16 %v706
      %v1227 = vunpack.c.h.b16 %v706
      %v1228 = vunpack.c.l.b16 %v707
      %v1229 = vunpack.c.h.b16 %v707
      %v1230 = vunpack.c.l.b16 %v708
      %v1231 = vunpack.c.h.b16 %v708
      %v1232 = vunpack.c.l.b16 %v709
      %v1233 = vunpack.c.h.b16 %v709
      %v1234 = vunpack.c.l.b16 %v710
      %v1235 = vunpack.c.h.b16 %v710
      %v1236 = vunpack.c.l.b16 %v711
      %v1237 = vunpack.c.h.b16 %v711
      %v1238 = vunpack.c.l.b16 %v712
      %v1239 = vunpack.c.h.b16 %v712
      %v1240 = vunpack.c.l.b16 %v713
      %v1241 = vunpack.c.h.b16 %v713
      %v1242 = vunpack.c.l.b16 %v714
      %v1243 = vunpack.c.h.b16 %v714
      %v1244 = vunpack.c.l.b16 %v715
      %v1245 = vunpack.c.h.b16 %v715
      %v1246 = vunpack.c.l.b16 %v716
      %v1247 = vunpack.c.h.b16 %v716
      %v1248 = vunpack.c.l.b16 %v717
      %v1249 = vunpack.c.h.b16 %v717
      %v1250 = vunpack.c.l.b16 %v718
      %v1251 = vunpack.c.h.b16 %v718
      %v1252 = vunpack.c.l.b16 %v719
      %v1253 = vunpack.c.h.b16 %v719
      %v1254 = vunpack.c.l.b16 %v720
      %v1255 = vunpack.c.h.b16 %v720
      %v1256 = vunpack.c.l.b16 %v721
      %v1257 = vunpack.c.h.b16 %v721
      %v1258 = vunpack.c.l.b16 %v722
      %v1259 = vunpack.c.h.b16 %v722
      %v1260 = vunpack.c.l.b16 %v723
      %v1261 = vunpack.c.h.b16 %v723
      %v1262 = vunpack.c.l.b16 %v724
      %v1263 = vunpack.c.h.b16 %v724
      %v1264 = vunpack.c.l.b16 %v725
      %v1265 = vunpack.c.h.b16 %v725
      %v1266 = vunpack.c.l.b16 %v726
      %v1267 = vunpack.c.h.b16 %v726
      %v1268 = vunpack.c.l.b16 %v727
      %v1269 = vunpack.c.h.b16 %v727
      %v1270 = vunpack.c.l.b16 %v728
      %v1271 = vunpack.c.h.b16 %v728
      %v1272 = vunpack.c.l.b16 %v729
      %v1273 = vunpack.c.h.b16 %v729
      %v1274 = vunpack.c.l.b16 %v730
      %v1275 = vunpack.c.h.b16 %v730
      %v1276 = vunpack.c.l.b16 %v731
      %v1277 = vunpack.c.h.b16 %v731
      %v1278 = vunpack.c.l.b16 %v732
      %v1279 = vunpack.c.h.b16 %v732
      %v1280 = vunpack.c.l.b16 %v733
      %v1281 = vunpack.c.h.b16 %v733
      %v1282 = vunpack.c.l.b16 %v734
      %v1283 = vunpack.c.h.b16 %v734
      %v1284 = vunpack.c.l.b16 %v735
      %v1285 = vunpack.c.h.b16 %v735
      %v1286 = vunpack.c.l.b16 %v736
      %v1287 = vunpack.c.h.b16 %v736
      %v1288 = vunpack.c.l.b16 %v737
      %v1289 = vunpack.c.h.b16 %v737
      %v1290 = vunpack.c.l.b16 %v738
      %v1291 = vunpack.c.h.b16 %v738
      %v1292 = vunpack.c.l.b16 %v739
      %v1293 = vunpack.c.h.b16 %v739
      %v1294 = vunpack.c.l.b16 %v740
      %v1295 = vunpack.c.h.b16 %v740
      %v1296 = vunpack.c.l.b16 %v741
      %v1297 = vunpack.c.h.b16 %v741
      %v1298 = vunpack.c.l.b16 %v742
      %v1299 = vunpack.c.h.b16 %v742
      %v1300 = vunpack.c.l.b16 %v743
      %v1301 = vunpack.c.h.b16 %v743
      %v1302 = vunpack.c.l.b16 %v744
      %v1303 = vunpack.c.h.b16 %v744
      %v1304 = vunpack.c.l.b16 %v745
      %v1305 = vunpack.c.h.b16 %v745
      %v1306 = vunpack.c.l.b16 %v746
      %v1307 = vunpack.c.h.b16 %v746
      %v1308 = vunpack.c.l.b16 %v747
      %v1309 = vunpack.c.h.b16 %v747
      %v1310 = vunpack.c.l.b16 %v748
      %v1311 = vunpack.c.h.b16 %v748
      %v1312 = vunpack.c.l.b16 %v749
      %v1313 = vunpack.c.h.b16 %v749
      %v1314 = vunpack.c.l.b16 %v750
      %v1315 = vunpack.c.h.b16 %v750
      %v1316 = vunpack.c.l.b16 %v751
      %v1317 = vunpack.c.h.b16 %v751
      %v1318 = vunpack.c.l.b16 %v752
      %v1319 = vunpack.c.h.b16 %v752
      %v1320 = vunpack.c.l.b16 %v753
      %v1321 = vunpack.c.h.b16 %v753
      %v1322 = vunpack.c.l.b16 %v754
      %v1323 = vunpack.c.h.b16 %v754
      %v1324 = vunpack.c.l.b16 %v755
      %v1325 = vunpack.c.h.b16 %v755
      %v1326 = vunpack.c.l.b16 %v756
      %v1327 = vunpack.c.h.b16 %v756
      %v1328 = vunpack.c.l.b16 %v757
      %v1329 = vunpack.c.h.b16 %v757
      %v1330 = vunpack.c.l.b16 %v758
      %v1331 = vunpack.c.h.b16 %v758
      %v1332 = vunpack.c.l.b16 %v759
      %v1333 = vunpack.c.h.b16 %v759
      %v1334 = vunpack.c.l.b16 %v760
      %v1335 = vunpack.c.h.b16 %v760
      %v1336 = vunpack.c.l.b16 %v761
      %v1337 = vunpack.c.h.b16 %v761
      %v1338 = vunpack.c.l.b16 %v762
      %v1339 = vunpack.c.h.b16 %v762
      %v1340 = vunpack.c.l.b16 %v763
      %v1341 = vunpack.c.h.b16 %v763
      %v1342 = vunpack.c.l.b16 %v764
      %v1343 = vunpack.c.h.b16 %v764
      %v1344 = vunpack.c.l.b16 %v765
      %v1345 = vunpack.c.h.b16 %v765
      %v1346 = vunpack.c.l.b16 %v766
      %v1347 = vunpack.c.h.b16 %v766
      %v1348 = vunpack.c.l.b16 %v767
      %v1349 = vunpack.c.h.b16 %v767
      %v1350 = vunpack.c.l.b16 %v768
      %v1351 = vunpack.c.h.b16 %v768
      %v1352 = vunpack.c.l.b16 %v769
      %v1353 = vunpack.c.h.b16 %v769
      %v1354 = vunpack.c.l.b16 %v770
      %v1355 = vunpack.c.h.b16 %v770
      %v1356 = vunpack.c.l.b16 %v771
      %v1357 = vunpack.c.h.b16 %v771
      %v1358 = vunpack.c.l.b16 %v772
      %v1359 = vunpack.c.h.b16 %v772
      %v1360 = vunpack.c.l.b16 %v773
      %v1361 = vunpack.c.h.b16 %v773
      %v1362 = vunpack.c.l.b16 %v774
      %v1363 = vunpack.c.h.b16 %v774
      %v1364 = vunpack.c.l.b16 %v775
      %v1365 = vunpack.c.h.b16 %v775
      %v1366 = vunpack.c.l.b16 %v776
      %v1367 = vunpack.c.h.b16 %v776
      %v1368 = vunpack.c.l.b16 %v777
      %v1369 = vunpack.c.h.b16 %v777
      %v1370 = vunpack.c.l.b16 %v778
      %v1371 = vunpack.c.h.b16 %v778
      %v1372 = vunpack.c.l.b16 %v779
      %v1373 = vunpack.c.h.b16 %v779
      %v1374 = vunpack.c.l.b16 %v780
      %v1375 = vunpack.c.h.b16 %v780
      %v1376 = vunpack.c.l.b16 %v781
      %v1377 = vunpack.c.h.b16 %v781
      %v1378 = vunpack.c.l.b16 %v782
      %v1379 = vunpack.c.h.b16 %v782
      %v1380 = vunpack.c.l.b16 %v783
      %v1381 = vunpack.c.h.b16 %v783
      %v1382 = vunpack.c.l.b16 %v784
      %v1383 = vunpack.c.h.b16 %v784
      %v1384 = vunpack.c.l.b16 %v785
      %v1385 = vunpack.c.h.b16 %v785
      %v1386 = vunpack.c.l.b16 %v786
      %v1387 = vunpack.c.h.b16 %v786
      %v1388 = vunpack.c.l.b16 %v787
      %v1389 = vunpack.c.h.b16 %v787
      %v1390 = vunpack.c.l.b16 %v788
      %v1391 = vunpack.c.h.b16 %v788
      %v1392 = vunpack.c.l.b16 %v789
      %v1393 = vunpack.c.h.b16 %v789
      %v1394 = vunpack.c.l.b16 %v790
      %v1395 = vunpack.c.h.b16 %v790
      %v1396 = vunpack.c.l.b16 %v791
      %v1397 = vunpack.c.h.b16 %v791
      %v1398 = vunpack.c.l.b16 %v792
      %v1399 = vunpack.c.h.b16 %v792
      %v1400 = vunpack.c.l.b16 %v793
      %v1401 = vunpack.c.h.b16 %v793
      %v1402 = vunpack.c.l.b16 %v794
      %v1403 = vunpack.c.h.b16 %v794
      %v1404 = vunpack.c.l.b16 %v795
      %v1405 = vunpack.c.h.b16 %v795
      %v1406 = vpack.c.b16 %v1018, %v1014
      %v1407 = vpack.c.b16 %v1019, %v1015
      %v1408 = vpack.c.b16 %v1020, %v1016
      %v1409 = vpack.c.b16 %v1021, %v1017
      %v1410 = vpack.c.b16 %v1026, %v1022
      %v1411 = vpack.c.b16 %v1027, %v1023
      %v1412 = vpack.c.b16 %v1028, %v1024
      %v1413 = vpack.c.b16 %v1029, %v1025
      %v1414 = vpack.c.b16 %v1034, %v1030
      %v1415 = vpack.c.b16 %v1035, %v1031
      %v1416 = vpack.c.b16 %v1036, %v1032
      %v1417 = vpack.c.b16 %v1037, %v1033
      %v1418 = vpack.c.b16 %v1042, %v1038
      %v1419 = vpack.c.b16 %v1043, %v1039
      %v1420 = vpack.c.b16 %v1044, %v1040
      %v1421 = vpack.c.b16 %v1045, %v1041
      %v1422 = vpack.c.b16 %v1050, %v1046
      %v1423 = vpack.c.b16 %v1051, %v1047
      %v1424 = vpack.c.b16 %v1052, %v1048
      %v1425 = vpack.c.b16 %v1053, %v1049
      %v1426 = vpack.c.b16 %v1058, %v1054
      %v1427 = vpack.c.b16 %v1059, %v1055
      %v1428 = vpack.c.b16 %v1060, %v1056
      %v1429 = vpack.c.b16 %v1061, %v1057
      %v1430 = vpack.c.b16 %v1066, %v1062
      %v1431 = vpack.c.b16 %v1067, %v1063
      %v1432 = vpack.c.b16 %v1068, %v1064
      %v1433 = vpack.c.b16 %v1069, %v1065
      %v1434 = vpack.c.b16 %v1074, %v1070
      %v1435 = vpack.c.b16 %v1075, %v1071
      %v1436 = vpack.c.b16 %v1076, %v1072
      %v1437 = vpack.c.b16 %v1077, %v1073
      %v1438 = vpack.c.b16 %v1082, %v1078
      %v1439 = vpack.c.b16 %v1083, %v1079
      %v1440 = vpack.c.b16 %v1084, %v1080
      %v1441 = vpack.c.b16 %v1085, %v1081
      %v1442 = vpack.c.b16 %v1090, %v1086
      %v1443 = vpack.c.b16 %v1091, %v1087
      %v1444 = vpack.c.b16 %v1092, %v1088
      %v1445 = vpack.c.b16 %v1093, %v1089
      %v1446 = vpack.c.b16 %v1098, %v1094
      %v1447 = vpack.c.b16 %v1099, %v1095
      %v1448 = vpack.c.b16 %v1100, %v1096
      %v1449 = vpack.c.b16 %v1101, %v1097
      %v1450 = vpack.c.b16 %v1106, %v1102
      %v1451 = vpack.c.b16 %v1107, %v1103
      %v1452 = vpack.c.b16 %v1108, %v1104
      %v1453 = vpack.c.b16 %v1109, %v1105
      %v1454 = vpack.c.b16 %v1114, %v1110
      %v1455 = vpack.c.b16 %v1115, %v1111
      %v1456 = vpack.c.b16 %v1116, %v1112
      %v1457 = vpack.c.b16 %v1117, %v1113
      %v1458 = vpack.c.b16 %v1122, %v1118
      %v1459 = vpack.c.b16 %v1123, %v1119
      %v1460 = vpack.c.b16 %v1124, %v1120
      %v1461 = vpack.c.b16 %v1125, %v1121
      %v1462 = vpack.c.b16 %v1130, %v1126
      %v1463 = vpack.c.b16 %v1131, %v1127
      %v1464 = vpack.c.b16 %v1132, %v1128
      %v1465 = vpack.c.b16 %v1133, %v1129
      %v1466 = vpack.c.b16 %v1138, %v1134
      %v1467 = vpack.c.b16 %v1139, %v1135
      %v1468 = vpack.c.b16 %v1140, %v1136
      %v1469 = vpack.c.b16 %v1141, %v1137
      %v1470 = vpack.c.b16 %v1146, %v1142
      %v1471 = vpack.c.b16 %v1147, %v1143
      %v1472 = vpack.c.b16 %v1148, %v1144
      %v1473 = vpack.c.b16 %v1149, %v1145
      %v1474 = vpack.c.b16 %v1154, %v1150
      %v1475 = vpack.c.b16 %v1155, %v1151
      %v1476 = vpack.c.b16 %v1156, %v1152
      %v1477 = vpack.c.b16 %v1157, %v1153
      %v1478 = vpack.c.b16 %v1162, %v1158
      %v1479 = vpack.c.b16 %v1163, %v1159
      %v1480 = vpack.c.b16 %v1164, %v1160
      %v1481 = vpack.c.b16 %v1165, %v1161
      %v1482 = vpack.c.b16 %v1170, %v1166
      %v1483 = vpack.c.b16 %v1171, %v1167
      %v1484 = vpack.c.b16 %v1172, %v1168
      %v1485 = vpack.c.b16 %v1173, %v1169
      %v1486 = vpack.c.b16 %v1178, %v1174
      %v1487 = vpack.c.b16 %v1179, %v1175
      %v1488 = vpack.c.b16 %v1180, %v1176
      %v1489 = vpack.c.b16 %v1181, %v1177
      %v1490 = vpack.c.b16 %v1186, %v1182
      %v1491 = vpack.c.b16 %v1187, %v1183
      %v1492 = vpack.c.b16 %v1188, %v1184
      %v1493 = vpack.c.b16 %v1189, %v1185
      %v1494 = vpack.c.b16 %v1194, %v1190
      %v1495 = vpack.c.b16 %v1195, %v1191
      %v1496 = vpack.c.b16 %v1196, %v1192
      %v1497 = vpack.c.b16 %v1197, %v1193
      %v1498 = vpack.c.b16 %v1202, %v1198
      %v1499 = vpack.c.b16 %v1203, %v1199
      %v1500 = vpack.c.b16 %v1204, %v1200
      %v1501 = vpack.c.b16 %v1205, %v1201
      %v1502 = vpack.c.b16 %v1210, %v1206
      %v1503 = vpack.c.b16 %v1211, %v1207
      %v1504 = vpack.c.b16 %v1212, %v1208
      %v1505 = vpack.c.b16 %v1213, %v1209
      %v1506 = vpack.c.b16 %v1218, %v1214
      %v1507 = vpack.c.b16 %v1219, %v1215
      %v1508 = vpack.c.b16 %v1220, %v1216
      %v1509 = vpack.c.b16 %v1221, %v1217
      %v1510 = vpack.c.b16 %v1226, %v1222
      %v1511 = vpack.c.b16 %v1227, %v1223
      %v1512 = vpack.c.b16 %v1228, %v1224
      %v1513 = vpack.c.b16 %v1229, %v1225
      %v1514 = vpack.c.b16 %v1234, %v1230
      %v1515 = vpack.c.b16 %v1235, %v1231
      %v1516 = vpack.c.b16 %v1236, %v1232
      %v1517 = vpack.c.b16 %v1237, %v1233
      %v1518 = vpack.c.b16 %v1242, %v1238
      %v1519 = vpack.c.b16 %v1243, %v1239
      %v1520 = vpack.c.b16 %v1244, %v1240
      %v1521 = vpack.c.b16 %v1245, %v1241
      %v1522 = vpack.c.b16 %v1250, %v1246
      %v1523 = vpack.c.b16 %v1251, %v1247
      %v1524 = vpack.c.b16 %v1252, %v1248
      %v1525 = vpack.c.b16 %v1253, %v1249
      %v1526 = vpack.c.b16 %v1258, %v1254
      %v1527 = vpack.c.b16 %v1259, %v1255
      %v1528 = vpack.c.b16 %v1260, %v1256
      %v1529 = vpack.c.b16 %v1261, %v1257
      %v1530 = vpack.c.b16 %v1266, %v1262
      %v1531 = vpack.c.b16 %v1267, %v1263
      %v1532 = vpack.c.b16 %v1268, %v1264
      %v1533 = vpack.c.b16 %v1269, %v1265
      %v1534 = vpack.c.b16 %v1274, %v1270
      %v1535 = vpack.c.b16 %v1275, %v1271
      %v1536 = vpack.c.b16 %v1276, %v1272
      %v1537 = vpack.c.b16 %v1277, %v1273
      %v1538 = vpack.c.b16 %v1282, %v1278
      %v1539 = vpack.c.b16 %v1283, %v1279
      %v1540 = vpack.c.b16 %v1284, %v1280
      %v1541 = vpack.c.b16 %v1285, %v1281
      %v1542 = vpack.c.b16 %v1290, %v1286
      %v1543 = vpack.c.b16 %v1291, %v1287
      %v1544 = vpack.c.b16 %v1292, %v1288
      %v1545 = vpack.c.b16 %v1293, %v1289
      %v1546 = vpack.c.b16 %v1298, %v1294
      %v1547 = vpack.c.b16 %v1299, %v1295
      %v1548 = vpack.c.b16 %v1300, %v1296
      %v1549 = vpack.c.b16 %v1301, %v1297
      %v1550 = vpack.c.b16 %v1306, %v1302
      %v1551 = vpack.c.b16 %v1307, %v1303
      %v1552 = vpack.c.b16 %v1308, %v1304
      %v1553 = vpack.c.b16 %v1309, %v1305
      %v1554 = vpack.c.b16 %v1314, %v1310
      %v1555 = vpack.c.b16 %v1315, %v1311
      %v1556 = vpack.c.b16 %v1316, %v1312
      %v1557 = vpack.c.b16 %v1317, %v1313
      %v1558 = vpack.c.b16 %v1322, %v1318
      %v1559 = vpack.c.b16 %v1323, %v1319
      %v1560 = vpack.c.b16 %v1324, %v1320
      %v1561 = vpack.c.b16 %v1325, %v1321
      %v1562 = vpack.c.b16 %v1330, %v1326
      %v1563 = vpack.c.b16 %v1331, %v1327
      %v1564 = vpack.c.b16 %v1332, %v1328
      %v1565 = vpack.c.b16 %v1333, %v1329
      %v1566 = vpack.c.b16 %v1338, %v1334
      %v1567 = vpack.c.b16 %v1339, %v1335
      %v1568 = vpack.c.b16 %v1340, %v1336
      %v1569 = vpack.c.b16 %v1341, %v1337
      %v1570 = vpack.c.b16 %v1346, %v1342
      %v1571 = vpack.c.b16 %v1347, %v1343
      %v1572 = vpack.c.b16 %v1348, %v1344
      %v1573 = vpack.c.b16 %v1349, %v1345
      %v1574 = vpack.c.b16 %v1354, %v1350
      %v1575 = vpack.c.b16 %v1355, %v1351
      %v1576 = vpack.c.b16 %v1356, %v1352
      %v1577 = vpack.c.b16 %v1357, %v1353
      %v1578 = vpack.c.b16 %v1362, %v1358
      %v1579 = vpack.c.b16 %v1363, %v1359
      %v1580 = vpack.c.b16 %v1364, %v1360
      %v1581 = vpack.c.b16 %v1365, %v1361
      %v1582 = vpack.c.b16 %v1370, %v1366
      %v1583 = vpack.c.b16 %v1371, %v1367
      %v1584 = vpack.c.b16 %v1372, %v1368
      %v1585 = vpack.c.b16 %v1373, %v1369
      %v1586 = vpack.c.b16 %v1378, %v1374
      %v1587 = vpack.c.b16 %v1379, %v1375
      %v1588 = vpack.c.b16 %v1380, %v1376
      %v1589 = vpack.c.b16 %v1381, %v1377
      %v1590 = vpack.c.b16 %v1386, %v1382
      %v1591 = vpack.c.b16 %v1387, %v1383
      %v1592 = vpack.c.b16 %v1388, %v1384
      %v1593 = vpack.c.b16 %v1389, %v1385
      %v1594 = vpack.c.b16 %v1394, %v1390
      %v1595 = vpack.c.b16 %v1395, %v1391
      %v1596 = vpack.c.b16 %v1396, %v1392
      %v1597 = vpack.c.b16 %v1397, %v1393
      %v1598 = vpack.c.b16 %v1402, %v1398
      %v1599 = vpack.c.b16 %v1403, %v1399
      %v1600 = vpack.c.b16 %v1404, %v1400
      %v1601 = vpack.c.b16 %v1405, %v1401
      %vm1798 = vcmask 130048
      %v1800 = vsel %vm1798, %v550, 0
      %v1803 = vsel %vm1798, %v557, 0
      %v1806 = vsel %vm1798, %v564, 0
      %v1809 = vsel %vm1798, %v571, 0
      %v1812 = vsel %vm1798, %v578, 0
      %v1815 = vsel %vm1798, %v585, 0
      %v1818 = vsel %vm1798, %v592, 0
      %v1821 = vsel %vm1798, %v599, 0
      %1823 = vmatprep.subr.bf16.mxu0 %v1407
      %1824 = vmatpush1.bf16.msra.mxu0 %v1406
      %1825 = vmatprep.subr.bf16.mxu0 %v1411
      %1826 = vmatpush1.bf16.msra.mxu0 %v1410
      %1827 = vmatprep.subr.bf16.mxu0 %v1415
      %1828 = vmatpush1.bf16.msra.mxu0 %v1414
      %1829 = vmatprep.subr.bf16.mxu0 %v1419
      %1830 = vmatpush1.bf16.msra.mxu0 %v1418
      %1831 = vmatprep.subr.bf16.mxu0 %v1423
      %1832 = vmatpush1.bf16.msra.mxu0 %v1422
      %1833 = vmatprep.subr.bf16.mxu0 %v1427
      %1834 = vmatpush1.bf16.msra.mxu0 %v1426
      %1835 = vmatprep.subr.bf16.mxu0 %v1431
      %1836 = vmatpush1.bf16.msra.mxu0 %v1430
      %1837 = vmatprep.subr.bf16.mxu0 %v1435
      %1838 = vmatpush1.bf16.msra.mxu0 %v1434
      %1839 = vmatprep.subr.bf16.mxu0 %v1439
      %1840 = vmatpush1.bf16.msra.mxu0 %v1438
      %1841 = vmatprep.subr.bf16.mxu0 %v1443
      %1842 = vmatpush1.bf16.msra.mxu0 %v1442
      %1843 = vmatprep.subr.bf16.mxu0 %v1447
      %1844 = vmatpush1.bf16.msra.mxu0 %v1446
      %1845 = vmatprep.subr.bf16.mxu0 %v1451
      %1846 = vmatpush1.bf16.msra.mxu0 %v1450
      %1847 = vmatprep.subr.bf16.mxu0 %v1455
      %1848 = vmatpush1.bf16.msra.mxu0 %v1454
      %1849 = vmatprep.subr.bf16.mxu0 %v1459
      %1850 = vmatpush1.bf16.msra.mxu0 %v1458
      %1851 = vmatprep.subr.bf16.mxu0 %v1463
      %1852 = vmatpush1.bf16.msra.mxu0 %v1462
      %1853 = vmatprep.subr.bf16.mxu0 %v1467
      %1854 = vmatpush1.bf16.msra.mxu0 %v1466
      %1855 = vmatprep.mubr.bf16.mxu0 %v545
      %1856 = vmatmul.mubr.bf16.gmra.mrb[0].mxu0 %v544
      %v1857 = vpop.f32.mrb[0].mxu0
      %v1858 = vadd.f32 %v801, %v1857
      %v1859 = vpop.f32.mrb[0].mxu0
      %v1860 = vadd.f32 %v805, %v1859
      %v1861 = vpop.f32.mrb[0].mxu0
      %v1862 = vadd.f32 %v801, %v1861
      %v1863 = vpop.f32.mrb[0].mxu0
      %v1864 = vadd.f32 %v805, %v1863
      %1865 = vmatprep.mubr.bf16.mxu0 %v552
      %1866 = vmatmul.mubr.bf16.gmra.mrb[0].mxu0 %v551
      %v1867 = vpop.f32.mrb[0].mxu0
      %v1868 = vadd.f32 %v801, %v1867
      %v1869 = vpop.f32.mrb[0].mxu0
      %v1870 = vadd.f32 %v805, %v1869
      %v1871 = vpop.f32.mrb[0].mxu0
      %v1872 = vadd.f32 %v801, %v1871
      %v1873 = vpop.f32.mrb[0].mxu0
      %v1874 = vadd.f32 %v805, %v1873
      %1875 = vmatprep.mubr.bf16.mxu0 %v559
      %1876 = vmatmul.mubr.bf16.gmra.mrb[0].mxu0 %v558
      %v1877 = vpop.f32.mrb[0].mxu0
      %v1878 = vadd.f32 %v801, %v1877
      %v1879 = vpop.f32.mrb[0].mxu0
      %v1880 = vadd.f32 %v805, %v1879
      %v1881 = vpop.f32.mrb[0].mxu0
      %v1882 = vadd.f32 %v801, %v1881
      %v1883 = vpop.f32.mrb[0].mxu0
      %v1884 = vadd.f32 %v805, %v1883
      %1885 = vmatprep.mubr.bf16.mxu0 %v566
      %1886 = vmatmul.mubr.bf16.gmra.mrb[0].mxu0 %v565
      %v1887 = vpop.f32.mrb[0].mxu0
      %v1888 = vadd.f32 %v801, %v1887
      %v1889 = vpop.f32.mrb[0].mxu0
      %v1890 = vadd.f32 %v805, %v1889
      %v1891 = vpop.f32.mrb[0].mxu0
      %v1892 = vadd.f32 %v801, %v1891
      %v1893 = vpop.f32.mrb[0].mxu0
      %v1894 = vadd.f32 %v805, %v1893
      %1895 = vmatprep.mubr.bf16.mxu0 %v573
      %1896 = vmatmul.mubr.bf16.gmra.mrb[0].mxu0 %v572
      %v1897 = vpop.f32.mrb[0].mxu0
      %v1898 = vadd.f32 %v801, %v1897
      %v1899 = vpop.f32.mrb[0].mxu0
      %v1900 = vadd.f32 %v805, %v1899
      %v1901 = vpop.f32.mrb[0].mxu0
      %v1902 = vadd.f32 %v801, %v1901
      %v1903 = vpop.f32.mrb[0].mxu0
      %v1904 = vadd.f32 %v805, %v1903
      %1905 = vmatprep.mubr.bf16.mxu0 %v580
      %1906 = vmatmul.mubr.bf16.gmra.mrb[0].mxu0 %v579
      %v1907 = vpop.f32.mrb[0].mxu0
      %v1908 = vadd.f32 %v801, %v1907
      %v1909 = vpop.f32.mrb[0].mxu0
      %v1910 = vadd.f32 %v805, %v1909
      %v1911 = vpop.f32.mrb[0].mxu0
      %v1912 = vadd.f32 %v801, %v1911
      %v1913 = vpop.f32.mrb[0].mxu0
      %v1914 = vadd.f32 %v805, %v1913
      %1915 = vmatprep.mubr.bf16.mxu0 %v587
      %1916 = vmatmul.mubr.bf16.gmra.mrb[0].mxu0 %v586
      %v1917 = vpop.f32.mrb[0].mxu0
      %v1918 = vadd.f32 %v801, %v1917
      %v1919 = vpop.f32.mrb[0].mxu0
      %v1920 = vadd.f32 %v805, %v1919
      %v1921 = vpop.f32.mrb[0].mxu0
      %v1922 = vadd.f32 %v801, %v1921
      %v1923 = vpop.f32.mrb[0].mxu0
      %v1924 = vadd.f32 %v805, %v1923
      %1925 = vmatprep.mubr.bf16.mxu0 %v594
      %1926 = vmatmul.mubr.bf16.gmra.mrb[0].mxu0 %v593
      %v1927 = vpop.f32.mrb[0].mxu0
      %v1928 = vadd.f32 %v801, %v1927
      %v1929 = vpop.f32.mrb[0].mxu0
      %v1930 = vadd.f32 %v805, %v1929
      %v1931 = vpop.f32.mrb[0].mxu0
      %v1932 = vadd.f32 %v801, %v1931
      %v1933 = vpop.f32.mrb[0].mxu0
      %v1934 = vadd.f32 %v805, %v1933
      %1935 = vdwg.mxu0
      %1936 = vmatprep.subr.bf16.mxu0 %v1471
      %1937 = vmatpush1.bf16.msra.mxu0 %v1470
      %1938 = vmatprep.subr.bf16.mxu0 %v1475
      %1939 = vmatpush1.bf16.msra.mxu0 %v1474
      %1940 = vmatprep.subr.bf16.mxu0 %v1479
      %1941 = vmatpush1.bf16.msra.mxu0 %v1478
      %1942 = vmatprep.subr.bf16.mxu0 %v1483
      %1943 = vmatpush1.bf16.msra.mxu0 %v1482
      %1944 = vmatprep.subr.bf16.mxu0 %v1487
      %1945 = vmatpush1.bf16.msra.mxu0 %v1486
      %1946 = vmatprep.subr.bf16.mxu0 %v1491
      %1947 = vmatpush1.bf16.msra.mxu0 %v1490
      %1948 = vmatprep.subr.bf16.mxu0 %v1495
      %1949 = vmatpush1.bf16.msra.mxu0 %v1494
      %1950 = vmatprep.subr.bf16.mxu0 %v1499
      %1951 = vmatpush1.bf16.msra.mxu0 %v1498
      %1952 = vmatprep.subr.bf16.mxu0 %v1503
      %1953 = vmatpush1.bf16.msra.mxu0 %v1502
      %1954 = vmatprep.subr.bf16.mxu0 %v1507
      %1955 = vmatpush1.bf16.msra.mxu0 %v1506
      %1956 = vmatprep.subr.bf16.mxu0 %v1511
      %1957 = vmatpush1.bf16.msra.mxu0 %v1510
      %1958 = vmatprep.subr.bf16.mxu0 %v1515
      %1959 = vmatpush1.bf16.msra.mxu0 %v1514
      %1960 = vmatprep.subr.bf16.mxu0 %v1519
      %1961 = vmatpush1.bf16.msra.mxu0 %v1518
      %1962 = vmatprep.subr.bf16.mxu0 %v1523
      %1963 = vmatpush1.bf16.msra.mxu0 %v1522
      %1964 = vmatprep.subr.bf16.mxu0 %v1527
      %1965 = vmatpush1.bf16.msra.mxu0 %v1526
      %1966 = vmatprep.subr.bf16.mxu0 %v1531
      %1967 = vmatpush1.bf16.msra.mxu0 %v1530
      %1968 = vmatprep.mubr.bf16.mxu0 %v547
      %1969 = vmatmul.mubr.bf16.gmra.mrb[0].mxu0 %v546
      %v1970 = vpop.f32.mrb[0].mxu0
      %v1971 = vadd.f32 %v1858, %v1970
      %v1972 = vpop.f32.mrb[0].mxu0
      %v1973 = vadd.f32 %v1860, %v1972
      %v1974 = vpop.f32.mrb[0].mxu0
      %v1975 = vadd.f32 %v1862, %v1974
      %v1976 = vpop.f32.mrb[0].mxu0
      %v1977 = vadd.f32 %v1864, %v1976
      %1978 = vmatprep.mubr.bf16.mxu0 %v554
      %1979 = vmatmul.mubr.bf16.gmra.mrb[0].mxu0 %v553
      %v1980 = vpop.f32.mrb[0].mxu0
      %v1981 = vadd.f32 %v1868, %v1980
      %v1982 = vpop.f32.mrb[0].mxu0
      %v1983 = vadd.f32 %v1870, %v1982
      %v1984 = vpop.f32.mrb[0].mxu0
      %v1985 = vadd.f32 %v1872, %v1984
      %v1986 = vpop.f32.mrb[0].mxu0
      %v1987 = vadd.f32 %v1874, %v1986
      %1988 = vmatprep.mubr.bf16.mxu0 %v561
      %1989 = vmatmul.mubr.bf16.gmra.mrb[0].mxu0 %v560
      %v1990 = vpop.f32.mrb[0].mxu0
      %v1991 = vadd.f32 %v1878, %v1990
      %v1992 = vpop.f32.mrb[0].mxu0
      %v1993 = vadd.f32 %v1880, %v1992
      %v1994 = vpop.f32.mrb[0].mxu0
      %v1995 = vadd.f32 %v1882, %v1994
      %v1996 = vpop.f32.mrb[0].mxu0
      %v1997 = vadd.f32 %v1884, %v1996
      %1998 = vmatprep.mubr.bf16.mxu0 %v568
      %1999 = vmatmul.mubr.bf16.gmra.mrb[0].mxu0 %v567
      %v2000 = vpop.f32.mrb[0].mxu0
      %v2001 = vadd.f32 %v1888, %v2000
      %v2002 = vpop.f32.mrb[0].mxu0
      %v2003 = vadd.f32 %v1890, %v2002
      %v2004 = vpop.f32.mrb[0].mxu0
      %v2005 = vadd.f32 %v1892, %v2004
      %v2006 = vpop.f32.mrb[0].mxu0
      %v2007 = vadd.f32 %v1894, %v2006
      %2008 = vmatprep.mubr.bf16.mxu0 %v575
      %2009 = vmatmul.mubr.bf16.gmra.mrb[0].mxu0 %v574
      %v2010 = vpop.f32.mrb[0].mxu0
      %v2011 = vadd.f32 %v1898, %v2010
      %v2012 = vpop.f32.mrb[0].mxu0
      %v2013 = vadd.f32 %v1900, %v2012
      %v2014 = vpop.f32.mrb[0].mxu0
      %v2015 = vadd.f32 %v1902, %v2014
      %v2016 = vpop.f32.mrb[0].mxu0
      %v2017 = vadd.f32 %v1904, %v2016
      %2018 = vmatprep.mubr.bf16.mxu0 %v582
      %2019 = vmatmul.mubr.bf16.gmra.mrb[0].mxu0 %v581
      %v2020 = vpop.f32.mrb[0].mxu0
      %v2021 = vadd.f32 %v1908, %v2020
      %v2022 = vpop.f32.mrb[0].mxu0
      %v2023 = vadd.f32 %v1910, %v2022
      %v2024 = vpop.f32.mrb[0].mxu0
      %v2025 = vadd.f32 %v1912, %v2024
      %v2026 = vpop.f32.mrb[0].mxu0
      %v2027 = vadd.f32 %v1914, %v2026
      %2028 = vmatprep.mubr.bf16.mxu0 %v589
      %2029 = vmatmul.mubr.bf16.gmra.mrb[0].mxu0 %v588
      %v2030 = vpop.f32.mrb[0].mxu0
      %v2031 = vadd.f32 %v1918, %v2030
      %v2032 = vpop.f32.mrb[0].mxu0
      %v2033 = vadd.f32 %v1920, %v2032
      %v2034 = vpop.f32.mrb[0].mxu0
      %v2035 = vadd.f32 %v1922, %v2034
      %v2036 = vpop.f32.mrb[0].mxu0
      %v2037 = vadd.f32 %v1924, %v2036
      %2038 = vmatprep.mubr.bf16.mxu0 %v596
      %2039 = vmatmul.mubr.bf16.gmra.mrb[0].mxu0 %v595
      %v2040 = vpop.f32.mrb[0].mxu0
      %v2041 = vadd.f32 %v1928, %v2040
      %v2042 = vpop.f32.mrb[0].mxu0
      %v2043 = vadd.f32 %v1930, %v2042
      %v2044 = vpop.f32.mrb[0].mxu0
      %v2045 = vadd.f32 %v1932, %v2044
      %v2046 = vpop.f32.mrb[0].mxu0
      %v2047 = vadd.f32 %v1934, %v2046
      %2048 = vdwg.mxu0
      %2049 = vmatprep.subr.bf16.mxu0 %v1535
      %2050 = vmatpush1.bf16.msra.mxu0 %v1534
      %2051 = vmatprep.subr.bf16.mxu0 %v1539
      %2052 = vmatpush1.bf16.msra.mxu0 %v1538
      %2053 = vmatprep.subr.bf16.mxu0 %v1543
      %2054 = vmatpush1.bf16.msra.mxu0 %v1542
      %2055 = vmatprep.subr.bf16.mxu0 %v1547
      %2056 = vmatpush1.bf16.msra.mxu0 %v1546
      %2057 = vmatprep.subr.bf16.mxu0 %v1551
      %2058 = vmatpush1.bf16.msra.mxu0 %v1550
      %2059 = vmatprep.subr.bf16.mxu0 %v1555
      %2060 = vmatpush1.bf16.msra.mxu0 %v1554
      %2061 = vmatprep.subr.bf16.mxu0 %v1559
      %2062 = vmatpush1.bf16.msra.mxu0 %v1558
      %2063 = vmatprep.subr.bf16.mxu0 %v1563
      %2064 = vmatpush1.bf16.msra.mxu0 %v1562
      %2065 = vmatprep.subr.bf16.mxu0 %v1567
      %2066 = vmatpush1.bf16.msra.mxu0 %v1566
      %2067 = vmatprep.subr.bf16.mxu0 %v1571
      %2068 = vmatpush1.bf16.msra.mxu0 %v1570
      %2069 = vmatprep.subr.bf16.mxu0 %v1575
      %2070 = vmatpush1.bf16.msra.mxu0 %v1574
      %2071 = vmatprep.subr.bf16.mxu0 %v1579
      %2072 = vmatpush1.bf16.msra.mxu0 %v1578
      %2073 = vmatprep.subr.bf16.mxu0 %v1583
      %2074 = vmatpush1.bf16.msra.mxu0 %v1582
      %2075 = vmatprep.subr.bf16.mxu0 %v1587
      %2076 = vmatpush1.bf16.msra.mxu0 %v1586
      %2077 = vmatprep.subr.bf16.mxu0 %v1591
      %2078 = vmatpush1.bf16.msra.mxu0 %v1590
      %2079 = vmatprep.subr.bf16.mxu0 %v1595
      %2080 = vmatpush1.bf16.msra.mxu0 %v1594
      %2081 = vmatprep.mubr.bf16.mxu0 %v549
      %2082 = vmatmul.mubr.bf16.gmra.mrb[0].mxu0 %v548
      %v2083 = vpop.f32.mrb[0].mxu0
      %v2084 = vadd.f32 %v1971, %v2083
      %v2085 = vpop.f32.mrb[0].mxu0
      %v2086 = vadd.f32 %v1973, %v2085
      %v2087 = vpop.f32.mrb[0].mxu0
      %v2088 = vadd.f32 %v1975, %v2087
      %v2089 = vpop.f32.mrb[0].mxu0
      %v2090 = vadd.f32 %v1977, %v2089
      %2091 = vmatprep.mubr.bf16.mxu0 %v556
      %2092 = vmatmul.mubr.bf16.gmra.mrb[0].mxu0 %v555
      %v2093 = vpop.f32.mrb[0].mxu0
      %v2094 = vadd.f32 %v1981, %v2093
      %v2095 = vpop.f32.mrb[0].mxu0
      %v2096 = vadd.f32 %v1983, %v2095
      %v2097 = vpop.f32.mrb[0].mxu0
      %v2098 = vadd.f32 %v1985, %v2097
      %v2099 = vpop.f32.mrb[0].mxu0
      %v2100 = vadd.f32 %v1987, %v2099
      %2101 = vmatprep.mubr.bf16.mxu0 %v563
      %2102 = vmatmul.mubr.bf16.gmra.mrb[0].mxu0 %v562
      %v2103 = vpop.f32.mrb[0].mxu0
      %v2104 = vadd.f32 %v1991, %v2103
      %v2105 = vpop.f32.mrb[0].mxu0
      %v2106 = vadd.f32 %v1993, %v2105
      %v2107 = vpop.f32.mrb[0].mxu0
      %v2108 = vadd.f32 %v1995, %v2107
      %v2109 = vpop.f32.mrb[0].mxu0
      %v2110 = vadd.f32 %v1997, %v2109
      %2111 = vmatprep.mubr.bf16.mxu0 %v570
      %2112 = vmatmul.mubr.bf16.gmra.mrb[0].mxu0 %v569
      %v2113 = vpop.f32.mrb[0].mxu0
      %v2114 = vadd.f32 %v2001, %v2113
      %v2115 = vpop.f32.mrb[0].mxu0
      %v2116 = vadd.f32 %v2003, %v2115
      %v2117 = vpop.f32.mrb[0].mxu0
      %v2118 = vadd.f32 %v2005, %v2117
      %v2119 = vpop.f32.mrb[0].mxu0
      %v2120 = vadd.f32 %v2007, %v2119
      %2121 = vmatprep.mubr.bf16.mxu0 %v577
      %2122 = vmatmul.mubr.bf16.gmra.mrb[0].mxu0 %v576
      %v2123 = vpop.f32.mrb[0].mxu0
      %v2124 = vadd.f32 %v2011, %v2123
      %v2125 = vpop.f32.mrb[0].mxu0
      %v2126 = vadd.f32 %v2013, %v2125
      %v2127 = vpop.f32.mrb[0].mxu0
      %v2128 = vadd.f32 %v2015, %v2127
      %v2129 = vpop.f32.mrb[0].mxu0
      %v2130 = vadd.f32 %v2017, %v2129
      %2131 = vmatprep.mubr.bf16.mxu0 %v584
      %2132 = vmatmul.mubr.bf16.gmra.mrb[0].mxu0 %v583
      %v2133 = vpop.f32.mrb[0].mxu0
      %v2134 = vadd.f32 %v2021, %v2133
      %v2135 = vpop.f32.mrb[0].mxu0
      %v2136 = vadd.f32 %v2023, %v2135
      %v2137 = vpop.f32.mrb[0].mxu0
      %v2138 = vadd.f32 %v2025, %v2137
      %v2139 = vpop.f32.mrb[0].mxu0
      %v2140 = vadd.f32 %v2027, %v2139
      %2141 = vmatprep.mubr.bf16.mxu0 %v591
      %2142 = vmatmul.mubr.bf16.gmra.mrb[0].mxu0 %v590
      %v2143 = vpop.f32.mrb[0].mxu0
      %v2144 = vadd.f32 %v2031, %v2143
      %v2145 = vpop.f32.mrb[0].mxu0
      %v2146 = vadd.f32 %v2033, %v2145
      %v2147 = vpop.f32.mrb[0].mxu0
      %v2148 = vadd.f32 %v2035, %v2147
      %v2149 = vpop.f32.mrb[0].mxu0
      %v2150 = vadd.f32 %v2037, %v2149
      %2151 = vmatprep.mubr.bf16.mxu0 %v598
      %2152 = vmatmul.mubr.bf16.gmra.mrb[0].mxu0 %v597
      %v2153 = vpop.f32.mrb[0].mxu0
      %v2154 = vadd.f32 %v2041, %v2153
      %v2155 = vpop.f32.mrb[0].mxu0
      %v2156 = vadd.f32 %v2043, %v2155
      %v2157 = vpop.f32.mrb[0].mxu0
      %v2158 = vadd.f32 %v2045, %v2157
      %v2159 = vpop.f32.mrb[0].mxu0
      %v2160 = vadd.f32 %v2047, %v2159
      %2161 = vdwg.mxu0
      %2162 = vmatprep.subr.bf16.mxu0 %v1599
      %2163 = vmatpush1.bf16.msra.mxu0 %v1598
      %2164 = vmatprep.subr.bf16.mxu0 0
      %2165 = vmatpush1.bf16.msra.mxu0 0
      %2166 = vmatprep.subr.bf16.mxu0 0
      %2167 = vmatpush1.bf16.msra.mxu0 0
      %2168 = vmatprep.subr.bf16.mxu0 0
      %2169 = vmatpush1.bf16.msra.mxu0 0
      %2170 = vmatprep.subr.bf16.mxu0 0
      %2171 = vmatpush1.bf16.msra.mxu0 0
      %2172 = vmatprep.subr.bf16.mxu0 0
      %2173 = vmatpush1.bf16.msra.mxu0 0
      %2174 = vmatprep.subr.bf16.mxu0 0
      %2175 = vmatpush1.bf16.msra.mxu0 0
      %2176 = vmatprep.subr.bf16.mxu0 0
      %2177 = vmatpush1.bf16.msra.mxu0 0
      %2178 = vmatprep.subr.bf16.mxu0 0
      %2179 = vmatpush1.bf16.msra.mxu0 0
      %2180 = vmatprep.subr.bf16.mxu0 0
      %2181 = vmatpush1.bf16.msra.mxu0 0
      %2182 = vmatprep.subr.bf16.mxu0 0
      %2183 = vmatpush1.bf16.msra.mxu0 0
      %2184 = vmatprep.subr.bf16.mxu0 0
      %2185 = vmatpush1.bf16.msra.mxu0 0
      %2186 = vmatprep.subr.bf16.mxu0 0
      %2187 = vmatpush1.bf16.msra.mxu0 0
      %2188 = vmatprep.subr.bf16.mxu0 0
      %2189 = vmatpush1.bf16.msra.mxu0 0
      %2190 = vmatprep.subr.bf16.mxu0 0
      %2191 = vmatpush1.bf16.msra.mxu0 0
      %2192 = vmatprep.subr.bf16.mxu0 0
      %2193 = vmatpush1.bf16.msra.mxu0 0
      %2194 = vmatprep.mubr.bf16.mxu0 0
      %2195 = vmatmul.mubr.bf16.gmra.mrb[0].mxu0 %v1800
      %v2196 = vpop.f32.mrb[0].mxu0
      %v2197 = vadd.f32 %v2084, %v2196
      %v2198 = vpop.f32.mrb[0].mxu0
      %v2199 = vadd.f32 %v2086, %v2198
      %v2200 = vpop.f32.mrb[0].mxu0
      %v2201 = vadd.f32 %v2088, %v2200
      %v2202 = vpop.f32.mrb[0].mxu0
      %v2203 = vadd.f32 %v2090, %v2202
      %2204 = vmatprep.mubr.bf16.mxu0 0
      %2205 = vmatmul.mubr.bf16.gmra.mrb[0].mxu0 %v1803
      %v2206 = vpop.f32.mrb[0].mxu0
      %v2207 = vadd.f32 %v2094, %v2206
      %v2208 = vpop.f32.mrb[0].mxu0
      %v2209 = vadd.f32 %v2096, %v2208
      %v2210 = vpop.f32.mrb[0].mxu0
      %v2211 = vadd.f32 %v2098, %v2210
      %v2212 = vpop.f32.mrb[0].mxu0
      %v2213 = vadd.f32 %v2100, %v2212
      %2214 = vmatprep.mubr.bf16.mxu0 0
      %2215 = vmatmul.mubr.bf16.gmra.mrb[0].mxu0 %v1806
      %v2216 = vpop.f32.mrb[0].mxu0
      %v2217 = vadd.f32 %v2104, %v2216
      %v2218 = vpop.f32.mrb[0].mxu0
      %v2219 = vadd.f32 %v2106, %v2218
      %v2220 = vpop.f32.mrb[0].mxu0
      %v2221 = vadd.f32 %v2108, %v2220
      %v2222 = vpop.f32.mrb[0].mxu0
      %v2223 = vadd.f32 %v2110, %v2222
      %2224 = vmatprep.mubr.bf16.mxu0 0
      %2225 = vmatmul.mubr.bf16.gmra.mrb[0].mxu0 %v1809
      %v2226 = vpop.f32.mrb[0].mxu0
      %v2227 = vadd.f32 %v2114, %v2226
      %v2228 = vpop.f32.mrb[0].mxu0
      %v2229 = vadd.f32 %v2116, %v2228
      %v2230 = vpop.f32.mrb[0].mxu0
      %v2231 = vadd.f32 %v2118, %v2230
      %v2232 = vpop.f32.mrb[0].mxu0
      %v2233 = vadd.f32 %v2120, %v2232
      %2234 = vmatprep.mubr.bf16.mxu0 0
      %2235 = vmatmul.mubr.bf16.gmra.mrb[0].mxu0 %v1812
      %v2236 = vpop.f32.mrb[0].mxu0
      %v2237 = vadd.f32 %v2124, %v2236
      %v2238 = vpop.f32.mrb[0].mxu0
      %v2239 = vadd.f32 %v2126, %v2238
      %v2240 = vpop.f32.mrb[0].mxu0
      %v2241 = vadd.f32 %v2128, %v2240
      %v2242 = vpop.f32.mrb[0].mxu0
      %v2243 = vadd.f32 %v2130, %v2242
      %2244 = vmatprep.mubr.bf16.mxu0 0
      %2245 = vmatmul.mubr.bf16.gmra.mrb[0].mxu0 %v1815
      %v2246 = vpop.f32.mrb[0].mxu0
      %v2247 = vadd.f32 %v2134, %v2246
      %v2248 = vpop.f32.mrb[0].mxu0
      %v2249 = vadd.f32 %v2136, %v2248
      %v2250 = vpop.f32.mrb[0].mxu0
      %v2251 = vadd.f32 %v2138, %v2250
      %v2252 = vpop.f32.mrb[0].mxu0
      %v2253 = vadd.f32 %v2140, %v2252
      %2254 = vmatprep.mubr.bf16.mxu0 0
      %2255 = vmatmul.mubr.bf16.gmra.mrb[0].mxu0 %v1818
      %v2256 = vpop.f32.mrb[0].mxu0
      %v2257 = vadd.f32 %v2144, %v2256
      %v2258 = vpop.f32.mrb[0].mxu0
      %v2259 = vadd.f32 %v2146, %v2258
      %v2260 = vpop.f32.mrb[0].mxu0
      %v2261 = vadd.f32 %v2148, %v2260
      %v2262 = vpop.f32.mrb[0].mxu0
      %v2263 = vadd.f32 %v2150, %v2262
      %2264 = vmatprep.mubr.bf16.mxu0 0
      %2265 = vmatmul.mubr.bf16.gmra.mrb[0].mxu0 %v1821
      %v2266 = vpop.f32.mrb[0].mxu0
      %v2267 = vadd.f32 %v2154, %v2266
      %v2268 = vpop.f32.mrb[0].mxu0
      %v2269 = vadd.f32 %v2156, %v2268
      %v2270 = vpop.f32.mrb[0].mxu0
      %v2271 = vadd.f32 %v2158, %v2270
      %v2272 = vpop.f32.mrb[0].mxu0
      %v2273 = vadd.f32 %v2160, %v2272
      %2274 = vdwg.mxu0
      %2275 = vmatprep.subr.bf16.mxu0 %v1409
      %2276 = vmatpush1.bf16.msra.mxu0 %v1408
      %2277 = vmatprep.subr.bf16.mxu0 %v1413
      %2278 = vmatpush1.bf16.msra.mxu0 %v1412
      %2279 = vmatprep.subr.bf16.mxu0 %v1417
      %2280 = vmatpush1.bf16.msra.mxu0 %v1416
      %2281 = vmatprep.subr.bf16.mxu0 %v1421
      %2282 = vmatpush1.bf16.msra.mxu0 %v1420
      %2283 = vmatprep.subr.bf16.mxu0 %v1425
      %2284 = vmatpush1.bf16.msra.mxu0 %v1424
      %2285 = vmatprep.subr.bf16.mxu0 %v1429
      %2286 = vmatpush1.bf16.msra.mxu0 %v1428
      %2287 = vmatprep.subr.bf16.mxu0 %v1433
      %2288 = vmatpush1.bf16.msra.mxu0 %v1432
      %2289 = vmatprep.subr.bf16.mxu0 %v1437
      %2290 = vmatpush1.bf16.msra.mxu0 %v1436
      %2291 = vmatprep.subr.bf16.mxu0 %v1441
      %2292 = vmatpush1.bf16.msra.mxu0 %v1440
      %2293 = vmatprep.subr.bf16.mxu0 %v1445
      %2294 = vmatpush1.bf16.msra.mxu0 %v1444
      %2295 = vmatprep.subr.bf16.mxu0 %v1449
      %2296 = vmatpush1.bf16.msra.mxu0 %v1448
      %2297 = vmatprep.subr.bf16.mxu0 %v1453
      %2298 = vmatpush1.bf16.msra.mxu0 %v1452
      %2299 = vmatprep.subr.bf16.mxu0 %v1457
      %2300 = vmatpush1.bf16.msra.mxu0 %v1456
      %2301 = vmatprep.subr.bf16.mxu0 %v1461
      %2302 = vmatpush1.bf16.msra.mxu0 %v1460
      %2303 = vmatprep.subr.bf16.mxu0 %v1465
      %2304 = vmatpush1.bf16.msra.mxu0 %v1464
      %2305 = vmatprep.subr.bf16.mxu0 %v1469
      %2306 = vmatpush1.bf16.msra.mxu0 %v1468
      %2307 = vmatprep.mubr.bf16.mxu0 %v545
      %2308 = vmatmul.mubr.bf16.gmra.mrb[0].mxu0 %v544
      %v2309 = vpop.f32.mrb[0].mxu0
      %v2310 = vadd.f32 %v809, %v2309
      %v2311 = vpop.f32.mrb[0].mxu0
      %v2312 = vadd.f32 %v813, %v2311
      %v2313 = vpop.f32.mrb[0].mxu0
      %v2314 = vadd.f32 %v809, %v2313
      %v2315 = vpop.f32.mrb[0].mxu0
      %v2316 = vadd.f32 %v813, %v2315
      %2317 = vmatprep.mubr.bf16.mxu0 %v552
      %2318 = vmatmul.mubr.bf16.gmra.mrb[0].mxu0 %v551
      %v2319 = vpop.f32.mrb[0].mxu0
      %v2320 = vadd.f32 %v809, %v2319
      %v2321 = vpop.f32.mrb[0].mxu0
      %v2322 = vadd.f32 %v813, %v2321
      %v2323 = vpop.f32.mrb[0].mxu0
      %v2324 = vadd.f32 %v809, %v2323
      %v2325 = vpop.f32.mrb[0].mxu0
      %v2326 = vadd.f32 %v813, %v2325
      %2327 = vmatprep.mubr.bf16.mxu0 %v559
      %2328 = vmatmul.mubr.bf16.gmra.mrb[0].mxu0 %v558
      %v2329 = vpop.f32.mrb[0].mxu0
      %v2330 = vadd.f32 %v809, %v2329
      %v2331 = vpop.f32.mrb[0].mxu0
      %v2332 = vadd.f32 %v813, %v2331
      %v2333 = vpop.f32.mrb[0].mxu0
      %v2334 = vadd.f32 %v809, %v2333
      %v2335 = vpop.f32.mrb[0].mxu0
      %v2336 = vadd.f32 %v813, %v2335
      %2337 = vmatprep.mubr.bf16.mxu0 %v566
      %2338 = vmatmul.mubr.bf16.gmra.mrb[0].mxu0 %v565
      %v2339 = vpop.f32.mrb[0].mxu0
      %v2340 = vadd.f32 %v809, %v2339
      %v2341 = vpop.f32.mrb[0].mxu0
      %v2342 = vadd.f32 %v813, %v2341
      %v2343 = vpop.f32.mrb[0].mxu0
      %v2344 = vadd.f32 %v809, %v2343
      %v2345 = vpop.f32.mrb[0].mxu0
      %v2346 = vadd.f32 %v813, %v2345
      %2347 = vmatprep.mubr.bf16.mxu0 %v573
      %2348 = vmatmul.mubr.bf16.gmra.mrb[0].mxu0 %v572
      %v2349 = vpop.f32.mrb[0].mxu0
      %v2350 = vadd.f32 %v809, %v2349
      %v2351 = vpop.f32.mrb[0].mxu0
      %v2352 = vadd.f32 %v813, %v2351
      %v2353 = vpop.f32.mrb[0].mxu0
      %v2354 = vadd.f32 %v809, %v2353
      %v2355 = vpop.f32.mrb[0].mxu0
      %v2356 = vadd.f32 %v813, %v2355
      %2357 = vmatprep.mubr.bf16.mxu0 %v580
      %2358 = vmatmul.mubr.bf16.gmra.mrb[0].mxu0 %v579
      %v2359 = vpop.f32.mrb[0].mxu0
      %v2360 = vadd.f32 %v809, %v2359
      %v2361 = vpop.f32.mrb[0].mxu0
      %v2362 = vadd.f32 %v813, %v2361
      %v2363 = vpop.f32.mrb[0].mxu0
      %v2364 = vadd.f32 %v809, %v2363
      %v2365 = vpop.f32.mrb[0].mxu0
      %v2366 = vadd.f32 %v813, %v2365
      %2367 = vmatprep.mubr.bf16.mxu0 %v587
      %2368 = vmatmul.mubr.bf16.gmra.mrb[0].mxu0 %v586
      %v2369 = vpop.f32.mrb[0].mxu0
      %v2370 = vadd.f32 %v809, %v2369
      %v2371 = vpop.f32.mrb[0].mxu0
      %v2372 = vadd.f32 %v813, %v2371
      %v2373 = vpop.f32.mrb[0].mxu0
      %v2374 = vadd.f32 %v809, %v2373
      %v2375 = vpop.f32.mrb[0].mxu0
      %v2376 = vadd.f32 %v813, %v2375
      %2377 = vmatprep.mubr.bf16.mxu0 %v594
      %2378 = vmatmul.mubr.bf16.gmra.mrb[0].mxu0 %v593
      %v2379 = vpop.f32.mrb[0].mxu0
      %v2380 = vadd.f32 %v809, %v2379
      %v2381 = vpop.f32.mrb[0].mxu0
      %v2382 = vadd.f32 %v813, %v2381
      %v2383 = vpop.f32.mrb[0].mxu0
      %v2384 = vadd.f32 %v809, %v2383
      %v2385 = vpop.f32.mrb[0].mxu0
      %v2386 = vadd.f32 %v813, %v2385
      %2387 = vdwg.mxu0
      %2388 = vmatprep.subr.bf16.mxu0 %v1473
      %2389 = vmatpush1.bf16.msra.mxu0 %v1472
      %2390 = vmatprep.subr.bf16.mxu0 %v1477
      %2391 = vmatpush1.bf16.msra.mxu0 %v1476
      %2392 = vmatprep.subr.bf16.mxu0 %v1481
      %2393 = vmatpush1.bf16.msra.mxu0 %v1480
      %2394 = vmatprep.subr.bf16.mxu0 %v1485
      %2395 = vmatpush1.bf16.msra.mxu0 %v1484
      %2396 = vmatprep.subr.bf16.mxu0 %v1489
      %2397 = vmatpush1.bf16.msra.mxu0 %v1488
      %2398 = vmatprep.subr.bf16.mxu0 %v1493
      %2399 = vmatpush1.bf16.msra.mxu0 %v1492
      %2400 = vmatprep.subr.bf16.mxu0 %v1497
      %2401 = vmatpush1.bf16.msra.mxu0 %v1496
      %2402 = vmatprep.subr.bf16.mxu0 %v1501
      %2403 = vmatpush1.bf16.msra.mxu0 %v1500
      %2404 = vmatprep.subr.bf16.mxu0 %v1505
      %2405 = vmatpush1.bf16.msra.mxu0 %v1504
      %2406 = vmatprep.subr.bf16.mxu0 %v1509
      %2407 = vmatpush1.bf16.msra.mxu0 %v1508
      %2408 = vmatprep.subr.bf16.mxu0 %v1513
      %2409 = vmatpush1.bf16.msra.mxu0 %v1512
      %2410 = vmatprep.subr.bf16.mxu0 %v1517
      %2411 = vmatpush1.bf16.msra.mxu0 %v1516
      %2412 = vmatprep.subr.bf16.mxu0 %v1521
      %2413 = vmatpush1.bf16.msra.mxu0 %v1520
      %2414 = vmatprep.subr.bf16.mxu0 %v1525
      %2415 = vmatpush1.bf16.msra.mxu0 %v1524
      %2416 = vmatprep.subr.bf16.mxu0 %v1529
      %2417 = vmatpush1.bf16.msra.mxu0 %v1528
      %2418 = vmatprep.subr.bf16.mxu0 %v1533
      %2419 = vmatpush1.bf16.msra.mxu0 %v1532
      %2420 = vmatprep.mubr.bf16.mxu0 %v547
      %2421 = vmatmul.mubr.bf16.gmra.mrb[0].mxu0 %v546
      %v2422 = vpop.f32.mrb[0].mxu0
      %v2423 = vadd.f32 %v2310, %v2422
      %v2424 = vpop.f32.mrb[0].mxu0
      %v2425 = vadd.f32 %v2312, %v2424
      %v2426 = vpop.f32.mrb[0].mxu0
      %v2427 = vadd.f32 %v2314, %v2426
      %v2428 = vpop.f32.mrb[0].mxu0
      %v2429 = vadd.f32 %v2316, %v2428
      %2430 = vmatprep.mubr.bf16.mxu0 %v554
      %2431 = vmatmul.mubr.bf16.gmra.mrb[0].mxu0 %v553
      %v2432 = vpop.f32.mrb[0].mxu0
      %v2433 = vadd.f32 %v2320, %v2432
      %v2434 = vpop.f32.mrb[0].mxu0
      %v2435 = vadd.f32 %v2322, %v2434
      %v2436 = vpop.f32.mrb[0].mxu0
      %v2437 = vadd.f32 %v2324, %v2436
      %v2438 = vpop.f32.mrb[0].mxu0
      %v2439 = vadd.f32 %v2326, %v2438
      %2440 = vmatprep.mubr.bf16.mxu0 %v561
      %2441 = vmatmul.mubr.bf16.gmra.mrb[0].mxu0 %v560
      %v2442 = vpop.f32.mrb[0].mxu0
      %v2443 = vadd.f32 %v2330, %v2442
      %v2444 = vpop.f32.mrb[0].mxu0
      %v2445 = vadd.f32 %v2332, %v2444
      %v2446 = vpop.f32.mrb[0].mxu0
      %v2447 = vadd.f32 %v2334, %v2446
      %v2448 = vpop.f32.mrb[0].mxu0
      %v2449 = vadd.f32 %v2336, %v2448
      %2450 = vmatprep.mubr.bf16.mxu0 %v568
      %2451 = vmatmul.mubr.bf16.gmra.mrb[0].mxu0 %v567
      %v2452 = vpop.f32.mrb[0].mxu0
      %v2453 = vadd.f32 %v2340, %v2452
      %v2454 = vpop.f32.mrb[0].mxu0
      %v2455 = vadd.f32 %v2342, %v2454
      %v2456 = vpop.f32.mrb[0].mxu0
      %v2457 = vadd.f32 %v2344, %v2456
      %v2458 = vpop.f32.mrb[0].mxu0
      %v2459 = vadd.f32 %v2346, %v2458
      %2460 = vmatprep.mubr.bf16.mxu0 %v575
      %2461 = vmatmul.mubr.bf16.gmra.mrb[0].mxu0 %v574
      %v2462 = vpop.f32.mrb[0].mxu0
      %v2463 = vadd.f32 %v2350, %v2462
      %v2464 = vpop.f32.mrb[0].mxu0
      %v2465 = vadd.f32 %v2352, %v2464
      %v2466 = vpop.f32.mrb[0].mxu0
      %v2467 = vadd.f32 %v2354, %v2466
      %v2468 = vpop.f32.mrb[0].mxu0
      %v2469 = vadd.f32 %v2356, %v2468
      %2470 = vmatprep.mubr.bf16.mxu0 %v582
      %2471 = vmatmul.mubr.bf16.gmra.mrb[0].mxu0 %v581
      %v2472 = vpop.f32.mrb[0].mxu0
      %v2473 = vadd.f32 %v2360, %v2472
      %v2474 = vpop.f32.mrb[0].mxu0
      %v2475 = vadd.f32 %v2362, %v2474
      %v2476 = vpop.f32.mrb[0].mxu0
      %v2477 = vadd.f32 %v2364, %v2476
      %v2478 = vpop.f32.mrb[0].mxu0
      %v2479 = vadd.f32 %v2366, %v2478
      %2480 = vmatprep.mubr.bf16.mxu0 %v589
      %2481 = vmatmul.mubr.bf16.gmra.mrb[0].mxu0 %v588
      %v2482 = vpop.f32.mrb[0].mxu0
      %v2483 = vadd.f32 %v2370, %v2482
      %v2484 = vpop.f32.mrb[0].mxu0
      %v2485 = vadd.f32 %v2372, %v2484
      %v2486 = vpop.f32.mrb[0].mxu0
      %v2487 = vadd.f32 %v2374, %v2486
      %v2488 = vpop.f32.mrb[0].mxu0
      %v2489 = vadd.f32 %v2376, %v2488
      %2490 = vmatprep.mubr.bf16.mxu0 %v596
      %2491 = vmatmul.mubr.bf16.gmra.mrb[0].mxu0 %v595
      %v2492 = vpop.f32.mrb[0].mxu0
      %v2493 = vadd.f32 %v2380, %v2492
      %v2494 = vpop.f32.mrb[0].mxu0
      %v2495 = vadd.f32 %v2382, %v2494
      %v2496 = vpop.f32.mrb[0].mxu0
      %v2497 = vadd.f32 %v2384, %v2496
      %v2498 = vpop.f32.mrb[0].mxu0
      %v2499 = vadd.f32 %v2386, %v2498
      %2500 = vdwg.mxu0
      %2501 = vmatprep.subr.bf16.mxu0 %v1537
      %2502 = vmatpush1.bf16.msra.mxu0 %v1536
      %2503 = vmatprep.subr.bf16.mxu0 %v1541
      %2504 = vmatpush1.bf16.msra.mxu0 %v1540
      %2505 = vmatprep.subr.bf16.mxu0 %v1545
      %2506 = vmatpush1.bf16.msra.mxu0 %v1544
      %2507 = vmatprep.subr.bf16.mxu0 %v1549
      %2508 = vmatpush1.bf16.msra.mxu0 %v1548
      %2509 = vmatprep.subr.bf16.mxu0 %v1553
      %2510 = vmatpush1.bf16.msra.mxu0 %v1552
      %2511 = vmatprep.subr.bf16.mxu0 %v1557
      %2512 = vmatpush1.bf16.msra.mxu0 %v1556
      %2513 = vmatprep.subr.bf16.mxu0 %v1561
      %2514 = vmatpush1.bf16.msra.mxu0 %v1560
      %2515 = vmatprep.subr.bf16.mxu0 %v1565
      %2516 = vmatpush1.bf16.msra.mxu0 %v1564
      %2517 = vmatprep.subr.bf16.mxu0 %v1569
      %2518 = vmatpush1.bf16.msra.mxu0 %v1568
      %2519 = vmatprep.subr.bf16.mxu0 %v1573
      %2520 = vmatpush1.bf16.msra.mxu0 %v1572
      %2521 = vmatprep.subr.bf16.mxu0 %v1577
      %2522 = vmatpush1.bf16.msra.mxu0 %v1576
      %2523 = vmatprep.subr.bf16.mxu0 %v1581
      %2524 = vmatpush1.bf16.msra.mxu0 %v1580
      %2525 = vmatprep.subr.bf16.mxu0 %v1585
      %2526 = vmatpush1.bf16.msra.mxu0 %v1584
      %2527 = vmatprep.subr.bf16.mxu0 %v1589
      %2528 = vmatpush1.bf16.msra.mxu0 %v1588
      %2529 = vmatprep.subr.bf16.mxu0 %v1593
      %2530 = vmatpush1.bf16.msra.mxu0 %v1592
      %2531 = vmatprep.subr.bf16.mxu0 %v1597
      %2532 = vmatpush1.bf16.msra.mxu0 %v1596
      %2533 = vmatprep.mubr.bf16.mxu0 %v549
      %2534 = vmatmul.mubr.bf16.gmra.mrb[0].mxu0 %v548
      %v2535 = vpop.f32.mrb[0].mxu0
      %v2536 = vadd.f32 %v2423, %v2535
      %v2537 = vpop.f32.mrb[0].mxu0
      %v2538 = vadd.f32 %v2425, %v2537
      %v2539 = vpop.f32.mrb[0].mxu0
      %v2540 = vadd.f32 %v2427, %v2539
      %v2541 = vpop.f32.mrb[0].mxu0
      %v2542 = vadd.f32 %v2429, %v2541
      %2543 = vmatprep.mubr.bf16.mxu0 %v556
      %2544 = vmatmul.mubr.bf16.gmra.mrb[0].mxu0 %v555
      %v2545 = vpop.f32.mrb[0].mxu0
      %v2546 = vadd.f32 %v2433, %v2545
      %v2547 = vpop.f32.mrb[0].mxu0
      %v2548 = vadd.f32 %v2435, %v2547
      %v2549 = vpop.f32.mrb[0].mxu0
      %v2550 = vadd.f32 %v2437, %v2549
      %v2551 = vpop.f32.mrb[0].mxu0
      %v2552 = vadd.f32 %v2439, %v2551
      %2553 = vmatprep.mubr.bf16.mxu0 %v563
      %2554 = vmatmul.mubr.bf16.gmra.mrb[0].mxu0 %v562
      %v2555 = vpop.f32.mrb[0].mxu0
      %v2556 = vadd.f32 %v2443, %v2555
      %v2557 = vpop.f32.mrb[0].mxu0
      %v2558 = vadd.f32 %v2445, %v2557
      %v2559 = vpop.f32.mrb[0].mxu0
      %v2560 = vadd.f32 %v2447, %v2559
      %v2561 = vpop.f32.mrb[0].mxu0
      %v2562 = vadd.f32 %v2449, %v2561
      %2563 = vmatprep.mubr.bf16.mxu0 %v570
      %2564 = vmatmul.mubr.bf16.gmra.mrb[0].mxu0 %v569
      %v2565 = vpop.f32.mrb[0].mxu0
      %v2566 = vadd.f32 %v2453, %v2565
      %v2567 = vpop.f32.mrb[0].mxu0
      %v2568 = vadd.f32 %v2455, %v2567
      %v2569 = vpop.f32.mrb[0].mxu0
      %v2570 = vadd.f32 %v2457, %v2569
      %v2571 = vpop.f32.mrb[0].mxu0
      %v2572 = vadd.f32 %v2459, %v2571
      %2573 = vmatprep.mubr.bf16.mxu0 %v577
      %2574 = vmatmul.mubr.bf16.gmra.mrb[0].mxu0 %v576
      %v2575 = vpop.f32.mrb[0].mxu0
      %v2576 = vadd.f32 %v2463, %v2575
      %v2577 = vpop.f32.mrb[0].mxu0
      %v2578 = vadd.f32 %v2465, %v2577
      %v2579 = vpop.f32.mrb[0].mxu0
      %v2580 = vadd.f32 %v2467, %v2579
      %v2581 = vpop.f32.mrb[0].mxu0
      %v2582 = vadd.f32 %v2469, %v2581
      %2583 = vmatprep.mubr.bf16.mxu0 %v584
      %2584 = vmatmul.mubr.bf16.gmra.mrb[0].mxu0 %v583
      %v2585 = vpop.f32.mrb[0].mxu0
      %v2586 = vadd.f32 %v2473, %v2585
      %v2587 = vpop.f32.mrb[0].mxu0
      %v2588 = vadd.f32 %v2475, %v2587
      %v2589 = vpop.f32.mrb[0].mxu0
      %v2590 = vadd.f32 %v2477, %v2589
      %v2591 = vpop.f32.mrb[0].mxu0
      %v2592 = vadd.f32 %v2479, %v2591
      %2593 = vmatprep.mubr.bf16.mxu0 %v591
      %2594 = vmatmul.mubr.bf16.gmra.mrb[0].mxu0 %v590
      %v2595 = vpop.f32.mrb[0].mxu0
      %v2596 = vadd.f32 %v2483, %v2595
      %v2597 = vpop.f32.mrb[0].mxu0
      %v2598 = vadd.f32 %v2485, %v2597
      %v2599 = vpop.f32.mrb[0].mxu0
      %v2600 = vadd.f32 %v2487, %v2599
      %v2601 = vpop.f32.mrb[0].mxu0
      %v2602 = vadd.f32 %v2489, %v2601
      %2603 = vmatprep.mubr.bf16.mxu0 %v598
      %2604 = vmatmul.mubr.bf16.gmra.mrb[0].mxu0 %v597
      %v2605 = vpop.f32.mrb[0].mxu0
      %v2606 = vadd.f32 %v2493, %v2605
      %v2607 = vpop.f32.mrb[0].mxu0
      %v2608 = vadd.f32 %v2495, %v2607
      %v2609 = vpop.f32.mrb[0].mxu0
      %v2610 = vadd.f32 %v2497, %v2609
      %v2611 = vpop.f32.mrb[0].mxu0
      %v2612 = vadd.f32 %v2499, %v2611
      %2613 = vdwg.mxu0
      %2614 = vmatprep.subr.bf16.mxu0 %v1601
      %2615 = vmatpush1.bf16.msra.mxu0 %v1600
      %2616 = vmatprep.subr.bf16.mxu0 0
      %2617 = vmatpush1.bf16.msra.mxu0 0
      %2618 = vmatprep.subr.bf16.mxu0 0
      %2619 = vmatpush1.bf16.msra.mxu0 0
      %2620 = vmatprep.subr.bf16.mxu0 0
      %2621 = vmatpush1.bf16.msra.mxu0 0
      %2622 = vmatprep.subr.bf16.mxu0 0
      %2623 = vmatpush1.bf16.msra.mxu0 0
      %2624 = vmatprep.subr.bf16.mxu0 0
      %2625 = vmatpush1.bf16.msra.mxu0 0
      %2626 = vmatprep.subr.bf16.mxu0 0
      %2627 = vmatpush1.bf16.msra.mxu0 0
      %2628 = vmatprep.subr.bf16.mxu0 0
      %2629 = vmatpush1.bf16.msra.mxu0 0
      %2630 = vmatprep.subr.bf16.mxu0 0
      %2631 = vmatpush1.bf16.msra.mxu0 0
      %2632 = vmatprep.subr.bf16.mxu0 0
      %2633 = vmatpush1.bf16.msra.mxu0 0
      %2634 = vmatprep.subr.bf16.mxu0 0
      %2635 = vmatpush1.bf16.msra.mxu0 0
      %2636 = vmatprep.subr.bf16.mxu0 0
      %2637 = vmatpush1.bf16.msra.mxu0 0
      %2638 = vmatprep.subr.bf16.mxu0 0
      %2639 = vmatpush1.bf16.msra.mxu0 0
      %2640 = vmatprep.subr.bf16.mxu0 0
      %2641 = vmatpush1.bf16.msra.mxu0 0
      %2642 = vmatprep.subr.bf16.mxu0 0
      %2643 = vmatpush1.bf16.msra.mxu0 0
      %2644 = vmatprep.subr.bf16.mxu0 0
      %2645 = vmatpush1.bf16.msra.mxu0 0
      %2646 = vmatprep.mubr.bf16.mxu0 0
      %2647 = vmatmul.mubr.bf16.gmra.mrb[0].mxu0 %v1800
      %v2648 = vpop.f32.mrb[0].mxu0
      %v2649 = vadd.f32 %v2536, %v2648
      %v2650 = vpop.f32.mrb[0].mxu0
      %v2651 = vadd.f32 %v2538, %v2650
      %v2652 = vpop.f32.mrb[0].mxu0
      %v2653 = vadd.f32 %v2540, %v2652
      %v2654 = vpop.f32.mrb[0].mxu0
      %v2655 = vadd.f32 %v2542, %v2654
      %2656 = vmatprep.mubr.bf16.mxu0 0
      %2657 = vmatmul.mubr.bf16.gmra.mrb[0].mxu0 %v1803
      %v2658 = vpop.f32.mrb[0].mxu0
      %v2659 = vadd.f32 %v2546, %v2658
      %v2660 = vpop.f32.mrb[0].mxu0
      %v2661 = vadd.f32 %v2548, %v2660
      %v2662 = vpop.f32.mrb[0].mxu0
      %v2663 = vadd.f32 %v2550, %v2662
      %v2664 = vpop.f32.mrb[0].mxu0
      %v2665 = vadd.f32 %v2552, %v2664
      %2666 = vmatprep.mubr.bf16.mxu0 0
      %2667 = vmatmul.mubr.bf16.gmra.mrb[0].mxu0 %v1806
      %v2668 = vpop.f32.mrb[0].mxu0
      %v2669 = vadd.f32 %v2556, %v2668
      %v2670 = vpop.f32.mrb[0].mxu0
      %v2671 = vadd.f32 %v2558, %v2670
      %v2672 = vpop.f32.mrb[0].mxu0
      %v2673 = vadd.f32 %v2560, %v2672
      %v2674 = vpop.f32.mrb[0].mxu0
      %v2675 = vadd.f32 %v2562, %v2674
      %2676 = vmatprep.mubr.bf16.mxu0 0
      %2677 = vmatmul.mubr.bf16.gmra.mrb[0].mxu0 %v1809
      %v2678 = vpop.f32.mrb[0].mxu0
      %v2679 = vadd.f32 %v2566, %v2678
      %v2680 = vpop.f32.mrb[0].mxu0
      %v2681 = vadd.f32 %v2568, %v2680
      %v2682 = vpop.f32.mrb[0].mxu0
      %v2683 = vadd.f32 %v2570, %v2682
      %v2684 = vpop.f32.mrb[0].mxu0
      %v2685 = vadd.f32 %v2572, %v2684
      %2686 = vmatprep.mubr.bf16.mxu0 0
      %2687 = vmatmul.mubr.bf16.gmra.mrb[0].mxu0 %v1812
      %v2688 = vpop.f32.mrb[0].mxu0
      %v2689 = vadd.f32 %v2576, %v2688
      %v2690 = vpop.f32.mrb[0].mxu0
      %v2691 = vadd.f32 %v2578, %v2690
      %v2692 = vpop.f32.mrb[0].mxu0
      %v2693 = vadd.f32 %v2580, %v2692
      %v2694 = vpop.f32.mrb[0].mxu0
      %v2695 = vadd.f32 %v2582, %v2694
      %2696 = vmatprep.mubr.bf16.mxu0 0
      %2697 = vmatmul.mubr.bf16.gmra.mrb[0].mxu0 %v1815
      %v2698 = vpop.f32.mrb[0].mxu0
      %v2699 = vadd.f32 %v2586, %v2698
      %v2700 = vpop.f32.mrb[0].mxu0
      %v2701 = vadd.f32 %v2588, %v2700
      %v2702 = vpop.f32.mrb[0].mxu0
      %v2703 = vadd.f32 %v2590, %v2702
      %v2704 = vpop.f32.mrb[0].mxu0
      %v2705 = vadd.f32 %v2592, %v2704
      %2706 = vmatprep.mubr.bf16.mxu0 0
      %2707 = vmatmul.mubr.bf16.gmra.mrb[0].mxu0 %v1818
      %v2708 = vpop.f32.mrb[0].mxu0
      %v2709 = vadd.f32 %v2596, %v2708
      %v2710 = vpop.f32.mrb[0].mxu0
      %v2711 = vadd.f32 %v2598, %v2710
      %v2712 = vpop.f32.mrb[0].mxu0
      %v2713 = vadd.f32 %v2600, %v2712
      %v2714 = vpop.f32.mrb[0].mxu0
      %v2715 = vadd.f32 %v2602, %v2714
      %2716 = vmatprep.mubr.bf16.mxu0 0
      %2717 = vmatmul.mubr.bf16.gmra.mrb[0].mxu0 %v1821
      %v2718 = vpop.f32.mrb[0].mxu0
      %v2719 = vadd.f32 %v2606, %v2718
      %v2720 = vpop.f32.mrb[0].mxu0
      %v2721 = vadd.f32 %v2608, %v2720
      %v2722 = vpop.f32.mrb[0].mxu0
      %v2723 = vadd.f32 %v2610, %v2722
      %v2724 = vpop.f32.mrb[0].mxu0
      %v2725 = vadd.f32 %v2612, %v2724
      %2726 = vdwg.mxu0
      %v2727 = vmax.f32 %v2197, 0.0
      %v2728 = vmax.f32 %v2199, 0.0
      %v2729 = vmax.f32 %v2649, 0.0
      %v2730 = vmax.f32 %v2651, 0.0
      %v2731 = vmax.f32 %v2201, 0.0
      %v2732 = vmax.f32 %v2203, 0.0
      %v2733 = vmax.f32 %v2653, 0.0
      %v2734 = vmax.f32 %v2655, 0.0
      %v2735 = vmax.f32 %v2207, 0.0
      %v2736 = vmax.f32 %v2209, 0.0
      %v2737 = vmax.f32 %v2659, 0.0
      %v2738 = vmax.f32 %v2661, 0.0
      %v2739 = vmax.f32 %v2211, 0.0
      %v2740 = vmax.f32 %v2213, 0.0
      %v2741 = vmax.f32 %v2663, 0.0
      %v2742 = vmax.f32 %v2665, 0.0
      %v2743 = vmax.f32 %v2217, 0.0
      %v2744 = vmax.f32 %v2219, 0.0
      %v2745 = vmax.f32 %v2669, 0.0
      %v2746 = vmax.f32 %v2671, 0.0
      %v2747 = vmax.f32 %v2221, 0.0
      %v2748 = vmax.f32 %v2223, 0.0
      %v2749 = vmax.f32 %v2673, 0.0
      %v2750 = vmax.f32 %v2675, 0.0
      %v2751 = vmax.f32 %v2227, 0.0
      %v2752 = vmax.f32 %v2229, 0.0
      %v2753 = vmax.f32 %v2679, 0.0
      %v2754 = vmax.f32 %v2681, 0.0
      %v2755 = vmax.f32 %v2231, 0.0
      %v2756 = vmax.f32 %v2233, 0.0
      %v2757 = vmax.f32 %v2683, 0.0
      %v2758 = vmax.f32 %v2685, 0.0
      %v2759 = vmax.f32 %v2237, 0.0
      %v2760 = vmax.f32 %v2239, 0.0
      %v2761 = vmax.f32 %v2689, 0.0
      %v2762 = vmax.f32 %v2691, 0.0
      %v2763 = vmax.f32 %v2241, 0.0
      %v2764 = vmax.f32 %v2243, 0.0
      %v2765 = vmax.f32 %v2693, 0.0
      %v2766 = vmax.f32 %v2695, 0.0
      %v2767 = vmax.f32 %v2247, 0.0
      %v2768 = vmax.f32 %v2249, 0.0
      %v2769 = vmax.f32 %v2699, 0.0
      %v2770 = vmax.f32 %v2701, 0.0
      %v2771 = vmax.f32 %v2251, 0.0
      %v2772 = vmax.f32 %v2253, 0.0
      %v2773 = vmax.f32 %v2703, 0.0
      %v2774 = vmax.f32 %v2705, 0.0
      %v2775 = vmax.f32 %v2257, 0.0
      %v2776 = vmax.f32 %v2259, 0.0
      %v2777 = vmax.f32 %v2709, 0.0
      %v2778 = vmax.f32 %v2711, 0.0
      %v2779 = vmax.f32 %v2261, 0.0
      %v2780 = vmax.f32 %v2263, 0.0
      %v2781 = vmax.f32 %v2713, 0.0
      %v2782 = vmax.f32 %v2715, 0.0
      %v2783 = vmax.f32 %v2267, 0.0
      %v2784 = vmax.f32 %v2269, 0.0
      %v2785 = vmax.f32 %v2719, 0.0
      %v2786 = vmax.f32 %v2721, 0.0
      %v2787 = vmax.f32 %v2271, 0.0
      %v2788 = vmax.f32 %v2273, 0.0
      %v2789 = vmax.f32 %v2723, 0.0
      %v2790 = vmax.f32 %v2725, 0.0
      %v2791 = vpack.c.bf16 %v2731, %v2727
      %v2792 = vpack.c.bf16 %v2732, %v2728
      %v2793 = vpack.c.bf16 %v2733, %v2729
      %v2794 = vpack.c.bf16 %v2734, %v2730
      %v2795 = vpack.c.bf16 %v2739, %v2735
      %v2796 = vpack.c.bf16 %v2740, %v2736
      %v2797 = vpack.c.bf16 %v2741, %v2737
      %v2798 = vpack.c.bf16 %v2742, %v2738
      %v2799 = vpack.c.bf16 %v2747, %v2743
      %v2800 = vpack.c.bf16 %v2748, %v2744
      %v2801 = vpack.c.bf16 %v2749, %v2745
      %v2802 = vpack.c.bf16 %v2750, %v2746
      %v2803 = vpack.c.bf16 %v2755, %v2751
      %v2804 = vpack.c.bf16 %v2756, %v2752
      %v2805 = vpack.c.bf16 %v2757, %v2753
      %v2806 = vpack.c.bf16 %v2758, %v2754
      %v2807 = vpack.c.bf16 %v2763, %v2759
      %v2808 = vpack.c.bf16 %v2764, %v2760
      %v2809 = vpack.c.bf16 %v2765, %v2761
      %v2810 = vpack.c.bf16 %v2766, %v2762
      %v2811 = vpack.c.bf16 %v2771, %v2767
      %v2812 = vpack.c.bf16 %v2772, %v2768
      %v2813 = vpack.c.bf16 %v2773, %v2769
      %v2814 = vpack.c.bf16 %v2774, %v2770
      %v2815 = vpack.c.bf16 %v2779, %v2775
      %v2816 = vpack.c.bf16 %v2780, %v2776
      %v2817 = vpack.c.bf16 %v2781, %v2777
      %v2818 = vpack.c.bf16 %v2782, %v2778
      %v2819 = vpack.c.bf16 %v2787, %v2783
      %v2820 = vpack.c.bf16 %v2788, %v2784
      %v2821 = vpack.c.bf16 %v2789, %v2785
      %v2822 = vpack.c.bf16 %v2790, %v2786
      %v2823 = vld [vmem:[%s3] sm:$0xff]
      %v2824 = vld [vmem:[%s3 + $0x8] sm:$0xff]
      %v2825 = vld [vmem:[%s3 + $0x10] sm:$0xff]
      %v2826 = vld [vmem:[%s3 + $0x18] sm:$0xff]
      %v2827 = vld [vmem:[%s3 + $0x20] sm:$0xff]
      %v2828 = vld [vmem:[%s3 + $0x28] sm:$0xff]
      %v2829 = vld [vmem:[%s3 + $0x30] sm:$0xff]
      %v2830 = vld [vmem:[%s3 + $0x38] sm:$0xff]
      %v2831 = vld [vmem:[%s3 + $0x40] sm:$0xff]
      %v2832 = vld [vmem:[%s3 + $0x48] sm:$0xff]
      %v2833 = vld [vmem:[%s3 + $0x50] sm:$0xff]
      %v2834 = vld [vmem:[%s3 + $0x58] sm:$0xff]
      %v2835 = vld [vmem:[%s3 + $0x60] sm:$0xff]
      %v2836 = vld [vmem:[%s3 + $0x68] sm:$0xff]
      %v2837 = vld [vmem:[%s3 + $0x70] sm:$0xff]
      %v2838 = vld [vmem:[%s3 + $0x78] sm:$0xff]
      %v2839 = vld [vmem:[%s3 + $0x80] sm:$0xff]
      %v2840 = vld [vmem:[%s3 + $0x88] sm:$0xff]
      %v2841 = vld [vmem:[%s3 + $0x90] sm:$0xff]
      %v2842 = vld [vmem:[%s3 + $0x98] sm:$0xff]
      %v2843 = vld [vmem:[%s3 + $0xa0] sm:$0xff]
      %v2844 = vld [vmem:[%s3 + $0xa8] sm:$0xff]
      %v2845 = vld [vmem:[%s3 + $0xb0] sm:$0xff]
      %v2846 = vld [vmem:[%s3 + $0xb8] sm:$0xff]
      %v2847 = vld [vmem:[%s3 + $0xc0] sm:$0xff]
      %v2848 = vld [vmem:[%s3 + $0xc8] sm:$0xff]
      %v2849 = vld [vmem:[%s3 + $0xd0] sm:$0xff]
      %v2850 = vld [vmem:[%s3 + $0xd8] sm:$0xff]
      %v2851 = vld [vmem:[%s3 + $0xe0] sm:$0xff]
      %v2852 = vld [vmem:[%s3 + $0xe8] sm:$0xff]
      %v2853 = vld [vmem:[%s3 + $0xf0] sm:$0xff]
      %v2854 = vld [vmem:[%s3 + $0xf8] sm:$0xff]
      %v2855 = vld [vmem:[%s3 + $0x100] sm:$0xff]
      %v2856 = vld [vmem:[%s3 + $0x108] sm:$0xff]
      %v2857 = vld [vmem:[%s3 + $0x110] sm:$0xff]
      %v2858 = vld [vmem:[%s3 + $0x118] sm:$0xff]
      %v2859 = vld [vmem:[%s3 + $0x120] sm:$0xff]
      %v2860 = vld [vmem:[%s3 + $0x128] sm:$0xff]
      %v2861 = vld [vmem:[%s3 + $0x130] sm:$0xff]
      %v2862 = vld [vmem:[%s3 + $0x138] sm:$0xff]
      %v2863 = vld [vmem:[%s3 + $0x140] sm:$0xff]
      %v2864 = vld [vmem:[%s3 + $0x148] sm:$0xff]
      %v2865 = vld [vmem:[%s3 + $0x150] sm:$0xff]
      %v2866 = vld [vmem:[%s3 + $0x158] sm:$0xff]
      %v2867 = vld [vmem:[%s3 + $0x160] sm:$0xff]
      %v2868 = vld [vmem:[%s3 + $0x168] sm:$0xff]
      %v2869 = vld [vmem:[%s3 + $0x170] sm:$0xff]
      %v2870 = vld [vmem:[%s3 + $0x178] sm:$0xff]
      %v2871 = vld [vmem:[%s3 + $0x180] sm:$0xff]
      %v2872 = vld [vmem:[%s3 + $0x188] sm:$0xff]
      %v2873 = vld [vmem:[%s3 + $0x190] sm:$0xff]
      %v2874 = vld [vmem:[%s3 + $0x198] sm:$0xff]
      %v2875 = vld [vmem:[%s3 + $0x1a0] sm:$0xff]
      %v2876 = vld [vmem:[%s3 + $0x1a8] sm:$0xff]
      %v2877 = vld [vmem:[%s3 + $0x1b0] sm:$0xff]
      %v2878 = vld [vmem:[%s3 + $0x1b8] sm:$0xff]
      %v2879 = vld [vmem:[%s3 + $0x1c0] sm:$0xff]
      %v2880 = vld [vmem:[%s3 + $0x1c8] sm:$0xff]
      %v2881 = vld [vmem:[%s3 + $0x1d0] sm:$0xff]
      %v2882 = vld [vmem:[%s3 + $0x1d8] sm:$0xff]
      %v2883 = vld [vmem:[%s3 + $0x1e0] sm:$0xff]
      %v2884 = vld [vmem:[%s3 + $0x1e8] sm:$0xff]
      %v2885 = vld [vmem:[%s3 + $0x1f0] sm:$0xff]
      %v2886 = vld [vmem:[%s3 + $0x1f8] sm:$0xff]
      %v2887 = vld [vmem:[%s4] sm:$0x3]
      %v2889 = vlaneseq
      %v2890 = vshrl.u32 %v2889, 7
      %v2891 = vsub.s32 0, %v2890
      %v2892 = vrot.slane %v2887, %v2891
      %v2893 = vlaneseq
      %v2894 = vshrl.u32 %v2893, 7
      %v2895 = vsub.s32 1, %v2894
      %v2896 = vrot.slane %v2887, %v2895
      %v2963 = vunpack.c.l.b16 %v2823
      %v2964 = vunpack.c.h.b16 %v2823
      %v2965 = vunpack.c.l.b16 %v2824
      %v2966 = vunpack.c.h.b16 %v2824
      %v2967 = vunpack.c.l.b16 %v2825
      %v2968 = vunpack.c.h.b16 %v2825
      %v2969 = vunpack.c.l.b16 %v2826
      %v2970 = vunpack.c.h.b16 %v2826
      %v2971 = vunpack.c.l.b16 %v2827
      %v2972 = vunpack.c.h.b16 %v2827
      %v2973 = vunpack.c.l.b16 %v2828
      %v2974 = vunpack.c.h.b16 %v2828
      %v2975 = vunpack.c.l.b16 %v2829
      %v2976 = vunpack.c.h.b16 %v2829
      %v2977 = vunpack.c.l.b16 %v2830
      %v2978 = vunpack.c.h.b16 %v2830
      %v2979 = vunpack.c.l.b16 %v2831
      %v2980 = vunpack.c.h.b16 %v2831
      %v2981 = vunpack.c.l.b16 %v2832
      %v2982 = vunpack.c.h.b16 %v2832
      %v2983 = vunpack.c.l.b16 %v2833
      %v2984 = vunpack.c.h.b16 %v2833
      %v2985 = vunpack.c.l.b16 %v2834
      %v2986 = vunpack.c.h.b16 %v2834
      %v2987 = vunpack.c.l.b16 %v2835
      %v2988 = vunpack.c.h.b16 %v2835
      %v2989 = vunpack.c.l.b16 %v2836
      %v2990 = vunpack.c.h.b16 %v2836
      %v2991 = vunpack.c.l.b16 %v2837
      %v2992 = vunpack.c.h.b16 %v2837
      %v2993 = vunpack.c.l.b16 %v2838
      %v2994 = vunpack.c.h.b16 %v2838
      %v2995 = vunpack.c.l.b16 %v2839
      %v2996 = vunpack.c.h.b16 %v2839
      %v2997 = vunpack.c.l.b16 %v2840
      %v2998 = vunpack.c.h.b16 %v2840
      %v2999 = vunpack.c.l.b16 %v2841
      %v3000 = vunpack.c.h.b16 %v2841
      %v3001 = vunpack.c.l.b16 %v2842
      %v3002 = vunpack.c.h.b16 %v2842
      %v3003 = vunpack.c.l.b16 %v2843
      %v3004 = vunpack.c.h.b16 %v2843
      %v3005 = vunpack.c.l.b16 %v2844
      %v3006 = vunpack.c.h.b16 %v2844
      %v3007 = vunpack.c.l.b16 %v2845
      %v3008 = vunpack.c.h.b16 %v2845
      %v3009 = vunpack.c.l.b16 %v2846
      %v3010 = vunpack.c.h.b16 %v2846
      %v3011 = vunpack.c.l.b16 %v2847
      %v3012 = vunpack.c.h.b16 %v2847
      %v3013 = vunpack.c.l.b16 %v2848
      %v3014 = vunpack.c.h.b16 %v2848
      %v3015 = vunpack.c.l.b16 %v2849
      %v3016 = vunpack.c.h.b16 %v2849
      %v3017 = vunpack.c.l.b16 %v2850
      %v3018 = vunpack.c.h.b16 %v2850
      %v3019 = vunpack.c.l.b16 %v2851
      %v3020 = vunpack.c.h.b16 %v2851
      %v3021 = vunpack.c.l.b16 %v2852
      %v3022 = vunpack.c.h.b16 %v2852
      %v3023 = vunpack.c.l.b16 %v2853
      %v3024 = vunpack.c.h.b16 %v2853
      %v3025 = vunpack.c.l.b16 %v2854
      %v3026 = vunpack.c.h.b16 %v2854
      %v3027 = vunpack.c.l.b16 %v2855
      %v3028 = vunpack.c.h.b16 %v2855
      %v3029 = vunpack.c.l.b16 %v2856
      %v3030 = vunpack.c.h.b16 %v2856
      %v3031 = vunpack.c.l.b16 %v2857
      %v3032 = vunpack.c.h.b16 %v2857
      %v3033 = vunpack.c.l.b16 %v2858
      %v3034 = vunpack.c.h.b16 %v2858
      %v3035 = vunpack.c.l.b16 %v2859
      %v3036 = vunpack.c.h.b16 %v2859
      %v3037 = vunpack.c.l.b16 %v2860
      %v3038 = vunpack.c.h.b16 %v2860
      %v3039 = vunpack.c.l.b16 %v2861
      %v3040 = vunpack.c.h.b16 %v2861
      %v3041 = vunpack.c.l.b16 %v2862
      %v3042 = vunpack.c.h.b16 %v2862
      %v3043 = vunpack.c.l.b16 %v2863
      %v3044 = vunpack.c.h.b16 %v2863
      %v3045 = vunpack.c.l.b16 %v2864
      %v3046 = vunpack.c.h.b16 %v2864
      %v3047 = vunpack.c.l.b16 %v2865
      %v3048 = vunpack.c.h.b16 %v2865
      %v3049 = vunpack.c.l.b16 %v2866
      %v3050 = vunpack.c.h.b16 %v2866
      %v3051 = vunpack.c.l.b16 %v2867
      %v3052 = vunpack.c.h.b16 %v2867
      %v3053 = vunpack.c.l.b16 %v2868
      %v3054 = vunpack.c.h.b16 %v2868
      %v3055 = vunpack.c.l.b16 %v2869
      %v3056 = vunpack.c.h.b16 %v2869
      %v3057 = vunpack.c.l.b16 %v2870
      %v3058 = vunpack.c.h.b16 %v2870
      %v3059 = vunpack.c.l.b16 %v2871
      %v3060 = vunpack.c.h.b16 %v2871
      %v3061 = vunpack.c.l.b16 %v2872
      %v3062 = vunpack.c.h.b16 %v2872
      %v3063 = vunpack.c.l.b16 %v2873
      %v3064 = vunpack.c.h.b16 %v2873
      %v3065 = vunpack.c.l.b16 %v2874
      %v3066 = vunpack.c.h.b16 %v2874
      %v3067 = vunpack.c.l.b16 %v2875
      %v3068 = vunpack.c.h.b16 %v2875
      %v3069 = vunpack.c.l.b16 %v2876
      %v3070 = vunpack.c.h.b16 %v2876
      %v3071 = vunpack.c.l.b16 %v2877
      %v3072 = vunpack.c.h.b16 %v2877
      %v3073 = vunpack.c.l.b16 %v2878
      %v3074 = vunpack.c.h.b16 %v2878
      %v3075 = vunpack.c.l.b16 %v2879
      %v3076 = vunpack.c.h.b16 %v2879
      %v3077 = vunpack.c.l.b16 %v2880
      %v3078 = vunpack.c.h.b16 %v2880
      %v3079 = vunpack.c.l.b16 %v2881
      %v3080 = vunpack.c.h.b16 %v2881
      %v3081 = vunpack.c.l.b16 %v2882
      %v3082 = vunpack.c.h.b16 %v2882
      %v3083 = vunpack.c.l.b16 %v2883
      %v3084 = vunpack.c.h.b16 %v2883
      %v3085 = vunpack.c.l.b16 %v2884
      %v3086 = vunpack.c.h.b16 %v2884
      %v3087 = vunpack.c.l.b16 %v2885
      %v3088 = vunpack.c.h.b16 %v2885
      %v3089 = vunpack.c.l.b16 %v2886
      %v3090 = vunpack.c.h.b16 %v2886
      %v3091 = vpack.c.b16 %v2965, %v2963
      %v3092 = vpack.c.b16 %v2966, %v2964
      %v3093 = vpack.c.b16 %v2969, %v2967
      %v3094 = vpack.c.b16 %v2970, %v2968
      %v3095 = vpack.c.b16 %v2973, %v2971
      %v3096 = vpack.c.b16 %v2974, %v2972
      %v3097 = vpack.c.b16 %v2977, %v2975
      %v3098 = vpack.c.b16 %v2978, %v2976
      %v3099 = vpack.c.b16 %v2981, %v2979
      %v3100 = vpack.c.b16 %v2982, %v2980
      %v3101 = vpack.c.b16 %v2985, %v2983
      %v3102 = vpack.c.b16 %v2986, %v2984
      %v3103 = vpack.c.b16 %v2989, %v2987
      %v3104 = vpack.c.b16 %v2990, %v2988
      %v3105 = vpack.c.b16 %v2993, %v2991
      %v3106 = vpack.c.b16 %v2994, %v2992
      %v3107 = vpack.c.b16 %v2997, %v2995
      %v3108 = vpack.c.b16 %v2998, %v2996
      %v3109 = vpack.c.b16 %v3001, %v2999
      %v3110 = vpack.c.b16 %v3002, %v3000
      %v3111 = vpack.c.b16 %v3005, %v3003
      %v3112 = vpack.c.b16 %v3006, %v3004
      %v3113 = vpack.c.b16 %v3009, %v3007
      %v3114 = vpack.c.b16 %v3010, %v3008
      %v3115 = vpack.c.b16 %v3013, %v3011
      %v3116 = vpack.c.b16 %v3014, %v3012
      %v3117 = vpack.c.b16 %v3017, %v3015
      %v3118 = vpack.c.b16 %v3018, %v3016
      %v3119 = vpack.c.b16 %v3021, %v3019
      %v3120 = vpack.c.b16 %v3022, %v3020
      %v3121 = vpack.c.b16 %v3025, %v3023
      %v3122 = vpack.c.b16 %v3026, %v3024
      %v3123 = vpack.c.b16 %v3029, %v3027
      %v3124 = vpack.c.b16 %v3030, %v3028
      %v3125 = vpack.c.b16 %v3033, %v3031
      %v3126 = vpack.c.b16 %v3034, %v3032
      %v3127 = vpack.c.b16 %v3037, %v3035
      %v3128 = vpack.c.b16 %v3038, %v3036
      %v3129 = vpack.c.b16 %v3041, %v3039
      %v3130 = vpack.c.b16 %v3042, %v3040
      %v3131 = vpack.c.b16 %v3045, %v3043
      %v3132 = vpack.c.b16 %v3046, %v3044
      %v3133 = vpack.c.b16 %v3049, %v3047
      %v3134 = vpack.c.b16 %v3050, %v3048
      %v3135 = vpack.c.b16 %v3053, %v3051
      %v3136 = vpack.c.b16 %v3054, %v3052
      %v3137 = vpack.c.b16 %v3057, %v3055
      %v3138 = vpack.c.b16 %v3058, %v3056
      %v3139 = vpack.c.b16 %v3061, %v3059
      %v3140 = vpack.c.b16 %v3062, %v3060
      %v3141 = vpack.c.b16 %v3065, %v3063
      %v3142 = vpack.c.b16 %v3066, %v3064
      %v3143 = vpack.c.b16 %v3069, %v3067
      %v3144 = vpack.c.b16 %v3070, %v3068
      %v3145 = vpack.c.b16 %v3073, %v3071
      %v3146 = vpack.c.b16 %v3074, %v3072
      %v3147 = vpack.c.b16 %v3077, %v3075
      %v3148 = vpack.c.b16 %v3078, %v3076
      %v3149 = vpack.c.b16 %v3081, %v3079
      %v3150 = vpack.c.b16 %v3082, %v3080
      %v3151 = vpack.c.b16 %v3085, %v3083
      %v3152 = vpack.c.b16 %v3086, %v3084
      %v3153 = vpack.c.b16 %v3089, %v3087
      %v3154 = vpack.c.b16 %v3090, %v3088
      %3219 = vmatprep.subr.bf16.mxu0 %v3092
      %3220 = vmatpush1.bf16.msra.mxu0 %v3091
      %3221 = vmatprep.subr.bf16.mxu0 %v3094
      %3222 = vmatpush1.bf16.msra.mxu0 %v3093
      %3223 = vmatprep.subr.bf16.mxu0 %v3096
      %3224 = vmatpush1.bf16.msra.mxu0 %v3095
      %3225 = vmatprep.subr.bf16.mxu0 %v3098
      %3226 = vmatpush1.bf16.msra.mxu0 %v3097
      %3227 = vmatprep.subr.bf16.mxu0 %v3100
      %3228 = vmatpush1.bf16.msra.mxu0 %v3099
      %3229 = vmatprep.subr.bf16.mxu0 %v3102
      %3230 = vmatpush1.bf16.msra.mxu0 %v3101
      %3231 = vmatprep.subr.bf16.mxu0 %v3104
      %3232 = vmatpush1.bf16.msra.mxu0 %v3103
      %3233 = vmatprep.subr.bf16.mxu0 %v3106
      %3234 = vmatpush1.bf16.msra.mxu0 %v3105
      %3235 = vmatprep.subr.bf16.mxu0 %v3108
      %3236 = vmatpush1.bf16.msra.mxu0 %v3107
      %3237 = vmatprep.subr.bf16.mxu0 %v3110
      %3238 = vmatpush1.bf16.msra.mxu0 %v3109
      %3239 = vmatprep.subr.bf16.mxu0 %v3112
      %3240 = vmatpush1.bf16.msra.mxu0 %v3111
      %3241 = vmatprep.subr.bf16.mxu0 %v3114
      %3242 = vmatpush1.bf16.msra.mxu0 %v3113
      %3243 = vmatprep.subr.bf16.mxu0 %v3116
      %3244 = vmatpush1.bf16.msra.mxu0 %v3115
      %3245 = vmatprep.subr.bf16.mxu0 %v3118
      %3246 = vmatpush1.bf16.msra.mxu0 %v3117
      %3247 = vmatprep.subr.bf16.mxu0 %v3120
      %3248 = vmatpush1.bf16.msra.mxu0 %v3119
      %3249 = vmatprep.subr.bf16.mxu0 %v3122
      %3250 = vmatpush1.bf16.msra.mxu0 %v3121
      %3251 = vmatprep.mubr.bf16.mxu0 %v2792
      %3252 = vmatmul.mubr.bf16.gmra.mrb[0].mxu0 %v2791
      %v3253 = vpop.f32.mrb[0].mxu0
      %v3254 = vadd.f32 %v2892, %v3253
      %v3255 = vpop.f32.mrb[0].mxu0
      %v3256 = vadd.f32 %v2896, %v3255
      %v3257 = vpop.f32.mrb[0].mxu0
      %v3258 = vadd.f32 %v2892, %v3257
      %v3259 = vpop.f32.mrb[0].mxu0
      %v3260 = vadd.f32 %v2896, %v3259
      %3261 = vmatprep.mubr.bf16.mxu0 %v2796
      %3262 = vmatmul.mubr.bf16.gmra.mrb[0].mxu0 %v2795
      %v3263 = vpop.f32.mrb[0].mxu0
      %v3264 = vadd.f32 %v2892, %v3263
      %v3265 = vpop.f32.mrb[0].mxu0
      %v3266 = vadd.f32 %v2896, %v3265
      %v3267 = vpop.f32.mrb[0].mxu0
      %v3268 = vadd.f32 %v2892, %v3267
      %v3269 = vpop.f32.mrb[0].mxu0
      %v3270 = vadd.f32 %v2896, %v3269
      %3271 = vmatprep.mubr.bf16.mxu0 %v2800
      %3272 = vmatmul.mubr.bf16.gmra.mrb[0].mxu0 %v2799
      %v3273 = vpop.f32.mrb[0].mxu0
      %v3274 = vadd.f32 %v2892, %v3273
      %v3275 = vpop.f32.mrb[0].mxu0
      %v3276 = vadd.f32 %v2896, %v3275
      %v3277 = vpop.f32.mrb[0].mxu0
      %v3278 = vadd.f32 %v2892, %v3277
      %v3279 = vpop.f32.mrb[0].mxu0
      %v3280 = vadd.f32 %v2896, %v3279
      %3281 = vmatprep.mubr.bf16.mxu0 %v2804
      %3282 = vmatmul.mubr.bf16.gmra.mrb[0].mxu0 %v2803
      %v3283 = vpop.f32.mrb[0].mxu0
      %v3284 = vadd.f32 %v2892, %v3283
      %v3285 = vpop.f32.mrb[0].mxu0
      %v3286 = vadd.f32 %v2896, %v3285
      %v3287 = vpop.f32.mrb[0].mxu0
      %v3288 = vadd.f32 %v2892, %v3287
      %v3289 = vpop.f32.mrb[0].mxu0
      %v3290 = vadd.f32 %v2896, %v3289
      %3291 = vmatprep.mubr.bf16.mxu0 %v2808
      %3292 = vmatmul.mubr.bf16.gmra.mrb[0].mxu0 %v2807
      %v3293 = vpop.f32.mrb[0].mxu0
      %v3294 = vadd.f32 %v2892, %v3293
      %v3295 = vpop.f32.mrb[0].mxu0
      %v3296 = vadd.f32 %v2896, %v3295
      %v3297 = vpop.f32.mrb[0].mxu0
      %v3298 = vadd.f32 %v2892, %v3297
      %v3299 = vpop.f32.mrb[0].mxu0
      %v3300 = vadd.f32 %v2896, %v3299
      %3301 = vmatprep.mubr.bf16.mxu0 %v2812
      %3302 = vmatmul.mubr.bf16.gmra.mrb[0].mxu0 %v2811
      %v3303 = vpop.f32.mrb[0].mxu0
      %v3304 = vadd.f32 %v2892, %v3303
      %v3305 = vpop.f32.mrb[0].mxu0
      %v3306 = vadd.f32 %v2896, %v3305
      %v3307 = vpop.f32.mrb[0].mxu0
      %v3308 = vadd.f32 %v2892, %v3307
      %v3309 = vpop.f32.mrb[0].mxu0
      %v3310 = vadd.f32 %v2896, %v3309
      %3311 = vmatprep.mubr.bf16.mxu0 %v2816
      %3312 = vmatmul.mubr.bf16.gmra.mrb[0].mxu0 %v2815
      %v3313 = vpop.f32.mrb[0].mxu0
      %v3314 = vadd.f32 %v2892, %v3313
      %v3315 = vpop.f32.mrb[0].mxu0
      %v3316 = vadd.f32 %v2896, %v3315
      %v3317 = vpop.f32.mrb[0].mxu0
      %v3318 = vadd.f32 %v2892, %v3317
      %v3319 = vpop.f32.mrb[0].mxu0
      %v3320 = vadd.f32 %v2896, %v3319
      %3321 = vmatprep.mubr.bf16.mxu0 %v2820
      %3322 = vmatmul.mubr.bf16.gmra.mrb[0].mxu0 %v2819
      %v3323 = vpop.f32.mrb[0].mxu0
      %v3324 = vadd.f32 %v2892, %v3323
      %v3325 = vpop.f32.mrb[0].mxu0
      %v3326 = vadd.f32 %v2896, %v3325
      %v3327 = vpop.f32.mrb[0].mxu0
      %v3328 = vadd.f32 %v2892, %v3327
      %v3329 = vpop.f32.mrb[0].mxu0
      %v3330 = vadd.f32 %v2896, %v3329
      %3331 = vdwg.mxu0
      %3332 = vmatprep.subr.bf16.mxu0 %v3124
      %3333 = vmatpush1.bf16.msra.mxu0 %v3123
      %3334 = vmatprep.subr.bf16.mxu0 %v3126
      %3335 = vmatpush1.bf16.msra.mxu0 %v3125
      %3336 = vmatprep.subr.bf16.mxu0 %v3128
      %3337 = vmatpush1.bf16.msra.mxu0 %v3127
      %3338 = vmatprep.subr.bf16.mxu0 %v3130
      %3339 = vmatpush1.bf16.msra.mxu0 %v3129
      %3340 = vmatprep.subr.bf16.mxu0 %v3132
      %3341 = vmatpush1.bf16.msra.mxu0 %v3131
      %3342 = vmatprep.subr.bf16.mxu0 %v3134
      %3343 = vmatpush1.bf16.msra.mxu0 %v3133
      %3344 = vmatprep.subr.bf16.mxu0 %v3136
      %3345 = vmatpush1.bf16.msra.mxu0 %v3135
      %3346 = vmatprep.subr.bf16.mxu0 %v3138
      %3347 = vmatpush1.bf16.msra.mxu0 %v3137
      %3348 = vmatprep.subr.bf16.mxu0 %v3140
      %3349 = vmatpush1.bf16.msra.mxu0 %v3139
      %3350 = vmatprep.subr.bf16.mxu0 %v3142
      %3351 = vmatpush1.bf16.msra.mxu0 %v3141
      %3352 = vmatprep.subr.bf16.mxu0 %v3144
      %3353 = vmatpush1.bf16.msra.mxu0 %v3143
      %3354 = vmatprep.subr.bf16.mxu0 %v3146
      %3355 = vmatpush1.bf16.msra.mxu0 %v3145
      %3356 = vmatprep.subr.bf16.mxu0 %v3148
      %3357 = vmatpush1.bf16.msra.mxu0 %v3147
      %3358 = vmatprep.subr.bf16.mxu0 %v3150
      %3359 = vmatpush1.bf16.msra.mxu0 %v3149
      %3360 = vmatprep.subr.bf16.mxu0 %v3152
      %3361 = vmatpush1.bf16.msra.mxu0 %v3151
      %3362 = vmatprep.subr.bf16.mxu0 %v3154
      %3363 = vmatpush1.bf16.msra.mxu0 %v3153
      %3364 = vmatprep.mubr.bf16.mxu0 %v2794
      %3365 = vmatmul.mubr.bf16.gmra.mrb[0].mxu0 %v2793
      %v3366 = vpop.f32.mrb[0].mxu0
      %v3367 = vadd.f32 %v3254, %v3366
      %v3368 = vpop.f32.mrb[0].mxu0
      %v3369 = vadd.f32 %v3256, %v3368
      %v3370 = vpop.f32.mrb[0].mxu0
      %v3371 = vadd.f32 %v3258, %v3370
      %v3372 = vpop.f32.mrb[0].mxu0
      %v3373 = vadd.f32 %v3260, %v3372
      %3374 = vmatprep.mubr.bf16.mxu0 %v2798
      %3375 = vmatmul.mubr.bf16.gmra.mrb[0].mxu0 %v2797
      %v3376 = vpop.f32.mrb[0].mxu0
      %v3377 = vadd.f32 %v3264, %v3376
      %v3378 = vpop.f32.mrb[0].mxu0
      %v3379 = vadd.f32 %v3266, %v3378
      %v3380 = vpop.f32.mrb[0].mxu0
      %v3381 = vadd.f32 %v3268, %v3380
      %v3382 = vpop.f32.mrb[0].mxu0
      %v3383 = vadd.f32 %v3270, %v3382
      %3384 = vmatprep.mubr.bf16.mxu0 %v2802
      %3385 = vmatmul.mubr.bf16.gmra.mrb[0].mxu0 %v2801
      %v3386 = vpop.f32.mrb[0].mxu0
      %v3387 = vadd.f32 %v3274, %v3386
      %v3388 = vpop.f32.mrb[0].mxu0
      %v3389 = vadd.f32 %v3276, %v3388
      %v3390 = vpop.f32.mrb[0].mxu0
      %v3391 = vadd.f32 %v3278, %v3390
      %v3392 = vpop.f32.mrb[0].mxu0
      %v3393 = vadd.f32 %v3280, %v3392
      %3394 = vmatprep.mubr.bf16.mxu0 %v2806
      %3395 = vmatmul.mubr.bf16.gmra.mrb[0].mxu0 %v2805
      %v3396 = vpop.f32.mrb[0].mxu0
      %v3397 = vadd.f32 %v3284, %v3396
      %v3398 = vpop.f32.mrb[0].mxu0
      %v3399 = vadd.f32 %v3286, %v3398
      %v3400 = vpop.f32.mrb[0].mxu0
      %v3401 = vadd.f32 %v3288, %v3400
      %v3402 = vpop.f32.mrb[0].mxu0
      %v3403 = vadd.f32 %v3290, %v3402
      %3404 = vmatprep.mubr.bf16.mxu0 %v2810
      %3405 = vmatmul.mubr.bf16.gmra.mrb[0].mxu0 %v2809
      %v3406 = vpop.f32.mrb[0].mxu0
      %v3407 = vadd.f32 %v3294, %v3406
      %v3408 = vpop.f32.mrb[0].mxu0
      %v3409 = vadd.f32 %v3296, %v3408
      %v3410 = vpop.f32.mrb[0].mxu0
      %v3411 = vadd.f32 %v3298, %v3410
      %v3412 = vpop.f32.mrb[0].mxu0
      %v3413 = vadd.f32 %v3300, %v3412
      %3414 = vmatprep.mubr.bf16.mxu0 %v2814
      %3415 = vmatmul.mubr.bf16.gmra.mrb[0].mxu0 %v2813
      %v3416 = vpop.f32.mrb[0].mxu0
      %v3417 = vadd.f32 %v3304, %v3416
      %v3418 = vpop.f32.mrb[0].mxu0
      %v3419 = vadd.f32 %v3306, %v3418
      %v3420 = vpop.f32.mrb[0].mxu0
      %v3421 = vadd.f32 %v3308, %v3420
      %v3422 = vpop.f32.mrb[0].mxu0
      %v3423 = vadd.f32 %v3310, %v3422
      %3424 = vmatprep.mubr.bf16.mxu0 %v2818
      %3425 = vmatmul.mubr.bf16.gmra.mrb[0].mxu0 %v2817
      %v3426 = vpop.f32.mrb[0].mxu0
      %v3427 = vadd.f32 %v3314, %v3426
      %v3428 = vpop.f32.mrb[0].mxu0
      %v3429 = vadd.f32 %v3316, %v3428
      %v3430 = vpop.f32.mrb[0].mxu0
      %v3431 = vadd.f32 %v3318, %v3430
      %v3432 = vpop.f32.mrb[0].mxu0
      %v3433 = vadd.f32 %v3320, %v3432
      %3434 = vmatprep.mubr.bf16.mxu0 %v2822
      %3435 = vmatmul.mubr.bf16.gmra.mrb[0].mxu0 %v2821
      %v3436 = vpop.f32.mrb[0].mxu0
      %v3437 = vadd.f32 %v3324, %v3436
      %v3438 = vpop.f32.mrb[0].mxu0
      %v3439 = vadd.f32 %v3326, %v3438
      %v3440 = vpop.f32.mrb[0].mxu0
      %v3441 = vadd.f32 %v3328, %v3440
      %v3442 = vpop.f32.mrb[0].mxu0
      %v3443 = vadd.f32 %v3330, %v3442
      %3444 = vdwg.mxu0
      %v3445 = vmul.f32 %v3369, 1.442695
      %v3446 = vpow.pop %v3445
      %v3447 = vmul.f32 %v3373, 1.442695
      %v3448 = vpow.pop %v3447
      %v3449 = vmul.f32 %v3379, 1.442695
      %v3450 = vpow.pop %v3449
      %v3451 = vmul.f32 %v3383, 1.442695
      %v3452 = vpow.pop %v3451
      %v3453 = vmul.f32 %v3389, 1.442695
      %v3454 = vpow.pop %v3453
      %v3455 = vmul.f32 %v3393, 1.442695
      %v3456 = vpow.pop %v3455
      %v3457 = vmul.f32 %v3399, 1.442695
      %v3458 = vpow.pop %v3457
      %v3459 = vmul.f32 %v3403, 1.442695
      %v3460 = vpow.pop %v3459
      %v3461 = vmul.f32 %v3409, 1.442695
      %v3462 = vpow.pop %v3461
      %v3463 = vmul.f32 %v3413, 1.442695
      %v3464 = vpow.pop %v3463
      %v3465 = vmul.f32 %v3419, 1.442695
      %v3466 = vpow.pop %v3465
      %v3467 = vmul.f32 %v3423, 1.442695
      %v3468 = vpow.pop %v3467
      %v3469 = vmul.f32 %v3429, 1.442695
      %v3470 = vpow.pop %v3469
      %v3471 = vmul.f32 %v3433, 1.442695
      %v3472 = vpow.pop %v3471
      %v3473 = vmul.f32 %v3439, 1.442695
      %v3474 = vpow.pop %v3473
      %v3475 = vmul.f32 %v3443, 1.442695
      %v3476 = vpow.pop %v3475
      %v3477 = vld [vmem:[%s416] sm:$0xff]
      %v3478 = vld [vmem:[%s416 + $0x8] sm:$0xff]
      %v3479 = vld [vmem:[%s416 + $0x10] sm:$0xff]
      %v3480 = vld [vmem:[%s416 + $0x18] sm:$0xff]
      %v3481 = vld [vmem:[%s416 + $0x20] sm:$0xff]
      %v3482 = vld [vmem:[%s416 + $0x28] sm:$0xff]
      %v3483 = vld [vmem:[%s416 + $0x30] sm:$0xff]
      %v3484 = vld [vmem:[%s416 + $0x38] sm:$0xff]
      %v3485 = vld [vmem:[%s416 + $0x40] sm:$0xff]
      %v3486 = vld [vmem:[%s416 + $0x48] sm:$0xff]
      %v3487 = vld [vmem:[%s416 + $0x50] sm:$0xff]
      %v3488 = vld [vmem:[%s416 + $0x58] sm:$0xff]
      %v3489 = vld [vmem:[%s416 + $0x60] sm:$0xff]
      %v3490 = vld [vmem:[%s416 + $0x68] sm:$0xff]
      %v3491 = vld [vmem:[%s416 + $0x70] sm:$0xff]
      %v3492 = vld [vmem:[%s416 + $0x78] sm:$0xff]
      %v3493 = vmul.f32 %v3446, %v3477
      %v3494 = vmul.f32 %v3448, %v3478
      %v3495 = vmul.f32 %v3450, %v3479
      %v3496 = vmul.f32 %v3452, %v3480
      %v3497 = vmul.f32 %v3454, %v3481
      %v3498 = vmul.f32 %v3456, %v3482
      %v3499 = vmul.f32 %v3458, %v3483
      %v3500 = vmul.f32 %v3460, %v3484
      %v3501 = vmul.f32 %v3462, %v3485
      %v3502 = vmul.f32 %v3464, %v3486
      %v3503 = vmul.f32 %v3466, %v3487
      %v3504 = vmul.f32 %v3468, %v3488
      %v3505 = vmul.f32 %v3470, %v3489
      %v3506 = vmul.f32 %v3472, %v3490
      %v3507 = vmul.f32 %v3474, %v3491
      %v3508 = vmul.f32 %v3476, %v3492
      %v3509 = vadd.f32 %v3367, %v3493
      %v3510 = vadd.f32 %v3371, %v3494
      %v3511 = vadd.f32 %v3377, %v3495
      %v3512 = vadd.f32 %v3381, %v3496
      %v3513 = vadd.f32 %v3387, %v3497
      %v3514 = vadd.f32 %v3391, %v3498
      %v3515 = vadd.f32 %v3397, %v3499
      %v3516 = vadd.f32 %v3401, %v3500
      %v3517 = vadd.f32 %v3407, %v3501
      %v3518 = vadd.f32 %v3411, %v3502
      %v3519 = vadd.f32 %v3417, %v3503
      %v3520 = vadd.f32 %v3421, %v3504
      %v3521 = vadd.f32 %v3427, %v3505
      %v3522 = vadd.f32 %v3431, %v3506
      %v3523 = vadd.f32 %v3437, %v3507
      %v3524 = vadd.f32 %v3441, %v3508
      %v3525 = vmul.f32 %v3446, %v3446
      %v3526 = vmul.f32 %v3448, %v3448
      %v3527 = vmul.f32 %v3450, %v3450
      %v3528 = vmul.f32 %v3452, %v3452
      %v3529 = vmul.f32 %v3454, %v3454
      %v3530 = vmul.f32 %v3456, %v3456
      %v3531 = vmul.f32 %v3458, %v3458
      %v3532 = vmul.f32 %v3460, %v3460
      %v3533 = vmul.f32 %v3462, %v3462
      %v3534 = vmul.f32 %v3464, %v3464
      %v3535 = vmul.f32 %v3466, %v3466
      %v3536 = vmul.f32 %v3468, %v3468
      %v3537 = vmul.f32 %v3470, %v3470
      %v3538 = vmul.f32 %v3472, %v3472
      %v3539 = vmul.f32 %v3474, %v3474
      %v3540 = vmul.f32 %v3476, %v3476
      %v3541 = vmul.f32 %v3367, %v3367
      %v3542 = vmul.f32 %v3371, %v3371
      %v3543 = vmul.f32 %v3377, %v3377
      %v3544 = vmul.f32 %v3381, %v3381
      %v3545 = vmul.f32 %v3387, %v3387
      %v3546 = vmul.f32 %v3391, %v3391
      %v3547 = vmul.f32 %v3397, %v3397
      %v3548 = vmul.f32 %v3401, %v3401
      %v3549 = vmul.f32 %v3407, %v3407
      %v3550 = vmul.f32 %v3411, %v3411
      %v3551 = vmul.f32 %v3417, %v3417
      %v3552 = vmul.f32 %v3421, %v3421
      %v3553 = vmul.f32 %v3427, %v3427
      %v3554 = vmul.f32 %v3431, %v3431
      %v3555 = vmul.f32 %v3437, %v3437
      %v3556 = vmul.f32 %v3441, %v3441
      %v3557 = vadd.f32 %v3525, %v3541
      %v3558 = vadd.f32 %v3526, %v3542
      %v3559 = vadd.f32 %v3527, %v3543
      %v3560 = vadd.f32 %v3528, %v3544
      %v3561 = vadd.f32 %v3529, %v3545
      %v3562 = vadd.f32 %v3530, %v3546
      %v3563 = vadd.f32 %v3531, %v3547
      %v3564 = vadd.f32 %v3532, %v3548
      %v3565 = vadd.f32 %v3533, %v3549
      %v3566 = vadd.f32 %v3534, %v3550
      %v3567 = vadd.f32 %v3535, %v3551
      %v3568 = vadd.f32 %v3536, %v3552
      %v3569 = vadd.f32 %v3537, %v3553
      %v3570 = vadd.f32 %v3538, %v3554
      %v3571 = vadd.f32 %v3539, %v3555
      %v3572 = vadd.f32 %v3540, %v3556
      %v3573 = vsub.f32 %v3557, %v3369
      %v3574 = vsub.f32 %v3558, %v3373
      %v3575 = vsub.f32 %v3559, %v3379
      %v3576 = vsub.f32 %v3560, %v3383
      %v3577 = vsub.f32 %v3561, %v3389
      %v3578 = vsub.f32 %v3562, %v3393
      %v3579 = vsub.f32 %v3563, %v3399
      %v3580 = vsub.f32 %v3564, %v3403
      %v3581 = vsub.f32 %v3565, %v3409
      %v3582 = vsub.f32 %v3566, %v3413
      %v3583 = vsub.f32 %v3567, %v3419
      %v3584 = vsub.f32 %v3568, %v3423
      %v3585 = vsub.f32 %v3569, %v3429
      %v3586 = vsub.f32 %v3570, %v3433
      %v3587 = vsub.f32 %v3571, %v3439
      %v3588 = vsub.f32 %v3572, %v3443
      %v3589 = vsub.f32 %v3573, 0.5
      %v3590 = vsub.f32 %v3574, 0.5
      %v3591 = vsub.f32 %v3575, 0.5
      %v3592 = vsub.f32 %v3576, 0.5
      %v3593 = vsub.f32 %v3577, 0.5
      %v3594 = vsub.f32 %v3578, 0.5
      %v3595 = vsub.f32 %v3579, 0.5
      %v3596 = vsub.f32 %v3580, 0.5
      %v3597 = vsub.f32 %v3581, 0.5
      %v3598 = vsub.f32 %v3582, 0.5
      %v3599 = vsub.f32 %v3583, 0.5
      %v3600 = vsub.f32 %v3584, 0.5
      %v3601 = vsub.f32 %v3585, 0.5
      %v3602 = vsub.f32 %v3586, 0.5
      %v3603 = vsub.f32 %v3587, 0.5
      %v3604 = vsub.f32 %v3588, 0.5
      %v3605 = vsel %vm1798, %v3589, 0.0
      %3606 = vadd.xlane.f32.xlu0 %v3605
      %v3607 = vpop.xlane.xlu0 %3606
      %v3608 = vsel %vm1798, %v3590, 0.0
      %3609 = vadd.xlane.f32.xlu0 %v3608
      %v3610 = vpop.xlane.xlu0 %3609
      %v3611 = vsel %vm1798, %v3591, 0.0
      %3612 = vadd.xlane.f32.xlu0 %v3611
      %v3613 = vpop.xlane.xlu0 %3612
      %v3614 = vsel %vm1798, %v3592, 0.0
      %3615 = vadd.xlane.f32.xlu0 %v3614
      %v3616 = vpop.xlane.xlu0 %3615
      %v3617 = vsel %vm1798, %v3593, 0.0
      %3618 = vadd.xlane.f32.xlu0 %v3617
      %v3619 = vpop.xlane.xlu0 %3618
      %v3620 = vsel %vm1798, %v3594, 0.0
      %3621 = vadd.xlane.f32.xlu0 %v3620
      %v3622 = vpop.xlane.xlu0 %3621
      %v3623 = vsel %vm1798, %v3595, 0.0
      %3624 = vadd.xlane.f32.xlu0 %v3623
      %v3625 = vpop.xlane.xlu0 %3624
      %v3626 = vsel %vm1798, %v3596, 0.0
      %3627 = vadd.xlane.f32.xlu0 %v3626
      %v3628 = vpop.xlane.xlu0 %3627
      %v3629 = vsel %vm1798, %v3597, 0.0
      %3630 = vadd.xlane.f32.xlu0 %v3629
      %v3631 = vpop.xlane.xlu0 %3630
      %v3632 = vsel %vm1798, %v3598, 0.0
      %3633 = vadd.xlane.f32.xlu0 %v3632
      %v3634 = vpop.xlane.xlu0 %3633
      %v3635 = vsel %vm1798, %v3599, 0.0
      %3636 = vadd.xlane.f32.xlu0 %v3635
      %v3637 = vpop.xlane.xlu0 %3636
      %v3638 = vsel %vm1798, %v3600, 0.0
      %3639 = vadd.xlane.f32.xlu0 %v3638
      %v3640 = vpop.xlane.xlu0 %3639
      %v3641 = vsel %vm1798, %v3601, 0.0
      %3642 = vadd.xlane.f32.xlu0 %v3641
      %v3643 = vpop.xlane.xlu0 %3642
      %v3644 = vsel %vm1798, %v3602, 0.0
      %3645 = vadd.xlane.f32.xlu0 %v3644
      %v3646 = vpop.xlane.xlu0 %3645
      %v3647 = vsel %vm1798, %v3603, 0.0
      %3648 = vadd.xlane.f32.xlu0 %v3647
      %v3649 = vpop.xlane.xlu0 %3648
      %v3650 = vsel %vm1798, %v3604, 0.0
      %3651 = vadd.xlane.f32.xlu0 %v3650
      %v3652 = vpop.xlane.xlu0 %3651
      %vm3653 = vcmask 7168
      %3654 = vst.msk [vmem:[%s429] sm:$0xff] %vm3653, %v3607
      %3655 = vst.msk [vmem:[%s429 + $0x8] sm:$0xff] %vm3653, %v3610
      %3656 = vst.msk [vmem:[%s429 + $0x10] sm:$0xff] %vm3653, %v3613
      %3657 = vst.msk [vmem:[%s429 + $0x18] sm:$0xff] %vm3653, %v3616
      %3658 = vst.msk [vmem:[%s429 + $0x20] sm:$0xff] %vm3653, %v3619
      %3659 = vst.msk [vmem:[%s429 + $0x28] sm:$0xff] %vm3653, %v3622
      %3660 = vst.msk [vmem:[%s429 + $0x30] sm:$0xff] %vm3653, %v3625
      %3661 = vst.msk [vmem:[%s429 + $0x38] sm:$0xff] %vm3653, %v3628
      %3662 = vst.msk [vmem:[%s429 + $0x40] sm:$0xff] %vm3653, %v3631
      %3663 = vst.msk [vmem:[%s429 + $0x48] sm:$0xff] %vm3653, %v3634
      %3664 = vst.msk [vmem:[%s429 + $0x50] sm:$0xff] %vm3653, %v3637
      %3665 = vst.msk [vmem:[%s429 + $0x58] sm:$0xff] %vm3653, %v3640
      %3666 = vst.msk [vmem:[%s429 + $0x60] sm:$0xff] %vm3653, %v3643
      %3667 = vst.msk [vmem:[%s429 + $0x68] sm:$0xff] %vm3653, %v3646
      %3668 = vst.msk [vmem:[%s429 + $0x70] sm:$0xff] %vm3653, %v3649
      %3669 = vst.msk [vmem:[%s429 + $0x78] sm:$0xff] %vm3653, %v3652
      %v3670 = vpack.c.bf16 %v3510, %v3509
      %v3671 = vpack.c.bf16 %v3512, %v3511
      %v3672 = vpack.c.bf16 %v3514, %v3513
      %v3673 = vpack.c.bf16 %v3516, %v3515
      %v3674 = vpack.c.bf16 %v3518, %v3517
      %v3675 = vpack.c.bf16 %v3520, %v3519
      %v3676 = vpack.c.bf16 %v3522, %v3521
      %v3677 = vpack.c.bf16 %v3524, %v3523
      %v3678 = vld [vmem:[%s6] sm:$0xff]
      %v3679 = vld [vmem:[%s6 + $0x8] sm:$0xff]
      %v3680 = vld [vmem:[%s6 + $0x10] sm:$0xff]
      %v3681 = vld [vmem:[%s6 + $0x18] sm:$0xff]
      %v3682 = vld [vmem:[%s7] sm:$0xf]
      %v3684 = vlaneseq
      %v3685 = vshrl.u32 %v3684, 7
      %v3686 = vsub.s32 0, %v3685
      %v3687 = vrot.slane %v3682, %v3686
      %v3688 = vlaneseq
      %v3689 = vshrl.u32 %v3688, 7
      %v3690 = vsub.s32 1, %v3689
      %v3691 = vrot.slane %v3682, %v3690
      %v3692 = vlaneseq
      %v3693 = vshrl.u32 %v3692, 7
      %v3694 = vsub.s32 2, %v3693
      %v3695 = vrot.slane %v3682, %v3694
      %v3696 = vlaneseq
      %v3697 = vshrl.u32 %v3696, 7
      %v3698 = vsub.s32 3, %v3697
      %v3699 = vrot.slane %v3682, %v3698
      %v3708 = vunpack.c.l.b16 %v3678
      %v3709 = vunpack.c.h.b16 %v3678
      %v3710 = vunpack.c.l.b16 %v3679
      %v3711 = vunpack.c.h.b16 %v3679
      %v3712 = vunpack.c.l.b16 %v3680
      %v3713 = vunpack.c.h.b16 %v3680
      %v3714 = vunpack.c.l.b16 %v3681
      %v3715 = vunpack.c.h.b16 %v3681
      %v3716 = vpack.c.b16 %v3712, %v3708
      %v3717 = vpack.c.b16 %v3713, %v3709
      %v3718 = vpack.c.b16 %v3714, %v3710
      %v3719 = vpack.c.b16 %v3715, %v3711
      %v3725 = vsel %vm1798, %v3670, 0
      %v3728 = vsel %vm1798, %v3671, 0
      %v3731 = vsel %vm1798, %v3672, 0
      %v3734 = vsel %vm1798, %v3673, 0
      %v3737 = vsel %vm1798, %v3674, 0
      %v3740 = vsel %vm1798, %v3675, 0
      %v3743 = vsel %vm1798, %v3676, 0
      %v3746 = vsel %vm1798, %v3677, 0
      %3748 = vmatprep.subr.bf16.mxu0 %v3717
      %3749 = vmatpush1.bf16.msra.mxu0 %v3716
      %3750 = vmatprep.subr.bf16.mxu0 0
      %3751 = vmatpush1.bf16.msra.mxu0 0
      %3752 = vmatprep.subr.bf16.mxu0 0
      %3753 = vmatpush1.bf16.msra.mxu0 0
      %3754 = vmatprep.subr.bf16.mxu0 0
      %3755 = vmatpush1.bf16.msra.mxu0 0
      %3756 = vmatprep.subr.bf16.mxu0 0
      %3757 = vmatpush1.bf16.msra.mxu0 0
      %3758 = vmatprep.subr.bf16.mxu0 0
      %3759 = vmatpush1.bf16.msra.mxu0 0
      %3760 = vmatprep.subr.bf16.mxu0 0
      %3761 = vmatpush1.bf16.msra.mxu0 0
      %3762 = vmatprep.subr.bf16.mxu0 0
      %3763 = vmatpush1.bf16.msra.mxu0 0
      %3764 = vmatprep.subr.bf16.mxu0 0
      %3765 = vmatpush1.bf16.msra.mxu0 0
      %3766 = vmatprep.subr.bf16.mxu0 0
      %3767 = vmatpush1.bf16.msra.mxu0 0
      %3768 = vmatprep.subr.bf16.mxu0 0
      %3769 = vmatpush1.bf16.msra.mxu0 0
      %3770 = vmatprep.subr.bf16.mxu0 0
      %3771 = vmatpush1.bf16.msra.mxu0 0
      %3772 = vmatprep.subr.bf16.mxu0 0
      %3773 = vmatpush1.bf16.msra.mxu0 0
      %3774 = vmatprep.subr.bf16.mxu0 0
      %3775 = vmatpush1.bf16.msra.mxu0 0
      %3776 = vmatprep.subr.bf16.mxu0 0
      %3777 = vmatpush1.bf16.msra.mxu0 0
      %3778 = vmatprep.subr.bf16.mxu0 0
      %3779 = vmatpush1.bf16.msra.mxu0 0
      %3780 = vmatprep.mubr.bf16.mxu0 0
      %3781 = vmatmul.mubr.bf16.gmra.mrb[0].mxu0 %v3725
      %v3782 = vpop.f32.mrb[0].mxu0
      %v3783 = vadd.f32 %v3687, %v3782
      %v3784 = vpop.f32.mrb[0].mxu0
      %v3785 = vadd.f32 %v3691, %v3784
      %v3786 = vpop.f32.mrb[0].mxu0
      %v3787 = vadd.f32 %v3687, %v3786
      %v3788 = vpop.f32.mrb[0].mxu0
      %v3789 = vadd.f32 %v3691, %v3788
      %3790 = vmatprep.mubr.bf16.mxu0 0
      %3791 = vmatmul.mubr.bf16.gmra.mrb[0].mxu0 %v3728
      %v3792 = vpop.f32.mrb[0].mxu0
      %v3793 = vadd.f32 %v3687, %v3792
      %v3794 = vpop.f32.mrb[0].mxu0
      %v3795 = vadd.f32 %v3691, %v3794
      %v3796 = vpop.f32.mrb[0].mxu0
      %v3797 = vadd.f32 %v3687, %v3796
      %v3798 = vpop.f32.mrb[0].mxu0
      %v3799 = vadd.f32 %v3691, %v3798
      %3800 = vmatprep.mubr.bf16.mxu0 0
      %3801 = vmatmul.mubr.bf16.gmra.mrb[0].mxu0 %v3731
      %v3802 = vpop.f32.mrb[0].mxu0
      %v3803 = vadd.f32 %v3687, %v3802
      %v3804 = vpop.f32.mrb[0].mxu0
      %v3805 = vadd.f32 %v3691, %v3804
      %v3806 = vpop.f32.mrb[0].mxu0
      %v3807 = vadd.f32 %v3687, %v3806
      %v3808 = vpop.f32.mrb[0].mxu0
      %v3809 = vadd.f32 %v3691, %v3808
      %3810 = vmatprep.mubr.bf16.mxu0 0
      %3811 = vmatmul.mubr.bf16.gmra.mrb[0].mxu0 %v3734
      %v3812 = vpop.f32.mrb[0].mxu0
      %v3813 = vadd.f32 %v3687, %v3812
      %v3814 = vpop.f32.mrb[0].mxu0
      %v3815 = vadd.f32 %v3691, %v3814
      %v3816 = vpop.f32.mrb[0].mxu0
      %v3817 = vadd.f32 %v3687, %v3816
      %v3818 = vpop.f32.mrb[0].mxu0
      %v3819 = vadd.f32 %v3691, %v3818
      %3820 = vmatprep.mubr.bf16.mxu0 0
      %3821 = vmatmul.mubr.bf16.gmra.mrb[0].mxu0 %v3737
      %v3822 = vpop.f32.mrb[0].mxu0
      %v3823 = vadd.f32 %v3687, %v3822
      %v3824 = vpop.f32.mrb[0].mxu0
      %v3825 = vadd.f32 %v3691, %v3824
      %v3826 = vpop.f32.mrb[0].mxu0
      %v3827 = vadd.f32 %v3687, %v3826
      %v3828 = vpop.f32.mrb[0].mxu0
      %v3829 = vadd.f32 %v3691, %v3828
      %3830 = vmatprep.mubr.bf16.mxu0 0
      %3831 = vmatmul.mubr.bf16.gmra.mrb[0].mxu0 %v3740
      %v3832 = vpop.f32.mrb[0].mxu0
      %v3833 = vadd.f32 %v3687, %v3832
      %v3834 = vpop.f32.mrb[0].mxu0
      %v3835 = vadd.f32 %v3691, %v3834
      %v3836 = vpop.f32.mrb[0].mxu0
      %v3837 = vadd.f32 %v3687, %v3836
      %v3838 = vpop.f32.mrb[0].mxu0
      %v3839 = vadd.f32 %v3691, %v3838
      %3840 = vmatprep.mubr.bf16.mxu0 0
      %3841 = vmatmul.mubr.bf16.gmra.mrb[0].mxu0 %v3743
      %v3842 = vpop.f32.mrb[0].mxu0
      %v3843 = vadd.f32 %v3687, %v3842
      %v3844 = vpop.f32.mrb[0].mxu0
      %v3845 = vadd.f32 %v3691, %v3844
      %v3846 = vpop.f32.mrb[0].mxu0
      %v3847 = vadd.f32 %v3687, %v3846
      %v3848 = vpop.f32.mrb[0].mxu0
      %v3849 = vadd.f32 %v3691, %v3848
      %3850 = vmatprep.mubr.bf16.mxu0 0
      %3851 = vmatmul.mubr.bf16.gmra.mrb[0].mxu0 %v3746
      %v3852 = vpop.f32.mrb[0].mxu0
      %v3853 = vadd.f32 %v3687, %v3852
      %v3854 = vpop.f32.mrb[0].mxu0
      %v3855 = vadd.f32 %v3691, %v3854
      %v3856 = vpop.f32.mrb[0].mxu0
      %v3857 = vadd.f32 %v3687, %v3856
      %v3858 = vpop.f32.mrb[0].mxu0
      %v3859 = vadd.f32 %v3691, %v3858
      %3860 = vdwg.mxu0
      %3861 = vmatprep.subr.bf16.mxu0 %v3719
      %3862 = vmatpush1.bf16.msra.mxu0 %v3718
      %3863 = vmatprep.subr.bf16.mxu0 0
      %3864 = vmatpush1.bf16.msra.mxu0 0
      %3865 = vmatprep.subr.bf16.mxu0 0
      %3866 = vmatpush1.bf16.msra.mxu0 0
      %3867 = vmatprep.subr.bf16.mxu0 0
      %3868 = vmatpush1.bf16.msra.mxu0 0
      %3869 = vmatprep.subr.bf16.mxu0 0
      %3870 = vmatpush1.bf16.msra.mxu0 0
      %3871 = vmatprep.subr.bf16.mxu0 0
      %3872 = vmatpush1.bf16.msra.mxu0 0
      %3873 = vmatprep.subr.bf16.mxu0 0
      %3874 = vmatpush1.bf16.msra.mxu0 0
      %3875 = vmatprep.subr.bf16.mxu0 0
      %3876 = vmatpush1.bf16.msra.mxu0 0
      %3877 = vmatprep.subr.bf16.mxu0 0
      %3878 = vmatpush1.bf16.msra.mxu0 0
      %3879 = vmatprep.subr.bf16.mxu0 0
      %3880 = vmatpush1.bf16.msra.mxu0 0
      %3881 = vmatprep.subr.bf16.mxu0 0
      %3882 = vmatpush1.bf16.msra.mxu0 0
      %3883 = vmatprep.subr.bf16.mxu0 0
      %3884 = vmatpush1.bf16.msra.mxu0 0
      %3885 = vmatprep.subr.bf16.mxu0 0
      %3886 = vmatpush1.bf16.msra.mxu0 0
      %3887 = vmatprep.subr.bf16.mxu0 0
      %3888 = vmatpush1.bf16.msra.mxu0 0
      %3889 = vmatprep.subr.bf16.mxu0 0
      %3890 = vmatpush1.bf16.msra.mxu0 0
      %3891 = vmatprep.subr.bf16.mxu0 0
      %3892 = vmatpush1.bf16.msra.mxu0 0
      %3893 = vmatprep.mubr.bf16.mxu0 0
      %3894 = vmatmul.mubr.bf16.gmra.mrb[0].mxu0 %v3725
      %v3895 = vpop.f32.mrb[0].mxu0
      %v3896 = vadd.f32 %v3695, %v3895
      %v3897 = vpop.f32.mrb[0].mxu0
      %v3898 = vadd.f32 %v3699, %v3897
      %v3899 = vpop.f32.mrb[0].mxu0
      %v3900 = vadd.f32 %v3695, %v3899
      %v3901 = vpop.f32.mrb[0].mxu0
      %v3902 = vadd.f32 %v3699, %v3901
      %3903 = vmatprep.mubr.bf16.mxu0 0
      %3904 = vmatmul.mubr.bf16.gmra.mrb[0].mxu0 %v3728
      %v3905 = vpop.f32.mrb[0].mxu0
      %v3906 = vadd.f32 %v3695, %v3905
      %v3907 = vpop.f32.mrb[0].mxu0
      %v3908 = vadd.f32 %v3699, %v3907
      %v3909 = vpop.f32.mrb[0].mxu0
      %v3910 = vadd.f32 %v3695, %v3909
      %v3911 = vpop.f32.mrb[0].mxu0
      %v3912 = vadd.f32 %v3699, %v3911
      %3913 = vmatprep.mubr.bf16.mxu0 0
      %3914 = vmatmul.mubr.bf16.gmra.mrb[0].mxu0 %v3731
      %v3915 = vpop.f32.mrb[0].mxu0
      %v3916 = vadd.f32 %v3695, %v3915
      %v3917 = vpop.f32.mrb[0].mxu0
      %v3918 = vadd.f32 %v3699, %v3917
      %v3919 = vpop.f32.mrb[0].mxu0
      %v3920 = vadd.f32 %v3695, %v3919
      %v3921 = vpop.f32.mrb[0].mxu0
      %v3922 = vadd.f32 %v3699, %v3921
      %3923 = vmatprep.mubr.bf16.mxu0 0
      %3924 = vmatmul.mubr.bf16.gmra.mrb[0].mxu0 %v3734
      %v3925 = vpop.f32.mrb[0].mxu0
      %v3926 = vadd.f32 %v3695, %v3925
      %v3927 = vpop.f32.mrb[0].mxu0
      %v3928 = vadd.f32 %v3699, %v3927
      %v3929 = vpop.f32.mrb[0].mxu0
      %v3930 = vadd.f32 %v3695, %v3929
      %v3931 = vpop.f32.mrb[0].mxu0
      %v3932 = vadd.f32 %v3699, %v3931
      %3933 = vmatprep.mubr.bf16.mxu0 0
      %3934 = vmatmul.mubr.bf16.gmra.mrb[0].mxu0 %v3737
      %v3935 = vpop.f32.mrb[0].mxu0
      %v3936 = vadd.f32 %v3695, %v3935
      %v3937 = vpop.f32.mrb[0].mxu0
      %v3938 = vadd.f32 %v3699, %v3937
      %v3939 = vpop.f32.mrb[0].mxu0
      %v3940 = vadd.f32 %v3695, %v3939
      %v3941 = vpop.f32.mrb[0].mxu0
      %v3942 = vadd.f32 %v3699, %v3941
      %3943 = vmatprep.mubr.bf16.mxu0 0
      %3944 = vmatmul.mubr.bf16.gmra.mrb[0].mxu0 %v3740
      %v3945 = vpop.f32.mrb[0].mxu0
      %v3946 = vadd.f32 %v3695, %v3945
      %v3947 = vpop.f32.mrb[0].mxu0
      %v3948 = vadd.f32 %v3699, %v3947
      %v3949 = vpop.f32.mrb[0].mxu0
      %v3950 = vadd.f32 %v3695, %v3949
      %v3951 = vpop.f32.mrb[0].mxu0
      %v3952 = vadd.f32 %v3699, %v3951
      %3953 = vmatprep.mubr.bf16.mxu0 0
      %3954 = vmatmul.mubr.bf16.gmra.mrb[0].mxu0 %v3743
      %v3955 = vpop.f32.mrb[0].mxu0
      %v3956 = vadd.f32 %v3695, %v3955
      %v3957 = vpop.f32.mrb[0].mxu0
      %v3958 = vadd.f32 %v3699, %v3957
      %v3959 = vpop.f32.mrb[0].mxu0
      %v3960 = vadd.f32 %v3695, %v3959
      %v3961 = vpop.f32.mrb[0].mxu0
      %v3962 = vadd.f32 %v3699, %v3961
      %3963 = vmatprep.mubr.bf16.mxu0 0
      %3964 = vmatmul.mubr.bf16.gmra.mrb[0].mxu0 %v3746
      %v3965 = vpop.f32.mrb[0].mxu0
      %v3966 = vadd.f32 %v3695, %v3965
      %v3967 = vpop.f32.mrb[0].mxu0
      %v3968 = vadd.f32 %v3699, %v3967
      %v3969 = vpop.f32.mrb[0].mxu0
      %v3970 = vadd.f32 %v3695, %v3969
      %v3971 = vpop.f32.mrb[0].mxu0
      %v3972 = vadd.f32 %v3699, %v3971
      %3973 = vdwg.mxu0
      %v3974 = vmax.f32 %v3783, 0.0
      %v3975 = vmax.f32 %v3785, 0.0
      %v3976 = vmax.f32 %v3896, 0.0
      %v3977 = vmax.f32 %v3898, 0.0
      %v3978 = vmax.f32 %v3787, 0.0
      %v3979 = vmax.f32 %v3789, 0.0
      %v3980 = vmax.f32 %v3900, 0.0
      %v3981 = vmax.f32 %v3902, 0.0
      %v3982 = vmax.f32 %v3793, 0.0
      %v3983 = vmax.f32 %v3795, 0.0
      %v3984 = vmax.f32 %v3906, 0.0
      %v3985 = vmax.f32 %v3908, 0.0
      %v3986 = vmax.f32 %v3797, 0.0
      %v3987 = vmax.f32 %v3799, 0.0
      %v3988 = vmax.f32 %v3910, 0.0
      %v3989 = vmax.f32 %v3912, 0.0
      %v3990 = vmax.f32 %v3803, 0.0
      %v3991 = vmax.f32 %v3805, 0.0
      %v3992 = vmax.f32 %v3916, 0.0
      %v3993 = vmax.f32 %v3918, 0.0
      %v3994 = vmax.f32 %v3807, 0.0
      %v3995 = vmax.f32 %v3809, 0.0
      %v3996 = vmax.f32 %v3920, 0.0
      %v3997 = vmax.f32 %v3922, 0.0
      %v3998 = vmax.f32 %v3813, 0.0
      %v3999 = vmax.f32 %v3815, 0.0
      %v4000 = vmax.f32 %v3926, 0.0
      %v4001 = vmax.f32 %v3928, 0.0
      %v4002 = vmax.f32 %v3817, 0.0
      %v4003 = vmax.f32 %v3819, 0.0
      %v4004 = vmax.f32 %v3930, 0.0
      %v4005 = vmax.f32 %v3932, 0.0
      %v4006 = vmax.f32 %v3823, 0.0
      %v4007 = vmax.f32 %v3825, 0.0
      %v4008 = vmax.f32 %v3936, 0.0
      %v4009 = vmax.f32 %v3938, 0.0
      %v4010 = vmax.f32 %v3827, 0.0
      %v4011 = vmax.f32 %v3829, 0.0
      %v4012 = vmax.f32 %v3940, 0.0
      %v4013 = vmax.f32 %v3942, 0.0
      %v4014 = vmax.f32 %v3833, 0.0
      %v4015 = vmax.f32 %v3835, 0.0
      %v4016 = vmax.f32 %v3946, 0.0
      %v4017 = vmax.f32 %v3948, 0.0
      %v4018 = vmax.f32 %v3837, 0.0
      %v4019 = vmax.f32 %v3839, 0.0
      %v4020 = vmax.f32 %v3950, 0.0
      %v4021 = vmax.f32 %v3952, 0.0
      %v4022 = vmax.f32 %v3843, 0.0
      %v4023 = vmax.f32 %v3845, 0.0
      %v4024 = vmax.f32 %v3956, 0.0
      %v4025 = vmax.f32 %v3958, 0.0
      %v4026 = vmax.f32 %v3847, 0.0
      %v4027 = vmax.f32 %v3849, 0.0
      %v4028 = vmax.f32 %v3960, 0.0
      %v4029 = vmax.f32 %v3962, 0.0
      %v4030 = vmax.f32 %v3853, 0.0
      %v4031 = vmax.f32 %v3855, 0.0
      %v4032 = vmax.f32 %v3966, 0.0
      %v4033 = vmax.f32 %v3968, 0.0
      %v4034 = vmax.f32 %v3857, 0.0
      %v4035 = vmax.f32 %v3859, 0.0
      %v4036 = vmax.f32 %v3970, 0.0
      %v4037 = vmax.f32 %v3972, 0.0
      %v4038 = vpack.c.bf16 %v3978, %v3974
      %v4039 = vpack.c.bf16 %v3979, %v3975
      %v4040 = vpack.c.bf16 %v3980, %v3976
      %v4041 = vpack.c.bf16 %v3981, %v3977
      %v4042 = vpack.c.bf16 %v3986, %v3982
      %v4043 = vpack.c.bf16 %v3987, %v3983
      %v4044 = vpack.c.bf16 %v3988, %v3984
      %v4045 = vpack.c.bf16 %v3989, %v3985
      %v4046 = vpack.c.bf16 %v3994, %v3990
      %v4047 = vpack.c.bf16 %v3995, %v3991
      %v4048 = vpack.c.bf16 %v3996, %v3992
      %v4049 = vpack.c.bf16 %v3997, %v3993
      %v4050 = vpack.c.bf16 %v4002, %v3998
      %v4051 = vpack.c.bf16 %v4003, %v3999
      %v4052 = vpack.c.bf16 %v4004, %v4000
      %v4053 = vpack.c.bf16 %v4005, %v4001
      %v4054 = vpack.c.bf16 %v4010, %v4006
      %v4055 = vpack.c.bf16 %v4011, %v4007
      %v4056 = vpack.c.bf16 %v4012, %v4008
      %v4057 = vpack.c.bf16 %v4013, %v4009
      %v4058 = vpack.c.bf16 %v4018, %v4014
      %v4059 = vpack.c.bf16 %v4019, %v4015
      %v4060 = vpack.c.bf16 %v4020, %v4016
      %v4061 = vpack.c.bf16 %v4021, %v4017
      %v4062 = vpack.c.bf16 %v4026, %v4022
      %v4063 = vpack.c.bf16 %v4027, %v4023
      %v4064 = vpack.c.bf16 %v4028, %v4024
      %v4065 = vpack.c.bf16 %v4029, %v4025
      %v4066 = vpack.c.bf16 %v4034, %v4030
      %v4067 = vpack.c.bf16 %v4035, %v4031
      %v4068 = vpack.c.bf16 %v4036, %v4032
      %v4069 = vpack.c.bf16 %v4037, %v4033
      %v4070 = vld [vmem:[%s8] sm:$0xff]
      %v4071 = vld [vmem:[%s8 + $0x8] sm:$0xff]
      %v4072 = vld [vmem:[%s8 + $0x10] sm:$0xff]
      %v4073 = vld [vmem:[%s8 + $0x18] sm:$0xf]
      %v4074 = vld [vmem:[%s8 + $0x1c] sm:$0xff]
      %v4075 = vld [vmem:[%s8 + $0x24] sm:$0xff]
      %v4076 = vld [vmem:[%s8 + $0x2c] sm:$0xff]
      %v4077 = vld [vmem:[%s8 + $0x34] sm:$0xf]
      %v4078 = vld [vmem:[%s8 + $0x38] sm:$0xff]
      %v4079 = vld [vmem:[%s8 + $0x40] sm:$0xff]
      %v4080 = vld [vmem:[%s8 + $0x48] sm:$0xff]
      %v4081 = vld [vmem:[%s8 + $0x50] sm:$0xf]
      %v4082 = vld [vmem:[%s8 + $0x54] sm:$0xff]
      %v4083 = vld [vmem:[%s8 + $0x5c] sm:$0xff]
      %v4084 = vld [vmem:[%s8 + $0x64] sm:$0xff]
      %v4085 = vld [vmem:[%s8 + $0x6c] sm:$0xf]
      %v4086 = vld [vmem:[%s8 + $0x70] sm:$0xff]
      %v4087 = vld [vmem:[%s8 + $0x78] sm:$0xff]
      %v4088 = vld [vmem:[%s8 + $0x80] sm:$0xff]
      %v4089 = vld [vmem:[%s8 + $0x88] sm:$0xf]
      %v4090 = vld [vmem:[%s8 + $0x8c] sm:$0xff]
      %v4091 = vld [vmem:[%s8 + $0x94] sm:$0xff]
      %v4092 = vld [vmem:[%s8 + $0x9c] sm:$0xff]
      %v4093 = vld [vmem:[%s8 + $0xa4] sm:$0xf]
      %v4094 = vld [vmem:[%s8 + $0xa8] sm:$0xff]
      %v4095 = vld [vmem:[%s8 + $0xb0] sm:$0xff]
      %v4096 = vld [vmem:[%s8 + $0xb8] sm:$0xff]
      %v4097 = vld [vmem:[%s8 + $0xc0] sm:$0xf]
      %v4098 = vld [vmem:[%s8 + $0xc4] sm:$0xff]
      %v4099 = vld [vmem:[%s8 + $0xcc] sm:$0xff]
      %v4100 = vld [vmem:[%s8 + $0xd4] sm:$0xff]
      %v4101 = vld [vmem:[%s8 + $0xdc] sm:$0xf]
      %v4102 = vld [vmem:[%s8 + $0xe0] sm:$0xff]
      %v4103 = vld [vmem:[%s8 + $0xe8] sm:$0xff]
      %v4104 = vld [vmem:[%s8 + $0xf0] sm:$0xff]
      %v4105 = vld [vmem:[%s8 + $0xf8] sm:$0xf]
      %v4106 = vld [vmem:[%s8 + $0xfc] sm:$0xff]
      %v4107 = vld [vmem:[%s8 + $0x104] sm:$0xff]
      %v4108 = vld [vmem:[%s8 + $0x10c] sm:$0xff]
      %v4109 = vld [vmem:[%s8 + $0x114] sm:$0xf]
      %v4110 = vld [vmem:[%s8 + $0x118] sm:$0xff]
      %v4111 = vld [vmem:[%s8 + $0x120] sm:$0xff]
      %v4112 = vld [vmem:[%s8 + $0x128] sm:$0xff]
      %v4113 = vld [vmem:[%s8 + $0x130] sm:$0xf]
      %v4114 = vld [vmem:[%s8 + $0x134] sm:$0xff]
      %v4115 = vld [vmem:[%s8 + $0x13c] sm:$0xff]
      %v4116 = vld [vmem:[%s8 + $0x144] sm:$0xff]
      %v4117 = vld [vmem:[%s8 + $0x14c] sm:$0xf]
      %v4118 = vld [vmem:[%s8 + $0x150] sm:$0xff]
      %v4119 = vld [vmem:[%s8 + $0x158] sm:$0xff]
      %v4120 = vld [vmem:[%s8 + $0x160] sm:$0xff]
      %v4121 = vld [vmem:[%s8 + $0x168] sm:$0xf]
      %v4122 = vld [vmem:[%s8 + $0x16c] sm:$0xff]
      %v4123 = vld [vmem:[%s8 + $0x174] sm:$0xff]
      %v4124 = vld [vmem:[%s8 + $0x17c] sm:$0xff]
      %v4125 = vld [vmem:[%s8 + $0x184] sm:$0xf]
      %v4126 = vld [vmem:[%s8 + $0x188] sm:$0xff]
      %v4127 = vld [vmem:[%s8 + $0x190] sm:$0xff]
      %v4128 = vld [vmem:[%s8 + $0x198] sm:$0xff]
      %v4129 = vld [vmem:[%s8 + $0x1a0] sm:$0xf]
      %v4130 = vld [vmem:[%s8 + $0x1a4] sm:$0xff]
      %v4131 = vld [vmem:[%s8 + $0x1ac] sm:$0xff]
      %v4132 = vld [vmem:[%s8 + $0x1b4] sm:$0xff]
      %v4133 = vld [vmem:[%s8 + $0x1bc] sm:$0xf]
      %v4134 = vld [vmem:[%s8 + $0x1c0] sm:$0xff]
      %v4135 = vld [vmem:[%s8 + $0x1c8] sm:$0xff]
      %v4136 = vld [vmem:[%s8 + $0x1d0] sm:$0xff]
      %v4137 = vld [vmem:[%s8 + $0x1d8] sm:$0xf]
      %v4138 = vld [vmem:[%s8 + $0x1dc] sm:$0xff]
      %v4139 = vld [vmem:[%s8 + $0x1e4] sm:$0xff]
      %v4140 = vld [vmem:[%s8 + $0x1ec] sm:$0xff]
      %v4141 = vld [vmem:[%s8 + $0x1f4] sm:$0xf]
      %v4142 = vld [vmem:[%s8 + $0x1f8] sm:$0xff]
      %v4143 = vld [vmem:[%s8 + $0x200] sm:$0xff]
      %v4144 = vld [vmem:[%s8 + $0x208] sm:$0xff]
      %v4145 = vld [vmem:[%s8 + $0x210] sm:$0xf]
      %v4146 = vld [vmem:[%s8 + $0x214] sm:$0xff]
      %v4147 = vld [vmem:[%s8 + $0x21c] sm:$0xff]
      %v4148 = vld [vmem:[%s8 + $0x224] sm:$0xff]
      %v4149 = vld [vmem:[%s8 + $0x22c] sm:$0xf]
      %v4150 = vld [vmem:[%s8 + $0x230] sm:$0xff]
      %v4151 = vld [vmem:[%s8 + $0x238] sm:$0xff]
      %v4152 = vld [vmem:[%s8 + $0x240] sm:$0xff]
      %v4153 = vld [vmem:[%s8 + $0x248] sm:$0xf]
      %v4154 = vld [vmem:[%s8 + $0x24c] sm:$0xff]
      %v4155 = vld [vmem:[%s8 + $0x254] sm:$0xff]
      %v4156 = vld [vmem:[%s8 + $0x25c] sm:$0xff]
      %v4157 = vld [vmem:[%s8 + $0x264] sm:$0xf]
      %v4158 = vld [vmem:[%s8 + $0x268] sm:$0xff]
      %v4159 = vld [vmem:[%s8 + $0x270] sm:$0xff]
      %v4160 = vld [vmem:[%s8 + $0x278] sm:$0xff]
      %v4161 = vld [vmem:[%s8 + $0x280] sm:$0xf]
      %v4162 = vld [vmem:[%s8 + $0x284] sm:$0xff]
      %v4163 = vld [vmem:[%s8 + $0x28c] sm:$0xff]
      %v4164 = vld [vmem:[%s8 + $0x294] sm:$0xff]
      %v4165 = vld [vmem:[%s8 + $0x29c] sm:$0xf]
      %v4166 = vld [vmem:[%s8 + $0x2a0] sm:$0xff]
      %v4167 = vld [vmem:[%s8 + $0x2a8] sm:$0xff]
      %v4168 = vld [vmem:[%s8 + $0x2b0] sm:$0xff]
      %v4169 = vld [vmem:[%s8 + $0x2b8] sm:$0xf]
      %v4170 = vld [vmem:[%s8 + $0x2bc] sm:$0xff]
      %v4171 = vld [vmem:[%s8 + $0x2c4] sm:$0xff]
      %v4172 = vld [vmem:[%s8 + $0x2cc] sm:$0xff]
      %v4173 = vld [vmem:[%s8 + $0x2d4] sm:$0xf]
      %v4174 = vld [vmem:[%s8 + $0x2d8] sm:$0xff]
      %v4175 = vld [vmem:[%s8 + $0x2e0] sm:$0xff]
      %v4176 = vld [vmem:[%s8 + $0x2e8] sm:$0xff]
      %v4177 = vld [vmem:[%s8 + $0x2f0] sm:$0xf]
      %v4178 = vld [vmem:[%s8 + $0x2f4] sm:$0xff]
      %v4179 = vld [vmem:[%s8 + $0x2fc] sm:$0xff]
      %v4180 = vld [vmem:[%s8 + $0x304] sm:$0xff]
      %v4181 = vld [vmem:[%s8 + $0x30c] sm:$0xf]
      %v4182 = vld [vmem:[%s8 + $0x310] sm:$0xff]
      %v4183 = vld [vmem:[%s8 + $0x318] sm:$0xff]
      %v4184 = vld [vmem:[%s8 + $0x320] sm:$0xff]
      %v4185 = vld [vmem:[%s8 + $0x328] sm:$0xf]
      %v4186 = vld [vmem:[%s8 + $0x32c] sm:$0xff]
      %v4187 = vld [vmem:[%s8 + $0x334] sm:$0xff]
      %v4188 = vld [vmem:[%s8 + $0x33c] sm:$0xff]
      %v4189 = vld [vmem:[%s8 + $0x344] sm:$0xf]
      %v4190 = vld [vmem:[%s8 + $0x348] sm:$0xff]
      %v4191 = vld [vmem:[%s8 + $0x350] sm:$0xff]
      %v4192 = vld [vmem:[%s8 + $0x358] sm:$0xff]
      %v4193 = vld [vmem:[%s8 + $0x360] sm:$0xf]
      %v4194 = vld [vmem:[%s8 + $0x364] sm:$0xff]
      %v4195 = vld [vmem:[%s8 + $0x36c] sm:$0xff]
      %v4196 = vld [vmem:[%s8 + $0x374] sm:$0xff]
      %v4197 = vld [vmem:[%s8 + $0x37c] sm:$0xf]
      %v4198 = vld [vmem:[%s8 + $0x380] sm:$0xff]
      %v4199 = vld [vmem:[%s8 + $0x388] sm:$0xff]
      %v4200 = vld [vmem:[%s8 + $0x390] sm:$0xff]
      %v4201 = vld [vmem:[%s8 + $0x398] sm:$0xf]
      %v4202 = vld [vmem:[%s8 + $0x39c] sm:$0xff]
      %v4203 = vld [vmem:[%s8 + $0x3a4] sm:$0xff]
      %v4204 = vld [vmem:[%s8 + $0x3ac] sm:$0xff]
      %v4205 = vld [vmem:[%s8 + $0x3b4] sm:$0xf]
      %v4206 = vld [vmem:[%s8 + $0x3b8] sm:$0xff]
      %v4207 = vld [vmem:[%s8 + $0x3c0] sm:$0xff]
      %v4208 = vld [vmem:[%s8 + $0x3c8] sm:$0xff]
      %v4209 = vld [vmem:[%s8 + $0x3d0] sm:$0xf]
      %v4210 = vld [vmem:[%s8 + $0x3d4] sm:$0xff]
      %v4211 = vld [vmem:[%s8 + $0x3dc] sm:$0xff]
      %v4212 = vld [vmem:[%s8 + $0x3e4] sm:$0xff]
      %v4213 = vld [vmem:[%s8 + $0x3ec] sm:$0xf]
      %v4214 = vld [vmem:[%s8 + $0x3f0] sm:$0xff]
      %v4215 = vld [vmem:[%s8 + $0x3f8] sm:$0xff]
      %v4216 = vld [vmem:[%s8 + $0x400] sm:$0xff]
      %v4217 = vld [vmem:[%s8 + $0x408] sm:$0xf]
      %v4218 = vld [vmem:[%s8 + $0x40c] sm:$0xff]
      %v4219 = vld [vmem:[%s8 + $0x414] sm:$0xff]
      %v4220 = vld [vmem:[%s8 + $0x41c] sm:$0xff]
      %v4221 = vld [vmem:[%s8 + $0x424] sm:$0xf]
      %v4222 = vld [vmem:[%s8 + $0x428] sm:$0xff]
      %v4223 = vld [vmem:[%s8 + $0x430] sm:$0xff]
      %v4224 = vld [vmem:[%s8 + $0x438] sm:$0xff]
      %v4225 = vld [vmem:[%s8 + $0x440] sm:$0xf]
      %v4226 = vld [vmem:[%s8 + $0x444] sm:$0xff]
      %v4227 = vld [vmem:[%s8 + $0x44c] sm:$0xff]
      %v4228 = vld [vmem:[%s8 + $0x454] sm:$0xff]
      %v4229 = vld [vmem:[%s8 + $0x45c] sm:$0xf]
      %v4230 = vld [vmem:[%s8 + $0x460] sm:$0xff]
      %v4231 = vld [vmem:[%s8 + $0x468] sm:$0xff]
      %v4232 = vld [vmem:[%s8 + $0x470] sm:$0xff]
      %v4233 = vld [vmem:[%s8 + $0x478] sm:$0xf]
      %v4234 = vld [vmem:[%s8 + $0x47c] sm:$0xff]
      %v4235 = vld [vmem:[%s8 + $0x484] sm:$0xff]
      %v4236 = vld [vmem:[%s8 + $0x48c] sm:$0xff]
      %v4237 = vld [vmem:[%s8 + $0x494] sm:$0xf]
      %v4238 = vld [vmem:[%s8 + $0x498] sm:$0xff]
      %v4239 = vld [vmem:[%s8 + $0x4a0] sm:$0xff]
      %v4240 = vld [vmem:[%s8 + $0x4a8] sm:$0xff]
      %v4241 = vld [vmem:[%s8 + $0x4b0] sm:$0xf]
      %v4242 = vld [vmem:[%s8 + $0x4b4] sm:$0xff]
      %v4243 = vld [vmem:[%s8 + $0x4bc] sm:$0xff]
      %v4244 = vld [vmem:[%s8 + $0x4c4] sm:$0xff]
      %v4245 = vld [vmem:[%s8 + $0x4cc] sm:$0xf]
      %v4246 = vld [vmem:[%s8 + $0x4d0] sm:$0xff]
      %v4247 = vld [vmem:[%s8 + $0x4d8] sm:$0xff]
      %v4248 = vld [vmem:[%s8 + $0x4e0] sm:$0xff]
      %v4249 = vld [vmem:[%s8 + $0x4e8] sm:$0xf]
      %v4250 = vld [vmem:[%s8 + $0x4ec] sm:$0xff]
      %v4251 = vld [vmem:[%s8 + $0x4f4] sm:$0xff]
      %v4252 = vld [vmem:[%s8 + $0x4fc] sm:$0xff]
      %v4253 = vld [vmem:[%s8 + $0x504] sm:$0xf]
      %v4254 = vld [vmem:[%s8 + $0x508] sm:$0xff]
      %v4255 = vld [vmem:[%s8 + $0x510] sm:$0xff]
      %v4256 = vld [vmem:[%s8 + $0x518] sm:$0xff]
      %v4257 = vld [vmem:[%s8 + $0x520] sm:$0xf]
      %v4258 = vld [vmem:[%s8 + $0x524] sm:$0xff]
      %v4259 = vld [vmem:[%s8 + $0x52c] sm:$0xff]
      %v4260 = vld [vmem:[%s8 + $0x534] sm:$0xff]
      %v4261 = vld [vmem:[%s8 + $0x53c] sm:$0xf]
      %v4262 = vld [vmem:[%s8 + $0x540] sm:$0xff]
      %v4263 = vld [vmem:[%s8 + $0x548] sm:$0xff]
      %v4264 = vld [vmem:[%s8 + $0x550] sm:$0xff]
      %v4265 = vld [vmem:[%s8 + $0x558] sm:$0xf]
      %v4266 = vld [vmem:[%s8 + $0x55c] sm:$0xff]
      %v4267 = vld [vmem:[%s8 + $0x564] sm:$0xff]
      %v4268 = vld [vmem:[%s8 + $0x56c] sm:$0xff]
      %v4269 = vld [vmem:[%s8 + $0x574] sm:$0xf]
      %v4270 = vld [vmem:[%s8 + $0x578] sm:$0xff]
      %v4271 = vld [vmem:[%s8 + $0x580] sm:$0xff]
      %v4272 = vld [vmem:[%s8 + $0x588] sm:$0xff]
      %v4273 = vld [vmem:[%s8 + $0x590] sm:$0xf]
      %v4274 = vld [vmem:[%s8 + $0x594] sm:$0xff]
      %v4275 = vld [vmem:[%s8 + $0x59c] sm:$0xff]
      %v4276 = vld [vmem:[%s8 + $0x5a4] sm:$0xff]
      %v4277 = vld [vmem:[%s8 + $0x5ac] sm:$0xf]
      %v4278 = vld [vmem:[%s8 + $0x5b0] sm:$0xff]
      %v4279 = vld [vmem:[%s8 + $0x5b8] sm:$0xff]
      %v4280 = vld [vmem:[%s8 + $0x5c0] sm:$0xff]
      %v4281 = vld [vmem:[%s8 + $0x5c8] sm:$0xf]
      %v4282 = vld [vmem:[%s8 + $0x5cc] sm:$0xff]
      %v4283 = vld [vmem:[%s8 + $0x5d4] sm:$0xff]
      %v4284 = vld [vmem:[%s8 + $0x5dc] sm:$0xff]
      %v4285 = vld [vmem:[%s8 + $0x5e4] sm:$0xf]
      %v4286 = vld [vmem:[%s8 + $0x5e8] sm:$0xff]
      %v4287 = vld [vmem:[%s8 + $0x5f0] sm:$0xff]
      %v4288 = vld [vmem:[%s8 + $0x5f8] sm:$0xff]
      %v4289 = vld [vmem:[%s8 + $0x600] sm:$0xf]
      %v4290 = vld [vmem:[%s8 + $0x604] sm:$0xff]
      %v4291 = vld [vmem:[%s8 + $0x60c] sm:$0xff]
      %v4292 = vld [vmem:[%s8 + $0x614] sm:$0xff]
      %v4293 = vld [vmem:[%s8 + $0x61c] sm:$0xf]
      %v4294 = vld [vmem:[%s8 + $0x620] sm:$0xff]
      %v4295 = vld [vmem:[%s8 + $0x628] sm:$0xff]
      %v4296 = vld [vmem:[%s8 + $0x630] sm:$0xff]
      %v4297 = vld [vmem:[%s8 + $0x638] sm:$0xf]
      %v4298 = vld [vmem:[%s8 + $0x63c] sm:$0xff]
      %v4299 = vld [vmem:[%s8 + $0x644] sm:$0xff]
      %v4300 = vld [vmem:[%s8 + $0x64c] sm:$0xff]
      %v4301 = vld [vmem:[%s8 + $0x654] sm:$0xf]
      %v4302 = vld [vmem:[%s8 + $0x658] sm:$0xff]
      %v4303 = vld [vmem:[%s8 + $0x660] sm:$0xff]
      %v4304 = vld [vmem:[%s8 + $0x668] sm:$0xff]
      %v4305 = vld [vmem:[%s8 + $0x670] sm:$0xf]
      %v4306 = vld [vmem:[%s8 + $0x674] sm:$0xff]
      %v4307 = vld [vmem:[%s8 + $0x67c] sm:$0xff]
      %v4308 = vld [vmem:[%s8 + $0x684] sm:$0xff]
      %v4309 = vld [vmem:[%s8 + $0x68c] sm:$0xf]
      %v4310 = vld [vmem:[%s8 + $0x690] sm:$0xff]
      %v4311 = vld [vmem:[%s8 + $0x698] sm:$0xff]
      %v4312 = vld [vmem:[%s8 + $0x6a0] sm:$0xff]
      %v4313 = vld [vmem:[%s8 + $0x6a8] sm:$0xf]
      %v4314 = vld [vmem:[%s8 + $0x6ac] sm:$0xff]
      %v4315 = vld [vmem:[%s8 + $0x6b4] sm:$0xff]
      %v4316 = vld [vmem:[%s8 + $0x6bc] sm:$0xff]
      %v4317 = vld [vmem:[%s8 + $0x6c4] sm:$0xf]
      %v4318 = vld [vmem:[%s8 + $0x6c8] sm:$0xff]
      %v4319 = vld [vmem:[%s8 + $0x6d0] sm:$0xff]
      %v4320 = vld [vmem:[%s8 + $0x6d8] sm:$0xff]
      %v4321 = vld [vmem:[%s8 + $0x6e0] sm:$0xf]
      %v4322 = vld [vmem:[%s8 + $0x6e4] sm:$0xff]
      %v4323 = vld [vmem:[%s8 + $0x6ec] sm:$0xff]
      %v4324 = vld [vmem:[%s8 + $0x6f4] sm:$0xff]
      %v4325 = vld [vmem:[%s8 + $0x6fc] sm:$0xf]
      %v4326 = vld [vmem:[%s9] sm:$0x7f]
      %v4328 = vlaneseq
      %v4329 = vshrl.u32 %v4328, 7
      %v4330 = vsub.s32 0, %v4329
      %v4331 = vrot.slane %v4326, %v4330
      %v4332 = vlaneseq
      %v4333 = vshrl.u32 %v4332, 7
      %v4334 = vsub.s32 1, %v4333
      %v4335 = vrot.slane %v4326, %v4334
      %v4336 = vlaneseq
      %v4337 = vshrl.u32 %v4336, 7
      %v4338 = vsub.s32 2, %v4337
      %v4339 = vrot.slane %v4326, %v4338
      %v4340 = vlaneseq
      %v4341 = vshrl.u32 %v4340, 7
      %v4342 = vsub.s32 3, %v4341
      %v4343 = vrot.slane %v4326, %v4342
      %v4344 = vlaneseq
      %v4345 = vshrl.u32 %v4344, 7
      %v4346 = vsub.s32 4, %v4345
      %v4347 = vrot.slane %v4326, %v4346
      %v4348 = vlaneseq
      %v4349 = vshrl.u32 %v4348, 7
      %v4350 = vsub.s32 5, %v4349
      %v4351 = vrot.slane %v4326, %v4350
      %v4352 = vlaneseq
      %v4353 = vshrl.u32 %v4352, 7
      %v4354 = vsub.s32 6, %v4353
      %v4355 = vrot.slane %v4326, %v4354
      %v4619 = vunpack.c.l.b16 %v4070
      %v4620 = vunpack.c.h.b16 %v4070
      %v4621 = vunpack.c.l.b16 %v4071
      %v4622 = vunpack.c.h.b16 %v4071
      %v4623 = vunpack.c.l.b16 %v4072
      %v4624 = vunpack.c.h.b16 %v4072
      %v4625 = vunpack.c.l.b16 %v4073
      %v4626 = vunpack.c.l.b16 %v4074
      %v4627 = vunpack.c.h.b16 %v4074
      %v4628 = vunpack.c.l.b16 %v4075
      %v4629 = vunpack.c.h.b16 %v4075
      %v4630 = vunpack.c.l.b16 %v4076
      %v4631 = vunpack.c.h.b16 %v4076
      %v4632 = vunpack.c.l.b16 %v4077
      %v4633 = vunpack.c.l.b16 %v4078
      %v4634 = vunpack.c.h.b16 %v4078
      %v4635 = vunpack.c.l.b16 %v4079
      %v4636 = vunpack.c.h.b16 %v4079
      %v4637 = vunpack.c.l.b16 %v4080
      %v4638 = vunpack.c.h.b16 %v4080
      %v4639 = vunpack.c.l.b16 %v4081
      %v4640 = vunpack.c.l.b16 %v4082
      %v4641 = vunpack.c.h.b16 %v4082
      %v4642 = vunpack.c.l.b16 %v4083
      %v4643 = vunpack.c.h.b16 %v4083
      %v4644 = vunpack.c.l.b16 %v4084
      %v4645 = vunpack.c.h.b16 %v4084
      %v4646 = vunpack.c.l.b16 %v4085
      %v4647 = vunpack.c.l.b16 %v4086
      %v4648 = vunpack.c.h.b16 %v4086
      %v4649 = vunpack.c.l.b16 %v4087
      %v4650 = vunpack.c.h.b16 %v4087
      %v4651 = vunpack.c.l.b16 %v4088
      %v4652 = vunpack.c.h.b16 %v4088
      %v4653 = vunpack.c.l.b16 %v4089
      %v4654 = vunpack.c.l.b16 %v4090
      %v4655 = vunpack.c.h.b16 %v4090
      %v4656 = vunpack.c.l.b16 %v4091
      %v4657 = vunpack.c.h.b16 %v4091
      %v4658 = vunpack.c.l.b16 %v4092
      %v4659 = vunpack.c.h.b16 %v4092
      %v4660 = vunpack.c.l.b16 %v4093
      %v4661 = vunpack.c.l.b16 %v4094
      %v4662 = vunpack.c.h.b16 %v4094
      %v4663 = vunpack.c.l.b16 %v4095
      %v4664 = vunpack.c.h.b16 %v4095
      %v4665 = vunpack.c.l.b16 %v4096
      %v4666 = vunpack.c.h.b16 %v4096
      %v4667 = vunpack.c.l.b16 %v4097
      %v4668 = vunpack.c.l.b16 %v4098
      %v4669 = vunpack.c.h.b16 %v4098
      %v4670 = vunpack.c.l.b16 %v4099
      %v4671 = vunpack.c.h.b16 %v4099
      %v4672 = vunpack.c.l.b16 %v4100
      %v4673 = vunpack.c.h.b16 %v4100
      %v4674 = vunpack.c.l.b16 %v4101
      %v4675 = vunpack.c.l.b16 %v4102
      %v4676 = vunpack.c.h.b16 %v4102
      %v4677 = vunpack.c.l.b16 %v4103
      %v4678 = vunpack.c.h.b16 %v4103
      %v4679 = vunpack.c.l.b16 %v4104
      %v4680 = vunpack.c.h.b16 %v4104
      %v4681 = vunpack.c.l.b16 %v4105
      %v4682 = vunpack.c.l.b16 %v4106
      %v4683 = vunpack.c.h.b16 %v4106
      %v4684 = vunpack.c.l.b16 %v4107
      %v4685 = vunpack.c.h.b16 %v4107
      %v4686 = vunpack.c.l.b16 %v4108
      %v4687 = vunpack.c.h.b16 %v4108
      %v4688 = vunpack.c.l.b16 %v4109
      %v4689 = vunpack.c.l.b16 %v4110
      %v4690 = vunpack.c.h.b16 %v4110
      %v4691 = vunpack.c.l.b16 %v4111
      %v4692 = vunpack.c.h.b16 %v4111
      %v4693 = vunpack.c.l.b16 %v4112
      %v4694 = vunpack.c.h.b16 %v4112
      %v4695 = vunpack.c.l.b16 %v4113
      %v4696 = vunpack.c.l.b16 %v4114
      %v4697 = vunpack.c.h.b16 %v4114
      %v4698 = vunpack.c.l.b16 %v4115
      %v4699 = vunpack.c.h.b16 %v4115
      %v4700 = vunpack.c.l.b16 %v4116
      %v4701 = vunpack.c.h.b16 %v4116
      %v4702 = vunpack.c.l.b16 %v4117
      %v4703 = vunpack.c.l.b16 %v4118
      %v4704 = vunpack.c.h.b16 %v4118
      %v4705 = vunpack.c.l.b16 %v4119
      %v4706 = vunpack.c.h.b16 %v4119
      %v4707 = vunpack.c.l.b16 %v4120
      %v4708 = vunpack.c.h.b16 %v4120
      %v4709 = vunpack.c.l.b16 %v4121
      %v4710 = vunpack.c.l.b16 %v4122
      %v4711 = vunpack.c.h.b16 %v4122
      %v4712 = vunpack.c.l.b16 %v4123
      %v4713 = vunpack.c.h.b16 %v4123
      %v4714 = vunpack.c.l.b16 %v4124
      %v4715 = vunpack.c.h.b16 %v4124
      %v4716 = vunpack.c.l.b16 %v4125
      %v4717 = vunpack.c.l.b16 %v4126
      %v4718 = vunpack.c.h.b16 %v4126
      %v4719 = vunpack.c.l.b16 %v4127
      %v4720 = vunpack.c.h.b16 %v4127
      %v4721 = vunpack.c.l.b16 %v4128
      %v4722 = vunpack.c.h.b16 %v4128
      %v4723 = vunpack.c.l.b16 %v4129
      %v4724 = vunpack.c.l.b16 %v4130
      %v4725 = vunpack.c.h.b16 %v4130
      %v4726 = vunpack.c.l.b16 %v4131
      %v4727 = vunpack.c.h.b16 %v4131
      %v4728 = vunpack.c.l.b16 %v4132
      %v4729 = vunpack.c.h.b16 %v4132
      %v4730 = vunpack.c.l.b16 %v4133
      %v4731 = vunpack.c.l.b16 %v4134
      %v4732 = vunpack.c.h.b16 %v4134
      %v4733 = vunpack.c.l.b16 %v4135
      %v4734 = vunpack.c.h.b16 %v4135
      %v4735 = vunpack.c.l.b16 %v4136
      %v4736 = vunpack.c.h.b16 %v4136
      %v4737 = vunpack.c.l.b16 %v4137
      %v4738 = vunpack.c.l.b16 %v4138
      %v4739 = vunpack.c.h.b16 %v4138
      %v4740 = vunpack.c.l.b16 %v4139
      %v4741 = vunpack.c.h.b16 %v4139
      %v4742 = vunpack.c.l.b16 %v4140
      %v4743 = vunpack.c.h.b16 %v4140
      %v4744 = vunpack.c.l.b16 %v4141
      %v4745 = vunpack.c.l.b16 %v4142
      %v4746 = vunpack.c.h.b16 %v4142
      %v4747 = vunpack.c.l.b16 %v4143
      %v4748 = vunpack.c.h.b16 %v4143
      %v4749 = vunpack.c.l.b16 %v4144
      %v4750 = vunpack.c.h.b16 %v4144
      %v4751 = vunpack.c.l.b16 %v4145
      %v4752 = vunpack.c.l.b16 %v4146
      %v4753 = vunpack.c.h.b16 %v4146
      %v4754 = vunpack.c.l.b16 %v4147
      %v4755 = vunpack.c.h.b16 %v4147
      %v4756 = vunpack.c.l.b16 %v4148
      %v4757 = vunpack.c.h.b16 %v4148
      %v4758 = vunpack.c.l.b16 %v4149
      %v4759 = vunpack.c.l.b16 %v4150
      %v4760 = vunpack.c.h.b16 %v4150
      %v4761 = vunpack.c.l.b16 %v4151
      %v4762 = vunpack.c.h.b16 %v4151
      %v4763 = vunpack.c.l.b16 %v4152
      %v4764 = vunpack.c.h.b16 %v4152
      %v4765 = vunpack.c.l.b16 %v4153
      %v4766 = vunpack.c.l.b16 %v4154
      %v4767 = vunpack.c.h.b16 %v4154
      %v4768 = vunpack.c.l.b16 %v4155
      %v4769 = vunpack.c.h.b16 %v4155
      %v4770 = vunpack.c.l.b16 %v4156
      %v4771 = vunpack.c.h.b16 %v4156
      %v4772 = vunpack.c.l.b16 %v4157
      %v4773 = vunpack.c.l.b16 %v4158
      %v4774 = vunpack.c.h.b16 %v4158
      %v4775 = vunpack.c.l.b16 %v4159
      %v4776 = vunpack.c.h.b16 %v4159
      %v4777 = vunpack.c.l.b16 %v4160
      %v4778 = vunpack.c.h.b16 %v4160
      %v4779 = vunpack.c.l.b16 %v4161
      %v4780 = vunpack.c.l.b16 %v4162
      %v4781 = vunpack.c.h.b16 %v4162
      %v4782 = vunpack.c.l.b16 %v4163
      %v4783 = vunpack.c.h.b16 %v4163
      %v4784 = vunpack.c.l.b16 %v4164
      %v4785 = vunpack.c.h.b16 %v4164
      %v4786 = vunpack.c.l.b16 %v4165
      %v4787 = vunpack.c.l.b16 %v4166
      %v4788 = vunpack.c.h.b16 %v4166
      %v4789 = vunpack.c.l.b16 %v4167
      %v4790 = vunpack.c.h.b16 %v4167
      %v4791 = vunpack.c.l.b16 %v4168
      %v4792 = vunpack.c.h.b16 %v4168
      %v4793 = vunpack.c.l.b16 %v4169
      %v4794 = vunpack.c.l.b16 %v4170
      %v4795 = vunpack.c.h.b16 %v4170
      %v4796 = vunpack.c.l.b16 %v4171
      %v4797 = vunpack.c.h.b16 %v4171
      %v4798 = vunpack.c.l.b16 %v4172
      %v4799 = vunpack.c.h.b16 %v4172
      %v4800 = vunpack.c.l.b16 %v4173
      %v4801 = vunpack.c.l.b16 %v4174
      %v4802 = vunpack.c.h.b16 %v4174
      %v4803 = vunpack.c.l.b16 %v4175
      %v4804 = vunpack.c.h.b16 %v4175
      %v4805 = vunpack.c.l.b16 %v4176
      %v4806 = vunpack.c.h.b16 %v4176
      %v4807 = vunpack.c.l.b16 %v4177
      %v4808 = vunpack.c.l.b16 %v4178
      %v4809 = vunpack.c.h.b16 %v4178
      %v4810 = vunpack.c.l.b16 %v4179
      %v4811 = vunpack.c.h.b16 %v4179
      %v4812 = vunpack.c.l.b16 %v4180
      %v4813 = vunpack.c.h.b16 %v4180
      %v4814 = vunpack.c.l.b16 %v4181
      %v4815 = vunpack.c.l.b16 %v4182
      %v4816 = vunpack.c.h.b16 %v4182
      %v4817 = vunpack.c.l.b16 %v4183
      %v4818 = vunpack.c.h.b16 %v4183
      %v4819 = vunpack.c.l.b16 %v4184
      %v4820 = vunpack.c.h.b16 %v4184
      %v4821 = vunpack.c.l.b16 %v4185
      %v4822 = vunpack.c.l.b16 %v4186
      %v4823 = vunpack.c.h.b16 %v4186
      %v4824 = vunpack.c.l.b16 %v4187
      %v4825 = vunpack.c.h.b16 %v4187
      %v4826 = vunpack.c.l.b16 %v4188
      %v4827 = vunpack.c.h.b16 %v4188
      %v4828 = vunpack.c.l.b16 %v4189
      %v4829 = vunpack.c.l.b16 %v4190
      %v4830 = vunpack.c.h.b16 %v4190
      %v4831 = vunpack.c.l.b16 %v4191
      %v4832 = vunpack.c.h.b16 %v4191
      %v4833 = vunpack.c.l.b16 %v4192
      %v4834 = vunpack.c.h.b16 %v4192
      %v4835 = vunpack.c.l.b16 %v4193
      %v4836 = vunpack.c.l.b16 %v4194
      %v4837 = vunpack.c.h.b16 %v4194
      %v4838 = vunpack.c.l.b16 %v4195
      %v4839 = vunpack.c.h.b16 %v4195
      %v4840 = vunpack.c.l.b16 %v4196
      %v4841 = vunpack.c.h.b16 %v4196
      %v4842 = vunpack.c.l.b16 %v4197
      %v4843 = vunpack.c.l.b16 %v4198
      %v4844 = vunpack.c.h.b16 %v4198
      %v4845 = vunpack.c.l.b16 %v4199
      %v4846 = vunpack.c.h.b16 %v4199
      %v4847 = vunpack.c.l.b16 %v4200
      %v4848 = vunpack.c.h.b16 %v4200
      %v4849 = vunpack.c.l.b16 %v4201
      %v4850 = vunpack.c.l.b16 %v4202
      %v4851 = vunpack.c.h.b16 %v4202
      %v4852 = vunpack.c.l.b16 %v4203
      %v4853 = vunpack.c.h.b16 %v4203
      %v4854 = vunpack.c.l.b16 %v4204
      %v4855 = vunpack.c.h.b16 %v4204
      %v4856 = vunpack.c.l.b16 %v4205
      %v4857 = vunpack.c.l.b16 %v4206
      %v4858 = vunpack.c.h.b16 %v4206
      %v4859 = vunpack.c.l.b16 %v4207
      %v4860 = vunpack.c.h.b16 %v4207
      %v4861 = vunpack.c.l.b16 %v4208
      %v4862 = vunpack.c.h.b16 %v4208
      %v4863 = vunpack.c.l.b16 %v4209
      %v4864 = vunpack.c.l.b16 %v4210
      %v4865 = vunpack.c.h.b16 %v4210
      %v4866 = vunpack.c.l.b16 %v4211
      %v4867 = vunpack.c.h.b16 %v4211
      %v4868 = vunpack.c.l.b16 %v4212
      %v4869 = vunpack.c.h.b16 %v4212
      %v4870 = vunpack.c.l.b16 %v4213
      %v4871 = vunpack.c.l.b16 %v4214
      %v4872 = vunpack.c.h.b16 %v4214
      %v4873 = vunpack.c.l.b16 %v4215
      %v4874 = vunpack.c.h.b16 %v4215
      %v4875 = vunpack.c.l.b16 %v4216
      %v4876 = vunpack.c.h.b16 %v4216
      %v4877 = vunpack.c.l.b16 %v4217
      %v4878 = vunpack.c.l.b16 %v4218
      %v4879 = vunpack.c.h.b16 %v4218
      %v4880 = vunpack.c.l.b16 %v4219
      %v4881 = vunpack.c.h.b16 %v4219
      %v4882 = vunpack.c.l.b16 %v4220
      %v4883 = vunpack.c.h.b16 %v4220
      %v4884 = vunpack.c.l.b16 %v4221
      %v4885 = vunpack.c.l.b16 %v4222
      %v4886 = vunpack.c.h.b16 %v4222
      %v4887 = vunpack.c.l.b16 %v4223
      %v4888 = vunpack.c.h.b16 %v4223
      %v4889 = vunpack.c.l.b16 %v4224
      %v4890 = vunpack.c.h.b16 %v4224
      %v4891 = vunpack.c.l.b16 %v4225
      %v4892 = vunpack.c.l.b16 %v4226
      %v4893 = vunpack.c.h.b16 %v4226
      %v4894 = vunpack.c.l.b16 %v4227
      %v4895 = vunpack.c.h.b16 %v4227
      %v4896 = vunpack.c.l.b16 %v4228
      %v4897 = vunpack.c.h.b16 %v4228
      %v4898 = vunpack.c.l.b16 %v4229
      %v4899 = vunpack.c.l.b16 %v4230
      %v4900 = vunpack.c.h.b16 %v4230
      %v4901 = vunpack.c.l.b16 %v4231
      %v4902 = vunpack.c.h.b16 %v4231
      %v4903 = vunpack.c.l.b16 %v4232
      %v4904 = vunpack.c.h.b16 %v4232
      %v4905 = vunpack.c.l.b16 %v4233
      %v4906 = vunpack.c.l.b16 %v4234
      %v4907 = vunpack.c.h.b16 %v4234
      %v4908 = vunpack.c.l.b16 %v4235
      %v4909 = vunpack.c.h.b16 %v4235
      %v4910 = vunpack.c.l.b16 %v4236
      %v4911 = vunpack.c.h.b16 %v4236
      %v4912 = vunpack.c.l.b16 %v4237
      %v4913 = vunpack.c.l.b16 %v4238
      %v4914 = vunpack.c.h.b16 %v4238
      %v4915 = vunpack.c.l.b16 %v4239
      %v4916 = vunpack.c.h.b16 %v4239
      %v4917 = vunpack.c.l.b16 %v4240
      %v4918 = vunpack.c.h.b16 %v4240
      %v4919 = vunpack.c.l.b16 %v4241
      %v4920 = vunpack.c.l.b16 %v4242
      %v4921 = vunpack.c.h.b16 %v4242
      %v4922 = vunpack.c.l.b16 %v4243
      %v4923 = vunpack.c.h.b16 %v4243
      %v4924 = vunpack.c.l.b16 %v4244
      %v4925 = vunpack.c.h.b16 %v4244
      %v4926 = vunpack.c.l.b16 %v4245
      %v4927 = vunpack.c.l.b16 %v4246
      %v4928 = vunpack.c.h.b16 %v4246
      %v4929 = vunpack.c.l.b16 %v4247
      %v4930 = vunpack.c.h.b16 %v4247
      %v4931 = vunpack.c.l.b16 %v4248
      %v4932 = vunpack.c.h.b16 %v4248
      %v4933 = vunpack.c.l.b16 %v4249
      %v4934 = vunpack.c.l.b16 %v4250
      %v4935 = vunpack.c.h.b16 %v4250
      %v4936 = vunpack.c.l.b16 %v4251
      %v4937 = vunpack.c.h.b16 %v4251
      %v4938 = vunpack.c.l.b16 %v4252
      %v4939 = vunpack.c.h.b16 %v4252
      %v4940 = vunpack.c.l.b16 %v4253
      %v4941 = vunpack.c.l.b16 %v4254
      %v4942 = vunpack.c.h.b16 %v4254
      %v4943 = vunpack.c.l.b16 %v4255
      %v4944 = vunpack.c.h.b16 %v4255
      %v4945 = vunpack.c.l.b16 %v4256
      %v4946 = vunpack.c.h.b16 %v4256
      %v4947 = vunpack.c.l.b16 %v4257
      %v4948 = vunpack.c.l.b16 %v4258
      %v4949 = vunpack.c.h.b16 %v4258
      %v4950 = vunpack.c.l.b16 %v4259
      %v4951 = vunpack.c.h.b16 %v4259
      %v4952 = vunpack.c.l.b16 %v4260
      %v4953 = vunpack.c.h.b16 %v4260
      %v4954 = vunpack.c.l.b16 %v4261
      %v4955 = vunpack.c.l.b16 %v4262
      %v4956 = vunpack.c.h.b16 %v4262
      %v4957 = vunpack.c.l.b16 %v4263
      %v4958 = vunpack.c.h.b16 %v4263
      %v4959 = vunpack.c.l.b16 %v4264
      %v4960 = vunpack.c.h.b16 %v4264
      %v4961 = vunpack.c.l.b16 %v4265
      %v4962 = vunpack.c.l.b16 %v4266
      %v4963 = vunpack.c.h.b16 %v4266
      %v4964 = vunpack.c.l.b16 %v4267
      %v4965 = vunpack.c.h.b16 %v4267
      %v4966 = vunpack.c.l.b16 %v4268
      %v4967 = vunpack.c.h.b16 %v4268
      %v4968 = vunpack.c.l.b16 %v4269
      %v4969 = vunpack.c.l.b16 %v4270
      %v4970 = vunpack.c.h.b16 %v4270
      %v4971 = vunpack.c.l.b16 %v4271
      %v4972 = vunpack.c.h.b16 %v4271
      %v4973 = vunpack.c.l.b16 %v4272
      %v4974 = vunpack.c.h.b16 %v4272
      %v4975 = vunpack.c.l.b16 %v4273
      %v4976 = vunpack.c.l.b16 %v4274
      %v4977 = vunpack.c.h.b16 %v4274
      %v4978 = vunpack.c.l.b16 %v4275
      %v4979 = vunpack.c.h.b16 %v4275
      %v4980 = vunpack.c.l.b16 %v4276
      %v4981 = vunpack.c.h.b16 %v4276
      %v4982 = vunpack.c.l.b16 %v4277
      %v4983 = vunpack.c.l.b16 %v4278
      %v4984 = vunpack.c.h.b16 %v4278
      %v4985 = vunpack.c.l.b16 %v4279
      %v4986 = vunpack.c.h.b16 %v4279
      %v4987 = vunpack.c.l.b16 %v4280
      %v4988 = vunpack.c.h.b16 %v4280
      %v4989 = vunpack.c.l.b16 %v4281
      %v4990 = vunpack.c.l.b16 %v4282
      %v4991 = vunpack.c.h.b16 %v4282
      %v4992 = vunpack.c.l.b16 %v4283
      %v4993 = vunpack.c.h.b16 %v4283
      %v4994 = vunpack.c.l.b16 %v4284
      %v4995 = vunpack.c.h.b16 %v4284
      %v4996 = vunpack.c.l.b16 %v4285
      %v4997 = vunpack.c.l.b16 %v4286
      %v4998 = vunpack.c.h.b16 %v4286
      %v4999 = vunpack.c.l.b16 %v4287
      %v5000 = vunpack.c.h.b16 %v4287
      %v5001 = vunpack.c.l.b16 %v4288
      %v5002 = vunpack.c.h.b16 %v4288
      %v5003 = vunpack.c.l.b16 %v4289
      %v5004 = vunpack.c.l.b16 %v4290
      %v5005 = vunpack.c.h.b16 %v4290
      %v5006 = vunpack.c.l.b16 %v4291
      %v5007 = vunpack.c.h.b16 %v4291
      %v5008 = vunpack.c.l.b16 %v4292
      %v5009 = vunpack.c.h.b16 %v4292
      %v5010 = vunpack.c.l.b16 %v4293
      %v5011 = vunpack.c.l.b16 %v4294
      %v5012 = vunpack.c.h.b16 %v4294
      %v5013 = vunpack.c.l.b16 %v4295
      %v5014 = vunpack.c.h.b16 %v4295
      %v5015 = vunpack.c.l.b16 %v4296
      %v5016 = vunpack.c.h.b16 %v4296
      %v5017 = vunpack.c.l.b16 %v4297
      %v5018 = vunpack.c.l.b16 %v4298
      %v5019 = vunpack.c.h.b16 %v4298
      %v5020 = vunpack.c.l.b16 %v4299
      %v5021 = vunpack.c.h.b16 %v4299
      %v5022 = vunpack.c.l.b16 %v4300
      %v5023 = vunpack.c.h.b16 %v4300
      %v5024 = vunpack.c.l.b16 %v4301
      %v5025 = vunpack.c.l.b16 %v4302
      %v5026 = vunpack.c.h.b16 %v4302
      %v5027 = vunpack.c.l.b16 %v4303
      %v5028 = vunpack.c.h.b16 %v4303
      %v5029 = vunpack.c.l.b16 %v4304
      %v5030 = vunpack.c.h.b16 %v4304
      %v5031 = vunpack.c.l.b16 %v4305
      %v5032 = vunpack.c.l.b16 %v4306
      %v5033 = vunpack.c.h.b16 %v4306
      %v5034 = vunpack.c.l.b16 %v4307
      %v5035 = vunpack.c.h.b16 %v4307
      %v5036 = vunpack.c.l.b16 %v4308
      %v5037 = vunpack.c.h.b16 %v4308
      %v5038 = vunpack.c.l.b16 %v4309
      %v5039 = vunpack.c.l.b16 %v4310
      %v5040 = vunpack.c.h.b16 %v4310
      %v5041 = vunpack.c.l.b16 %v4311
      %v5042 = vunpack.c.h.b16 %v4311
      %v5043 = vunpack.c.l.b16 %v4312
      %v5044 = vunpack.c.h.b16 %v4312
      %v5045 = vunpack.c.l.b16 %v4313
      %v5046 = vunpack.c.l.b16 %v4314
      %v5047 = vunpack.c.h.b16 %v4314
      %v5048 = vunpack.c.l.b16 %v4315
      %v5049 = vunpack.c.h.b16 %v4315
      %v5050 = vunpack.c.l.b16 %v4316
      %v5051 = vunpack.c.h.b16 %v4316
      %v5052 = vunpack.c.l.b16 %v4317
      %v5053 = vunpack.c.l.b16 %v4318
      %v5054 = vunpack.c.h.b16 %v4318
      %v5055 = vunpack.c.l.b16 %v4319
      %v5056 = vunpack.c.h.b16 %v4319
      %v5057 = vunpack.c.l.b16 %v4320
      %v5058 = vunpack.c.h.b16 %v4320
      %v5059 = vunpack.c.l.b16 %v4321
      %v5060 = vunpack.c.l.b16 %v4322
      %v5061 = vunpack.c.h.b16 %v4322
      %v5062 = vunpack.c.l.b16 %v4323
      %v5063 = vunpack.c.h.b16 %v4323
      %v5064 = vunpack.c.l.b16 %v4324
      %v5065 = vunpack.c.h.b16 %v4324
      %v5066 = vunpack.c.l.b16 %v4325
      %v5067 = vpack.c.b16 %v4626, %v4619
      %v5068 = vpack.c.b16 %v4627, %v4620
      %v5069 = vpack.c.b16 %v4628, %v4621
      %v5070 = vpack.c.b16 %v4629, %v4622
      %v5071 = vpack.c.b16 %v4630, %v4623
      %v5072 = vpack.c.b16 %v4631, %v4624
      %v5073 = vpack.c.b16 %v4632, %v4625
      %v5074 = vpack.c.b16 %v4640, %v4633
      %v5075 = vpack.c.b16 %v4641, %v4634
      %v5076 = vpack.c.b16 %v4642, %v4635
      %v5077 = vpack.c.b16 %v4643, %v4636
      %v5078 = vpack.c.b16 %v4644, %v4637
      %v5079 = vpack.c.b16 %v4645, %v4638
      %v5080 = vpack.c.b16 %v4646, %v4639
      %v5081 = vpack.c.b16 %v4654, %v4647
      %v5082 = vpack.c.b16 %v4655, %v4648
      %v5083 = vpack.c.b16 %v4656, %v4649
      %v5084 = vpack.c.b16 %v4657, %v4650
      %v5085 = vpack.c.b16 %v4658, %v4651
      %v5086 = vpack.c.b16 %v4659, %v4652
      %v5087 = vpack.c.b16 %v4660, %v4653
      %v5088 = vpack.c.b16 %v4668, %v4661
      %v5089 = vpack.c.b16 %v4669, %v4662
      %v5090 = vpack.c.b16 %v4670, %v4663
      %v5091 = vpack.c.b16 %v4671, %v4664
      %v5092 = vpack.c.b16 %v4672, %v4665
      %v5093 = vpack.c.b16 %v4673, %v4666
      %v5094 = vpack.c.b16 %v4674, %v4667
      %v5095 = vpack.c.b16 %v4682, %v4675
      %v5096 = vpack.c.b16 %v4683, %v4676
      %v5097 = vpack.c.b16 %v4684, %v4677
      %v5098 = vpack.c.b16 %v4685, %v4678
      %v5099 = vpack.c.b16 %v4686, %v4679
      %v5100 = vpack.c.b16 %v4687, %v4680
      %v5101 = vpack.c.b16 %v4688, %v4681
      %v5102 = vpack.c.b16 %v4696, %v4689
      %v5103 = vpack.c.b16 %v4697, %v4690
      %v5104 = vpack.c.b16 %v4698, %v4691
      %v5105 = vpack.c.b16 %v4699, %v4692
      %v5106 = vpack.c.b16 %v4700, %v4693
      %v5107 = vpack.c.b16 %v4701, %v4694
      %v5108 = vpack.c.b16 %v4702, %v4695
      %v5109 = vpack.c.b16 %v4710, %v4703
      %v5110 = vpack.c.b16 %v4711, %v4704
      %v5111 = vpack.c.b16 %v4712, %v4705
      %v5112 = vpack.c.b16 %v4713, %v4706
      %v5113 = vpack.c.b16 %v4714, %v4707
      %v5114 = vpack.c.b16 %v4715, %v4708
      %v5115 = vpack.c.b16 %v4716, %v4709
      %v5116 = vpack.c.b16 %v4724, %v4717
      %v5117 = vpack.c.b16 %v4725, %v4718
      %v5118 = vpack.c.b16 %v4726, %v4719
      %v5119 = vpack.c.b16 %v4727, %v4720
      %v5120 = vpack.c.b16 %v4728, %v4721
      %v5121 = vpack.c.b16 %v4729, %v4722
      %v5122 = vpack.c.b16 %v4730, %v4723
      %v5123 = vpack.c.b16 %v4738, %v4731
      %v5124 = vpack.c.b16 %v4739, %v4732
      %v5125 = vpack.c.b16 %v4740, %v4733
      %v5126 = vpack.c.b16 %v4741, %v4734
      %v5127 = vpack.c.b16 %v4742, %v4735
      %v5128 = vpack.c.b16 %v4743, %v4736
      %v5129 = vpack.c.b16 %v4744, %v4737
      %v5130 = vpack.c.b16 %v4752, %v4745
      %v5131 = vpack.c.b16 %v4753, %v4746
      %v5132 = vpack.c.b16 %v4754, %v4747
      %v5133 = vpack.c.b16 %v4755, %v4748
      %v5134 = vpack.c.b16 %v4756, %v4749
      %v5135 = vpack.c.b16 %v4757, %v4750
      %v5136 = vpack.c.b16 %v4758, %v4751
      %v5137 = vpack.c.b16 %v4766, %v4759
      %v5138 = vpack.c.b16 %v4767, %v4760
      %v5139 = vpack.c.b16 %v4768, %v4761
      %v5140 = vpack.c.b16 %v4769, %v4762
      %v5141 = vpack.c.b16 %v4770, %v4763
      %v5142 = vpack.c.b16 %v4771, %v4764
      %v5143 = vpack.c.b16 %v4772, %v4765
      %v5144 = vpack.c.b16 %v4780, %v4773
      %v5145 = vpack.c.b16 %v4781, %v4774
      %v5146 = vpack.c.b16 %v4782, %v4775
      %v5147 = vpack.c.b16 %v4783, %v4776
      %v5148 = vpack.c.b16 %v4784, %v4777
      %v5149 = vpack.c.b16 %v4785, %v4778
      %v5150 = vpack.c.b16 %v4786, %v4779
      %v5151 = vpack.c.b16 %v4794, %v4787
      %v5152 = vpack.c.b16 %v4795, %v4788
      %v5153 = vpack.c.b16 %v4796, %v4789
      %v5154 = vpack.c.b16 %v4797, %v4790
      %v5155 = vpack.c.b16 %v4798, %v4791
      %v5156 = vpack.c.b16 %v4799, %v4792
      %v5157 = vpack.c.b16 %v4800, %v4793
      %v5158 = vpack.c.b16 %v4808, %v4801
      %v5159 = vpack.c.b16 %v4809, %v4802
      %v5160 = vpack.c.b16 %v4810, %v4803
      %v5161 = vpack.c.b16 %v4811, %v4804
      %v5162 = vpack.c.b16 %v4812, %v4805
      %v5163 = vpack.c.b16 %v4813, %v4806
      %v5164 = vpack.c.b16 %v4814, %v4807
      %v5165 = vpack.c.b16 %v4822, %v4815
      %v5166 = vpack.c.b16 %v4823, %v4816
      %v5167 = vpack.c.b16 %v4824, %v4817
      %v5168 = vpack.c.b16 %v4825, %v4818
      %v5169 = vpack.c.b16 %v4826, %v4819
      %v5170 = vpack.c.b16 %v4827, %v4820
      %v5171 = vpack.c.b16 %v4828, %v4821
      %v5172 = vpack.c.b16 %v4836, %v4829
      %v5173 = vpack.c.b16 %v4837, %v4830
      %v5174 = vpack.c.b16 %v4838, %v4831
      %v5175 = vpack.c.b16 %v4839, %v4832
      %v5176 = vpack.c.b16 %v4840, %v4833
      %v5177 = vpack.c.b16 %v4841, %v4834
      %v5178 = vpack.c.b16 %v4842, %v4835
      %v5179 = vpack.c.b16 %v4850, %v4843
      %v5180 = vpack.c.b16 %v4851, %v4844
      %v5181 = vpack.c.b16 %v4852, %v4845
      %v5182 = vpack.c.b16 %v4853, %v4846
      %v5183 = vpack.c.b16 %v4854, %v4847
      %v5184 = vpack.c.b16 %v4855, %v4848
      %v5185 = vpack.c.b16 %v4856, %v4849
      %v5186 = vpack.c.b16 %v4864, %v4857
      %v5187 = vpack.c.b16 %v4865, %v4858
      %v5188 = vpack.c.b16 %v4866, %v4859
      %v5189 = vpack.c.b16 %v4867, %v4860
      %v5190 = vpack.c.b16 %v4868, %v4861
      %v5191 = vpack.c.b16 %v4869, %v4862
      %v5192 = vpack.c.b16 %v4870, %v4863
      %v5193 = vpack.c.b16 %v4878, %v4871
      %v5194 = vpack.c.b16 %v4879, %v4872
      %v5195 = vpack.c.b16 %v4880, %v4873
      %v5196 = vpack.c.b16 %v4881, %v4874
      %v5197 = vpack.c.b16 %v4882, %v4875
      %v5198 = vpack.c.b16 %v4883, %v4876
      %v5199 = vpack.c.b16 %v4884, %v4877
      %v5200 = vpack.c.b16 %v4892, %v4885
      %v5201 = vpack.c.b16 %v4893, %v4886
      %v5202 = vpack.c.b16 %v4894, %v4887
      %v5203 = vpack.c.b16 %v4895, %v4888
      %v5204 = vpack.c.b16 %v4896, %v4889
      %v5205 = vpack.c.b16 %v4897, %v4890
      %v5206 = vpack.c.b16 %v4898, %v4891
      %v5207 = vpack.c.b16 %v4906, %v4899
      %v5208 = vpack.c.b16 %v4907, %v4900
      %v5209 = vpack.c.b16 %v4908, %v4901
      %v5210 = vpack.c.b16 %v4909, %v4902
      %v5211 = vpack.c.b16 %v4910, %v4903
      %v5212 = vpack.c.b16 %v4911, %v4904
      %v5213 = vpack.c.b16 %v4912, %v4905
      %v5214 = vpack.c.b16 %v4920, %v4913
      %v5215 = vpack.c.b16 %v4921, %v4914
      %v5216 = vpack.c.b16 %v4922, %v4915
      %v5217 = vpack.c.b16 %v4923, %v4916
      %v5218 = vpack.c.b16 %v4924, %v4917
      %v5219 = vpack.c.b16 %v4925, %v4918
      %v5220 = vpack.c.b16 %v4926, %v4919
      %v5221 = vpack.c.b16 %v4934, %v4927
      %v5222 = vpack.c.b16 %v4935, %v4928
      %v5223 = vpack.c.b16 %v4936, %v4929
      %v5224 = vpack.c.b16 %v4937, %v4930
      %v5225 = vpack.c.b16 %v4938, %v4931
      %v5226 = vpack.c.b16 %v4939, %v4932
      %v5227 = vpack.c.b16 %v4940, %v4933
      %v5228 = vpack.c.b16 %v4948, %v4941
      %v5229 = vpack.c.b16 %v4949, %v4942
      %v5230 = vpack.c.b16 %v4950, %v4943
      %v5231 = vpack.c.b16 %v4951, %v4944
      %v5232 = vpack.c.b16 %v4952, %v4945
      %v5233 = vpack.c.b16 %v4953, %v4946
      %v5234 = vpack.c.b16 %v4954, %v4947
      %v5235 = vpack.c.b16 %v4962, %v4955
      %v5236 = vpack.c.b16 %v4963, %v4956
      %v5237 = vpack.c.b16 %v4964, %v4957
      %v5238 = vpack.c.b16 %v4965, %v4958
      %v5239 = vpack.c.b16 %v4966, %v4959
      %v5240 = vpack.c.b16 %v4967, %v4960
      %v5241 = vpack.c.b16 %v4968, %v4961
      %v5242 = vpack.c.b16 %v4976, %v4969
      %v5243 = vpack.c.b16 %v4977, %v4970
      %v5244 = vpack.c.b16 %v4978, %v4971
      %v5245 = vpack.c.b16 %v4979, %v4972
      %v5246 = vpack.c.b16 %v4980, %v4973
      %v5247 = vpack.c.b16 %v4981, %v4974
      %v5248 = vpack.c.b16 %v4982, %v4975
      %v5249 = vpack.c.b16 %v4990, %v4983
      %v5250 = vpack.c.b16 %v4991, %v4984
      %v5251 = vpack.c.b16 %v4992, %v4985
      %v5252 = vpack.c.b16 %v4993, %v4986
      %v5253 = vpack.c.b16 %v4994, %v4987
      %v5254 = vpack.c.b16 %v4995, %v4988
      %v5255 = vpack.c.b16 %v4996, %v4989
      %v5256 = vpack.c.b16 %v5004, %v4997
      %v5257 = vpack.c.b16 %v5005, %v4998
      %v5258 = vpack.c.b16 %v5006, %v4999
      %v5259 = vpack.c.b16 %v5007, %v5000
      %v5260 = vpack.c.b16 %v5008, %v5001
      %v5261 = vpack.c.b16 %v5009, %v5002
      %v5262 = vpack.c.b16 %v5010, %v5003
      %v5263 = vpack.c.b16 %v5018, %v5011
      %v5264 = vpack.c.b16 %v5019, %v5012
      %v5265 = vpack.c.b16 %v5020, %v5013
      %v5266 = vpack.c.b16 %v5021, %v5014
      %v5267 = vpack.c.b16 %v5022, %v5015
      %v5268 = vpack.c.b16 %v5023, %v5016
      %v5269 = vpack.c.b16 %v5024, %v5017
      %v5270 = vpack.c.b16 %v5032, %v5025
      %v5271 = vpack.c.b16 %v5033, %v5026
      %v5272 = vpack.c.b16 %v5034, %v5027
      %v5273 = vpack.c.b16 %v5035, %v5028
      %v5274 = vpack.c.b16 %v5036, %v5029
      %v5275 = vpack.c.b16 %v5037, %v5030
      %v5276 = vpack.c.b16 %v5038, %v5031
      %v5277 = vpack.c.b16 %v5046, %v5039
      %v5278 = vpack.c.b16 %v5047, %v5040
      %v5279 = vpack.c.b16 %v5048, %v5041
      %v5280 = vpack.c.b16 %v5049, %v5042
      %v5281 = vpack.c.b16 %v5050, %v5043
      %v5282 = vpack.c.b16 %v5051, %v5044
      %v5283 = vpack.c.b16 %v5052, %v5045
      %v5284 = vpack.c.b16 %v5060, %v5053
      %v5285 = vpack.c.b16 %v5061, %v5054
      %v5286 = vpack.c.b16 %v5062, %v5055
      %v5287 = vpack.c.b16 %v5063, %v5056
      %v5288 = vpack.c.b16 %v5064, %v5057
      %v5289 = vpack.c.b16 %v5065, %v5058
      %v5290 = vpack.c.b16 %v5066, %v5059
      %5515 = vmatprep.subr.bf16.mxu0 %v5068
      %5516 = vmatpush1.bf16.msra.mxu0 %v5067
      %5517 = vmatprep.subr.bf16.mxu0 %v5075
      %5518 = vmatpush1.bf16.msra.mxu0 %v5074
      %5519 = vmatprep.subr.bf16.mxu0 %v5082
      %5520 = vmatpush1.bf16.msra.mxu0 %v5081
      %5521 = vmatprep.subr.bf16.mxu0 %v5089
      %5522 = vmatpush1.bf16.msra.mxu0 %v5088
      %5523 = vmatprep.subr.bf16.mxu0 %v5096
      %5524 = vmatpush1.bf16.msra.mxu0 %v5095
      %5525 = vmatprep.subr.bf16.mxu0 %v5103
      %5526 = vmatpush1.bf16.msra.mxu0 %v5102
      %5527 = vmatprep.subr.bf16.mxu0 %v5110
      %5528 = vmatpush1.bf16.msra.mxu0 %v5109
      %5529 = vmatprep.subr.bf16.mxu0 %v5117
      %5530 = vmatpush1.bf16.msra.mxu0 %v5116
      %5531 = vmatprep.subr.bf16.mxu0 %v5124
      %5532 = vmatpush1.bf16.msra.mxu0 %v5123
      %5533 = vmatprep.subr.bf16.mxu0 %v5131
      %5534 = vmatpush1.bf16.msra.mxu0 %v5130
      %5535 = vmatprep.subr.bf16.mxu0 %v5138
      %5536 = vmatpush1.bf16.msra.mxu0 %v5137
      %5537 = vmatprep.subr.bf16.mxu0 %v5145
      %5538 = vmatpush1.bf16.msra.mxu0 %v5144
      %5539 = vmatprep.subr.bf16.mxu0 %v5152
      %5540 = vmatpush1.bf16.msra.mxu0 %v5151
      %5541 = vmatprep.subr.bf16.mxu0 %v5159
      %5542 = vmatpush1.bf16.msra.mxu0 %v5158
      %5543 = vmatprep.subr.bf16.mxu0 %v5166
      %5544 = vmatpush1.bf16.msra.mxu0 %v5165
      %5545 = vmatprep.subr.bf16.mxu0 %v5173
      %5546 = vmatpush1.bf16.msra.mxu0 %v5172
      %5547 = vmatprep.mubr.bf16.mxu0 %v4039
      %5548 = vmatmul.mubr.bf16.gmra.mrb[0].mxu0 %v4038
      %v5549 = vpop.f32.mrb[0].mxu0
      %v5550 = vadd.f32 %v4331, %v5549
      %v5551 = vpop.f32.mrb[0].mxu0
      %v5552 = vadd.f32 %v4335, %v5551
      %v5553 = vpop.f32.mrb[0].mxu0
      %v5554 = vadd.f32 %v4331, %v5553
      %v5555 = vpop.f32.mrb[0].mxu0
      %v5556 = vadd.f32 %v4335, %v5555
      %5557 = vmatprep.mubr.bf16.mxu0 %v4043
      %5558 = vmatmul.mubr.bf16.gmra.mrb[0].mxu0 %v4042
      %v5559 = vpop.f32.mrb[0].mxu0
      %v5560 = vadd.f32 %v4331, %v5559
      %v5561 = vpop.f32.mrb[0].mxu0
      %v5562 = vadd.f32 %v4335, %v5561
      %v5563 = vpop.f32.mrb[0].mxu0
      %v5564 = vadd.f32 %v4331, %v5563
      %v5565 = vpop.f32.mrb[0].mxu0
      %v5566 = vadd.f32 %v4335, %v5565
      %5567 = vmatprep.mubr.bf16.mxu0 %v4047
      %5568 = vmatmul.mubr.bf16.gmra.mrb[0].mxu0 %v4046
      %v5569 = vpop.f32.mrb[0].mxu0
      %v5570 = vadd.f32 %v4331, %v5569
      %v5571 = vpop.f32.mrb[0].mxu0
      %v5572 = vadd.f32 %v4335, %v5571
      %v5573 = vpop.f32.mrb[0].mxu0
      %v5574 = vadd.f32 %v4331, %v5573
      %v5575 = vpop.f32.mrb[0].mxu0
      %v5576 = vadd.f32 %v4335, %v5575
      %5577 = vmatprep.mubr.bf16.mxu0 %v4051
      %5578 = vmatmul.mubr.bf16.gmra.mrb[0].mxu0 %v4050
      %v5579 = vpop.f32.mrb[0].mxu0
      %v5580 = vadd.f32 %v4331, %v5579
      %v5581 = vpop.f32.mrb[0].mxu0
      %v5582 = vadd.f32 %v4335, %v5581
      %v5583 = vpop.f32.mrb[0].mxu0
      %v5584 = vadd.f32 %v4331, %v5583
      %v5585 = vpop.f32.mrb[0].mxu0
      %v5586 = vadd.f32 %v4335, %v5585
      %5587 = vmatprep.mubr.bf16.mxu0 %v4055
      %5588 = vmatmul.mubr.bf16.gmra.mrb[0].mxu0 %v4054
      %v5589 = vpop.f32.mrb[0].mxu0
      %v5590 = vadd.f32 %v4331, %v5589
      %v5591 = vpop.f32.mrb[0].mxu0
      %v5592 = vadd.f32 %v4335, %v5591
      %v5593 = vpop.f32.mrb[0].mxu0
      %v5594 = vadd.f32 %v4331, %v5593
      %v5595 = vpop.f32.mrb[0].mxu0
      %v5596 = vadd.f32 %v4335, %v5595
      %5597 = vmatprep.mubr.bf16.mxu0 %v4059
      %5598 = vmatmul.mubr.bf16.gmra.mrb[0].mxu0 %v4058
      %v5599 = vpop.f32.mrb[0].mxu0
      %v5600 = vadd.f32 %v4331, %v5599
      %v5601 = vpop.f32.mrb[0].mxu0
      %v5602 = vadd.f32 %v4335, %v5601
      %v5603 = vpop.f32.mrb[0].mxu0
      %v5604 = vadd.f32 %v4331, %v5603
      %v5605 = vpop.f32.mrb[0].mxu0
      %v5606 = vadd.f32 %v4335, %v5605
      %5607 = vmatprep.mubr.bf16.mxu0 %v4063
      %5608 = vmatmul.mubr.bf16.gmra.mrb[0].mxu0 %v4062
      %v5609 = vpop.f32.mrb[0].mxu0
      %v5610 = vadd.f32 %v4331, %v5609
      %v5611 = vpop.f32.mrb[0].mxu0
      %v5612 = vadd.f32 %v4335, %v5611
      %v5613 = vpop.f32.mrb[0].mxu0
      %v5614 = vadd.f32 %v4331, %v5613
      %v5615 = vpop.f32.mrb[0].mxu0
      %v5616 = vadd.f32 %v4335, %v5615
      %5617 = vmatprep.mubr.bf16.mxu0 %v4067
      %5618 = vmatmul.mubr.bf16.gmra.mrb[0].mxu0 %v4066
      %v5619 = vpop.f32.mrb[0].mxu0
      %v5620 = vadd.f32 %v4331, %v5619
      %v5621 = vpop.f32.mrb[0].mxu0
      %v5622 = vadd.f32 %v4335, %v5621
      %v5623 = vpop.f32.mrb[0].mxu0
      %v5624 = vadd.f32 %v4331, %v5623
      %v5625 = vpop.f32.mrb[0].mxu0
      %v5626 = vadd.f32 %v4335, %v5625
      %5627 = vdwg.mxu0
      %5628 = vmatprep.subr.bf16.mxu0 %v5180
      %5629 = vmatpush1.bf16.msra.mxu0 %v5179
      %5630 = vmatprep.subr.bf16.mxu0 %v5187
      %5631 = vmatpush1.bf16.msra.mxu0 %v5186
      %5632 = vmatprep.subr.bf16.mxu0 %v5194
      %5633 = vmatpush1.bf16.msra.mxu0 %v5193
      %5634 = vmatprep.subr.bf16.mxu0 %v5201
      %5635 = vmatpush1.bf16.msra.mxu0 %v5200
      %5636 = vmatprep.subr.bf16.mxu0 %v5208
      %5637 = vmatpush1.bf16.msra.mxu0 %v5207
      %5638 = vmatprep.subr.bf16.mxu0 %v5215
      %5639 = vmatpush1.bf16.msra.mxu0 %v5214
      %5640 = vmatprep.subr.bf16.mxu0 %v5222
      %5641 = vmatpush1.bf16.msra.mxu0 %v5221
      %5642 = vmatprep.subr.bf16.mxu0 %v5229
      %5643 = vmatpush1.bf16.msra.mxu0 %v5228
      %5644 = vmatprep.subr.bf16.mxu0 %v5236
      %5645 = vmatpush1.bf16.msra.mxu0 %v5235
      %5646 = vmatprep.subr.bf16.mxu0 %v5243
      %5647 = vmatpush1.bf16.msra.mxu0 %v5242
      %5648 = vmatprep.subr.bf16.mxu0 %v5250
      %5649 = vmatpush1.bf16.msra.mxu0 %v5249
      %5650 = vmatprep.subr.bf16.mxu0 %v5257
      %5651 = vmatpush1.bf16.msra.mxu0 %v5256
      %5652 = vmatprep.subr.bf16.mxu0 %v5264
      %5653 = vmatpush1.bf16.msra.mxu0 %v5263
      %5654 = vmatprep.subr.bf16.mxu0 %v5271
      %5655 = vmatpush1.bf16.msra.mxu0 %v5270
      %5656 = vmatprep.subr.bf16.mxu0 %v5278
      %5657 = vmatpush1.bf16.msra.mxu0 %v5277
      %5658 = vmatprep.subr.bf16.mxu0 %v5285
      %5659 = vmatpush1.bf16.msra.mxu0 %v5284
      %5660 = vmatprep.mubr.bf16.mxu0 %v4041
      %5661 = vmatmul.mubr.bf16.gmra.mrb[0].mxu0 %v4040
      %v5662 = vpop.f32.mrb[0].mxu0
      %v5663 = vadd.f32 %v5550, %v5662
      %v5664 = vpop.f32.mrb[0].mxu0
      %v5665 = vadd.f32 %v5552, %v5664
      %v5666 = vpop.f32.mrb[0].mxu0
      %v5667 = vadd.f32 %v5554, %v5666
      %v5668 = vpop.f32.mrb[0].mxu0
      %v5669 = vadd.f32 %v5556, %v5668
      %5670 = vmatprep.mubr.bf16.mxu0 %v4045
      %5671 = vmatmul.mubr.bf16.gmra.mrb[0].mxu0 %v4044
      %v5672 = vpop.f32.mrb[0].mxu0
      %v5673 = vadd.f32 %v5560, %v5672
      %v5674 = vpop.f32.mrb[0].mxu0
      %v5675 = vadd.f32 %v5562, %v5674
      %v5676 = vpop.f32.mrb[0].mxu0
      %v5677 = vadd.f32 %v5564, %v5676
      %v5678 = vpop.f32.mrb[0].mxu0
      %v5679 = vadd.f32 %v5566, %v5678
      %5680 = vmatprep.mubr.bf16.mxu0 %v4049
      %5681 = vmatmul.mubr.bf16.gmra.mrb[0].mxu0 %v4048
      %v5682 = vpop.f32.mrb[0].mxu0
      %v5683 = vadd.f32 %v5570, %v5682
      %v5684 = vpop.f32.mrb[0].mxu0
      %v5685 = vadd.f32 %v5572, %v5684
      %v5686 = vpop.f32.mrb[0].mxu0
      %v5687 = vadd.f32 %v5574, %v5686
      %v5688 = vpop.f32.mrb[0].mxu0
      %v5689 = vadd.f32 %v5576, %v5688
      %5690 = vmatprep.mubr.bf16.mxu0 %v4053
      %5691 = vmatmul.mubr.bf16.gmra.mrb[0].mxu0 %v4052
      %v5692 = vpop.f32.mrb[0].mxu0
      %v5693 = vadd.f32 %v5580, %v5692
      %v5694 = vpop.f32.mrb[0].mxu0
      %v5695 = vadd.f32 %v5582, %v5694
      %v5696 = vpop.f32.mrb[0].mxu0
      %v5697 = vadd.f32 %v5584, %v5696
      %v5698 = vpop.f32.mrb[0].mxu0
      %v5699 = vadd.f32 %v5586, %v5698
      %5700 = vmatprep.mubr.bf16.mxu0 %v4057
      %5701 = vmatmul.mubr.bf16.gmra.mrb[0].mxu0 %v4056
      %v5702 = vpop.f32.mrb[0].mxu0
      %v5703 = vadd.f32 %v5590, %v5702
      %v5704 = vpop.f32.mrb[0].mxu0
      %v5705 = vadd.f32 %v5592, %v5704
      %v5706 = vpop.f32.mrb[0].mxu0
      %v5707 = vadd.f32 %v5594, %v5706
      %v5708 = vpop.f32.mrb[0].mxu0
      %v5709 = vadd.f32 %v5596, %v5708
      %5710 = vmatprep.mubr.bf16.mxu0 %v4061
      %5711 = vmatmul.mubr.bf16.gmra.mrb[0].mxu0 %v4060
      %v5712 = vpop.f32.mrb[0].mxu0
      %v5713 = vadd.f32 %v5600, %v5712
      %v5714 = vpop.f32.mrb[0].mxu0
      %v5715 = vadd.f32 %v5602, %v5714
      %v5716 = vpop.f32.mrb[0].mxu0
      %v5717 = vadd.f32 %v5604, %v5716
      %v5718 = vpop.f32.mrb[0].mxu0
      %v5719 = vadd.f32 %v5606, %v5718
      %5720 = vmatprep.mubr.bf16.mxu0 %v4065
      %5721 = vmatmul.mubr.bf16.gmra.mrb[0].mxu0 %v4064
      %v5722 = vpop.f32.mrb[0].mxu0
      %v5723 = vadd.f32 %v5610, %v5722
      %v5724 = vpop.f32.mrb[0].mxu0
      %v5725 = vadd.f32 %v5612, %v5724
      %v5726 = vpop.f32.mrb[0].mxu0
      %v5727 = vadd.f32 %v5614, %v5726
      %v5728 = vpop.f32.mrb[0].mxu0
      %v5729 = vadd.f32 %v5616, %v5728
      %5730 = vmatprep.mubr.bf16.mxu0 %v4069
      %5731 = vmatmul.mubr.bf16.gmra.mrb[0].mxu0 %v4068
      %v5732 = vpop.f32.mrb[0].mxu0
      %v5733 = vadd.f32 %v5620, %v5732
      %v5734 = vpop.f32.mrb[0].mxu0
      %v5735 = vadd.f32 %v5622, %v5734
      %v5736 = vpop.f32.mrb[0].mxu0
      %v5737 = vadd.f32 %v5624, %v5736
      %v5738 = vpop.f32.mrb[0].mxu0
      %v5739 = vadd.f32 %v5626, %v5738
      %5740 = vdwg.mxu0
      %5741 = vmatprep.subr.bf16.mxu0 %v5070
      %5742 = vmatpush1.bf16.msra.mxu0 %v5069
      %5743 = vmatprep.subr.bf16.mxu0 %v5077
      %5744 = vmatpush1.bf16.msra.mxu0 %v5076
      %5745 = vmatprep.subr.bf16.mxu0 %v5084
      %5746 = vmatpush1.bf16.msra.mxu0 %v5083
      %5747 = vmatprep.subr.bf16.mxu0 %v5091
      %5748 = vmatpush1.bf16.msra.mxu0 %v5090
      %5749 = vmatprep.subr.bf16.mxu0 %v5098
      %5750 = vmatpush1.bf16.msra.mxu0 %v5097
      %5751 = vmatprep.subr.bf16.mxu0 %v5105
      %5752 = vmatpush1.bf16.msra.mxu0 %v5104
      %5753 = vmatprep.subr.bf16.mxu0 %v5112
      %5754 = vmatpush1.bf16.msra.mxu0 %v5111
      %5755 = vmatprep.subr.bf16.mxu0 %v5119
      %5756 = vmatpush1.bf16.msra.mxu0 %v5118
      %5757 = vmatprep.subr.bf16.mxu0 %v5126
      %5758 = vmatpush1.bf16.msra.mxu0 %v5125
      %5759 = vmatprep.subr.bf16.mxu0 %v5133
      %5760 = vmatpush1.bf16.msra.mxu0 %v5132
      %5761 = vmatprep.subr.bf16.mxu0 %v5140
      %5762 = vmatpush1.bf16.msra.mxu0 %v5139
      %5763 = vmatprep.subr.bf16.mxu0 %v5147
      %5764 = vmatpush1.bf16.msra.mxu0 %v5146
      %5765 = vmatprep.subr.bf16.mxu0 %v5154
      %5766 = vmatpush1.bf16.msra.mxu0 %v5153
      %5767 = vmatprep.subr.bf16.mxu0 %v5161
      %5768 = vmatpush1.bf16.msra.mxu0 %v5160
      %5769 = vmatprep.subr.bf16.mxu0 %v5168
      %5770 = vmatpush1.bf16.msra.mxu0 %v5167
      %5771 = vmatprep.subr.bf16.mxu0 %v5175
      %5772 = vmatpush1.bf16.msra.mxu0 %v5174
      %5773 = vmatprep.mubr.bf16.mxu0 %v4039
      %5774 = vmatmul.mubr.bf16.gmra.mrb[0].mxu0 %v4038
      %v5775 = vpop.f32.mrb[0].mxu0
      %v5776 = vadd.f32 %v4339, %v5775
      %v5777 = vpop.f32.mrb[0].mxu0
      %v5778 = vadd.f32 %v4343, %v5777
      %v5779 = vpop.f32.mrb[0].mxu0
      %v5780 = vadd.f32 %v4339, %v5779
      %v5781 = vpop.f32.mrb[0].mxu0
      %v5782 = vadd.f32 %v4343, %v5781
      %5783 = vmatprep.mubr.bf16.mxu0 %v4043
      %5784 = vmatmul.mubr.bf16.gmra.mrb[0].mxu0 %v4042
      %v5785 = vpop.f32.mrb[0].mxu0
      %v5786 = vadd.f32 %v4339, %v5785
      %v5787 = vpop.f32.mrb[0].mxu0
      %v5788 = vadd.f32 %v4343, %v5787
      %v5789 = vpop.f32.mrb[0].mxu0
      %v5790 = vadd.f32 %v4339, %v5789
      %v5791 = vpop.f32.mrb[0].mxu0
      %v5792 = vadd.f32 %v4343, %v5791
      %5793 = vmatprep.mubr.bf16.mxu0 %v4047
      %5794 = vmatmul.mubr.bf16.gmra.mrb[0].mxu0 %v4046
      %v5795 = vpop.f32.mrb[0].mxu0
      %v5796 = vadd.f32 %v4339, %v5795
      %v5797 = vpop.f32.mrb[0].mxu0
      %v5798 = vadd.f32 %v4343, %v5797
      %v5799 = vpop.f32.mrb[0].mxu0
      %v5800 = vadd.f32 %v4339, %v5799
      %v5801 = vpop.f32.mrb[0].mxu0
      %v5802 = vadd.f32 %v4343, %v5801
      %5803 = vmatprep.mubr.bf16.mxu0 %v4051
      %5804 = vmatmul.mubr.bf16.gmra.mrb[0].mxu0 %v4050
      %v5805 = vpop.f32.mrb[0].mxu0
      %v5806 = vadd.f32 %v4339, %v5805
      %v5807 = vpop.f32.mrb[0].mxu0
      %v5808 = vadd.f32 %v4343, %v5807
      %v5809 = vpop.f32.mrb[0].mxu0
      %v5810 = vadd.f32 %v4339, %v5809
      %v5811 = vpop.f32.mrb[0].mxu0
      %v5812 = vadd.f32 %v4343, %v5811
      %5813 = vmatprep.mubr.bf16.mxu0 %v4055
      %5814 = vmatmul.mubr.bf16.gmra.mrb[0].mxu0 %v4054
      %v5815 = vpop.f32.mrb[0].mxu0
      %v5816 = vadd.f32 %v4339, %v5815
      %v5817 = vpop.f32.mrb[0].mxu0
      %v5818 = vadd.f32 %v4343, %v5817
      %v5819 = vpop.f32.mrb[0].mxu0
      %v5820 = vadd.f32 %v4339, %v5819
      %v5821 = vpop.f32.mrb[0].mxu0
      %v5822 = vadd.f32 %v4343, %v5821
      %5823 = vmatprep.mubr.bf16.mxu0 %v4059
      %5824 = vmatmul.mubr.bf16.gmra.mrb[0].mxu0 %v4058
      %v5825 = vpop.f32.mrb[0].mxu0
      %v5826 = vadd.f32 %v4339, %v5825
      %v5827 = vpop.f32.mrb[0].mxu0
      %v5828 = vadd.f32 %v4343, %v5827
      %v5829 = vpop.f32.mrb[0].mxu0
      %v5830 = vadd.f32 %v4339, %v5829
      %v5831 = vpop.f32.mrb[0].mxu0
      %v5832 = vadd.f32 %v4343, %v5831
      %5833 = vmatprep.mubr.bf16.mxu0 %v4063
      %5834 = vmatmul.mubr.bf16.gmra.mrb[0].mxu0 %v4062
      %v5835 = vpop.f32.mrb[0].mxu0
      %v5836 = vadd.f32 %v4339, %v5835
      %v5837 = vpop.f32.mrb[0].mxu0
      %v5838 = vadd.f32 %v4343, %v5837
      %v5839 = vpop.f32.mrb[0].mxu0
      %v5840 = vadd.f32 %v4339, %v5839
      %v5841 = vpop.f32.mrb[0].mxu0
      %v5842 = vadd.f32 %v4343, %v5841
      %5843 = vmatprep.mubr.bf16.mxu0 %v4067
      %5844 = vmatmul.mubr.bf16.gmra.mrb[0].mxu0 %v4066
      %v5845 = vpop.f32.mrb[0].mxu0
      %v5846 = vadd.f32 %v4339, %v5845
      %v5847 = vpop.f32.mrb[0].mxu0
      %v5848 = vadd.f32 %v4343, %v5847
      %v5849 = vpop.f32.mrb[0].mxu0
      %v5850 = vadd.f32 %v4339, %v5849
      %v5851 = vpop.f32.mrb[0].mxu0
      %v5852 = vadd.f32 %v4343, %v5851
      %5853 = vdwg.mxu0
      %5854 = vmatprep.subr.bf16.mxu0 %v5182
      %5855 = vmatpush1.bf16.msra.mxu0 %v5181
      %5856 = vmatprep.subr.bf16.mxu0 %v5189
      %5857 = vmatpush1.bf16.msra.mxu0 %v5188
      %5858 = vmatprep.subr.bf16.mxu0 %v5196
      %5859 = vmatpush1.bf16.msra.mxu0 %v5195
      %5860 = vmatprep.subr.bf16.mxu0 %v5203
      %5861 = vmatpush1.bf16.msra.mxu0 %v5202
      %5862 = vmatprep.subr.bf16.mxu0 %v5210
      %5863 = vmatpush1.bf16.msra.mxu0 %v5209
      %5864 = vmatprep.subr.bf16.mxu0 %v5217
      %5865 = vmatpush1.bf16.msra.mxu0 %v5216
      %5866 = vmatprep.subr.bf16.mxu0 %v5224
      %5867 = vmatpush1.bf16.msra.mxu0 %v5223
      %5868 = vmatprep.subr.bf16.mxu0 %v5231
      %5869 = vmatpush1.bf16.msra.mxu0 %v5230
      %5870 = vmatprep.subr.bf16.mxu0 %v5238
      %5871 = vmatpush1.bf16.msra.mxu0 %v5237
      %5872 = vmatprep.subr.bf16.mxu0 %v5245
      %5873 = vmatpush1.bf16.msra.mxu0 %v5244
      %5874 = vmatprep.subr.bf16.mxu0 %v5252
      %5875 = vmatpush1.bf16.msra.mxu0 %v5251
      %5876 = vmatprep.subr.bf16.mxu0 %v5259
      %5877 = vmatpush1.bf16.msra.mxu0 %v5258
      %5878 = vmatprep.subr.bf16.mxu0 %v5266
      %5879 = vmatpush1.bf16.msra.mxu0 %v5265
      %5880 = vmatprep.subr.bf16.mxu0 %v5273
      %5881 = vmatpush1.bf16.msra.mxu0 %v5272
      %5882 = vmatprep.subr.bf16.mxu0 %v5280
      %5883 = vmatpush1.bf16.msra.mxu0 %v5279
      %5884 = vmatprep.subr.bf16.mxu0 %v5287
      %5885 = vmatpush1.bf16.msra.mxu0 %v5286
      %5886 = vmatprep.mubr.bf16.mxu0 %v4041
      %5887 = vmatmul.mubr.bf16.gmra.mrb[0].mxu0 %v4040
      %v5888 = vpop.f32.mrb[0].mxu0
      %v5889 = vadd.f32 %v5776, %v5888
      %v5890 = vpop.f32.mrb[0].mxu0
      %v5891 = vadd.f32 %v5778, %v5890
      %v5892 = vpop.f32.mrb[0].mxu0
      %v5893 = vadd.f32 %v5780, %v5892
      %v5894 = vpop.f32.mrb[0].mxu0
      %v5895 = vadd.f32 %v5782, %v5894
      %5896 = vmatprep.mubr.bf16.mxu0 %v4045
      %5897 = vmatmul.mubr.bf16.gmra.mrb[0].mxu0 %v4044
      %v5898 = vpop.f32.mrb[0].mxu0
      %v5899 = vadd.f32 %v5786, %v5898
      %v5900 = vpop.f32.mrb[0].mxu0
      %v5901 = vadd.f32 %v5788, %v5900
      %v5902 = vpop.f32.mrb[0].mxu0
      %v5903 = vadd.f32 %v5790, %v5902
      %v5904 = vpop.f32.mrb[0].mxu0
      %v5905 = vadd.f32 %v5792, %v5904
      %5906 = vmatprep.mubr.bf16.mxu0 %v4049
      %5907 = vmatmul.mubr.bf16.gmra.mrb[0].mxu0 %v4048
      %v5908 = vpop.f32.mrb[0].mxu0
      %v5909 = vadd.f32 %v5796, %v5908
      %v5910 = vpop.f32.mrb[0].mxu0
      %v5911 = vadd.f32 %v5798, %v5910
      %v5912 = vpop.f32.mrb[0].mxu0
      %v5913 = vadd.f32 %v5800, %v5912
      %v5914 = vpop.f32.mrb[0].mxu0
      %v5915 = vadd.f32 %v5802, %v5914
      %5916 = vmatprep.mubr.bf16.mxu0 %v4053
      %5917 = vmatmul.mubr.bf16.gmra.mrb[0].mxu0 %v4052
      %v5918 = vpop.f32.mrb[0].mxu0
      %v5919 = vadd.f32 %v5806, %v5918
      %v5920 = vpop.f32.mrb[0].mxu0
      %v5921 = vadd.f32 %v5808, %v5920
      %v5922 = vpop.f32.mrb[0].mxu0
      %v5923 = vadd.f32 %v5810, %v5922
      %v5924 = vpop.f32.mrb[0].mxu0
      %v5925 = vadd.f32 %v5812, %v5924
      %5926 = vmatprep.mubr.bf16.mxu0 %v4057
      %5927 = vmatmul.mubr.bf16.gmra.mrb[0].mxu0 %v4056
      %v5928 = vpop.f32.mrb[0].mxu0
      %v5929 = vadd.f32 %v5816, %v5928
      %v5930 = vpop.f32.mrb[0].mxu0
      %v5931 = vadd.f32 %v5818, %v5930
      %v5932 = vpop.f32.mrb[0].mxu0
      %v5933 = vadd.f32 %v5820, %v5932
      %v5934 = vpop.f32.mrb[0].mxu0
      %v5935 = vadd.f32 %v5822, %v5934
      %5936 = vmatprep.mubr.bf16.mxu0 %v4061
      %5937 = vmatmul.mubr.bf16.gmra.mrb[0].mxu0 %v4060
      %v5938 = vpop.f32.mrb[0].mxu0
      %v5939 = vadd.f32 %v5826, %v5938
      %v5940 = vpop.f32.mrb[0].mxu0
      %v5941 = vadd.f32 %v5828, %v5940
      %v5942 = vpop.f32.mrb[0].mxu0
      %v5943 = vadd.f32 %v5830, %v5942
      %v5944 = vpop.f32.mrb[0].mxu0
      %v5945 = vadd.f32 %v5832, %v5944
      %5946 = vmatprep.mubr.bf16.mxu0 %v4065
      %5947 = vmatmul.mubr.bf16.gmra.mrb[0].mxu0 %v4064
      %v5948 = vpop.f32.mrb[0].mxu0
      %v5949 = vadd.f32 %v5836, %v5948
      %v5950 = vpop.f32.mrb[0].mxu0
      %v5951 = vadd.f32 %v5838, %v5950
      %v5952 = vpop.f32.mrb[0].mxu0
      %v5953 = vadd.f32 %v5840, %v5952
      %v5954 = vpop.f32.mrb[0].mxu0
      %v5955 = vadd.f32 %v5842, %v5954
      %5956 = vmatprep.mubr.bf16.mxu0 %v4069
      %5957 = vmatmul.mubr.bf16.gmra.mrb[0].mxu0 %v4068
      %v5958 = vpop.f32.mrb[0].mxu0
      %v5959 = vadd.f32 %v5846, %v5958
      %v5960 = vpop.f32.mrb[0].mxu0
      %v5961 = vadd.f32 %v5848, %v5960
      %v5962 = vpop.f32.mrb[0].mxu0
      %v5963 = vadd.f32 %v5850, %v5962
      %v5964 = vpop.f32.mrb[0].mxu0
      %v5965 = vadd.f32 %v5852, %v5964
      %5966 = vdwg.mxu0
      %5967 = vmatprep.subr.bf16.mxu0 %v5072
      %5968 = vmatpush1.bf16.msra.mxu0 %v5071
      %5969 = vmatprep.subr.bf16.mxu0 %v5079
      %5970 = vmatpush1.bf16.msra.mxu0 %v5078
      %5971 = vmatprep.subr.bf16.mxu0 %v5086
      %5972 = vmatpush1.bf16.msra.mxu0 %v5085
      %5973 = vmatprep.subr.bf16.mxu0 %v5093
      %5974 = vmatpush1.bf16.msra.mxu0 %v5092
      %5975 = vmatprep.subr.bf16.mxu0 %v5100
      %5976 = vmatpush1.bf16.msra.mxu0 %v5099
      %5977 = vmatprep.subr.bf16.mxu0 %v5107
      %5978 = vmatpush1.bf16.msra.mxu0 %v5106
      %5979 = vmatprep.subr.bf16.mxu0 %v5114
      %5980 = vmatpush1.bf16.msra.mxu0 %v5113
      %5981 = vmatprep.subr.bf16.mxu0 %v5121
      %5982 = vmatpush1.bf16.msra.mxu0 %v5120
      %5983 = vmatprep.subr.bf16.mxu0 %v5128
      %5984 = vmatpush1.bf16.msra.mxu0 %v5127
      %5985 = vmatprep.subr.bf16.mxu0 %v5135
      %5986 = vmatpush1.bf16.msra.mxu0 %v5134
      %5987 = vmatprep.subr.bf16.mxu0 %v5142
      %5988 = vmatpush1.bf16.msra.mxu0 %v5141
      %5989 = vmatprep.subr.bf16.mxu0 %v5149
      %5990 = vmatpush1.bf16.msra.mxu0 %v5148
      %5991 = vmatprep.subr.bf16.mxu0 %v5156
      %5992 = vmatpush1.bf16.msra.mxu0 %v5155
      %5993 = vmatprep.subr.bf16.mxu0 %v5163
      %5994 = vmatpush1.bf16.msra.mxu0 %v5162
      %5995 = vmatprep.subr.bf16.mxu0 %v5170
      %5996 = vmatpush1.bf16.msra.mxu0 %v5169
      %5997 = vmatprep.subr.bf16.mxu0 %v5177
      %5998 = vmatpush1.bf16.msra.mxu0 %v5176
      %5999 = vmatprep.mubr.bf16.mxu0 %v4039
      %6000 = vmatmul.mubr.bf16.gmra.mrb[0].mxu0 %v4038
      %v6001 = vpop.f32.mrb[0].mxu0
      %v6002 = vadd.f32 %v4347, %v6001
      %v6003 = vpop.f32.mrb[0].mxu0
      %v6004 = vadd.f32 %v4351, %v6003
      %v6005 = vpop.f32.mrb[0].mxu0
      %v6006 = vadd.f32 %v4347, %v6005
      %v6007 = vpop.f32.mrb[0].mxu0
      %v6008 = vadd.f32 %v4351, %v6007
      %6009 = vmatprep.mubr.bf16.mxu0 %v4043
      %6010 = vmatmul.mubr.bf16.gmra.mrb[0].mxu0 %v4042
      %v6011 = vpop.f32.mrb[0].mxu0
      %v6012 = vadd.f32 %v4347, %v6011
      %v6013 = vpop.f32.mrb[0].mxu0
      %v6014 = vadd.f32 %v4351, %v6013
      %v6015 = vpop.f32.mrb[0].mxu0
      %v6016 = vadd.f32 %v4347, %v6015
      %v6017 = vpop.f32.mrb[0].mxu0
      %v6018 = vadd.f32 %v4351, %v6017
      %6019 = vmatprep.mubr.bf16.mxu0 %v4047
      %6020 = vmatmul.mubr.bf16.gmra.mrb[0].mxu0 %v4046
      %v6021 = vpop.f32.mrb[0].mxu0
      %v6022 = vadd.f32 %v4347, %v6021
      %v6023 = vpop.f32.mrb[0].mxu0
      %v6024 = vadd.f32 %v4351, %v6023
      %v6025 = vpop.f32.mrb[0].mxu0
      %v6026 = vadd.f32 %v4347, %v6025
      %v6027 = vpop.f32.mrb[0].mxu0
      %v6028 = vadd.f32 %v4351, %v6027
      %6029 = vmatprep.mubr.bf16.mxu0 %v4051
      %6030 = vmatmul.mubr.bf16.gmra.mrb[0].mxu0 %v4050
      %v6031 = vpop.f32.mrb[0].mxu0
      %v6032 = vadd.f32 %v4347, %v6031
      %v6033 = vpop.f32.mrb[0].mxu0
      %v6034 = vadd.f32 %v4351, %v6033
      %v6035 = vpop.f32.mrb[0].mxu0
      %v6036 = vadd.f32 %v4347, %v6035
      %v6037 = vpop.f32.mrb[0].mxu0
      %v6038 = vadd.f32 %v4351, %v6037
      %6039 = vmatprep.mubr.bf16.mxu0 %v4055
      %6040 = vmatmul.mubr.bf16.gmra.mrb[0].mxu0 %v4054
      %v6041 = vpop.f32.mrb[0].mxu0
      %v6042 = vadd.f32 %v4347, %v6041
      %v6043 = vpop.f32.mrb[0].mxu0
      %v6044 = vadd.f32 %v4351, %v6043
      %v6045 = vpop.f32.mrb[0].mxu0
      %v6046 = vadd.f32 %v4347, %v6045
      %v6047 = vpop.f32.mrb[0].mxu0
      %v6048 = vadd.f32 %v4351, %v6047
      %6049 = vmatprep.mubr.bf16.mxu0 %v4059
      %6050 = vmatmul.mubr.bf16.gmra.mrb[0].mxu0 %v4058
      %v6051 = vpop.f32.mrb[0].mxu0
      %v6052 = vadd.f32 %v4347, %v6051
      %v6053 = vpop.f32.mrb[0].mxu0
      %v6054 = vadd.f32 %v4351, %v6053
      %v6055 = vpop.f32.mrb[0].mxu0
      %v6056 = vadd.f32 %v4347, %v6055
      %v6057 = vpop.f32.mrb[0].mxu0
      %v6058 = vadd.f32 %v4351, %v6057
      %6059 = vmatprep.mubr.bf16.mxu0 %v4063
      %6060 = vmatmul.mubr.bf16.gmra.mrb[0].mxu0 %v4062
      %v6061 = vpop.f32.mrb[0].mxu0
      %v6062 = vadd.f32 %v4347, %v6061
      %v6063 = vpop.f32.mrb[0].mxu0
      %v6064 = vadd.f32 %v4351, %v6063
      %v6065 = vpop.f32.mrb[0].mxu0
      %v6066 = vadd.f32 %v4347, %v6065
      %v6067 = vpop.f32.mrb[0].mxu0
      %v6068 = vadd.f32 %v4351, %v6067
      %6069 = vmatprep.mubr.bf16.mxu0 %v4067
      %6070 = vmatmul.mubr.bf16.gmra.mrb[0].mxu0 %v4066
      %v6071 = vpop.f32.mrb[0].mxu0
      %v6072 = vadd.f32 %v4347, %v6071
      %v6073 = vpop.f32.mrb[0].mxu0
      %v6074 = vadd.f32 %v4351, %v6073
      %v6075 = vpop.f32.mrb[0].mxu0
      %v6076 = vadd.f32 %v4347, %v6075
      %v6077 = vpop.f32.mrb[0].mxu0
      %v6078 = vadd.f32 %v4351, %v6077
      %6079 = vdwg.mxu0
      %6080 = vmatprep.subr.bf16.mxu0 %v5184
      %6081 = vmatpush1.bf16.msra.mxu0 %v5183
      %6082 = vmatprep.subr.bf16.mxu0 %v5191
      %6083 = vmatpush1.bf16.msra.mxu0 %v5190
      %6084 = vmatprep.subr.bf16.mxu0 %v5198
      %6085 = vmatpush1.bf16.msra.mxu0 %v5197
      %6086 = vmatprep.subr.bf16.mxu0 %v5205
      %6087 = vmatpush1.bf16.msra.mxu0 %v5204
      %6088 = vmatprep.subr.bf16.mxu0 %v5212
      %6089 = vmatpush1.bf16.msra.mxu0 %v5211
      %6090 = vmatprep.subr.bf16.mxu0 %v5219
      %6091 = vmatpush1.bf16.msra.mxu0 %v5218
      %6092 = vmatprep.subr.bf16.mxu0 %v5226
      %6093 = vmatpush1.bf16.msra.mxu0 %v5225
      %6094 = vmatprep.subr.bf16.mxu0 %v5233
      %6095 = vmatpush1.bf16.msra.mxu0 %v5232
      %6096 = vmatprep.subr.bf16.mxu0 %v5240
      %6097 = vmatpush1.bf16.msra.mxu0 %v5239
      %6098 = vmatprep.subr.bf16.mxu0 %v5247
      %6099 = vmatpush1.bf16.msra.mxu0 %v5246
      %6100 = vmatprep.subr.bf16.mxu0 %v5254
      %6101 = vmatpush1.bf16.msra.mxu0 %v5253
      %6102 = vmatprep.subr.bf16.mxu0 %v5261
      %6103 = vmatpush1.bf16.msra.mxu0 %v5260
      %6104 = vmatprep.subr.bf16.mxu0 %v5268
      %6105 = vmatpush1.bf16.msra.mxu0 %v5267
      %6106 = vmatprep.subr.bf16.mxu0 %v5275
      %6107 = vmatpush1.bf16.msra.mxu0 %v5274
      %6108 = vmatprep.subr.bf16.mxu0 %v5282
      %6109 = vmatpush1.bf16.msra.mxu0 %v5281
      %6110 = vmatprep.subr.bf16.mxu0 %v5289
      %6111 = vmatpush1.bf16.msra.mxu0 %v5288
      %6112 = vmatprep.mubr.bf16.mxu0 %v4041
      %6113 = vmatmul.mubr.bf16.gmra.mrb[0].mxu0 %v4040
      %v6114 = vpop.f32.mrb[0].mxu0
      %v6115 = vadd.f32 %v6002, %v6114
      %v6116 = vpop.f32.mrb[0].mxu0
      %v6117 = vadd.f32 %v6004, %v6116
      %v6118 = vpop.f32.mrb[0].mxu0
      %v6119 = vadd.f32 %v6006, %v6118
      %v6120 = vpop.f32.mrb[0].mxu0
      %v6121 = vadd.f32 %v6008, %v6120
      %6122 = vmatprep.mubr.bf16.mxu0 %v4045
      %6123 = vmatmul.mubr.bf16.gmra.mrb[0].mxu0 %v4044
      %v6124 = vpop.f32.mrb[0].mxu0
      %v6125 = vadd.f32 %v6012, %v6124
      %v6126 = vpop.f32.mrb[0].mxu0
      %v6127 = vadd.f32 %v6014, %v6126
      %v6128 = vpop.f32.mrb[0].mxu0
      %v6129 = vadd.f32 %v6016, %v6128
      %v6130 = vpop.f32.mrb[0].mxu0
      %v6131 = vadd.f32 %v6018, %v6130
      %6132 = vmatprep.mubr.bf16.mxu0 %v4049
      %6133 = vmatmul.mubr.bf16.gmra.mrb[0].mxu0 %v4048
      %v6134 = vpop.f32.mrb[0].mxu0
      %v6135 = vadd.f32 %v6022, %v6134
      %v6136 = vpop.f32.mrb[0].mxu0
      %v6137 = vadd.f32 %v6024, %v6136
      %v6138 = vpop.f32.mrb[0].mxu0
      %v6139 = vadd.f32 %v6026, %v6138
      %v6140 = vpop.f32.mrb[0].mxu0
      %v6141 = vadd.f32 %v6028, %v6140
      %6142 = vmatprep.mubr.bf16.mxu0 %v4053
      %6143 = vmatmul.mubr.bf16.gmra.mrb[0].mxu0 %v4052
      %v6144 = vpop.f32.mrb[0].mxu0
      %v6145 = vadd.f32 %v6032, %v6144
      %v6146 = vpop.f32.mrb[0].mxu0
      %v6147 = vadd.f32 %v6034, %v6146
      %v6148 = vpop.f32.mrb[0].mxu0
      %v6149 = vadd.f32 %v6036, %v6148
      %v6150 = vpop.f32.mrb[0].mxu0
      %v6151 = vadd.f32 %v6038, %v6150
      %6152 = vmatprep.mubr.bf16.mxu0 %v4057
      %6153 = vmatmul.mubr.bf16.gmra.mrb[0].mxu0 %v4056
      %v6154 = vpop.f32.mrb[0].mxu0
      %v6155 = vadd.f32 %v6042, %v6154
      %v6156 = vpop.f32.mrb[0].mxu0
      %v6157 = vadd.f32 %v6044, %v6156
      %v6158 = vpop.f32.mrb[0].mxu0
      %v6159 = vadd.f32 %v6046, %v6158
      %v6160 = vpop.f32.mrb[0].mxu0
      %v6161 = vadd.f32 %v6048, %v6160
      %6162 = vmatprep.mubr.bf16.mxu0 %v4061
      %6163 = vmatmul.mubr.bf16.gmra.mrb[0].mxu0 %v4060
      %v6164 = vpop.f32.mrb[0].mxu0
      %v6165 = vadd.f32 %v6052, %v6164
      %v6166 = vpop.f32.mrb[0].mxu0
      %v6167 = vadd.f32 %v6054, %v6166
      %v6168 = vpop.f32.mrb[0].mxu0
      %v6169 = vadd.f32 %v6056, %v6168
      %v6170 = vpop.f32.mrb[0].mxu0
      %v6171 = vadd.f32 %v6058, %v6170
      %6172 = vmatprep.mubr.bf16.mxu0 %v4065
      %6173 = vmatmul.mubr.bf16.gmra.mrb[0].mxu0 %v4064
      %v6174 = vpop.f32.mrb[0].mxu0
      %v6175 = vadd.f32 %v6062, %v6174
      %v6176 = vpop.f32.mrb[0].mxu0
      %v6177 = vadd.f32 %v6064, %v6176
      %v6178 = vpop.f32.mrb[0].mxu0
      %v6179 = vadd.f32 %v6066, %v6178
      %v6180 = vpop.f32.mrb[0].mxu0
      %v6181 = vadd.f32 %v6068, %v6180
      %6182 = vmatprep.mubr.bf16.mxu0 %v4069
      %6183 = vmatmul.mubr.bf16.gmra.mrb[0].mxu0 %v4068
      %v6184 = vpop.f32.mrb[0].mxu0
      %v6185 = vadd.f32 %v6072, %v6184
      %v6186 = vpop.f32.mrb[0].mxu0
      %v6187 = vadd.f32 %v6074, %v6186
      %v6188 = vpop.f32.mrb[0].mxu0
      %v6189 = vadd.f32 %v6076, %v6188
      %v6190 = vpop.f32.mrb[0].mxu0
      %v6191 = vadd.f32 %v6078, %v6190
      %6192 = vdwg.mxu0
      %6193 = vmatprep.subr.bf16.mxu0 0
      %6194 = vmatpush1.bf16.msra.mxu0 %v5073
      %6195 = vmatprep.subr.bf16.mxu0 0
      %6196 = vmatpush1.bf16.msra.mxu0 %v5080
      %6197 = vmatprep.subr.bf16.mxu0 0
      %6198 = vmatpush1.bf16.msra.mxu0 %v5087
      %6199 = vmatprep.subr.bf16.mxu0 0
      %6200 = vmatpush1.bf16.msra.mxu0 %v5094
      %6201 = vmatprep.subr.bf16.mxu0 0
      %6202 = vmatpush1.bf16.msra.mxu0 %v5101
      %6203 = vmatprep.subr.bf16.mxu0 0
      %6204 = vmatpush1.bf16.msra.mxu0 %v5108
      %6205 = vmatprep.subr.bf16.mxu0 0
      %6206 = vmatpush1.bf16.msra.mxu0 %v5115
      %6207 = vmatprep.subr.bf16.mxu0 0
      %6208 = vmatpush1.bf16.msra.mxu0 %v5122
      %6209 = vmatprep.subr.bf16.mxu0 0
      %6210 = vmatpush1.bf16.msra.mxu0 %v5129
      %6211 = vmatprep.subr.bf16.mxu0 0
      %6212 = vmatpush1.bf16.msra.mxu0 %v5136
      %6213 = vmatprep.subr.bf16.mxu0 0
      %6214 = vmatpush1.bf16.msra.mxu0 %v5143
      %6215 = vmatprep.subr.bf16.mxu0 0
      %6216 = vmatpush1.bf16.msra.mxu0 %v5150
      %6217 = vmatprep.subr.bf16.mxu0 0
      %6218 = vmatpush1.bf16.msra.mxu0 %v5157
      %6219 = vmatprep.subr.bf16.mxu0 0
      %6220 = vmatpush1.bf16.msra.mxu0 %v5164
      %6221 = vmatprep.subr.bf16.mxu0 0
      %6222 = vmatpush1.bf16.msra.mxu0 %v5171
      %6223 = vmatprep.subr.bf16.mxu0 0
      %6224 = vmatpush1.bf16.msra.mxu0 %v5178
      %6225 = vmatprep.mubr.bf16.mxu0 %v4039
      %6226 = vmatmul.mubr.bf16.gmra.mrb[0].mxu0 %v4038
      %v6227 = vpop.f32.mrb[0].mxu0
      %v6228 = vadd.f32 %v4355, %v6227
      %v6229 = vpop.f32.mrb[0].mxu0
      %v6230 = vpop.f32.mrb[0].mxu0
      %v6231 = vadd.f32 %v4355, %v6230
      %v6232 = vpop.f32.mrb[0].mxu0
      %6233 = vmatprep.mubr.bf16.mxu0 %v4043
      %6234 = vmatmul.mubr.bf16.gmra.mrb[0].mxu0 %v4042
      %v6235 = vpop.f32.mrb[0].mxu0
      %v6236 = vadd.f32 %v4355, %v6235
      %v6237 = vpop.f32.mrb[0].mxu0
      %v6238 = vpop.f32.mrb[0].mxu0
      %v6239 = vadd.f32 %v4355, %v6238
      %v6240 = vpop.f32.mrb[0].mxu0
      %6241 = vmatprep.mubr.bf16.mxu0 %v4047
      %6242 = vmatmul.mubr.bf16.gmra.mrb[0].mxu0 %v4046
      %v6243 = vpop.f32.mrb[0].mxu0
      %v6244 = vadd.f32 %v4355, %v6243
      %v6245 = vpop.f32.mrb[0].mxu0
      %v6246 = vpop.f32.mrb[0].mxu0
      %v6247 = vadd.f32 %v4355, %v6246
      %v6248 = vpop.f32.mrb[0].mxu0
      %6249 = vmatprep.mubr.bf16.mxu0 %v4051
      %6250 = vmatmul.mubr.bf16.gmra.mrb[0].mxu0 %v4050
      %v6251 = vpop.f32.mrb[0].mxu0
      %v6252 = vadd.f32 %v4355, %v6251
      %v6253 = vpop.f32.mrb[0].mxu0
      %v6254 = vpop.f32.mrb[0].mxu0
      %v6255 = vadd.f32 %v4355, %v6254
      %v6256 = vpop.f32.mrb[0].mxu0
      %6257 = vmatprep.mubr.bf16.mxu0 %v4055
      %6258 = vmatmul.mubr.bf16.gmra.mrb[0].mxu0 %v4054
      %v6259 = vpop.f32.mrb[0].mxu0
      %v6260 = vadd.f32 %v4355, %v6259
      %v6261 = vpop.f32.mrb[0].mxu0
      %v6262 = vpop.f32.mrb[0].mxu0
      %v6263 = vadd.f32 %v4355, %v6262
      %v6264 = vpop.f32.mrb[0].mxu0
      %6265 = vmatprep.mubr.bf16.mxu0 %v4059
      %6266 = vmatmul.mubr.bf16.gmra.mrb[0].mxu0 %v4058
      %v6267 = vpop.f32.mrb[0].mxu0
      %v6268 = vadd.f32 %v4355, %v6267
      %v6269 = vpop.f32.mrb[0].mxu0
      %v6270 = vpop.f32.mrb[0].mxu0
      %v6271 = vadd.f32 %v4355, %v6270
      %v6272 = vpop.f32.mrb[0].mxu0
      %6273 = vmatprep.mubr.bf16.mxu0 %v4063
      %6274 = vmatmul.mubr.bf16.gmra.mrb[0].mxu0 %v4062
      %v6275 = vpop.f32.mrb[0].mxu0
      %v6276 = vadd.f32 %v4355, %v6275
      %v6277 = vpop.f32.mrb[0].mxu0
      %v6278 = vpop.f32.mrb[0].mxu0
      %v6279 = vadd.f32 %v4355, %v6278
      %v6280 = vpop.f32.mrb[0].mxu0
      %6281 = vmatprep.mubr.bf16.mxu0 %v4067
      %6282 = vmatmul.mubr.bf16.gmra.mrb[0].mxu0 %v4066
      %v6283 = vpop.f32.mrb[0].mxu0
      %v6284 = vadd.f32 %v4355, %v6283
      %v6285 = vpop.f32.mrb[0].mxu0
      %v6286 = vpop.f32.mrb[0].mxu0
      %v6287 = vadd.f32 %v4355, %v6286
      %v6288 = vpop.f32.mrb[0].mxu0
      %6289 = vdwg.mxu0
      %6290 = vmatprep.subr.bf16.mxu0 0
      %6291 = vmatpush1.bf16.msra.mxu0 %v5185
      %6292 = vmatprep.subr.bf16.mxu0 0
      %6293 = vmatpush1.bf16.msra.mxu0 %v5192
      %6294 = vmatprep.subr.bf16.mxu0 0
      %6295 = vmatpush1.bf16.msra.mxu0 %v5199
      %6296 = vmatprep.subr.bf16.mxu0 0
      %6297 = vmatpush1.bf16.msra.mxu0 %v5206
      %6298 = vmatprep.subr.bf16.mxu0 0
      %6299 = vmatpush1.bf16.msra.mxu0 %v5213
      %6300 = vmatprep.subr.bf16.mxu0 0
      %6301 = vmatpush1.bf16.msra.mxu0 %v5220
      %6302 = vmatprep.subr.bf16.mxu0 0
      %6303 = vmatpush1.bf16.msra.mxu0 %v5227
      %6304 = vmatprep.subr.bf16.mxu0 0
      %6305 = vmatpush1.bf16.msra.mxu0 %v5234
      %6306 = vmatprep.subr.bf16.mxu0 0
      %6307 = vmatpush1.bf16.msra.mxu0 %v5241
      %6308 = vmatprep.subr.bf16.mxu0 0
      %6309 = vmatpush1.bf16.msra.mxu0 %v5248
      %6310 = vmatprep.subr.bf16.mxu0 0
      %6311 = vmatpush1.bf16.msra.mxu0 %v5255
      %6312 = vmatprep.subr.bf16.mxu0 0
      %6313 = vmatpush1.bf16.msra.mxu0 %v5262
      %6314 = vmatprep.subr.bf16.mxu0 0
      %6315 = vmatpush1.bf16.msra.mxu0 %v5269
      %6316 = vmatprep.subr.bf16.mxu0 0
      %6317 = vmatpush1.bf16.msra.mxu0 %v5276
      %6318 = vmatprep.subr.bf16.mxu0 0
      %6319 = vmatpush1.bf16.msra.mxu0 %v5283
      %6320 = vmatprep.subr.bf16.mxu0 0
      %6321 = vmatpush1.bf16.msra.mxu0 %v5290
      %6322 = vmatprep.mubr.bf16.mxu0 %v4041
      %6323 = vmatmul.mubr.bf16.gmra.mrb[0].mxu0 %v4040
      %v6324 = vpop.f32.mrb[0].mxu0
      %v6325 = vadd.f32 %v6228, %v6324
      %v6326 = vpop.f32.mrb[0].mxu0
      %v6327 = vpop.f32.mrb[0].mxu0
      %v6328 = vadd.f32 %v6231, %v6327
      %v6329 = vpop.f32.mrb[0].mxu0
      %6330 = vmatprep.mubr.bf16.mxu0 %v4045
      %6331 = vmatmul.mubr.bf16.gmra.mrb[0].mxu0 %v4044
      %v6332 = vpop.f32.mrb[0].mxu0
      %v6333 = vadd.f32 %v6236, %v6332
      %v6334 = vpop.f32.mrb[0].mxu0
      %v6335 = vpop.f32.mrb[0].mxu0
      %v6336 = vadd.f32 %v6239, %v6335
      %v6337 = vpop.f32.mrb[0].mxu0
      %6338 = vmatprep.mubr.bf16.mxu0 %v4049
      %6339 = vmatmul.mubr.bf16.gmra.mrb[0].mxu0 %v4048
      %v6340 = vpop.f32.mrb[0].mxu0
      %v6341 = vadd.f32 %v6244, %v6340
      %v6342 = vpop.f32.mrb[0].mxu0
      %v6343 = vpop.f32.mrb[0].mxu0
      %v6344 = vadd.f32 %v6247, %v6343
      %v6345 = vpop.f32.mrb[0].mxu0
      %6346 = vmatprep.mubr.bf16.mxu0 %v4053
      %6347 = vmatmul.mubr.bf16.gmra.mrb[0].mxu0 %v4052
      %v6348 = vpop.f32.mrb[0].mxu0
      %v6349 = vadd.f32 %v6252, %v6348
      %v6350 = vpop.f32.mrb[0].mxu0
      %v6351 = vpop.f32.mrb[0].mxu0
      %v6352 = vadd.f32 %v6255, %v6351
      %v6353 = vpop.f32.mrb[0].mxu0
      %6354 = vmatprep.mubr.bf16.mxu0 %v4057
      %6355 = vmatmul.mubr.bf16.gmra.mrb[0].mxu0 %v4056
      %v6356 = vpop.f32.mrb[0].mxu0
      %v6357 = vadd.f32 %v6260, %v6356
      %v6358 = vpop.f32.mrb[0].mxu0
      %v6359 = vpop.f32.mrb[0].mxu0
      %v6360 = vadd.f32 %v6263, %v6359
      %v6361 = vpop.f32.mrb[0].mxu0
      %6362 = vmatprep.mubr.bf16.mxu0 %v4061
      %6363 = vmatmul.mubr.bf16.gmra.mrb[0].mxu0 %v4060
      %v6364 = vpop.f32.mrb[0].mxu0
      %v6365 = vadd.f32 %v6268, %v6364
      %v6366 = vpop.f32.mrb[0].mxu0
      %v6367 = vpop.f32.mrb[0].mxu0
      %v6368 = vadd.f32 %v6271, %v6367
      %v6369 = vpop.f32.mrb[0].mxu0
      %6370 = vmatprep.mubr.bf16.mxu0 %v4065
      %6371 = vmatmul.mubr.bf16.gmra.mrb[0].mxu0 %v4064
      %v6372 = vpop.f32.mrb[0].mxu0
      %v6373 = vadd.f32 %v6276, %v6372
      %v6374 = vpop.f32.mrb[0].mxu0
      %v6375 = vpop.f32.mrb[0].mxu0
      %v6376 = vadd.f32 %v6279, %v6375
      %v6377 = vpop.f32.mrb[0].mxu0
      %6378 = vmatprep.mubr.bf16.mxu0 %v4069
      %6379 = vmatmul.mubr.bf16.gmra.mrb[0].mxu0 %v4068
      %v6380 = vpop.f32.mrb[0].mxu0
      %v6381 = vadd.f32 %v6284, %v6380
      %v6382 = vpop.f32.mrb[0].mxu0
      %v6383 = vpop.f32.mrb[0].mxu0
      %v6384 = vadd.f32 %v6287, %v6383
      %v6385 = vpop.f32.mrb[0].mxu0
      %6386 = vdwg.mxu0
      %v6387 = vxor.u32 %v5663, 2147483648
      %v6388 = vxor.u32 %v5665, 2147483648
      %v6389 = vxor.u32 %v5889, 2147483648
      %v6390 = vxor.u32 %v5891, 2147483648
      %v6391 = vxor.u32 %v6115, 2147483648
      %v6392 = vxor.u32 %v6117, 2147483648
      %v6393 = vxor.u32 %v6325, 2147483648
      %v6394 = vxor.u32 %v5667, 2147483648
      %v6395 = vxor.u32 %v5669, 2147483648
      %v6396 = vxor.u32 %v5893, 2147483648
      %v6397 = vxor.u32 %v5895, 2147483648
      %v6398 = vxor.u32 %v6119, 2147483648
      %v6399 = vxor.u32 %v6121, 2147483648
      %v6400 = vxor.u32 %v6328, 2147483648
      %v6401 = vxor.u32 %v5673, 2147483648
      %v6402 = vxor.u32 %v5675, 2147483648
      %v6403 = vxor.u32 %v5899, 2147483648
      %v6404 = vxor.u32 %v5901, 2147483648
      %v6405 = vxor.u32 %v6125, 2147483648
      %v6406 = vxor.u32 %v6127, 2147483648
      %v6407 = vxor.u32 %v6333, 2147483648
      %v6408 = vxor.u32 %v5677, 2147483648
      %v6409 = vxor.u32 %v5679, 2147483648
      %v6410 = vxor.u32 %v5903, 2147483648
      %v6411 = vxor.u32 %v5905, 2147483648
      %v6412 = vxor.u32 %v6129, 2147483648
      %v6413 = vxor.u32 %v6131, 2147483648
      %v6414 = vxor.u32 %v6336, 2147483648
      %v6415 = vxor.u32 %v5683, 2147483648
      %v6416 = vxor.u32 %v5685, 2147483648
      %v6417 = vxor.u32 %v5909, 2147483648
      %v6418 = vxor.u32 %v5911, 2147483648
      %v6419 = vxor.u32 %v6135, 2147483648
      %v6420 = vxor.u32 %v6137, 2147483648
      %v6421 = vxor.u32 %v6341, 2147483648
      %v6422 = vxor.u32 %v5687, 2147483648
      %v6423 = vxor.u32 %v5689, 2147483648
      %v6424 = vxor.u32 %v5913, 2147483648
      %v6425 = vxor.u32 %v5915, 2147483648
      %v6426 = vxor.u32 %v6139, 2147483648
      %v6427 = vxor.u32 %v6141, 2147483648
      %v6428 = vxor.u32 %v6344, 2147483648
      %v6429 = vxor.u32 %v5693, 2147483648
      %v6430 = vxor.u32 %v5695, 2147483648
      %v6431 = vxor.u32 %v5919, 2147483648
      %v6432 = vxor.u32 %v5921, 2147483648
      %v6433 = vxor.u32 %v6145, 2147483648
      %v6434 = vxor.u32 %v6147, 2147483648
      %v6435 = vxor.u32 %v6349, 2147483648
      %v6436 = vxor.u32 %v5697, 2147483648
      %v6437 = vxor.u32 %v5699, 2147483648
      %v6438 = vxor.u32 %v5923, 2147483648
      %v6439 = vxor.u32 %v5925, 2147483648
      %v6440 = vxor.u32 %v6149, 2147483648
      %v6441 = vxor.u32 %v6151, 2147483648
      %v6442 = vxor.u32 %v6352, 2147483648
      %v6443 = vxor.u32 %v5703, 2147483648
      %v6444 = vxor.u32 %v5705, 2147483648
      %v6445 = vxor.u32 %v5929, 2147483648
      %v6446 = vxor.u32 %v5931, 2147483648
      %v6447 = vxor.u32 %v6155, 2147483648
      %v6448 = vxor.u32 %v6157, 2147483648
      %v6449 = vxor.u32 %v6357, 2147483648
      %v6450 = vxor.u32 %v5707, 2147483648
      %v6451 = vxor.u32 %v5709, 2147483648
      %v6452 = vxor.u32 %v5933, 2147483648
      %v6453 = vxor.u32 %v5935, 2147483648
      %v6454 = vxor.u32 %v6159, 2147483648
      %v6455 = vxor.u32 %v6161, 2147483648
      %v6456 = vxor.u32 %v6360, 2147483648
      %v6457 = vxor.u32 %v5713, 2147483648
      %v6458 = vxor.u32 %v5715, 2147483648
      %v6459 = vxor.u32 %v5939, 2147483648
      %v6460 = vxor.u32 %v5941, 2147483648
      %v6461 = vxor.u32 %v6165, 2147483648
      %v6462 = vxor.u32 %v6167, 2147483648
      %v6463 = vxor.u32 %v6365, 2147483648
      %v6464 = vxor.u32 %v5717, 2147483648
      %v6465 = vxor.u32 %v5719, 2147483648
      %v6466 = vxor.u32 %v5943, 2147483648
      %v6467 = vxor.u32 %v5945, 2147483648
      %v6468 = vxor.u32 %v6169, 2147483648
      %v6469 = vxor.u32 %v6171, 2147483648
      %v6470 = vxor.u32 %v6368, 2147483648
      %v6471 = vxor.u32 %v5723, 2147483648
      %v6472 = vxor.u32 %v5725, 2147483648
      %v6473 = vxor.u32 %v5949, 2147483648
      %v6474 = vxor.u32 %v5951, 2147483648
      %v6475 = vxor.u32 %v6175, 2147483648
      %v6476 = vxor.u32 %v6177, 2147483648
      %v6477 = vxor.u32 %v6373, 2147483648
      %v6478 = vxor.u32 %v5727, 2147483648
      %v6479 = vxor.u32 %v5729, 2147483648
      %v6480 = vxor.u32 %v5953, 2147483648
      %v6481 = vxor.u32 %v5955, 2147483648
      %v6482 = vxor.u32 %v6179, 2147483648
      %v6483 = vxor.u32 %v6181, 2147483648
      %v6484 = vxor.u32 %v6376, 2147483648
      %v6485 = vxor.u32 %v5733, 2147483648
      %v6486 = vxor.u32 %v5735, 2147483648
      %v6487 = vxor.u32 %v5959, 2147483648
      %v6488 = vxor.u32 %v5961, 2147483648
      %v6489 = vxor.u32 %v6185, 2147483648
      %v6490 = vxor.u32 %v6187, 2147483648
      %v6491 = vxor.u32 %v6381, 2147483648
      %v6492 = vxor.u32 %v5737, 2147483648
      %v6493 = vxor.u32 %v5739, 2147483648
      %v6494 = vxor.u32 %v5963, 2147483648
      %v6495 = vxor.u32 %v5965, 2147483648
      %v6496 = vxor.u32 %v6189, 2147483648
      %v6497 = vxor.u32 %v6191, 2147483648
      %v6498 = vxor.u32 %v6384, 2147483648
      %v6499 = vmul.f32 %v6387, 1.442695
      %v6500 = vpow.pop %v6499
      %v6501 = vmul.f32 %v6388, 1.442695
      %v6502 = vpow.pop %v6501
      %v6503 = vmul.f32 %v6389, 1.442695
      %v6504 = vpow.pop %v6503
      %v6505 = vmul.f32 %v6390, 1.442695
      %v6506 = vpow.pop %v6505
      %v6507 = vmul.f32 %v6391, 1.442695
      %v6508 = vpow.pop %v6507
      %v6509 = vmul.f32 %v6392, 1.442695
      %v6510 = vpow.pop %v6509
      %v6511 = vmul.f32 %v6393, 1.442695
      %v6512 = vpow.pop %v6511
      %v6513 = vmul.f32 %v6394, 1.442695
      %v6514 = vpow.pop %v6513
      %v6515 = vmul.f32 %v6395, 1.442695
      %v6516 = vpow.pop %v6515
      %v6517 = vmul.f32 %v6396, 1.442695
      %v6518 = vpow.pop %v6517
      %v6519 = vmul.f32 %v6397, 1.442695
      %v6520 = vpow.pop %v6519
      %v6521 = vmul.f32 %v6398, 1.442695
      %v6522 = vpow.pop %v6521
      %v6523 = vmul.f32 %v6399, 1.442695
      %v6524 = vpow.pop %v6523
      %v6525 = vmul.f32 %v6400, 1.442695
      %v6526 = vpow.pop %v6525
      %v6527 = vmul.f32 %v6401, 1.442695
      %v6528 = vpow.pop %v6527
      %v6529 = vmul.f32 %v6402, 1.442695
      %v6530 = vpow.pop %v6529
      %v6531 = vmul.f32 %v6403, 1.442695
      %v6532 = vpow.pop %v6531
      %v6533 = vmul.f32 %v6404, 1.442695
      %v6534 = vpow.pop %v6533
      %v6535 = vmul.f32 %v6405, 1.442695
      %v6536 = vpow.pop %v6535
      %v6537 = vmul.f32 %v6406, 1.442695
      %v6538 = vpow.pop %v6537
      %v6539 = vmul.f32 %v6407, 1.442695
      %v6540 = vpow.pop %v6539
      %v6541 = vmul.f32 %v6408, 1.442695
      %v6542 = vpow.pop %v6541
      %v6543 = vmul.f32 %v6409, 1.442695
      %v6544 = vpow.pop %v6543
      %v6545 = vmul.f32 %v6410, 1.442695
      %v6546 = vpow.pop %v6545
      %v6547 = vmul.f32 %v6411, 1.442695
      %v6548 = vpow.pop %v6547
      %v6549 = vmul.f32 %v6412, 1.442695
      %v6550 = vpow.pop %v6549
      %v6551 = vmul.f32 %v6413, 1.442695
      %v6552 = vpow.pop %v6551
      %v6553 = vmul.f32 %v6414, 1.442695
      %v6554 = vpow.pop %v6553
      %v6555 = vmul.f32 %v6415, 1.442695
      %v6556 = vpow.pop %v6555
      %v6557 = vmul.f32 %v6416, 1.442695
      %v6558 = vpow.pop %v6557
      %v6559 = vmul.f32 %v6417, 1.442695
      %v6560 = vpow.pop %v6559
      %v6561 = vmul.f32 %v6418, 1.442695
      %v6562 = vpow.pop %v6561
      %v6563 = vmul.f32 %v6419, 1.442695
      %v6564 = vpow.pop %v6563
      %v6565 = vmul.f32 %v6420, 1.442695
      %v6566 = vpow.pop %v6565
      %v6567 = vmul.f32 %v6421, 1.442695
      %v6568 = vpow.pop %v6567
      %v6569 = vmul.f32 %v6422, 1.442695
      %v6570 = vpow.pop %v6569
      %v6571 = vmul.f32 %v6423, 1.442695
      %v6572 = vpow.pop %v6571
      %v6573 = vmul.f32 %v6424, 1.442695
      %v6574 = vpow.pop %v6573
      %v6575 = vmul.f32 %v6425, 1.442695
      %v6576 = vpow.pop %v6575
      %v6577 = vmul.f32 %v6426, 1.442695
      %v6578 = vpow.pop %v6577
      %v6579 = vmul.f32 %v6427, 1.442695
      %v6580 = vpow.pop %v6579
      %v6581 = vmul.f32 %v6428, 1.442695
      %v6582 = vpow.pop %v6581
      %v6583 = vmul.f32 %v6429, 1.442695
      %v6584 = vpow.pop %v6583
      %v6585 = vmul.f32 %v6430, 1.442695
      %v6586 = vpow.pop %v6585
      %v6587 = vmul.f32 %v6431, 1.442695
      %v6588 = vpow.pop %v6587
      %v6589 = vmul.f32 %v6432, 1.442695
      %v6590 = vpow.pop %v6589
      %v6591 = vmul.f32 %v6433, 1.442695
      %v6592 = vpow.pop %v6591
      %v6593 = vmul.f32 %v6434, 1.442695
      %v6594 = vpow.pop %v6593
      %v6595 = vmul.f32 %v6435, 1.442695
      %v6596 = vpow.pop %v6595
      %v6597 = vmul.f32 %v6436, 1.442695
      %v6598 = vpow.pop %v6597
      %v6599 = vmul.f32 %v6437, 1.442695
      %v6600 = vpow.pop %v6599
      %v6601 = vmul.f32 %v6438, 1.442695
      %v6602 = vpow.pop %v6601
      %v6603 = vmul.f32 %v6439, 1.442695
      %v6604 = vpow.pop %v6603
      %v6605 = vmul.f32 %v6440, 1.442695
      %v6606 = vpow.pop %v6605
      %v6607 = vmul.f32 %v6441, 1.442695
      %v6608 = vpow.pop %v6607
      %v6609 = vmul.f32 %v6442, 1.442695
      %v6610 = vpow.pop %v6609
      %v6611 = vmul.f32 %v6443, 1.442695
      %v6612 = vpow.pop %v6611
      %v6613 = vmul.f32 %v6444, 1.442695
      %v6614 = vpow.pop %v6613
      %v6615 = vmul.f32 %v6445, 1.442695
      %v6616 = vpow.pop %v6615
      %v6617 = vmul.f32 %v6446, 1.442695
      %v6618 = vpow.pop %v6617
      %v6619 = vmul.f32 %v6447, 1.442695
      %v6620 = vpow.pop %v6619
      %v6621 = vmul.f32 %v6448, 1.442695
      %v6622 = vpow.pop %v6621
      %v6623 = vmul.f32 %v6449, 1.442695
      %v6624 = vpow.pop %v6623
      %v6625 = vmul.f32 %v6450, 1.442695
      %v6626 = vpow.pop %v6625
      %v6627 = vmul.f32 %v6451, 1.442695
      %v6628 = vpow.pop %v6627
      %v6629 = vmul.f32 %v6452, 1.442695
      %v6630 = vpow.pop %v6629
      %v6631 = vmul.f32 %v6453, 1.442695
      %v6632 = vpow.pop %v6631
      %v6633 = vmul.f32 %v6454, 1.442695
      %v6634 = vpow.pop %v6633
      %v6635 = vmul.f32 %v6455, 1.442695
      %v6636 = vpow.pop %v6635
      %v6637 = vmul.f32 %v6456, 1.442695
      %v6638 = vpow.pop %v6637
      %v6639 = vmul.f32 %v6457, 1.442695
      %v6640 = vpow.pop %v6639
      %v6641 = vmul.f32 %v6458, 1.442695
      %v6642 = vpow.pop %v6641
      %v6643 = vmul.f32 %v6459, 1.442695
      %v6644 = vpow.pop %v6643
      %v6645 = vmul.f32 %v6460, 1.442695
      %v6646 = vpow.pop %v6645
      %v6647 = vmul.f32 %v6461, 1.442695
      %v6648 = vpow.pop %v6647
      %v6649 = vmul.f32 %v6462, 1.442695
      %v6650 = vpow.pop %v6649
      %v6651 = vmul.f32 %v6463, 1.442695
      %v6652 = vpow.pop %v6651
      %v6653 = vmul.f32 %v6464, 1.442695
      %v6654 = vpow.pop %v6653
      %v6655 = vmul.f32 %v6465, 1.442695
      %v6656 = vpow.pop %v6655
      %v6657 = vmul.f32 %v6466, 1.442695
      %v6658 = vpow.pop %v6657
      %v6659 = vmul.f32 %v6467, 1.442695
      %v6660 = vpow.pop %v6659
      %v6661 = vmul.f32 %v6468, 1.442695
      %v6662 = vpow.pop %v6661
      %v6663 = vmul.f32 %v6469, 1.442695
      %v6664 = vpow.pop %v6663
      %v6665 = vmul.f32 %v6470, 1.442695
      %v6666 = vpow.pop %v6665
      %v6667 = vmul.f32 %v6471, 1.442695
      %v6668 = vpow.pop %v6667
      %v6669 = vmul.f32 %v6472, 1.442695
      %v6670 = vpow.pop %v6669
      %v6671 = vmul.f32 %v6473, 1.442695
      %v6672 = vpow.pop %v6671
      %v6673 = vmul.f32 %v6474, 1.442695
      %v6674 = vpow.pop %v6673
      %v6675 = vmul.f32 %v6475, 1.442695
      %v6676 = vpow.pop %v6675
      %v6677 = vmul.f32 %v6476, 1.442695
      %v6678 = vpow.pop %v6677
      %v6679 = vmul.f32 %v6477, 1.442695
      %v6680 = vpow.pop %v6679
      %v6681 = vmul.f32 %v6478, 1.442695
      %v6682 = vpow.pop %v6681
      %v6683 = vmul.f32 %v6479, 1.442695
      %v6684 = vpow.pop %v6683
      %v6685 = vmul.f32 %v6480, 1.442695
      %v6686 = vpow.pop %v6685
      %v6687 = vmul.f32 %v6481, 1.442695
      %v6688 = vpow.pop %v6687
      %v6689 = vmul.f32 %v6482, 1.442695
      %v6690 = vpow.pop %v6689
      %v6691 = vmul.f32 %v6483, 1.442695
      %v6692 = vpow.pop %v6691
      %v6693 = vmul.f32 %v6484, 1.442695
      %v6694 = vpow.pop %v6693
      %v6695 = vmul.f32 %v6485, 1.442695
      %v6696 = vpow.pop %v6695
      %v6697 = vmul.f32 %v6486, 1.442695
      %v6698 = vpow.pop %v6697
      %v6699 = vmul.f32 %v6487, 1.442695
      %v6700 = vpow.pop %v6699
      %v6701 = vmul.f32 %v6488, 1.442695
      %v6702 = vpow.pop %v6701
      %v6703 = vmul.f32 %v6489, 1.442695
      %v6704 = vpow.pop %v6703
      %v6705 = vmul.f32 %v6490, 1.442695
      %v6706 = vpow.pop %v6705
      %v6707 = vmul.f32 %v6491, 1.442695
      %v6708 = vpow.pop %v6707
      %v6709 = vmul.f32 %v6492, 1.442695
      %v6710 = vpow.pop %v6709
      %v6711 = vmul.f32 %v6493, 1.442695
      %v6712 = vpow.pop %v6711
      %v6713 = vmul.f32 %v6494, 1.442695
      %v6714 = vpow.pop %v6713
      %v6715 = vmul.f32 %v6495, 1.442695
      %v6716 = vpow.pop %v6715
      %v6717 = vmul.f32 %v6496, 1.442695
      %v6718 = vpow.pop %v6717
      %v6719 = vmul.f32 %v6497, 1.442695
      %v6720 = vpow.pop %v6719
      %v6721 = vmul.f32 %v6498, 1.442695
      %v6722 = vpow.pop %v6721
      %v6723 = vadd.f32 %v6500, 1.0
      %v6724 = vadd.f32 %v6502, 1.0
      %v6725 = vadd.f32 %v6504, 1.0
      %v6726 = vadd.f32 %v6506, 1.0
      %v6727 = vadd.f32 %v6508, 1.0
      %v6728 = vadd.f32 %v6510, 1.0
      %v6729 = vadd.f32 %v6512, 1.0
      %v6730 = vadd.f32 %v6514, 1.0
      %v6731 = vadd.f32 %v6516, 1.0
      %v6732 = vadd.f32 %v6518, 1.0
      %v6733 = vadd.f32 %v6520, 1.0
      %v6734 = vadd.f32 %v6522, 1.0
      %v6735 = vadd.f32 %v6524, 1.0
      %v6736 = vadd.f32 %v6526, 1.0
      %v6737 = vadd.f32 %v6528, 1.0
      %v6738 = vadd.f32 %v6530, 1.0
      %v6739 = vadd.f32 %v6532, 1.0
      %v6740 = vadd.f32 %v6534, 1.0
      %v6741 = vadd.f32 %v6536, 1.0
      %v6742 = vadd.f32 %v6538, 1.0
      %v6743 = vadd.f32 %v6540, 1.0
      %v6744 = vadd.f32 %v6542, 1.0
      %v6745 = vadd.f32 %v6544, 1.0
      %v6746 = vadd.f32 %v6546, 1.0
      %v6747 = vadd.f32 %v6548, 1.0
      %v6748 = vadd.f32 %v6550, 1.0
      %v6749 = vadd.f32 %v6552, 1.0
      %v6750 = vadd.f32 %v6554, 1.0
      %v6751 = vadd.f32 %v6556, 1.0
      %v6752 = vadd.f32 %v6558, 1.0
      %v6753 = vadd.f32 %v6560, 1.0
      %v6754 = vadd.f32 %v6562, 1.0
      %v6755 = vadd.f32 %v6564, 1.0
      %v6756 = vadd.f32 %v6566, 1.0
      %v6757 = vadd.f32 %v6568, 1.0
      %v6758 = vadd.f32 %v6570, 1.0
      %v6759 = vadd.f32 %v6572, 1.0
      %v6760 = vadd.f32 %v6574, 1.0
      %v6761 = vadd.f32 %v6576, 1.0
      %v6762 = vadd.f32 %v6578, 1.0
      %v6763 = vadd.f32 %v6580, 1.0
      %v6764 = vadd.f32 %v6582, 1.0
      %v6765 = vadd.f32 %v6584, 1.0
      %v6766 = vadd.f32 %v6586, 1.0
      %v6767 = vadd.f32 %v6588, 1.0
      %v6768 = vadd.f32 %v6590, 1.0
      %v6769 = vadd.f32 %v6592, 1.0
      %v6770 = vadd.f32 %v6594, 1.0
      %v6771 = vadd.f32 %v6596, 1.0
      %v6772 = vadd.f32 %v6598, 1.0
      %v6773 = vadd.f32 %v6600, 1.0
      %v6774 = vadd.f32 %v6602, 1.0
      %v6775 = vadd.f32 %v6604, 1.0
      %v6776 = vadd.f32 %v6606, 1.0
      %v6777 = vadd.f32 %v6608, 1.0
      %v6778 = vadd.f32 %v6610, 1.0
      %v6779 = vadd.f32 %v6612, 1.0
      %v6780 = vadd.f32 %v6614, 1.0
      %v6781 = vadd.f32 %v6616, 1.0
      %v6782 = vadd.f32 %v6618, 1.0
      %v6783 = vadd.f32 %v6620, 1.0
      %v6784 = vadd.f32 %v6622, 1.0
      %v6785 = vadd.f32 %v6624, 1.0
      %v6786 = vadd.f32 %v6626, 1.0
      %v6787 = vadd.f32 %v6628, 1.0
      %v6788 = vadd.f32 %v6630, 1.0
      %v6789 = vadd.f32 %v6632, 1.0
      %v6790 = vadd.f32 %v6634, 1.0
      %v6791 = vadd.f32 %v6636, 1.0
      %v6792 = vadd.f32 %v6638, 1.0
      %v6793 = vadd.f32 %v6640, 1.0
      %v6794 = vadd.f32 %v6642, 1.0
      %v6795 = vadd.f32 %v6644, 1.0
      %v6796 = vadd.f32 %v6646, 1.0
      %v6797 = vadd.f32 %v6648, 1.0
      %v6798 = vadd.f32 %v6650, 1.0
      %v6799 = vadd.f32 %v6652, 1.0
      %v6800 = vadd.f32 %v6654, 1.0
      %v6801 = vadd.f32 %v6656, 1.0
      %v6802 = vadd.f32 %v6658, 1.0
      %v6803 = vadd.f32 %v6660, 1.0
      %v6804 = vadd.f32 %v6662, 1.0
      %v6805 = vadd.f32 %v6664, 1.0
      %v6806 = vadd.f32 %v6666, 1.0
      %v6807 = vadd.f32 %v6668, 1.0
      %v6808 = vadd.f32 %v6670, 1.0
      %v6809 = vadd.f32 %v6672, 1.0
      %v6810 = vadd.f32 %v6674, 1.0
      %v6811 = vadd.f32 %v6676, 1.0
      %v6812 = vadd.f32 %v6678, 1.0
      %v6813 = vadd.f32 %v6680, 1.0
      %v6814 = vadd.f32 %v6682, 1.0
      %v6815 = vadd.f32 %v6684, 1.0
      %v6816 = vadd.f32 %v6686, 1.0
      %v6817 = vadd.f32 %v6688, 1.0
      %v6818 = vadd.f32 %v6690, 1.0
      %v6819 = vadd.f32 %v6692, 1.0
      %v6820 = vadd.f32 %v6694, 1.0
      %v6821 = vadd.f32 %v6696, 1.0
      %v6822 = vadd.f32 %v6698, 1.0
      %v6823 = vadd.f32 %v6700, 1.0
      %v6824 = vadd.f32 %v6702, 1.0
      %v6825 = vadd.f32 %v6704, 1.0
      %v6826 = vadd.f32 %v6706, 1.0
      %v6827 = vadd.f32 %v6708, 1.0
      %v6828 = vadd.f32 %v6710, 1.0
      %v6829 = vadd.f32 %v6712, 1.0
      %v6830 = vadd.f32 %v6714, 1.0
      %v6831 = vadd.f32 %v6716, 1.0
      %v6832 = vadd.f32 %v6718, 1.0
      %v6833 = vadd.f32 %v6720, 1.0
      %v6834 = vadd.f32 %v6722, 1.0
      %v6835 = vrcp.pop %v6723
      %v6836 = vmul.f32 1.0, %v6835
      %v6837 = vrcp.pop %v6724
      %v6838 = vmul.f32 1.0, %v6837
      %v6839 = vrcp.pop %v6725
      %v6840 = vmul.f32 1.0, %v6839
      %v6841 = vrcp.pop %v6726
      %v6842 = vmul.f32 1.0, %v6841
      %v6843 = vrcp.pop %v6727
      %v6844 = vmul.f32 1.0, %v6843
      %v6845 = vrcp.pop %v6728
      %v6846 = vmul.f32 1.0, %v6845
      %v6847 = vrcp.pop %v6729
      %v6848 = vmul.f32 1.0, %v6847
      %v6849 = vrcp.pop %v6730
      %v6850 = vmul.f32 1.0, %v6849
      %v6851 = vrcp.pop %v6731
      %v6852 = vmul.f32 1.0, %v6851
      %v6853 = vrcp.pop %v6732
      %v6854 = vmul.f32 1.0, %v6853
      %v6855 = vrcp.pop %v6733
      %v6856 = vmul.f32 1.0, %v6855
      %v6857 = vrcp.pop %v6734
      %v6858 = vmul.f32 1.0, %v6857
      %v6859 = vrcp.pop %v6735
      %v6860 = vmul.f32 1.0, %v6859
      %v6861 = vrcp.pop %v6736
      %v6862 = vmul.f32 1.0, %v6861
      %v6863 = vrcp.pop %v6737
      %v6864 = vmul.f32 1.0, %v6863
      %v6865 = vrcp.pop %v6738
      %v6866 = vmul.f32 1.0, %v6865
      %v6867 = vrcp.pop %v6739
      %v6868 = vmul.f32 1.0, %v6867
      %v6869 = vrcp.pop %v6740
      %v6870 = vmul.f32 1.0, %v6869
      %v6871 = vrcp.pop %v6741
      %v6872 = vmul.f32 1.0, %v6871
      %v6873 = vrcp.pop %v6742
      %v6874 = vmul.f32 1.0, %v6873
      %v6875 = vrcp.pop %v6743
      %v6876 = vmul.f32 1.0, %v6875
      %v6877 = vrcp.pop %v6744
      %v6878 = vmul.f32 1.0, %v6877
      %v6879 = vrcp.pop %v6745
      %v6880 = vmul.f32 1.0, %v6879
      %v6881 = vrcp.pop %v6746
      %v6882 = vmul.f32 1.0, %v6881
      %v6883 = vrcp.pop %v6747
      %v6884 = vmul.f32 1.0, %v6883
      %v6885 = vrcp.pop %v6748
      %v6886 = vmul.f32 1.0, %v6885
      %v6887 = vrcp.pop %v6749
      %v6888 = vmul.f32 1.0, %v6887
      %v6889 = vrcp.pop %v6750
      %v6890 = vmul.f32 1.0, %v6889
      %v6891 = vrcp.pop %v6751
      %v6892 = vmul.f32 1.0, %v6891
      %v6893 = vrcp.pop %v6752
      %v6894 = vmul.f32 1.0, %v6893
      %v6895 = vrcp.pop %v6753
      %v6896 = vmul.f32 1.0, %v6895
      %v6897 = vrcp.pop %v6754
      %v6898 = vmul.f32 1.0, %v6897
      %v6899 = vrcp.pop %v6755
      %v6900 = vmul.f32 1.0, %v6899
      %v6901 = vrcp.pop %v6756
      %v6902 = vmul.f32 1.0, %v6901
      %v6903 = vrcp.pop %v6757
      %v6904 = vmul.f32 1.0, %v6903
      %v6905 = vrcp.pop %v6758
      %v6906 = vmul.f32 1.0, %v6905
      %v6907 = vrcp.pop %v6759
      %v6908 = vmul.f32 1.0, %v6907
      %v6909 = vrcp.pop %v6760
      %v6910 = vmul.f32 1.0, %v6909
      %v6911 = vrcp.pop %v6761
      %v6912 = vmul.f32 1.0, %v6911
      %v6913 = vrcp.pop %v6762
      %v6914 = vmul.f32 1.0, %v6913
      %v6915 = vrcp.pop %v6763
      %v6916 = vmul.f32 1.0, %v6915
      %v6917 = vrcp.pop %v6764
      %v6918 = vmul.f32 1.0, %v6917
      %v6919 = vrcp.pop %v6765
      %v6920 = vmul.f32 1.0, %v6919
      %v6921 = vrcp.pop %v6766
      %v6922 = vmul.f32 1.0, %v6921
      %v6923 = vrcp.pop %v6767
      %v6924 = vmul.f32 1.0, %v6923
      %v6925 = vrcp.pop %v6768
      %v6926 = vmul.f32 1.0, %v6925
      %v6927 = vrcp.pop %v6769
      %v6928 = vmul.f32 1.0, %v6927
      %v6929 = vrcp.pop %v6770
      %v6930 = vmul.f32 1.0, %v6929
      %v6931 = vrcp.pop %v6771
      %v6932 = vmul.f32 1.0, %v6931
      %v6933 = vrcp.pop %v6772
      %v6934 = vmul.f32 1.0, %v6933
      %v6935 = vrcp.pop %v6773
      %v6936 = vmul.f32 1.0, %v6935
      %v6937 = vrcp.pop %v6774
      %v6938 = vmul.f32 1.0, %v6937
      %v6939 = vrcp.pop %v6775
      %v6940 = vmul.f32 1.0, %v6939
      %v6941 = vrcp.pop %v6776
      %v6942 = vmul.f32 1.0, %v6941
      %v6943 = vrcp.pop %v6777
      %v6944 = vmul.f32 1.0, %v6943
      %v6945 = vrcp.pop %v6778
      %v6946 = vmul.f32 1.0, %v6945
      %v6947 = vrcp.pop %v6779
      %v6948 = vmul.f32 1.0, %v6947
      %v6949 = vrcp.pop %v6780
      %v6950 = vmul.f32 1.0, %v6949
      %v6951 = vrcp.pop %v6781
      %v6952 = vmul.f32 1.0, %v6951
      %v6953 = vrcp.pop %v6782
      %v6954 = vmul.f32 1.0, %v6953
      %v6955 = vrcp.pop %v6783
      %v6956 = vmul.f32 1.0, %v6955
      %v6957 = vrcp.pop %v6784
      %v6958 = vmul.f32 1.0, %v6957
      %v6959 = vrcp.pop %v6785
      %v6960 = vmul.f32 1.0, %v6959
      %v6961 = vrcp.pop %v6786
      %v6962 = vmul.f32 1.0, %v6961
      %v6963 = vrcp.pop %v6787
      %v6964 = vmul.f32 1.0, %v6963
      %v6965 = vrcp.pop %v6788
      %v6966 = vmul.f32 1.0, %v6965
      %v6967 = vrcp.pop %v6789
      %v6968 = vmul.f32 1.0, %v6967
      %v6969 = vrcp.pop %v6790
      %v6970 = vmul.f32 1.0, %v6969
      %v6971 = vrcp.pop %v6791
      %v6972 = vmul.f32 1.0, %v6971
      %v6973 = vrcp.pop %v6792
      %v6974 = vmul.f32 1.0, %v6973
      %v6975 = vrcp.pop %v6793
      %v6976 = vmul.f32 1.0, %v6975
      %v6977 = vrcp.pop %v6794
      %v6978 = vmul.f32 1.0, %v6977
      %v6979 = vrcp.pop %v6795
      %v6980 = vmul.f32 1.0, %v6979
      %v6981 = vrcp.pop %v6796
      %v6982 = vmul.f32 1.0, %v6981
      %v6983 = vrcp.pop %v6797
      %v6984 = vmul.f32 1.0, %v6983
      %v6985 = vrcp.pop %v6798
      %v6986 = vmul.f32 1.0, %v6985
      %v6987 = vrcp.pop %v6799
      %v6988 = vmul.f32 1.0, %v6987
      %v6989 = vrcp.pop %v6800
      %v6990 = vmul.f32 1.0, %v6989
      %v6991 = vrcp.pop %v6801
      %v6992 = vmul.f32 1.0, %v6991
      %v6993 = vrcp.pop %v6802
      %v6994 = vmul.f32 1.0, %v6993
      %v6995 = vrcp.pop %v6803
      %v6996 = vmul.f32 1.0, %v6995
      %v6997 = vrcp.pop %v6804
      %v6998 = vmul.f32 1.0, %v6997
      %v6999 = vrcp.pop %v6805
      %v7000 = vmul.f32 1.0, %v6999
      %v7001 = vrcp.pop %v6806
      %v7002 = vmul.f32 1.0, %v7001
      %v7003 = vrcp.pop %v6807
      %v7004 = vmul.f32 1.0, %v7003
      %v7005 = vrcp.pop %v6808
      %v7006 = vmul.f32 1.0, %v7005
      %v7007 = vrcp.pop %v6809
      %v7008 = vmul.f32 1.0, %v7007
      %v7009 = vrcp.pop %v6810
      %v7010 = vmul.f32 1.0, %v7009
      %v7011 = vrcp.pop %v6811
      %v7012 = vmul.f32 1.0, %v7011
      %v7013 = vrcp.pop %v6812
      %v7014 = vmul.f32 1.0, %v7013
      %v7015 = vrcp.pop %v6813
      %v7016 = vmul.f32 1.0, %v7015
      %v7017 = vrcp.pop %v6814
      %v7018 = vmul.f32 1.0, %v7017
      %v7019 = vrcp.pop %v6815
      %v7020 = vmul.f32 1.0, %v7019
      %v7021 = vrcp.pop %v6816
      %v7022 = vmul.f32 1.0, %v7021
      %v7023 = vrcp.pop %v6817
      %v7024 = vmul.f32 1.0, %v7023
      %v7025 = vrcp.pop %v6818
      %v7026 = vmul.f32 1.0, %v7025
      %v7027 = vrcp.pop %v6819
      %v7028 = vmul.f32 1.0, %v7027
      %v7029 = vrcp.pop %v6820
      %v7030 = vmul.f32 1.0, %v7029
      %v7031 = vrcp.pop %v6821
      %v7032 = vmul.f32 1.0, %v7031
      %v7033 = vrcp.pop %v6822
      %v7034 = vmul.f32 1.0, %v7033
      %v7035 = vrcp.pop %v6823
      %v7036 = vmul.f32 1.0, %v7035
      %v7037 = vrcp.pop %v6824
      %v7038 = vmul.f32 1.0, %v7037
      %v7039 = vrcp.pop %v6825
      %v7040 = vmul.f32 1.0, %v7039
      %v7041 = vrcp.pop %v6826
      %v7042 = vmul.f32 1.0, %v7041
      %v7043 = vrcp.pop %v6827
      %v7044 = vmul.f32 1.0, %v7043
      %v7045 = vrcp.pop %v6828
      %v7046 = vmul.f32 1.0, %v7045
      %v7047 = vrcp.pop %v6829
      %v7048 = vmul.f32 1.0, %v7047
      %v7049 = vrcp.pop %v6830
      %v7050 = vmul.f32 1.0, %v7049
      %v7051 = vrcp.pop %v6831
      %v7052 = vmul.f32 1.0, %v7051
      %v7053 = vrcp.pop %v6832
      %v7054 = vmul.f32 1.0, %v7053
      %v7055 = vrcp.pop %v6833
      %v7056 = vmul.f32 1.0, %v7055
      %v7057 = vrcp.pop %v6834
      %v7058 = vmul.f32 1.0, %v7057
      %7059 = vst [vmem:[%s423] sm:$0xff] %v6836
      %7060 = vst [vmem:[%s423 + $0x8] sm:$0xff] %v6838
      %7061 = vst [vmem:[%s423 + $0x10] sm:$0xff] %v6840
      %7062 = vst [vmem:[%s423 + $0x18] sm:$0xff] %v6842
      %7063 = vst [vmem:[%s423 + $0x20] sm:$0xff] %v6844
      %7064 = vst [vmem:[%s423 + $0x28] sm:$0xff] %v6846
      %7065 = vst.msk [vmem:[%s423 + $0x30] sm:$0xff] %vm1798, %v6848
      %7066 = vst [vmem:[%s423 + $0x38] sm:$0xff] %v6850
      %7067 = vst [vmem:[%s423 + $0x40] sm:$0xff] %v6852
      %7068 = vst [vmem:[%s423 + $0x48] sm:$0xff] %v6854
      %7069 = vst [vmem:[%s423 + $0x50] sm:$0xff] %v6856
      %7070 = vst [vmem:[%s423 + $0x58] sm:$0xff] %v6858
      %7071 = vst [vmem:[%s423 + $0x60] sm:$0xff] %v6860
      %7072 = vst.msk [vmem:[%s423 + $0x68] sm:$0xff] %vm1798, %v6862
      %7073 = vst [vmem:[%s423 + $0x70] sm:$0xff] %v6864
      %7074 = vst [vmem:[%s423 + $0x78] sm:$0xff] %v6866
      %7075 = vst [vmem:[%s423 + $0x80] sm:$0xff] %v6868
      %7076 = vst [vmem:[%s423 + $0x88] sm:$0xff] %v6870
      %7077 = vst [vmem:[%s423 + $0x90] sm:$0xff] %v6872
      %7078 = vst [vmem:[%s423 + $0x98] sm:$0xff] %v6874
      %7079 = vst.msk [vmem:[%s423 + $0xa0] sm:$0xff] %vm1798, %v6876
      %7080 = vst [vmem:[%s423 + $0xa8] sm:$0xff] %v6878
      %7081 = vst [vmem:[%s423 + $0xb0] sm:$0xff] %v6880
      %7082 = vst [vmem:[%s423 + $0xb8] sm:$0xff] %v6882
      %7083 = vst [vmem:[%s423 + $0xc0] sm:$0xff] %v6884
      %7084 = vst [vmem:[%s423 + $0xc8] sm:$0xff] %v6886
      %7085 = vst [vmem:[%s423 + $0xd0] sm:$0xff] %v6888
      %7086 = vst.msk [vmem:[%s423 + $0xd8] sm:$0xff] %vm1798, %v6890
      %7087 = vst [vmem:[%s423 + $0xe0] sm:$0xff] %v6892
      %7088 = vst [vmem:[%s423 + $0xe8] sm:$0xff] %v6894
      %7089 = vst [vmem:[%s423 + $0xf0] sm:$0xff] %v6896
      %7090 = vst [vmem:[%s423 + $0xf8] sm:$0xff] %v6898
      %7091 = vst [vmem:[%s423 + $0x100] sm:$0xff] %v6900
      %7092 = vst [vmem:[%s423 + $0x108] sm:$0xff] %v6902
      %7093 = vst.msk [vmem:[%s423 + $0x110] sm:$0xff] %vm1798, %v6904
      %7094 = vst [vmem:[%s423 + $0x118] sm:$0xff] %v6906
      %7095 = vst [vmem:[%s423 + $0x120] sm:$0xff] %v6908
      %7096 = vst [vmem:[%s423 + $0x128] sm:$0xff] %v6910
      %7097 = vst [vmem:[%s423 + $0x130] sm:$0xff] %v6912
      %7098 = vst [vmem:[%s423 + $0x138] sm:$0xff] %v6914
      %7099 = vst [vmem:[%s423 + $0x140] sm:$0xff] %v6916
      %7100 = vst.msk [vmem:[%s423 + $0x148] sm:$0xff] %vm1798, %v6918
      %7101 = vst [vmem:[%s423 + $0x150] sm:$0xff] %v6920
      %7102 = vst [vmem:[%s423 + $0x158] sm:$0xff] %v6922
      %7103 = vst [vmem:[%s423 + $0x160] sm:$0xff] %v6924
      %7104 = vst [vmem:[%s423 + $0x168] sm:$0xff] %v6926
      %7105 = vst [vmem:[%s423 + $0x170] sm:$0xff] %v6928
      %7106 = vst [vmem:[%s423 + $0x178] sm:$0xff] %v6930
      %7107 = vst.msk [vmem:[%s423 + $0x180] sm:$0xff] %vm1798, %v6932
      %7108 = vst [vmem:[%s423 + $0x188] sm:$0xff] %v6934
      %7109 = vst [vmem:[%s423 + $0x190] sm:$0xff] %v6936
      %7110 = vst [vmem:[%s423 + $0x198] sm:$0xff] %v6938
      %7111 = vst [vmem:[%s423 + $0x1a0] sm:$0xff] %v6940
      %7112 = vst [vmem:[%s423 + $0x1a8] sm:$0xff] %v6942
      %7113 = vst [vmem:[%s423 + $0x1b0] sm:$0xff] %v6944
      %7114 = vst.msk [vmem:[%s423 + $0x1b8] sm:$0xff] %vm1798, %v6946
      %7115 = vst [vmem:[%s423 + $0x1c0] sm:$0xff] %v6948
      %7116 = vst [vmem:[%s423 + $0x1c8] sm:$0xff] %v6950
      %7117 = vst [vmem:[%s423 + $0x1d0] sm:$0xff] %v6952
      %7118 = vst [vmem:[%s423 + $0x1d8] sm:$0xff] %v6954
      %7119 = vst [vmem:[%s423 + $0x1e0] sm:$0xff] %v6956
      %7120 = vst [vmem:[%s423 + $0x1e8] sm:$0xff] %v6958
      %7121 = vst.msk [vmem:[%s423 + $0x1f0] sm:$0xff] %vm1798, %v6960
      %7122 = vst [vmem:[%s423 + $0x1f8] sm:$0xff] %v6962
      %7123 = vst [vmem:[%s423 + $0x200] sm:$0xff] %v6964
      %7124 = vst [vmem:[%s423 + $0x208] sm:$0xff] %v6966
      %7125 = vst [vmem:[%s423 + $0x210] sm:$0xff] %v6968
      %7126 = vst [vmem:[%s423 + $0x218] sm:$0xff] %v6970
      %7127 = vst [vmem:[%s423 + $0x220] sm:$0xff] %v6972
      %7128 = vst.msk [vmem:[%s423 + $0x228] sm:$0xff] %vm1798, %v6974
      %7129 = vst [vmem:[%s423 + $0x230] sm:$0xff] %v6976
      %7130 = vst [vmem:[%s423 + $0x238] sm:$0xff] %v6978
      %7131 = vst [vmem:[%s423 + $0x240] sm:$0xff] %v6980
      %7132 = vst [vmem:[%s423 + $0x248] sm:$0xff] %v6982
      %7133 = vst [vmem:[%s423 + $0x250] sm:$0xff] %v6984
      %7134 = vst [vmem:[%s423 + $0x258] sm:$0xff] %v6986
      %7135 = vst.msk [vmem:[%s423 + $0x260] sm:$0xff] %vm1798, %v6988
      %7136 = vst [vmem:[%s423 + $0x268] sm:$0xff] %v6990
      %7137 = vst [vmem:[%s423 + $0x270] sm:$0xff] %v6992
      %7138 = vst [vmem:[%s423 + $0x278] sm:$0xff] %v6994
      %7139 = vst [vmem:[%s423 + $0x280] sm:$0xff] %v6996
      %7140 = vst [vmem:[%s423 + $0x288] sm:$0xff] %v6998
      %7141 = vst [vmem:[%s423 + $0x290] sm:$0xff] %v7000
      %7142 = vst.msk [vmem:[%s423 + $0x298] sm:$0xff] %vm1798, %v7002
      %7143 = vst [vmem:[%s423 + $0x2a0] sm:$0xff] %v7004
      %7144 = vst [vmem:[%s423 + $0x2a8] sm:$0xff] %v7006
      %7145 = vst [vmem:[%s423 + $0x2b0] sm:$0xff] %v7008
      %7146 = vst [vmem:[%s423 + $0x2b8] sm:$0xff] %v7010
      %7147 = vst [vmem:[%s423 + $0x2c0] sm:$0xff] %v7012
      %7148 = vst [vmem:[%s423 + $0x2c8] sm:$0xff] %v7014
      %7149 = vst.msk [vmem:[%s423 + $0x2d0] sm:$0xff] %vm1798, %v7016
      %7150 = vst [vmem:[%s423 + $0x2d8] sm:$0xff] %v7018
      %7151 = vst [vmem:[%s423 + $0x2e0] sm:$0xff] %v7020
      %7152 = vst [vmem:[%s423 + $0x2e8] sm:$0xff] %v7022
      %7153 = vst [vmem:[%s423 + $0x2f0] sm:$0xff] %v7024
      %7154 = vst [vmem:[%s423 + $0x2f8] sm:$0xff] %v7026
      %7155 = vst [vmem:[%s423 + $0x300] sm:$0xff] %v7028
      %7156 = vst.msk [vmem:[%s423 + $0x308] sm:$0xff] %vm1798, %v7030
      %7157 = vst [vmem:[%s423 + $0x310] sm:$0xff] %v7032
      %7158 = vst [vmem:[%s423 + $0x318] sm:$0xff] %v7034
      %7159 = vst [vmem:[%s423 + $0x320] sm:$0xff] %v7036
      %7160 = vst [vmem:[%s423 + $0x328] sm:$0xff] %v7038
      %7161 = vst [vmem:[%s423 + $0x330] sm:$0xff] %v7040
      %7162 = vst [vmem:[%s423 + $0x338] sm:$0xff] %v7042
      %7163 = vst.msk [vmem:[%s423 + $0x340] sm:$0xff] %vm1798, %v7044
      %7164 = vst [vmem:[%s423 + $0x348] sm:$0xff] %v7046
      %7165 = vst [vmem:[%s423 + $0x350] sm:$0xff] %v7048
      %7166 = vst [vmem:[%s423 + $0x358] sm:$0xff] %v7050
      %7167 = vst [vmem:[%s423 + $0x360] sm:$0xff] %v7052
      %7168 = vst [vmem:[%s423 + $0x368] sm:$0xff] %v7054
      %7169 = vst [vmem:[%s423 + $0x370] sm:$0xff] %v7056
      %7170 = vst.msk [vmem:[%s423 + $0x378] sm:$0xff] %vm1798, %v7058
      %s7171 = smul.u32 16, %s23
      %p7172 = scmp.lt.s32.totalorder %s7171, 31
      %s7173 = scalar_select %p7172, %s7171, 31
      %s7174 = smul.addr %s7173, 7
      %s7175 = smul.addr %s7174, 8
      %s7176 = scalar_lea.vmem %s10, %s7175
      %s7177 = smul.u32 16, %s23
      %p7178 = scmp.lt.s32.totalorder %s7177, 31
      %s7179 = scalar_select %p7178, %s7177, 31
      %s7180 = smul.addr %s7179, 8
      %s7181 = scalar_lea.vmem %s11, %s7180
      // Predicated region
      $region61: #{vae_forward.1} parent=59 // pred_check
        %p7182 = pneg %p261
      $region62: #{vae_forward.1} parent=59 // pred_check_branch
        %7184 = sbr.rel (%p7182) target = $region64
      $region63: #{vae_forward.1} parent=59 // pred_region
        %s7185 = smul.u32 16, %s23
      $region64: #{vae_forward.1} parent=59 // pred_fallthru
        _
      // Predicated region
      $region65: #{vae_forward.1} parent=59 // pred_check
        %p7186 = pneg %p287
      $region66: #{vae_forward.1} parent=59 // pred_check_branch
        %7188 = sbr.rel (%p7186) target = $region68
      $region67: #{vae_forward.1} parent=59 // pred_region
        %s7189 = smul.u32 16, %s23
      $region68: #{vae_forward.1} parent=59 // pred_fallthru
        _
    $region60: #{vae_forward.1} parent=5 // pred_fallthru
      _
    %p7190 = scmp.le.s32.totalorder 2, %s18
    // Predicated region
    $region69: #{vae_forward.1} parent=5 // pred_check
      %p7191 = pneg %p7190
    $region70: #{vae_forward.1} parent=5 // pred_check_branch
      %7193 = sbr.rel (%p7191) target = $region72
    $region71: #{vae_forward.1} parent=5 // pred_region
      %s7194 = ssub.s32 %s18, 2
      // Predicated region
      $region73: #{vae_forward.1} parent=71 // pred_check
        %p7195 = pneg %p267
      $region74: #{vae_forward.1} parent=71 // pred_check_branch
        %7197 = sbr.rel (%p7195) target = $region76
      $region75: #{vae_forward.1} parent=71 // pred_region
        %s7198 = smul.u32 16, %s24
        %p7199 = scmp.lt.s32.totalorder %s7198, 31
        %s7200 = scalar_select %p7199, %s7198, 31
        %s7201 = smul.addr %s7200, 7
        %s7202 = smul.addr %s7201, 8
        %s7203 = scalar_lea.vmem %s10, %s7202
      $region76: #{vae_forward.1} parent=71 // pred_fallthru
        _
      // Predicated region
      $region77: #{vae_forward.1} parent=71 // pred_check
        %p7204 = pneg %p293
      $region78: #{vae_forward.1} parent=71 // pred_check_branch
        %7206 = sbr.rel (%p7204) target = $region80
      $region79: #{vae_forward.1} parent=71 // pred_region
        %s7207 = smul.u32 16, %s24
        %p7208 = scmp.lt.s32.totalorder %s7207, 31
        %s7209 = scalar_select %p7208, %s7207, 31
        %s7210 = smul.addr %s7209, 8
        %s7211 = scalar_lea.vmem %s11, %s7210
      $region80: #{vae_forward.1} parent=71 // pred_fallthru
        _
    $region72: #{vae_forward.1} parent=5 // pred_fallthru
      _
  $region6: #{vae_forward.1} parent=0 // loop_footer
    %s22 = sadd.s32 1, %s18
  $region7: #{vae_forward.1} parent=0 // loop_footer_branch
    %17 = sbr.rel target = $region3
  $region8: #{vae_forward.1} parent=0 // loop_exit
    _

</llo_original>
